<compile_context>
chip_gen: v6e
topology: v6e:2x2x1
jax: 0.10.0
libtpu: 0.0.40
codegen_flags: <defaults>
</compile_context>

<pallas_src>
import functools
import math

import jax
import jax.numpy as jnp
from jax import lax
from jax.experimental import pallas as pl
from jax.experimental.pallas import tpu as pltpu

_LANE = 128


def _gelu_tanh(x):
    c = math.sqrt(2.0 / math.pi)
    return 0.5 * x * (1.0 + jnp.tanh(c * (x + 0.044715 * (x * x * x))))


def _round_up(v, m):
    return ((v + m - 1) // m) * m


def _row_tiling(m):
    """Row-tile size (multiple of 8) and padded row count."""
    if m <= 128:
        tm = _round_up(m, 8)
    else:
        tm = 128
    return tm, _round_up(m, tm)


def _pick_tile(dim, cap):
    """Largest multiple of 128 that divides `dim` and is <= cap (dim % 128 == 0)."""
    t = (min(cap, dim) // _LANE) * _LANE
    while dim % t != 0:
        t -= _LANE
    return t


def _pad_rows(x, m_pad):
    m = x.shape[0]
    if m_pad == m:
        return x
    return jnp.pad(x, ((0, m_pad - m), (0, 0)))


# ---------------------------------------------------------------------------
# 1. Tiled linear: y = x @ W.T + b  (optionally fused GELU epilogue)
# ---------------------------------------------------------------------------
def _linear_kernel(x_ref, w_ref, b_ref, o_ref, acc_ref, *, apply_gelu):
    k_step = pl.program_id(2)

    @pl.when(k_step == 0)
    def _():
        acc_ref[...] = jnp.zeros_like(acc_ref)

    # x:(tm,tk) . W:(tn,tk) contracted on the shared "in" axis -> (tm,tn).
    # MXU handles the transposed RHS natively; no wrapper-side weight.T.
    acc_ref[...] += lax.dot_general(
        x_ref[...], w_ref[...],
        dimension_numbers=(((1,), (1,)), ((), ())),
        preferred_element_type=jnp.float32,
    )

    @pl.when(k_step == pl.num_programs(2) - 1)
    def _():
        y = acc_ref[...] + b_ref[...].astype(jnp.float32)
        if apply_gelu:
            y = _gelu_tanh(y)
        o_ref[...] = y.astype(o_ref.dtype)


def pallas_linear(x, w, b, *, apply_gelu=False):
    """x: (M, K), w: (N, K) [PyTorch layout], b: (N,) -> (M, N)."""
    m, k_dim = x.shape
    n, k_w = w.shape
    assert k_w == k_dim
    assert k_dim % _LANE == 0 and n % _LANE == 0, "features must be multiples of 128"

    tm, m_pad = _row_tiling(m)
    x_p = _pad_rows(x, m_pad)
    tn = _pick_tile(n, 256)
    tk = _pick_tile(k_dim, 512)
    grid = (m_pad // tm, n // tn, k_dim // tk)

    b2 = b.reshape(1, n)
    itemsize = jnp.dtype(x.dtype).itemsize
    # double-buffered inputs + double-buffered output + f32 accumulator
    vmem_est = (2 * (tm * tk + tn * tk + tn) * itemsize
                + 2 * tm * tn * itemsize + tm * tn * 4)
    vmem_limit = int(min(32 * 1024 * 1024, max(4 * 1024 * 1024, 2 * vmem_est)))

    kernel = functools.partial(_linear_kernel, apply_gelu=apply_gelu)
    out = pl.pallas_call(
        kernel,
        out_shape=jax.ShapeDtypeStruct((m_pad, n), x.dtype),
        grid=grid,
        in_specs=[
            pl.BlockSpec((tm, tk), lambda i, j, kk: (i, kk)),
            pl.BlockSpec((tn, tk), lambda i, j, kk: (j, kk)),
            pl.BlockSpec((1, tn), lambda i, j, kk: (0, j)),
        ],
        out_specs=pl.BlockSpec((tm, tn), lambda i, j, kk: (i, j)),
        scratch_shapes=[pltpu.VMEM((tm, tn), jnp.float32)],
        compiler_params=pltpu.CompilerParams(
            dimension_semantics=("parallel", "parallel", "arbitrary"),
            vmem_limit_bytes=vmem_limit,
        ),
        cost_estimate=pl.CostEstimate(
            flops=2 * m_pad * n * k_dim,
            transcendentals=m_pad * n if apply_gelu else 0,
            bytes_accessed=int((m_pad * k_dim + n * k_dim + n + m_pad * n) * itemsize),
        ),
    )(x_p, w, b2)
    return out[:m] if m_pad != m else out


# ---------------------------------------------------------------------------
# 2. Head-mixing attention (per token position, H x H softmax over heads)
# ---------------------------------------------------------------------------
def _heads_attn_kernel(q_ref, k_ref, v_ref, o_ref, *, n_heads, head_dim, scale):
    q = q_ref[...].astype(jnp.float32)
    k = k_ref[...].astype(jnp.float32)
    v = v_ref[...].astype(jnp.float32)
    hd = head_dim

    # scores[h][g] : (tm, 1) = <q head h, k head g> * scale  (row-wise)
    scores = []
    for h in range(n_heads):
        qh = q[:, h * hd:(h + 1) * hd]
        row = []
        for g in range(n_heads):
            kg = k[:, g * hd:(g + 1) * hd]
            row.append(jnp.sum(qh * kg, axis=-1, keepdims=True) * scale)
        scores.append(row)

    outs = []
    for h in range(n_heads):
        row = scores[h]
        m = row[0]
        for g in range(1, n_heads):
            m = jnp.maximum(m, row[g])
        exps = [jnp.exp(s - m) for s in row]
        denom = exps[0]
        for g in range(1, n_heads):
            denom = denom + exps[g]
        inv = 1.0 / denom
        out_h = (exps[0] * inv) * v[:, 0:hd]
        for g in range(1, n_heads):
            out_h = out_h + (exps[g] * inv) * v[:, g * hd:(g + 1) * hd]
        outs.append(out_h)

    o_ref[...] = jnp.concatenate(outs, axis=-1).astype(o_ref.dtype)


def pallas_heads_attention(q, k, v, *, n_heads, head_dim):
    m, d = q.shape
    assert d == n_heads * head_dim
    tm, m_pad = _row_tiling(m)
    q_p, k_p, v_p = (_pad_rows(t, m_pad) for t in (q, k, v))

    kernel = functools.partial(
        _heads_attn_kernel, n_heads=n_heads, head_dim=head_dim,
        scale=1.0 / math.sqrt(head_dim))
    out = pl.pallas_call(
        kernel,
        out_shape=jax.ShapeDtypeStruct((m_pad, d), q.dtype),
        grid=(m_pad // tm,),
        in_specs=[
            pl.BlockSpec((tm, d), lambda i: (i, 0)),
            pl.BlockSpec((tm, d), lambda i: (i, 0)),
            pl.BlockSpec((tm, d), lambda i: (i, 0)),
        ],
        out_specs=pl.BlockSpec((tm, d), lambda i: (i, 0)),
        compiler_params=pltpu.CompilerParams(
            dimension_semantics=("parallel",)),
    )(q_p, k_p, v_p)
    return out[:m] if m_pad != m else out


# ---------------------------------------------------------------------------
# 3. Fused residual add + LayerNorm
# ---------------------------------------------------------------------------
def _add_ln_kernel(x_ref, r_ref, g_ref, b_ref, o_ref, *, eps):
    z = x_ref[...].astype(jnp.float32) + r_ref[...].astype(jnp.float32)
    mean = jnp.mean(z, axis=-1, keepdims=True)
    zc = z - mean
    var = jnp.mean(zc * zc, axis=-1, keepdims=True)
    inv = lax.rsqrt(var + eps)
    y = zc * inv * g_ref[...].astype(jnp.float32) + b_ref[...].astype(jnp.float32)
    o_ref[...] = y.astype(o_ref.dtype)


def pallas_add_layernorm(x, r, gamma, beta, *, eps=1e-5):
    m, d = x.shape
    tm, m_pad = _row_tiling(m)
    x_p, r_p = _pad_rows(x, m_pad), _pad_rows(r, m_pad)
    g2, b2 = gamma.reshape(1, d), beta.reshape(1, d)

    kernel = functools.partial(_add_ln_kernel, eps=eps)
    out = pl.pallas_call(
        kernel,
        out_shape=jax.ShapeDtypeStruct((m_pad, d), x.dtype),
        grid=(m_pad // tm,),
        in_specs=[
            pl.BlockSpec((tm, d), lambda i: (i, 0)),
            pl.BlockSpec((tm, d), lambda i: (i, 0)),
            pl.BlockSpec((1, d), lambda i: (0, 0)),
            pl.BlockSpec((1, d), lambda i: (0, 0)),
        ],
        out_specs=pl.BlockSpec((tm, d), lambda i: (i, 0)),
        compiler_params=pltpu.CompilerParams(
            dimension_semantics=("parallel",)),
    )(x_p, r_p, g2, b2)
    return out[:m] if m_pad != m else out


# ---------------------------------------------------------------------------
# 4. Orthogonal regularizer: mean((W W^T - I)^2)
# ---------------------------------------------------------------------------
def _ortho_loss_kernel(w_ref, o_ref):
    w = w_ref[...].astype(jnp.float32)
    gram = lax.dot_general(
        w, w, dimension_numbers=(((1,), (1,)), ((), ())),
        preferred_element_type=jnp.float32)
    n = gram.shape[0]
    row = lax.broadcasted_iota(jnp.int32, (n, n), 0)
    col = lax.broadcasted_iota(jnp.int32, (n, n), 1)
    diff = jnp.where(row == col, gram - 1.0, gram)
    sq = diff * diff
    partial = jnp.sum(sq, axis=1, keepdims=True)          # (n, 1)
    total = jnp.sum(partial, axis=0, keepdims=True)       # (1, 1)
    o_ref[...] = total * (1.0 / float(n * n))


def pallas_orthogonal_loss(w):
    n, k_dim = w.shape
    return pl.pallas_call(
        _ortho_loss_kernel,
        out_shape=jax.ShapeDtypeStruct((1, 1), jnp.float32),
        grid=(1,),
        in_specs=[pl.BlockSpec((n, k_dim), lambda i: (0, 0))],
        out_specs=pl.BlockSpec((1, 1), lambda i: (0, 0)),
        compiler_params=pltpu.CompilerParams(
            dimension_semantics=("arbitrary",)),
    )(w)


# ---------------------------------------------------------------------------
# Full layer forward (wrapper; reshapes are plain-JAX glue)
# ---------------------------------------------------------------------------
def disentangled_transformer_layer(x, params, *, n_heads):
    B, S, D = x.shape
    hd = D // n_heads
    xm = x.reshape(B * S, D)

    q = pallas_linear(xm, params["wq"], params["bq"])
    k = pallas_linear(xm, params["wk"], params["bk"])
    v = pallas_linear(xm, params["wv"], params["bv"])

    attn = pallas_heads_attention(q, k, v, n_heads=n_heads, head_dim=hd)
    attn = pallas_linear(attn, params["wo"], params["bo"])

    h1 = pallas_add_layernorm(xm, attn, params["g1"], params["be1"])
    ff = pallas_linear(h1, params["w1"], params["b1"], apply_gelu=True)
    ff = pallas_linear(ff, params["w2"], params["b2"])
    out = pallas_add_layernorm(h1, ff, params["g2"], params["be2"])

    loss = (pallas_orthogonal_loss(params["wq"])
            + pallas_orthogonal_loss(params["wk"])
            + pallas_orthogonal_loss(params["wv"])
            + pallas_orthogonal_loss(params["wo"])
            + pallas_orthogonal_loss(params["w1"])
            + pallas_orthogonal_loss(params["w2"]))

    return out.reshape(B, S, D), loss[0, 0]


# ---------------------------------------------------------------------------
# Pure-JAX reference (mirrors the PyTorch module, highest-precision matmuls)
# ---------------------------------------------------------------------------
def reference_layer(x, p, n_heads, eps=1e-5):
    B, S, D = x.shape
    hd = D // n_heads

    def lin(z, w, b):
        return jnp.dot(z, w.T, precision="highest") + b

    xm = x.reshape(B * S, D)
    q = lin(xm, p["wq"], p["bq"]).reshape(B, S, n_heads, hd)
    k = lin(xm, p["wk"], p["bk"]).reshape(B, S, n_heads, hd)
    v = lin(xm, p["wv"], p["bv"]).reshape(B, S, n_heads, hd)

    scores = jnp.einsum("bshd,bsgd->bshg", q, k,
                        precision="highest") / math.sqrt(hd)
    w_att = jax.nn.softmax(scores, axis=-1)
    attn = jnp.einsum("bshg,bsgd->bshd", w_att, v,
                      precision="highest").reshape(B * S, D)
    attn = lin(attn, p["wo"], p["bo"])

    def ln(z, g, b):
        mu = z.mean(-1, keepdims=True)
        var = ((z - mu) ** 2).mean(-1, keepdims=True)
        return (z - mu) / jnp.sqrt(var + eps) * g + b

    h1 = ln(xm + attn, p["g1"], p["be1"])
    f = lin(h1, p["w1"], p["b1"])
    f = _gelu_tanh(f)
    f = lin(f, p["w2"], p["b2"])
    out = ln(h1 + f, p["g2"], p["be2"]).reshape(B, S, D)

    def oloss(w):
        g = jnp.dot(w, w.T, precision="highest")
        return jnp.mean((g - jnp.eye(w.shape[0], dtype=w.dtype)) ** 2)

    loss = sum(oloss(p[name]) for name in ("wq", "wk", "wv", "wo", "w1", "w2"))
    return out, loss


if __name__ == "__main__":
    key = jax.random.PRNGKey(0)
    B, S, D, H = 2, 16, 128, 4          # hidden=128 keeps every output lane-dense
    keys = iter(jax.random.split(key, 16))

    def linear_init(kw, kb, out_f, in_f):
        bound = 1.0 / math.sqrt(in_f)
        w = jax.random.uniform(kw, (out_f, in_f), jnp.float32, -bound, bound)
        b = jax.random.uniform(kb, (out_f,), jnp.float32, -bound, bound)
        return w, b

    params = {}
    params["wq"], params["bq"] = linear_init(next(keys), next(keys), D, D)
    params["wk"], params["bk"] = linear_init(next(keys), next(keys), D, D)
    params["wv"], params["bv"] = linear_init(next(keys), next(keys), D, D)
    params["wo"], params["bo"] = linear_init(next(keys), next(keys), D, D)
    params["w1"], params["b1"] = linear_init(next(keys), next(keys), 4 * D, D)
    params["w2"], params["b2"] = linear_init(next(keys), next(keys), D, 4 * D)
    params["g1"] = jnp.ones((D,), jnp.float32)
    params["be1"] = jnp.zeros((D,), jnp.float32)
    params["g2"] = jnp.ones((D,), jnp.float32)
    params["be2"] = jnp.zeros((D,), jnp.float32)

    x = jax.random.normal(next(keys), (B, S, D), jnp.float32)

    fwd = jax.jit(functools.partial(disentangled_transformer_layer, n_heads=H))
    out, loss = fwd(x, params)
    out = jax.block_until_ready(out)
    loss = jax.block_until_ready(loss)

    out_ref, loss_ref = reference_layer(x, params, H)
    assert out.shape == (B, S, D)
    assert jnp.allclose(out, out_ref, atol=2e-4, rtol=2e-4), (
        float(jnp.max(jnp.abs(out - out_ref))))
    assert jnp.allclose(loss, loss_ref, atol=1e-6, rtol=1e-4), (
        float(loss), float(loss_ref))

    print("KERNEL_OK")
</pallas_src>

<mosaic_0001>
module attributes {stable_mosaic.version = 11 : i64} {
  func.func @_add_ln_kernel(%arg0: i32, %arg1: memref<32x128xf32, #tpu.memory_space<vmem>>, %arg2: memref<32x128xf32, #tpu.memory_space<vmem>>, %arg3: memref<1x128xf32, #tpu.memory_space<vmem>>, %arg4: memref<1x128xf32, #tpu.memory_space<vmem>>, %arg5: memref<32x128xf32, #tpu.memory_space<vmem>>) attributes {dimension_semantics = [#tpu.dimension_semantics<parallel>], iteration_bounds = array<i64: 1>, scalar_prefetch = 0 : i64, scratch_operands = 0 : i64, tpu.core_type = #tpu.core_type<tc>, window_params = [{transform_indices = @transform_0, window_bounds = array<i64: 32, 128>}, {transform_indices = @transform_1, window_bounds = array<i64: 32, 128>}, {pipeline_mode = #tpu.pipeline_mode<synchronous>, transform_indices = @transform_2, window_bounds = array<i64: 1, 128>}, {pipeline_mode = #tpu.pipeline_mode<synchronous>, transform_indices = @transform_3, window_bounds = array<i64: 1, 128>}, {transform_indices = @transform_4, window_bounds = array<i64: 32, 128>}]} {
    %c0 = arith.constant 0 : index
    %c0_0 = arith.constant 0 : index
    %0 = vector.load %arg1[%c0, %c0_0] : memref<32x128xf32, #tpu.memory_space<vmem>>, vector<32x128xf32>
    %c0_1 = arith.constant 0 : index
    %c0_2 = arith.constant 0 : index
    %1 = vector.load %arg2[%c0_1, %c0_2] : memref<32x128xf32, #tpu.memory_space<vmem>>, vector<32x128xf32>
    %2 = arith.addf %0, %1 : vector<32x128xf32>
    %cst = arith.constant dense<0.000000e+00> : vector<32xf32>
    %3 = vector.multi_reduction <add>, %2, %cst [1] : vector<32x128xf32> to vector<32xf32>
    %4 = vector.shape_cast %3 : vector<32xf32> to vector<32x1xf32>
    %cst_3 = arith.constant 1.280000e+02 : f32
    %5 = vector.broadcast %cst_3 : f32 to vector<32x1xf32>
    %6 = arith.divf %4, %5 : vector<32x1xf32>
    %7 = vector.broadcast %6 : vector<32x1xf32> to vector<32x128xf32>
    %8 = arith.subf %2, %7 : vector<32x128xf32>
    %9 = arith.mulf %8, %8 : vector<32x128xf32>
    %cst_4 = arith.constant dense<0.000000e+00> : vector<32xf32>
    %10 = vector.multi_reduction <add>, %9, %cst_4 [1] : vector<32x128xf32> to vector<32xf32>
    %11 = vector.shape_cast %10 : vector<32xf32> to vector<32x1xf32>
    %cst_5 = arith.constant 1.280000e+02 : f32
    %12 = vector.broadcast %cst_5 : f32 to vector<32x1xf32>
    %13 = arith.divf %11, %12 : vector<32x1xf32>
    %cst_6 = arith.constant 9.99999974E-6 : f32
    %14 = vector.broadcast %cst_6 : f32 to vector<32x1xf32>
    %15 = arith.addf %13, %14 : vector<32x1xf32>
    %16 = math.rsqrt %15 : vector<32x1xf32>
    %17 = vector.broadcast %16 : vector<32x1xf32> to vector<32x128xf32>
    %18 = arith.mulf %8, %17 : vector<32x128xf32>
    %c0_7 = arith.constant 0 : index
    %c0_8 = arith.constant 0 : index
    %19 = vector.load %arg3[%c0_7, %c0_8] : memref<1x128xf32, #tpu.memory_space<vmem>>, vector<1x128xf32>
    %20 = vector.broadcast %19 : vector<1x128xf32> to vector<32x128xf32>
    %21 = arith.mulf %18, %20 : vector<32x128xf32>
    %c0_9 = arith.constant 0 : index
    %c0_10 = arith.constant 0 : index
    %22 = vector.load %arg4[%c0_9, %c0_10] : memref<1x128xf32, #tpu.memory_space<vmem>>, vector<1x128xf32>
    %23 = vector.broadcast %22 : vector<1x128xf32> to vector<32x128xf32>
    %24 = arith.addf %21, %23 : vector<32x128xf32>
    %c0_11 = arith.constant 0 : index
    %c0_12 = arith.constant 0 : index
    %25 = vector.load %arg5[%c0_11, %c0_12] : memref<32x128xf32, #tpu.memory_space<vmem>>, vector<32x128xf32>
    tpu.vector_store %arg5[%c0_11, %c0_12], %24 {strides = array<i32>} : memref<32x128xf32, #tpu.memory_space<vmem>>, vector<32x128xf32>,
    return
  }
  func.func @transform_0(%arg0: i32) -> (i32, i32) {
    %c0_i32 = arith.constant 0 : i32
    %c0_i32_0 = arith.constant 0 : i32
    return %arg0, %c0_i32 : i32, i32
  }
  func.func @transform_1(%arg0: i32) -> (i32, i32) {
    %c0_i32 = arith.constant 0 : i32
    %c0_i32_0 = arith.constant 0 : i32
    return %arg0, %c0_i32 : i32, i32
  }
  func.func @transform_2(%arg0: i32) -> (i32, i32) {
    %c0_i32 = arith.constant 0 : i32
    %c0_i32_0 = arith.constant 0 : i32
    %c0_i32_1 = arith.constant 0 : i32
    return %c0_i32, %c0_i32_0 : i32, i32
  }
  func.func @transform_3(%arg0: i32) -> (i32, i32) {
    %c0_i32 = arith.constant 0 : i32
    %c0_i32_0 = arith.constant 0 : i32
    %c0_i32_1 = arith.constant 0 : i32
    return %c0_i32, %c0_i32_0 : i32, i32
  }
  func.func @transform_4(%arg0: i32) -> (i32, i32) {
    %c0_i32 = arith.constant 0 : i32
    %c0_i32_0 = arith.constant 0 : i32
    return %arg0, %c0_i32 : i32, i32
  }
}

module attributes {stable_mosaic.version = 11 : i64} {
  func.func @_heads_attn_kernel(%arg0: i32, %arg1: memref<32x128xf32, #tpu.memory_space<vmem>>, %arg2: memref<32x128xf32, #tpu.memory_space<vmem>>, %arg3: memref<32x128xf32, #tpu.memory_space<vmem>>, %arg4: memref<32x128xf32, #tpu.memory_space<vmem>>) attributes {dimension_semantics = [#tpu.dimension_semantics<parallel>], iteration_bounds = array<i64: 1>, scalar_prefetch = 0 : i64, scratch_operands = 0 : i64, tpu.core_type = #tpu.core_type<tc>, window_params = [{transform_indices = @transform_0, window_bounds = array<i64: 32, 128>}, {transform_indices = @transform_1, window_bounds = array<i64: 32, 128>}, {transform_indices = @transform_2, window_bounds = array<i64: 32, 128>}, {transform_indices = @transform_3, window_bounds = array<i64: 32, 128>}]} {
    %c0 = arith.constant 0 : index
    %c0_0 = arith.constant 0 : index
    %0 = vector.load %arg1[%c0, %c0_0] : memref<32x128xf32, #tpu.memory_space<vmem>>, vector<32x128xf32>
    %c0_1 = arith.constant 0 : index
    %c0_2 = arith.constant 0 : index
    %1 = vector.load %arg2[%c0_1, %c0_2] : memref<32x128xf32, #tpu.memory_space<vmem>>, vector<32x128xf32>
    %c0_3 = arith.constant 0 : index
    %c0_4 = arith.constant 0 : index
    %2 = vector.load %arg3[%c0_3, %c0_4] : memref<32x128xf32, #tpu.memory_space<vmem>>, vector<32x128xf32>
    %3 = vector.extract_strided_slice %0 {offsets = [0, 0], sizes = [32, 32], strides = [1, 1]} : vector<32x128xf32> to vector<32x32xf32>
    %4 = vector.extract_strided_slice %1 {offsets = [0, 0], sizes = [32, 32], strides = [1, 1]} : vector<32x128xf32> to vector<32x32xf32>
    %5 = arith.mulf %3, %4 : vector<32x32xf32>
    %cst = arith.constant dense<0.000000e+00> : vector<32xf32>
    %6 = vector.multi_reduction <add>, %5, %cst [1] : vector<32x32xf32> to vector<32xf32>
    %7 = vector.shape_cast %6 : vector<32xf32> to vector<32x1xf32>
    %cst_5 = arith.constant 0.176776692 : f32
    %8 = vector.broadcast %cst_5 : f32 to vector<32x1xf32>
    %9 = arith.mulf %7, %8 : vector<32x1xf32>
    %10 = vector.extract_strided_slice %1 {offsets = [0, 32], sizes = [32, 32], strides = [1, 1]} : vector<32x128xf32> to vector<32x32xf32>
    %11 = arith.mulf %3, %10 : vector<32x32xf32>
    %cst_6 = arith.constant dense<0.000000e+00> : vector<32xf32>
    %12 = vector.multi_reduction <add>, %11, %cst_6 [1] : vector<32x32xf32> to vector<32xf32>
    %13 = vector.shape_cast %12 : vector<32xf32> to vector<32x1xf32>
    %cst_7 = arith.constant 0.176776692 : f32
    %14 = vector.broadcast %cst_7 : f32 to vector<32x1xf32>
    %15 = arith.mulf %13, %14 : vector<32x1xf32>
    %16 = vector.extract_strided_slice %1 {offsets = [0, 64], sizes = [32, 32], strides = [1, 1]} : vector<32x128xf32> to vector<32x32xf32>
    %17 = arith.mulf %3, %16 : vector<32x32xf32>
    %cst_8 = arith.constant dense<0.000000e+00> : vector<32xf32>
    %18 = vector.multi_reduction <add>, %17, %cst_8 [1] : vector<32x32xf32> to vector<32xf32>
    %19 = vector.shape_cast %18 : vector<32xf32> to vector<32x1xf32>
    %cst_9 = arith.constant 0.176776692 : f32
    %20 = vector.broadcast %cst_9 : f32 to vector<32x1xf32>
    %21 = arith.mulf %19, %20 : vector<32x1xf32>
    %22 = vector.extract_strided_slice %1 {offsets = [0, 96], sizes = [32, 32], strides = [1, 1]} : vector<32x128xf32> to vector<32x32xf32>
    %23 = arith.mulf %3, %22 : vector<32x32xf32>
    %cst_10 = arith.constant dense<0.000000e+00> : vector<32xf32>
    %24 = vector.multi_reduction <add>, %23, %cst_10 [1] : vector<32x32xf32> to vector<32xf32>
    %25 = vector.shape_cast %24 : vector<32xf32> to vector<32x1xf32>
    %cst_11 = arith.constant 0.176776692 : f32
    %26 = vector.broadcast %cst_11 : f32 to vector<32x1xf32>
    %27 = arith.mulf %25, %26 : vector<32x1xf32>
    %28 = vector.extract_strided_slice %0 {offsets = [0, 32], sizes = [32, 32], strides = [1, 1]} : vector<32x128xf32> to vector<32x32xf32>
    %29 = vector.extract_strided_slice %1 {offsets = [0, 0], sizes = [32, 32], strides = [1, 1]} : vector<32x128xf32> to vector<32x32xf32>
    %30 = arith.mulf %28, %29 : vector<32x32xf32>
    %cst_12 = arith.constant dense<0.000000e+00> : vector<32xf32>
    %31 = vector.multi_reduction <add>, %30, %cst_12 [1] : vector<32x32xf32> to vector<32xf32>
    %32 = vector.shape_cast %31 : vector<32xf32> to vector<32x1xf32>
    %cst_13 = arith.constant 0.176776692 : f32
    %33 = vector.broadcast %cst_13 : f32 to vector<32x1xf32>
    %34 = arith.mulf %32, %33 : vector<32x1xf32>
    %35 = vector.extract_strided_slice %1 {offsets = [0, 32], sizes = [32, 32], strides = [1, 1]} : vector<32x128xf32> to vector<32x32xf32>
    %36 = arith.mulf %28, %35 : vector<32x32xf32>
    %cst_14 = arith.constant dense<0.000000e+00> : vector<32xf32>
    %37 = vector.multi_reduction <add>, %36, %cst_14 [1] : vector<32x32xf32> to vector<32xf32>
    %38 = vector.shape_cast %37 : vector<32xf32> to vector<32x1xf32>
    %cst_15 = arith.constant 0.176776692 : f32
    %39 = vector.broadcast %cst_15 : f32 to vector<32x1xf32>
    %40 = arith.mulf %38, %39 : vector<32x1xf32>
    %41 = vector.extract_strided_slice %1 {offsets = [0, 64], sizes = [32, 32], strides = [1, 1]} : vector<32x128xf32> to vector<32x32xf32>
    %42 = arith.mulf %28, %41 : vector<32x32xf32>
    %cst_16 = arith.constant dense<0.000000e+00> : vector<32xf32>
    %43 = vector.multi_reduction <add>, %42, %cst_16 [1] : vector<32x32xf32> to vector<32xf32>
    %44 = vector.shape_cast %43 : vector<32xf32> to vector<32x1xf32>
    %cst_17 = arith.constant 0.176776692 : f32
    %45 = vector.broadcast %cst_17 : f32 to vector<32x1xf32>
    %46 = arith.mulf %44, %45 : vector<32x1xf32>
    %47 = vector.extract_strided_slice %1 {offsets = [0, 96], sizes = [32, 32], strides = [1, 1]} : vector<32x128xf32> to vector<32x32xf32>
    %48 = arith.mulf %28, %47 : vector<32x32xf32>
    %cst_18 = arith.constant dense<0.000000e+00> : vector<32xf32>
    %49 = vector.multi_reduction <add>, %48, %cst_18 [1] : vector<32x32xf32> to vector<32xf32>
    %50 = vector.shape_cast %49 : vector<32xf32> to vector<32x1xf32>
    %cst_19 = arith.constant 0.176776692 : f32
    %51 = vector.broadcast %cst_19 : f32 to vector<32x1xf32>
    %52 = arith.mulf %50, %51 : vector<32x1xf32>
    %53 = vector.extract_strided_slice %0 {offsets = [0, 64], sizes = [32, 32], strides = [1, 1]} : vector<32x128xf32> to vector<32x32xf32>
    %54 = vector.extract_strided_slice %1 {offsets = [0, 0], sizes = [32, 32], strides = [1, 1]} : vector<32x128xf32> to vector<32x32xf32>
    %55 = arith.mulf %53, %54 : vector<32x32xf32>
    %cst_20 = arith.constant dense<0.000000e+00> : vector<32xf32>
    %56 = vector.multi_reduction <add>, %55, %cst_20 [1] : vector<32x32xf32> to vector<32xf32>
    %57 = vector.shape_cast %56 : vector<32xf32> to vector<32x1xf32>
    %cst_21 = arith.constant 0.176776692 : f32
    %58 = vector.broadcast %cst_21 : f32 to vector<32x1xf32>
    %59 = arith.mulf %57, %58 : vector<32x1xf32>
    %60 = vector.extract_strided_slice %1 {offsets = [0, 32], sizes = [32, 32], strides = [1, 1]} : vector<32x128xf32> to vector<32x32xf32>
    %61 = arith.mulf %53, %60 : vector<32x32xf32>
    %cst_22 = arith.constant dense<0.000000e+00> : vector<32xf32>
    %62 = vector.multi_reduction <add>, %61, %cst_22 [1] : vector<32x32xf32> to vector<32xf32>
    %63 = vector.shape_cast %62 : vector<32xf32> to vector<32x1xf32>
    %cst_23 = arith.constant 0.176776692 : f32
    %64 = vector.broadcast %cst_23 : f32 to vector<32x1xf32>
    %65 = arith.mulf %63, %64 : vector<32x1xf32>
    %66 = vector.extract_strided_slice %1 {offsets = [0, 64], sizes = [32, 32], strides = [1, 1]} : vector<32x128xf32> to vector<32x32xf32>
    %67 = arith.mulf %53, %66 : vector<32x32xf32>
    %cst_24 = arith.constant dense<0.000000e+00> : vector<32xf32>
    %68 = vector.multi_reduction <add>, %67, %cst_24 [1] : vector<32x32xf32> to vector<32xf32>
    %69 = vector.shape_cast %68 : vector<32xf32> to vector<32x1xf32>
    %cst_25 = arith.constant 0.176776692 : f32
    %70 = vector.broadcast %cst_25 : f32 to vector<32x1xf32>
    %71 = arith.mulf %69, %70 : vector<32x1xf32>
    %72 = vector.extract_strided_slice %1 {offsets = [0, 96], sizes = [32, 32], strides = [1, 1]} : vector<32x128xf32> to vector<32x32xf32>
    %73 = arith.mulf %53, %72 : vector<32x32xf32>
    %cst_26 = arith.constant dense<0.000000e+00> : vector<32xf32>
    %74 = vector.multi_reduction <add>, %73, %cst_26 [1] : vector<32x32xf32> to vector<32xf32>
    %75 = vector.shape_cast %74 : vector<32xf32> to vector<32x1xf32>
    %cst_27 = arith.constant 0.176776692 : f32
    %76 = vector.broadcast %cst_27 : f32 to vector<32x1xf32>
    %77 = arith.mulf %75, %76 : vector<32x1xf32>
    %78 = vector.extract_strided_slice %0 {offsets = [0, 96], sizes = [32, 32], strides = [1, 1]} : vector<32x128xf32> to vector<32x32xf32>
    %79 = vector.extract_strided_slice %1 {offsets = [0, 0], sizes = [32, 32], strides = [1, 1]} : vector<32x128xf32> to vector<32x32xf32>
    %80 = arith.mulf %78, %79 : vector<32x32xf32>
    %cst_28 = arith.constant dense<0.000000e+00> : vector<32xf32>
    %81 = vector.multi_reduction <add>, %80, %cst_28 [1] : vector<32x32xf32> to vector<32xf32>
    %82 = vector.shape_cast %81 : vector<32xf32> to vector<32x1xf32>
    %cst_29 = arith.constant 0.176776692 : f32
    %83 = vector.broadcast %cst_29 : f32 to vector<32x1xf32>
    %84 = arith.mulf %82, %83 : vector<32x1xf32>
    %85 = vector.extract_strided_slice %1 {offsets = [0, 32], sizes = [32, 32], strides = [1, 1]} : vector<32x128xf32> to vector<32x32xf32>
    %86 = arith.mulf %78, %85 : vector<32x32xf32>
    %cst_30 = arith.constant dense<0.000000e+00> : vector<32xf32>
    %87 = vector.multi_reduction <add>, %86, %cst_30 [1] : vector<32x32xf32> to vector<32xf32>
    %88 = vector.shape_cast %87 : vector<32xf32> to vector<32x1xf32>
    %cst_31 = arith.constant 0.176776692 : f32
    %89 = vector.broadcast %cst_31 : f32 to vector<32x1xf32>
    %90 = arith.mulf %88, %89 : vector<32x1xf32>
    %91 = vector.extract_strided_slice %1 {offsets = [0, 64], sizes = [32, 32], strides = [1, 1]} : vector<32x128xf32> to vector<32x32xf32>
    %92 = arith.mulf %78, %91 : vector<32x32xf32>
    %cst_32 = arith.constant dense<0.000000e+00> : vector<32xf32>
    %93 = vector.multi_reduction <add>, %92, %cst_32 [1] : vector<32x32xf32> to vector<32xf32>
    %94 = vector.shape_cast %93 : vector<32xf32> to vector<32x1xf32>
    %cst_33 = arith.constant 0.176776692 : f32
    %95 = vector.broadcast %cst_33 : f32 to vector<32x1xf32>
    %96 = arith.mulf %94, %95 : vector<32x1xf32>
    %97 = vector.extract_strided_slice %1 {offsets = [0, 96], sizes = [32, 32], strides = [1, 1]} : vector<32x128xf32> to vector<32x32xf32>
    %98 = arith.mulf %78, %97 : vector<32x32xf32>
    %cst_34 = arith.constant dense<0.000000e+00> : vector<32xf32>
    %99 = vector.multi_reduction <add>, %98, %cst_34 [1] : vector<32x32xf32> to vector<32xf32>
    %100 = vector.shape_cast %99 : vector<32xf32> to vector<32x1xf32>
    %cst_35 = arith.constant 0.176776692 : f32
    %101 = vector.broadcast %cst_35 : f32 to vector<32x1xf32>
    %102 = arith.mulf %100, %101 : vector<32x1xf32>
    %103 = arith.maximumf %9, %15 : vector<32x1xf32>
    %104 = arith.maximumf %103, %21 : vector<32x1xf32>
    %105 = arith.maximumf %104, %27 : vector<32x1xf32>
    %106 = arith.subf %9, %105 : vector<32x1xf32>
    %107 = math.exp %106 : vector<32x1xf32>
    %108 = arith.subf %15, %105 : vector<32x1xf32>
    %109 = math.exp %108 : vector<32x1xf32>
    %110 = arith.subf %21, %105 : vector<32x1xf32>
    %111 = math.exp %110 : vector<32x1xf32>
    %112 = arith.subf %27, %105 : vector<32x1xf32>
    %113 = math.exp %112 : vector<32x1xf32>
    %114 = arith.addf %107, %109 : vector<32x1xf32>
    %115 = arith.addf %114, %111 : vector<32x1xf32>
    %116 = arith.addf %115, %113 : vector<32x1xf32>
    %cst_36 = arith.constant 1.000000e+00 : f32
    %117 = vector.broadcast %cst_36 : f32 to vector<32x1xf32>
    %118 = arith.divf %117, %116 : vector<32x1xf32>
    %119 = arith.mulf %107, %118 : vector<32x1xf32>
    %120 = vector.extract_strided_slice %2 {offsets = [0, 0], sizes = [32, 32], strides = [1, 1]} : vector<32x128xf32> to vector<32x32xf32>
    %121 = vector.broadcast %119 : vector<32x1xf32> to vector<32x32xf32>
    %122 = arith.mulf %121, %120 : vector<32x32xf32>
    %123 = arith.mulf %109, %118 : vector<32x1xf32>
    %124 = vector.extract_strided_slice %2 {offsets = [0, 32], sizes = [32, 32], strides = [1, 1]} : vector<32x128xf32> to vector<32x32xf32>
    %125 = vector.broadcast %123 : vector<32x1xf32> to vector<32x32xf32>
    %126 = arith.mulf %125, %124 : vector<32x32xf32>
    %127 = arith.addf %122, %126 : vector<32x32xf32>
    %128 = arith.mulf %111, %118 : vector<32x1xf32>
    %129 = vector.extract_strided_slice %2 {offsets = [0, 64], sizes = [32, 32], strides = [1, 1]} : vector<32x128xf32> to vector<32x32xf32>
    %130 = vector.broadcast %128 : vector<32x1xf32> to vector<32x32xf32>
    %131 = arith.mulf %130, %129 : vector<32x32xf32>
    %132 = arith.addf %127, %131 : vector<32x32xf32>
    %133 = arith.mulf %113, %118 : vector<32x1xf32>
    %134 = vector.extract_strided_slice %2 {offsets = [0, 96], sizes = [32, 32], strides = [1, 1]} : vector<32x128xf32> to vector<32x32xf32>
    %135 = vector.broadcast %133 : vector<32x1xf32> to vector<32x32xf32>
    %136 = arith.mulf %135, %134 : vector<32x32xf32>
    %137 = arith.addf %132, %136 : vector<32x32xf32>
    %138 = arith.maximumf %34, %40 : vector<32x1xf32>
    %139 = arith.maximumf %138, %46 : vector<32x1xf32>
    %140 = arith.maximumf %139, %52 : vector<32x1xf32>
    %141 = arith.subf %34, %140 : vector<32x1xf32>
    %142 = math.exp %141 : vector<32x1xf32>
    %143 = arith.subf %40, %140 : vector<32x1xf32>
    %144 = math.exp %143 : vector<32x1xf32>
    %145 = arith.subf %46, %140 : vector<32x1xf32>
    %146 = math.exp %145 : vector<32x1xf32>
    %147 = arith.subf %52, %140 : vector<32x1xf32>
    %148 = math.exp %147 : vector<32x1xf32>
    %149 = arith.addf %142, %144 : vector<32x1xf32>
    %150 = arith.addf %149, %146 : vector<32x1xf32>
    %151 = arith.addf %150, %148 : vector<32x1xf32>
    %cst_37 = arith.constant 1.000000e+00 : f32
    %152 = vector.broadcast %cst_37 : f32 to vector<32x1xf32>
    %153 = arith.divf %152, %151 : vector<32x1xf32>
    %154 = arith.mulf %142, %153 : vector<32x1xf32>
    %155 = vector.extract_strided_slice %2 {offsets = [0, 0], sizes = [32, 32], strides = [1, 1]} : vector<32x128xf32> to vector<32x32xf32>
    %156 = vector.broadcast %154 : vector<32x1xf32> to vector<32x32xf32>
    %157 = arith.mulf %156, %155 : vector<32x32xf32>
    %158 = arith.mulf %144, %153 : vector<32x1xf32>
    %159 = vector.extract_strided_slice %2 {offsets = [0, 32], sizes = [32, 32], strides = [1, 1]} : vector<32x128xf32> to vector<32x32xf32>
    %160 = vector.broadcast %158 : vector<32x1xf32> to vector<32x32xf32>
    %161 = arith.mulf %160, %159 : vector<32x32xf32>
    %162 = arith.addf %157, %161 : vector<32x32xf32>
    %163 = arith.mulf %146, %153 : vector<32x1xf32>
    %164 = vector.extract_strided_slice %2 {offsets = [0, 64], sizes = [32, 32], strides = [1, 1]} : vector<32x128xf32> to vector<32x32xf32>
    %165 = vector.broadcast %163 : vector<32x1xf32> to vector<32x32xf32>
    %166 = arith.mulf %165, %164 : vector<32x32xf32>
    %167 = arith.addf %162, %166 : vector<32x32xf32>
    %168 = arith.mulf %148, %153 : vector<32x1xf32>
    %169 = vector.extract_strided_slice %2 {offsets = [0, 96], sizes = [32, 32], strides = [1, 1]} : vector<32x128xf32> to vector<32x32xf32>
    %170 = vector.broadcast %168 : vector<32x1xf32> to vector<32x32xf32>
    %171 = arith.mulf %170, %169 : vector<32x32xf32>
    %172 = arith.addf %167, %171 : vector<32x32xf32>
    %173 = arith.maximumf %59, %65 : vector<32x1xf32>
    %174 = arith.maximumf %173, %71 : vector<32x1xf32>
    %175 = arith.maximumf %174, %77 : vector<32x1xf32>
    %176 = arith.subf %59, %175 : vector<32x1xf32>
    %177 = math.exp %176 : vector<32x1xf32>
    %178 = arith.subf %65, %175 : vector<32x1xf32>
    %179 = math.exp %178 : vector<32x1xf32>
    %180 = arith.subf %71, %175 : vector<32x1xf32>
    %181 = math.exp %180 : vector<32x1xf32>
    %182 = arith.subf %77, %175 : vector<32x1xf32>
    %183 = math.exp %182 : vector<32x1xf32>
    %184 = arith.addf %177, %179 : vector<32x1xf32>
    %185 = arith.addf %184, %181 : vector<32x1xf32>
    %186 = arith.addf %185, %183 : vector<32x1xf32>
    %cst_38 = arith.constant 1.000000e+00 : f32
    %187 = vector.broadcast %cst_38 : f32 to vector<32x1xf32>
    %188 = arith.divf %187, %186 : vector<32x1xf32>
    %189 = arith.mulf %177, %188 : vector<32x1xf32>
    %190 = vector.extract_strided_slice %2 {offsets = [0, 0], sizes = [32, 32], strides = [1, 1]} : vector<32x128xf32> to vector<32x32xf32>
    %191 = vector.broadcast %189 : vector<32x1xf32> to vector<32x32xf32>
    %192 = arith.mulf %191, %190 : vector<32x32xf32>
    %193 = arith.mulf %179, %188 : vector<32x1xf32>
    %194 = vector.extract_strided_slice %2 {offsets = [0, 32], sizes = [32, 32], strides = [1, 1]} : vector<32x128xf32> to vector<32x32xf32>
    %195 = vector.broadcast %193 : vector<32x1xf32> to vector<32x32xf32>
    %196 = arith.mulf %195, %194 : vector<32x32xf32>
    %197 = arith.addf %192, %196 : vector<32x32xf32>
    %198 = arith.mulf %181, %188 : vector<32x1xf32>
    %199 = vector.extract_strided_slice %2 {offsets = [0, 64], sizes = [32, 32], strides = [1, 1]} : vector<32x128xf32> to vector<32x32xf32>
    %200 = vector.broadcast %198 : vector<32x1xf32> to vector<32x32xf32>
    %201 = arith.mulf %200, %199 : vector<32x32xf32>
    %202 = arith.addf %197, %201 : vector<32x32xf32>
    %203 = arith.mulf %183, %188 : vector<32x1xf32>
    %204 = vector.extract_strided_slice %2 {offsets = [0, 96], sizes = [32, 32], strides = [1, 1]} : vector<32x128xf32> to vector<32x32xf32>
    %205 = vector.broadcast %203 : vector<32x1xf32> to vector<32x32xf32>
    %206 = arith.mulf %205, %204 : vector<32x32xf32>
    %207 = arith.addf %202, %206 : vector<32x32xf32>
    %208 = arith.maximumf %84, %90 : vector<32x1xf32>
    %209 = arith.maximumf %208, %96 : vector<32x1xf32>
    %210 = arith.maximumf %209, %102 : vector<32x1xf32>
    %211 = arith.subf %84, %210 : vector<32x1xf32>
    %212 = math.exp %211 : vector<32x1xf32>
    %213 = arith.subf %90, %210 : vector<32x1xf32>
    %214 = math.exp %213 : vector<32x1xf32>
    %215 = arith.subf %96, %210 : vector<32x1xf32>
    %216 = math.exp %215 : vector<32x1xf32>
    %217 = arith.subf %102, %210 : vector<32x1xf32>
    %218 = math.exp %217 : vector<32x1xf32>
    %219 = arith.addf %212, %214 : vector<32x1xf32>
    %220 = arith.addf %219, %216 : vector<32x1xf32>
    %221 = arith.addf %220, %218 : vector<32x1xf32>
    %cst_39 = arith.constant 1.000000e+00 : f32
    %222 = vector.broadcast %cst_39 : f32 to vector<32x1xf32>
    %223 = arith.divf %222, %221 : vector<32x1xf32>
    %224 = arith.mulf %212, %223 : vector<32x1xf32>
    %225 = vector.extract_strided_slice %2 {offsets = [0, 0], sizes = [32, 32], strides = [1, 1]} : vector<32x128xf32> to vector<32x32xf32>
    %226 = vector.broadcast %224 : vector<32x1xf32> to vector<32x32xf32>
    %227 = arith.mulf %226, %225 : vector<32x32xf32>
    %228 = arith.mulf %214, %223 : vector<32x1xf32>
    %229 = vector.extract_strided_slice %2 {offsets = [0, 32], sizes = [32, 32], strides = [1, 1]} : vector<32x128xf32> to vector<32x32xf32>
    %230 = vector.broadcast %228 : vector<32x1xf32> to vector<32x32xf32>
    %231 = arith.mulf %230, %229 : vector<32x32xf32>
    %232 = arith.addf %227, %231 : vector<32x32xf32>
    %233 = arith.mulf %216, %223 : vector<32x1xf32>
    %234 = vector.extract_strided_slice %2 {offsets = [0, 64], sizes = [32, 32], strides = [1, 1]} : vector<32x128xf32> to vector<32x32xf32>
    %235 = vector.broadcast %233 : vector<32x1xf32> to vector<32x32xf32>
    %236 = arith.mulf %235, %234 : vector<32x32xf32>
    %237 = arith.addf %232, %236 : vector<32x32xf32>
    %238 = arith.mulf %218, %223 : vector<32x1xf32>
    %239 = vector.extract_strided_slice %2 {offsets = [0, 96], sizes = [32, 32], strides = [1, 1]} : vector<32x128xf32> to vector<32x32xf32>
    %240 = vector.broadcast %238 : vector<32x1xf32> to vector<32x32xf32>
    %241 = arith.mulf %240, %239 : vector<32x32xf32>
    %242 = arith.addf %237, %241 : vector<32x32xf32>
    %243 = tpu.concatenate %137, %172, %207, %242 in 1 : vector<32x32xf32>, vector<32x32xf32>, vector<32x32xf32>, vector<32x32xf32> -> vector<32x128xf32>
    %c0_40 = arith.constant 0 : index
    %c0_41 = arith.constant 0 : index
    %244 = vector.load %arg4[%c0_40, %c0_41] : memref<32x128xf32, #tpu.memory_space<vmem>>, vector<32x128xf32>
    tpu.vector_store %arg4[%c0_40, %c0_41], %243 {strides = array<i32>} : memref<32x128xf32, #tpu.memory_space<vmem>>, vector<32x128xf32>,
    return
  }
  func.func @transform_0(%arg0: i32) -> (i32, i32) {
    %c0_i32 = arith.constant 0 : i32
    %c0_i32_0 = arith.constant 0 : i32
    return %arg0, %c0_i32 : i32, i32
  }
  func.func @transform_1(%arg0: i32) -> (i32, i32) {
    %c0_i32 = arith.constant 0 : i32
    %c0_i32_0 = arith.constant 0 : i32
    return %arg0, %c0_i32 : i32, i32
  }
  func.func @transform_2(%arg0: i32) -> (i32, i32) {
    %c0_i32 = arith.constant 0 : i32
    %c0_i32_0 = arith.constant 0 : i32
    return %arg0, %c0_i32 : i32, i32
  }
  func.func @transform_3(%arg0: i32) -> (i32, i32) {
    %c0_i32 = arith.constant 0 : i32
    %c0_i32_0 = arith.constant 0 : i32
    return %arg0, %c0_i32 : i32, i32
  }
}

module attributes {stable_mosaic.version = 11 : i64} {
  func.func @_linear_kernel(%arg0: i32, %arg1: i32, %arg2: i32, %arg3: memref<32x128xf32, #tpu.memory_space<vmem>>, %arg4: memref<128x128xf32, #tpu.memory_space<vmem>>, %arg5: memref<1x128xf32, #tpu.memory_space<vmem>>, %arg6: memref<32x128xf32, #tpu.memory_space<vmem>>, %arg7: memref<32x128xf32, #tpu.memory_space<vmem>>) attributes {dimension_semantics = [#tpu.dimension_semantics<parallel>, #tpu.dimension_semantics<parallel>, #tpu.dimension_semantics<arbitrary>], iteration_bounds = array<i64: 1, 1, 1>, scalar_prefetch = 0 : i64, scratch_operands = 1 : i64, tpu.core_type = #tpu.core_type<tc>, window_params = [{transform_indices = @transform_0, window_bounds = array<i64: 32, 128>}, {transform_indices = @transform_1, window_bounds = array<i64: 128, 128>}, {transform_indices = @transform_2, window_bounds = array<i64: 1, 128>}, {transform_indices = @transform_3, window_bounds = array<i64: 32, 128>}]} {
    %c0_i32 = arith.constant 0 : i32
    %0 = arith.cmpi eq, %arg2, %c0_i32 : i32
    %1 = arith.extui %0 : i1 to i32
    %c0_i32_0 = arith.constant 0 : i32
    %2 = arith.cmpi ne, %1, %c0_i32_0 : i32
    scf.if %2 {
      %cst_10 = arith.constant 0.000000e+00 : f32
      %12 = vector.broadcast %cst_10 : f32 to vector<32x128xf32>
      %c0_11 = arith.constant 0 : index
      %c0_12 = arith.constant 0 : index
      %13 = vector.load %arg7[%c0_11, %c0_12] : memref<32x128xf32, #tpu.memory_space<vmem>>, vector<32x128xf32>
      tpu.vector_store %arg7[%c0_11, %c0_12], %12 {strides = array<i32>} : memref<32x128xf32, #tpu.memory_space<vmem>>, vector<32x128xf32>,
    } else {
    }
    %c0 = arith.constant 0 : index
    %c0_1 = arith.constant 0 : index
    %3 = vector.load %arg7[%c0, %c0_1] : memref<32x128xf32, #tpu.memory_space<vmem>>, vector<32x128xf32>
    %c0_2 = arith.constant 0 : index
    %c0_3 = arith.constant 0 : index
    %4 = vector.load %arg3[%c0_2, %c0_3] : memref<32x128xf32, #tpu.memory_space<vmem>>, vector<32x128xf32>
    %c0_4 = arith.constant 0 : index
    %c0_5 = arith.constant 0 : index
    %5 = vector.load %arg4[%c0_4, %c0_5] : memref<128x128xf32, #tpu.memory_space<vmem>>, vector<128x128xf32>
    %cst = arith.constant dense<0.000000e+00> : vector<32x128xf32>
    %6 = tpu.matmul %4, %5, %cst {dimension_numbers = #tpu.dot_dimension_numbers<[1], [1], [0], [0], [0, 0, 1, 0], [], []>} : vector<32x128xf32>, vector<128x128xf32>, vector<32x128xf32> -> vector<32x128xf32>
    %7 = arith.addf %3, %6 : vector<32x128xf32>
    %c0_6 = arith.constant 0 : index
    %c0_7 = arith.constant 0 : index
    %8 = vector.load %arg7[%c0_6, %c0_7] : memref<32x128xf32, #tpu.memory_space<vmem>>, vector<32x128xf32>
    tpu.vector_store %arg7[%c0_6, %c0_7], %7 {strides = array<i32>} : memref<32x128xf32, #tpu.memory_space<vmem>>, vector<32x128xf32>,
    %c0_i32_8 = arith.constant 0 : i32
    %9 = arith.cmpi eq, %arg2, %c0_i32_8 : i32
    %10 = arith.extui %9 : i1 to i32
    %c0_i32_9 = arith.constant 0 : i32
    %11 = arith.cmpi ne, %10, %c0_i32_9 : i32
    scf.if %11 {
      %c0_10 = arith.constant 0 : index
      %c0_11 = arith.constant 0 : index
      %12 = vector.load %arg7[%c0_10, %c0_11] : memref<32x128xf32, #tpu.memory_space<vmem>>, vector<32x128xf32>
      %c0_12 = arith.constant 0 : index
      %c0_13 = arith.constant 0 : index
      %13 = vector.load %arg5[%c0_12, %c0_13] : memref<1x128xf32, #tpu.memory_space<vmem>>, vector<1x128xf32>
      %14 = vector.broadcast %13 : vector<1x128xf32> to vector<32x128xf32>
      %15 = arith.addf %12, %14 : vector<32x128xf32>
      %c0_14 = arith.constant 0 : index
      %c0_15 = arith.constant 0 : index
      %16 = vector.load %arg6[%c0_14, %c0_15] : memref<32x128xf32, #tpu.memory_space<vmem>>, vector<32x128xf32>
      tpu.vector_store %arg6[%c0_14, %c0_15], %15 {strides = array<i32>} : memref<32x128xf32, #tpu.memory_space<vmem>>, vector<32x128xf32>,
    } else {
    }
    return
  }
  func.func @transform_0(%arg0: i32, %arg1: i32, %arg2: i32) -> (i32, i32) {
    %c0_i32 = arith.constant 0 : i32
    return %arg0, %arg2 : i32, i32
  }
  func.func @transform_1(%arg0: i32, %arg1: i32, %arg2: i32) -> (i32, i32) {
    %c0_i32 = arith.constant 0 : i32
    return %arg1, %arg2 : i32, i32
  }
  func.func @transform_2(%arg0: i32, %arg1: i32, %arg2: i32) -> (i32, i32) {
    %c0_i32 = arith.constant 0 : i32
    %c0_i32_0 = arith.constant 0 : i32
    return %c0_i32, %arg1 : i32, i32
  }
  func.func @transform_3(%arg0: i32, %arg1: i32, %arg2: i32) -> (i32, i32) {
    %c0_i32 = arith.constant 0 : i32
    return %arg0, %arg1 : i32, i32
  }
}

module attributes {stable_mosaic.version = 11 : i64} {
  func.func @_linear_kernel(%arg0: i32, %arg1: i32, %arg2: i32, %arg3: memref<32x128xf32, #tpu.memory_space<vmem>>, %arg4: memref<128x128xf32, #tpu.memory_space<vmem>>, %arg5: memref<1x128xf32, #tpu.memory_space<vmem>>, %arg6: memref<32x128xf32, #tpu.memory_space<vmem>>, %arg7: memref<32x128xf32, #tpu.memory_space<vmem>>) attributes {dimension_semantics = [#tpu.dimension_semantics<parallel>, #tpu.dimension_semantics<parallel>, #tpu.dimension_semantics<arbitrary>], iteration_bounds = array<i64: 1, 1, 1>, scalar_prefetch = 0 : i64, scratch_operands = 1 : i64, tpu.core_type = #tpu.core_type<tc>, window_params = [{transform_indices = @transform_0, window_bounds = array<i64: 32, 128>}, {transform_indices = @transform_1, window_bounds = array<i64: 128, 128>}, {transform_indices = @transform_2, window_bounds = array<i64: 1, 128>}, {transform_indices = @transform_3, window_bounds = array<i64: 32, 128>}]} {
    %c0_i32 = arith.constant 0 : i32
    %0 = arith.cmpi eq, %arg2, %c0_i32 : i32
    %1 = arith.extui %0 : i1 to i32
    %c0_i32_0 = arith.constant 0 : i32
    %2 = arith.cmpi ne, %1, %c0_i32_0 : i32
    scf.if %2 {
      %cst_10 = arith.constant 0.000000e+00 : f32
      %12 = vector.broadcast %cst_10 : f32 to vector<32x128xf32>
      %c0_11 = arith.constant 0 : index
      %c0_12 = arith.constant 0 : index
      %13 = vector.load %arg7[%c0_11, %c0_12] : memref<32x128xf32, #tpu.memory_space<vmem>>, vector<32x128xf32>
      tpu.vector_store %arg7[%c0_11, %c0_12], %12 {strides = array<i32>} : memref<32x128xf32, #tpu.memory_space<vmem>>, vector<32x128xf32>,
    } else {
    }
    %c0 = arith.constant 0 : index
    %c0_1 = arith.constant 0 : index
    %3 = vector.load %arg7[%c0, %c0_1] : memref<32x128xf32, #tpu.memory_space<vmem>>, vector<32x128xf32>
    %c0_2 = arith.constant 0 : index
    %c0_3 = arith.constant 0 : index
    %4 = vector.load %arg3[%c0_2, %c0_3] : memref<32x128xf32, #tpu.memory_space<vmem>>, vector<32x128xf32>
    %c0_4 = arith.constant 0 : index
    %c0_5 = arith.constant 0 : index
    %5 = vector.load %arg4[%c0_4, %c0_5] : memref<128x128xf32, #tpu.memory_space<vmem>>, vector<128x128xf32>
    %cst = arith.constant dense<0.000000e+00> : vector<32x128xf32>
    %6 = tpu.matmul %4, %5, %cst {dimension_numbers = #tpu.dot_dimension_numbers<[1], [1], [0], [0], [0, 0, 1, 0], [], []>} : vector<32x128xf32>, vector<128x128xf32>, vector<32x128xf32> -> vector<32x128xf32>
    %7 = arith.addf %3, %6 : vector<32x128xf32>
    %c0_6 = arith.constant 0 : index
    %c0_7 = arith.constant 0 : index
    %8 = vector.load %arg7[%c0_6, %c0_7] : memref<32x128xf32, #tpu.memory_space<vmem>>, vector<32x128xf32>
    tpu.vector_store %arg7[%c0_6, %c0_7], %7 {strides = array<i32>} : memref<32x128xf32, #tpu.memory_space<vmem>>, vector<32x128xf32>,
    %c0_i32_8 = arith.constant 0 : i32
    %9 = arith.cmpi eq, %arg2, %c0_i32_8 : i32
    %10 = arith.extui %9 : i1 to i32
    %c0_i32_9 = arith.constant 0 : i32
    %11 = arith.cmpi ne, %10, %c0_i32_9 : i32
    scf.if %11 {
      %c0_10 = arith.constant 0 : index
      %c0_11 = arith.constant 0 : index
      %12 = vector.load %arg7[%c0_10, %c0_11] : memref<32x128xf32, #tpu.memory_space<vmem>>, vector<32x128xf32>
      %c0_12 = arith.constant 0 : index
      %c0_13 = arith.constant 0 : index
      %13 = vector.load %arg5[%c0_12, %c0_13] : memref<1x128xf32, #tpu.memory_space<vmem>>, vector<1x128xf32>
      %14 = vector.broadcast %13 : vector<1x128xf32> to vector<32x128xf32>
      %15 = arith.addf %12, %14 : vector<32x128xf32>
      %c0_14 = arith.constant 0 : index
      %c0_15 = arith.constant 0 : index
      %16 = vector.load %arg6[%c0_14, %c0_15] : memref<32x128xf32, #tpu.memory_space<vmem>>, vector<32x128xf32>
      tpu.vector_store %arg6[%c0_14, %c0_15], %15 {strides = array<i32>} : memref<32x128xf32, #tpu.memory_space<vmem>>, vector<32x128xf32>,
    } else {
    }
    return
  }
  func.func @transform_0(%arg0: i32, %arg1: i32, %arg2: i32) -> (i32, i32) {
    %c0_i32 = arith.constant 0 : i32
    return %arg0, %arg2 : i32, i32
  }
  func.func @transform_1(%arg0: i32, %arg1: i32, %arg2: i32) -> (i32, i32) {
    %c0_i32 = arith.constant 0 : i32
    return %arg1, %arg2 : i32, i32
  }
  func.func @transform_2(%arg0: i32, %arg1: i32, %arg2: i32) -> (i32, i32) {
    %c0_i32 = arith.constant 0 : i32
    %c0_i32_0 = arith.constant 0 : i32
    return %c0_i32, %arg1 : i32, i32
  }
  func.func @transform_3(%arg0: i32, %arg1: i32, %arg2: i32) -> (i32, i32) {
    %c0_i32 = arith.constant 0 : i32
    return %arg0, %arg1 : i32, i32
  }
}

module attributes {stable_mosaic.version = 11 : i64} {
  func.func @_linear_kernel(%arg0: i32, %arg1: i32, %arg2: i32, %arg3: memref<32x512xf32, #tpu.memory_space<vmem>>, %arg4: memref<128x512xf32, #tpu.memory_space<vmem>>, %arg5: memref<1x128xf32, #tpu.memory_space<vmem>>, %arg6: memref<32x128xf32, #tpu.memory_space<vmem>>, %arg7: memref<32x128xf32, #tpu.memory_space<vmem>>) attributes {dimension_semantics = [#tpu.dimension_semantics<parallel>, #tpu.dimension_semantics<parallel>, #tpu.dimension_semantics<arbitrary>], iteration_bounds = array<i64: 1, 1, 1>, scalar_prefetch = 0 : i64, scratch_operands = 1 : i64, tpu.core_type = #tpu.core_type<tc>, window_params = [{transform_indices = @transform_0, window_bounds = array<i64: 32, 512>}, {transform_indices = @transform_1, window_bounds = array<i64: 128, 512>}, {transform_indices = @transform_2, window_bounds = array<i64: 1, 128>}, {transform_indices = @transform_3, window_bounds = array<i64: 32, 128>}]} {
    %c0_i32 = arith.constant 0 : i32
    %0 = arith.cmpi eq, %arg2, %c0_i32 : i32
    %1 = arith.extui %0 : i1 to i32
    %c0_i32_0 = arith.constant 0 : i32
    %2 = arith.cmpi ne, %1, %c0_i32_0 : i32
    scf.if %2 {
      %cst_10 = arith.constant 0.000000e+00 : f32
      %12 = vector.broadcast %cst_10 : f32 to vector<32x128xf32>
      %c0_11 = arith.constant 0 : index
      %c0_12 = arith.constant 0 : index
      %13 = vector.load %arg7[%c0_11, %c0_12] : memref<32x128xf32, #tpu.memory_space<vmem>>, vector<32x128xf32>
      tpu.vector_store %arg7[%c0_11, %c0_12], %12 {strides = array<i32>} : memref<32x128xf32, #tpu.memory_space<vmem>>, vector<32x128xf32>,
    } else {
    }
    %c0 = arith.constant 0 : index
    %c0_1 = arith.constant 0 : index
    %3 = vector.load %arg7[%c0, %c0_1] : memref<32x128xf32, #tpu.memory_space<vmem>>, vector<32x128xf32>
    %c0_2 = arith.constant 0 : index
    %c0_3 = arith.constant 0 : index
    %4 = vector.load %arg3[%c0_2, %c0_3] : memref<32x512xf32, #tpu.memory_space<vmem>>, vector<32x512xf32>
    %c0_4 = arith.constant 0 : index
    %c0_5 = arith.constant 0 : index
    %5 = vector.load %arg4[%c0_4, %c0_5] : memref<128x512xf32, #tpu.memory_space<vmem>>, vector<128x512xf32>
    %cst = arith.constant dense<0.000000e+00> : vector<32x128xf32>
    %6 = tpu.matmul %4, %5, %cst {dimension_numbers = #tpu.dot_dimension_numbers<[1], [1], [0], [0], [0, 0, 1, 0], [], []>} : vector<32x512xf32>, vector<128x512xf32>, vector<32x128xf32> -> vector<32x128xf32>
    %7 = arith.addf %3, %6 : vector<32x128xf32>
    %c0_6 = arith.constant 0 : index
    %c0_7 = arith.constant 0 : index
    %8 = vector.load %arg7[%c0_6, %c0_7] : memref<32x128xf32, #tpu.memory_space<vmem>>, vector<32x128xf32>
    tpu.vector_store %arg7[%c0_6, %c0_7], %7 {strides = array<i32>} : memref<32x128xf32, #tpu.memory_space<vmem>>, vector<32x128xf32>,
    %c0_i32_8 = arith.constant 0 : i32
    %9 = arith.cmpi eq, %arg2, %c0_i32_8 : i32
    %10 = arith.extui %9 : i1 to i32
    %c0_i32_9 = arith.constant 0 : i32
    %11 = arith.cmpi ne, %10, %c0_i32_9 : i32
    scf.if %11 {
      %c0_10 = arith.constant 0 : index
      %c0_11 = arith.constant 0 : index
      %12 = vector.load %arg7[%c0_10, %c0_11] : memref<32x128xf32, #tpu.memory_space<vmem>>, vector<32x128xf32>
      %c0_12 = arith.constant 0 : index
      %c0_13 = arith.constant 0 : index
      %13 = vector.load %arg5[%c0_12, %c0_13] : memref<1x128xf32, #tpu.memory_space<vmem>>, vector<1x128xf32>
      %14 = vector.broadcast %13 : vector<1x128xf32> to vector<32x128xf32>
      %15 = arith.addf %12, %14 : vector<32x128xf32>
      %c0_14 = arith.constant 0 : index
      %c0_15 = arith.constant 0 : index
      %16 = vector.load %arg6[%c0_14, %c0_15] : memref<32x128xf32, #tpu.memory_space<vmem>>, vector<32x128xf32>
      tpu.vector_store %arg6[%c0_14, %c0_15], %15 {strides = array<i32>} : memref<32x128xf32, #tpu.memory_space<vmem>>, vector<32x128xf32>,
    } else {
    }
    return
  }
  func.func @transform_0(%arg0: i32, %arg1: i32, %arg2: i32) -> (i32, i32) {
    %c0_i32 = arith.constant 0 : i32
    return %arg0, %arg2 : i32, i32
  }
  func.func @transform_1(%arg0: i32, %arg1: i32, %arg2: i32) -> (i32, i32) {
    %c0_i32 = arith.constant 0 : i32
    return %arg1, %arg2 : i32, i32
  }
  func.func @transform_2(%arg0: i32, %arg1: i32, %arg2: i32) -> (i32, i32) {
    %c0_i32 = arith.constant 0 : i32
    %c0_i32_0 = arith.constant 0 : i32
    return %c0_i32, %arg1 : i32, i32
  }
  func.func @transform_3(%arg0: i32, %arg1: i32, %arg2: i32) -> (i32, i32) {
    %c0_i32 = arith.constant 0 : i32
    return %arg0, %arg1 : i32, i32
  }
}

module attributes {stable_mosaic.version = 11 : i64} {
  func.func @_add_ln_kernel(%arg0: i32, %arg1: memref<32x128xf32, #tpu.memory_space<vmem>>, %arg2: memref<32x128xf32, #tpu.memory_space<vmem>>, %arg3: memref<1x128xf32, #tpu.memory_space<vmem>>, %arg4: memref<1x128xf32, #tpu.memory_space<vmem>>, %arg5: memref<32x128xf32, #tpu.memory_space<vmem>>) attributes {dimension_semantics = [#tpu.dimension_semantics<parallel>], iteration_bounds = array<i64: 1>, scalar_prefetch = 0 : i64, scratch_operands = 0 : i64, tpu.core_type = #tpu.core_type<tc>, window_params = [{transform_indices = @transform_0, window_bounds = array<i64: 32, 128>}, {transform_indices = @transform_1, window_bounds = array<i64: 32, 128>}, {pipeline_mode = #tpu.pipeline_mode<synchronous>, transform_indices = @transform_2, window_bounds = array<i64: 1, 128>}, {pipeline_mode = #tpu.pipeline_mode<synchronous>, transform_indices = @transform_3, window_bounds = array<i64: 1, 128>}, {transform_indices = @transform_4, window_bounds = array<i64: 32, 128>}]} {
    %c0 = arith.constant 0 : index
    %c0_0 = arith.constant 0 : index
    %0 = vector.load %arg1[%c0, %c0_0] : memref<32x128xf32, #tpu.memory_space<vmem>>, vector<32x128xf32>
    %c0_1 = arith.constant 0 : index
    %c0_2 = arith.constant 0 : index
    %1 = vector.load %arg2[%c0_1, %c0_2] : memref<32x128xf32, #tpu.memory_space<vmem>>, vector<32x128xf32>
    %2 = arith.addf %0, %1 : vector<32x128xf32>
    %cst = arith.constant dense<0.000000e+00> : vector<32xf32>
    %3 = vector.multi_reduction <add>, %2, %cst [1] : vector<32x128xf32> to vector<32xf32>
    %4 = vector.shape_cast %3 : vector<32xf32> to vector<32x1xf32>
    %cst_3 = arith.constant 1.280000e+02 : f32
    %5 = vector.broadcast %cst_3 : f32 to vector<32x1xf32>
    %6 = arith.divf %4, %5 : vector<32x1xf32>
    %7 = vector.broadcast %6 : vector<32x1xf32> to vector<32x128xf32>
    %8 = arith.subf %2, %7 : vector<32x128xf32>
    %9 = arith.mulf %8, %8 : vector<32x128xf32>
    %cst_4 = arith.constant dense<0.000000e+00> : vector<32xf32>
    %10 = vector.multi_reduction <add>, %9, %cst_4 [1] : vector<32x128xf32> to vector<32xf32>
    %11 = vector.shape_cast %10 : vector<32xf32> to vector<32x1xf32>
    %cst_5 = arith.constant 1.280000e+02 : f32
    %12 = vector.broadcast %cst_5 : f32 to vector<32x1xf32>
    %13 = arith.divf %11, %12 : vector<32x1xf32>
    %cst_6 = arith.constant 9.99999974E-6 : f32
    %14 = vector.broadcast %cst_6 : f32 to vector<32x1xf32>
    %15 = arith.addf %13, %14 : vector<32x1xf32>
    %16 = math.rsqrt %15 : vector<32x1xf32>
    %17 = vector.broadcast %16 : vector<32x1xf32> to vector<32x128xf32>
    %18 = arith.mulf %8, %17 : vector<32x128xf32>
    %c0_7 = arith.constant 0 : index
    %c0_8 = arith.constant 0 : index
    %19 = vector.load %arg3[%c0_7, %c0_8] : memref<1x128xf32, #tpu.memory_space<vmem>>, vector<1x128xf32>
    %20 = vector.broadcast %19 : vector<1x128xf32> to vector<32x128xf32>
    %21 = arith.mulf %18, %20 : vector<32x128xf32>
    %c0_9 = arith.constant 0 : index
    %c0_10 = arith.constant 0 : index
    %22 = vector.load %arg4[%c0_9, %c0_10] : memref<1x128xf32, #tpu.memory_space<vmem>>, vector<1x128xf32>
    %23 = vector.broadcast %22 : vector<1x128xf32> to vector<32x128xf32>
    %24 = arith.addf %21, %23 : vector<32x128xf32>
    %c0_11 = arith.constant 0 : index
    %c0_12 = arith.constant 0 : index
    %25 = vector.load %arg5[%c0_11, %c0_12] : memref<32x128xf32, #tpu.memory_space<vmem>>, vector<32x128xf32>
    tpu.vector_store %arg5[%c0_11, %c0_12], %24 {strides = array<i32>} : memref<32x128xf32, #tpu.memory_space<vmem>>, vector<32x128xf32>,
    return
  }
  func.func @transform_0(%arg0: i32) -> (i32, i32) {
    %c0_i32 = arith.constant 0 : i32
    %c0_i32_0 = arith.constant 0 : i32
    return %arg0, %c0_i32 : i32, i32
  }
  func.func @transform_1(%arg0: i32) -> (i32, i32) {
    %c0_i32 = arith.constant 0 : i32
    %c0_i32_0 = arith.constant 0 : i32
    return %arg0, %c0_i32 : i32, i32
  }
  func.func @transform_2(%arg0: i32) -> (i32, i32) {
    %c0_i32 = arith.constant 0 : i32
    %c0_i32_0 = arith.constant 0 : i32
    %c0_i32_1 = arith.constant 0 : i32
    return %c0_i32, %c0_i32_0 : i32, i32
  }
  func.func @transform_3(%arg0: i32) -> (i32, i32) {
    %c0_i32 = arith.constant 0 : i32
    %c0_i32_0 = arith.constant 0 : i32
    %c0_i32_1 = arith.constant 0 : i32
    return %c0_i32, %c0_i32_0 : i32, i32
  }
  func.func @transform_4(%arg0: i32) -> (i32, i32) {
    %c0_i32 = arith.constant 0 : i32
    %c0_i32_0 = arith.constant 0 : i32
    return %arg0, %c0_i32 : i32, i32
  }
}

module attributes {stable_mosaic.version = 11 : i64} {
  func.func @_linear_kernel(%arg0: i32, %arg1: i32, %arg2: i32, %arg3: memref<32x128xf32, #tpu.memory_space<vmem>>, %arg4: memref<256x128xf32, #tpu.memory_space<vmem>>, %arg5: memref<1x256xf32, #tpu.memory_space<vmem>>, %arg6: memref<32x256xf32, #tpu.memory_space<vmem>>, %arg7: memref<32x256xf32, #tpu.memory_space<vmem>>) attributes {dimension_semantics = [#tpu.dimension_semantics<parallel>, #tpu.dimension_semantics<parallel>, #tpu.dimension_semantics<arbitrary>], iteration_bounds = array<i64: 1, 2, 1>, scalar_prefetch = 0 : i64, scratch_operands = 1 : i64, tpu.core_type = #tpu.core_type<tc>, window_params = [{transform_indices = @transform_0, window_bounds = array<i64: 32, 128>}, {transform_indices = @transform_1, window_bounds = array<i64: 256, 128>}, {transform_indices = @transform_2, window_bounds = array<i64: 1, 256>}, {transform_indices = @transform_3, window_bounds = array<i64: 32, 256>}]} {
    %c0_i32 = arith.constant 0 : i32
    %0 = arith.cmpi eq, %arg2, %c0_i32 : i32
    %1 = arith.extui %0 : i1 to i32
    %c0_i32_0 = arith.constant 0 : i32
    %2 = arith.cmpi ne, %1, %c0_i32_0 : i32
    scf.if %2 {
      %cst_10 = arith.constant 0.000000e+00 : f32
      %12 = vector.broadcast %cst_10 : f32 to vector<32x256xf32>
      %c0_11 = arith.constant 0 : index
      %c0_12 = arith.constant 0 : index
      %13 = vector.load %arg7[%c0_11, %c0_12] : memref<32x256xf32, #tpu.memory_space<vmem>>, vector<32x256xf32>
      tpu.vector_store %arg7[%c0_11, %c0_12], %12 {strides = array<i32>} : memref<32x256xf32, #tpu.memory_space<vmem>>, vector<32x256xf32>,
    } else {
    }
    %c0 = arith.constant 0 : index
    %c0_1 = arith.constant 0 : index
    %3 = vector.load %arg7[%c0, %c0_1] : memref<32x256xf32, #tpu.memory_space<vmem>>, vector<32x256xf32>
    %c0_2 = arith.constant 0 : index
    %c0_3 = arith.constant 0 : index
    %4 = vector.load %arg3[%c0_2, %c0_3] : memref<32x128xf32, #tpu.memory_space<vmem>>, vector<32x128xf32>
    %c0_4 = arith.constant 0 : index
    %c0_5 = arith.constant 0 : index
    %5 = vector.load %arg4[%c0_4, %c0_5] : memref<256x128xf32, #tpu.memory_space<vmem>>, vector<256x128xf32>
    %cst = arith.constant dense<0.000000e+00> : vector<32x256xf32>
    %6 = tpu.matmul %4, %5, %cst {dimension_numbers = #tpu.dot_dimension_numbers<[1], [1], [0], [0], [0, 0, 1, 0], [], []>} : vector<32x128xf32>, vector<256x128xf32>, vector<32x256xf32> -> vector<32x256xf32>
    %7 = arith.addf %3, %6 : vector<32x256xf32>
    %c0_6 = arith.constant 0 : index
    %c0_7 = arith.constant 0 : index
    %8 = vector.load %arg7[%c0_6, %c0_7] : memref<32x256xf32, #tpu.memory_space<vmem>>, vector<32x256xf32>
    tpu.vector_store %arg7[%c0_6, %c0_7], %7 {strides = array<i32>} : memref<32x256xf32, #tpu.memory_space<vmem>>, vector<32x256xf32>,
    %c0_i32_8 = arith.constant 0 : i32
    %9 = arith.cmpi eq, %arg2, %c0_i32_8 : i32
    %10 = arith.extui %9 : i1 to i32
    %c0_i32_9 = arith.constant 0 : i32
    %11 = arith.cmpi ne, %10, %c0_i32_9 : i32
    scf.if %11 {
      %c0_10 = arith.constant 0 : index
      %c0_11 = arith.constant 0 : index
      %12 = vector.load %arg7[%c0_10, %c0_11] : memref<32x256xf32, #tpu.memory_space<vmem>>, vector<32x256xf32>
      %c0_12 = arith.constant 0 : index
      %c0_13 = arith.constant 0 : index
      %13 = vector.load %arg5[%c0_12, %c0_13] : memref<1x256xf32, #tpu.memory_space<vmem>>, vector<1x256xf32>
      %14 = vector.broadcast %13 : vector<1x256xf32> to vector<32x256xf32>
      %15 = arith.addf %12, %14 : vector<32x256xf32>
      %cst_14 = arith.constant 5.000000e-01 : f32
      %16 = vector.broadcast %cst_14 : f32 to vector<32x256xf32>
      %17 = arith.mulf %16, %15 : vector<32x256xf32>
      %18 = arith.mulf %15, %15 : vector<32x256xf32>
      %19 = arith.mulf %18, %15 : vector<32x256xf32>
      %cst_15 = arith.constant 4.471500e-02 : f32
      %20 = vector.broadcast %cst_15 : f32 to vector<32x256xf32>
      %21 = arith.mulf %20, %19 : vector<32x256xf32>
      %22 = arith.addf %15, %21 : vector<32x256xf32>
      %cst_16 = arith.constant 0.797884583 : f32
      %23 = vector.broadcast %cst_16 : f32 to vector<32x256xf32>
      %24 = arith.mulf %23, %22 : vector<32x256xf32>
      %25 = math.tanh %24 : vector<32x256xf32>
      %cst_17 = arith.constant 1.000000e+00 : f32
      %26 = vector.broadcast %cst_17 : f32 to vector<32x256xf32>
      %27 = arith.addf %26, %25 : vector<32x256xf32>
      %28 = arith.mulf %17, %27 : vector<32x256xf32>
      %c0_18 = arith.constant 0 : index
      %c0_19 = arith.constant 0 : index
      %29 = vector.load %arg6[%c0_18, %c0_19] : memref<32x256xf32, #tpu.memory_space<vmem>>, vector<32x256xf32>
      tpu.vector_store %arg6[%c0_18, %c0_19], %28 {strides = array<i32>} : memref<32x256xf32, #tpu.memory_space<vmem>>, vector<32x256xf32>,
    } else {
    }
    return
  }
  func.func @transform_0(%arg0: i32, %arg1: i32, %arg2: i32) -> (i32, i32) {
    %c0_i32 = arith.constant 0 : i32
    return %arg0, %arg2 : i32, i32
  }
  func.func @transform_1(%arg0: i32, %arg1: i32, %arg2: i32) -> (i32, i32) {
    %c0_i32 = arith.constant 0 : i32
    return %arg1, %arg2 : i32, i32
  }
  func.func @transform_2(%arg0: i32, %arg1: i32, %arg2: i32) -> (i32, i32) {
    %c0_i32 = arith.constant 0 : i32
    %c0_i32_0 = arith.constant 0 : i32
    return %c0_i32, %arg1 : i32, i32
  }
  func.func @transform_3(%arg0: i32, %arg1: i32, %arg2: i32) -> (i32, i32) {
    %c0_i32 = arith.constant 0 : i32
    return %arg0, %arg1 : i32, i32
  }
}

module attributes {stable_mosaic.version = 11 : i64} {
  func.func @_ortho_loss_kernel(%arg0: i32, %arg1: memref<128x128xf32, #tpu.memory_space<vmem>>, %arg2: memref<1x1xf32, #tpu.memory_space<vmem>>) attributes {dimension_semantics = [#tpu.dimension_semantics<arbitrary>], iteration_bounds = array<i64: 1>, scalar_prefetch = 0 : i64, scratch_operands = 0 : i64, tpu.core_type = #tpu.core_type<tc>, window_params = [{pipeline_mode = #tpu.pipeline_mode<synchronous>, transform_indices = @transform_0, window_bounds = array<i64: 128, 128>}, {pipeline_mode = #tpu.pipeline_mode<synchronous>, transform_indices = @transform_1, window_bounds = array<i64: 1, 1>}]} {
    %c0 = arith.constant 0 : index
    %c0_0 = arith.constant 0 : index
    %0 = vector.load %arg1[%c0, %c0_0] : memref<128x128xf32, #tpu.memory_space<vmem>>, vector<128x128xf32>
    %cst = arith.constant dense<0.000000e+00> : vector<128x128xf32>
    %1 = tpu.matmul %0, %0, %cst {dimension_numbers = #tpu.dot_dimension_numbers<[1], [1], [0], [0], [0, 0, 1, 0], [], []>} : vector<128x128xf32>, vector<128x128xf32>, vector<128x128xf32> -> vector<128x128xf32>
    %2 = tpu.iota {dimensions = array<i32: 0>} : vector<128x128xi32>
    %3 = tpu.iota {dimensions = array<i32: 1>} : vector<128x128xi32>
    %4 = arith.cmpi eq, %2, %3 : vector<128x128xi32>
    %cst_1 = arith.constant 1.000000e+00 : f32
    %5 = vector.broadcast %cst_1 : f32 to vector<128x128xf32>
    %6 = arith.subf %1, %5 : vector<128x128xf32>
    %7 = arith.select %4, %6, %1 : vector<128x128xi1>, vector<128x128xf32>
    %8 = arith.mulf %7, %7 : vector<128x128xf32>
    %cst_2 = arith.constant dense<0.000000e+00> : vector<128xf32>
    %9 = vector.multi_reduction <add>, %8, %cst_2 [1] : vector<128x128xf32> to vector<128xf32>
    %10 = vector.shape_cast %9 : vector<128xf32> to vector<128x1xf32>
    %cst_3 = arith.constant dense<0.000000e+00> : vector<1xf32>
    %11 = vector.multi_reduction <add>, %10, %cst_3 [0] : vector<128x1xf32> to vector<1xf32>
    %12 = vector.shape_cast %11 : vector<1xf32> to vector<1x1xf32>
    %cst_4 = arith.constant 6.10351563E-5 : f32
    %13 = vector.broadcast %cst_4 : f32 to vector<1x1xf32>
    %14 = arith.mulf %12, %13 : vector<1x1xf32>
    %c0_5 = arith.constant 0 : index
    %c0_6 = arith.constant 0 : index
    %15 = vector.load %arg2[%c0_5, %c0_6] : memref<1x1xf32, #tpu.memory_space<vmem>>, vector<1x1xf32>
    tpu.vector_store %arg2[%c0_5, %c0_6], %14 {strides = array<i32>} : memref<1x1xf32, #tpu.memory_space<vmem>>, vector<1x1xf32>,
    return
  }
  func.func @transform_0(%arg0: i32) -> (i32, i32) {
    %c0_i32 = arith.constant 0 : i32
    %c0_i32_0 = arith.constant 0 : i32
    %c0_i32_1 = arith.constant 0 : i32
    return %c0_i32, %c0_i32_0 : i32, i32
  }
  func.func @transform_1(%arg0: i32) -> (i32, i32) {
    %c0_i32 = arith.constant 0 : i32
    %c0_i32_0 = arith.constant 0 : i32
    %c0_i32_1 = arith.constant 0 : i32
    return %c0_i32, %c0_i32_0 : i32, i32
  }
}

module attributes {stable_mosaic.version = 11 : i64} {
  func.func @_ortho_loss_kernel(%arg0: i32, %arg1: memref<512x128xf32, #tpu.memory_space<vmem>>, %arg2: memref<1x1xf32, #tpu.memory_space<vmem>>) attributes {dimension_semantics = [#tpu.dimension_semantics<arbitrary>], iteration_bounds = array<i64: 1>, scalar_prefetch = 0 : i64, scratch_operands = 0 : i64, tpu.core_type = #tpu.core_type<tc>, window_params = [{pipeline_mode = #tpu.pipeline_mode<synchronous>, transform_indices = @transform_0, window_bounds = array<i64: 512, 128>}, {pipeline_mode = #tpu.pipeline_mode<synchronous>, transform_indices = @transform_1, window_bounds = array<i64: 1, 1>}]} {
    %c0 = arith.constant 0 : index
    %c0_0 = arith.constant 0 : index
    %0 = vector.load %arg1[%c0, %c0_0] : memref<512x128xf32, #tpu.memory_space<vmem>>, vector<512x128xf32>
    %cst = arith.constant dense<0.000000e+00> : vector<512x512xf32>
    %1 = tpu.matmul %0, %0, %cst {dimension_numbers = #tpu.dot_dimension_numbers<[1], [1], [0], [0], [0, 0, 1, 0], [], []>} : vector<512x128xf32>, vector<512x128xf32>, vector<512x512xf32> -> vector<512x512xf32>
    %2 = tpu.iota {dimensions = array<i32: 0>} : vector<512x512xi32>
    %3 = tpu.iota {dimensions = array<i32: 1>} : vector<512x512xi32>
    %4 = arith.cmpi eq, %2, %3 : vector<512x512xi32>
    %cst_1 = arith.constant 1.000000e+00 : f32
    %5 = vector.broadcast %cst_1 : f32 to vector<512x512xf32>
    %6 = arith.subf %1, %5 : vector<512x512xf32>
    %7 = arith.select %4, %6, %1 : vector<512x512xi1>, vector<512x512xf32>
    %8 = arith.mulf %7, %7 : vector<512x512xf32>
    %cst_2 = arith.constant dense<0.000000e+00> : vector<512xf32>
    %9 = vector.multi_reduction <add>, %8, %cst_2 [1] : vector<512x512xf32> to vector<512xf32>
    %10 = vector.shape_cast %9 : vector<512xf32> to vector<512x1xf32>
    %cst_3 = arith.constant dense<0.000000e+00> : vector<1xf32>
    %11 = vector.multi_reduction <add>, %10, %cst_3 [0] : vector<512x1xf32> to vector<1xf32>
    %12 = vector.shape_cast %11 : vector<1xf32> to vector<1x1xf32>
    %cst_4 = arith.constant 3.81469727E-6 : f32
    %13 = vector.broadcast %cst_4 : f32 to vector<1x1xf32>
    %14 = arith.mulf %12, %13 : vector<1x1xf32>
    %c0_5 = arith.constant 0 : index
    %c0_6 = arith.constant 0 : index
    %15 = vector.load %arg2[%c0_5, %c0_6] : memref<1x1xf32, #tpu.memory_space<vmem>>, vector<1x1xf32>
    tpu.vector_store %arg2[%c0_5, %c0_6], %14 {strides = array<i32>} : memref<1x1xf32, #tpu.memory_space<vmem>>, vector<1x1xf32>,
    return
  }
  func.func @transform_0(%arg0: i32) -> (i32, i32) {
    %c0_i32 = arith.constant 0 : i32
    %c0_i32_0 = arith.constant 0 : i32
    %c0_i32_1 = arith.constant 0 : i32
    return %c0_i32, %c0_i32_0 : i32, i32
  }
  func.func @transform_1(%arg0: i32) -> (i32, i32) {
    %c0_i32 = arith.constant 0 : i32
    %c0_i32_0 = arith.constant 0 : i32
    %c0_i32_1 = arith.constant 0 : i32
    return %c0_i32, %c0_i32_0 : i32, i32
  }
}

module attributes {stable_mosaic.version = 11 : i64} {
  func.func @_ortho_loss_kernel(%arg0: i32, %arg1: memref<128x512xf32, #tpu.memory_space<vmem>>, %arg2: memref<1x1xf32, #tpu.memory_space<vmem>>) attributes {dimension_semantics = [#tpu.dimension_semantics<arbitrary>], iteration_bounds = array<i64: 1>, scalar_prefetch = 0 : i64, scratch_operands = 0 : i64, tpu.core_type = #tpu.core_type<tc>, window_params = [{pipeline_mode = #tpu.pipeline_mode<synchronous>, transform_indices = @transform_0, window_bounds = array<i64: 128, 512>}, {pipeline_mode = #tpu.pipeline_mode<synchronous>, transform_indices = @transform_1, window_bounds = array<i64: 1, 1>}]} {
    %c0 = arith.constant 0 : index
    %c0_0 = arith.constant 0 : index
    %0 = vector.load %arg1[%c0, %c0_0] : memref<128x512xf32, #tpu.memory_space<vmem>>, vector<128x512xf32>
    %cst = arith.constant dense<0.000000e+00> : vector<128x128xf32>
    %1 = tpu.matmul %0, %0, %cst {dimension_numbers = #tpu.dot_dimension_numbers<[1], [1], [0], [0], [0, 0, 1, 0], [], []>} : vector<128x512xf32>, vector<128x512xf32>, vector<128x128xf32> -> vector<128x128xf32>
    %2 = tpu.iota {dimensions = array<i32: 0>} : vector<128x128xi32>
    %3 = tpu.iota {dimensions = array<i32: 1>} : vector<128x128xi32>
    %4 = arith.cmpi eq, %2, %3 : vector<128x128xi32>
    %cst_1 = arith.constant 1.000000e+00 : f32
    %5 = vector.broadcast %cst_1 : f32 to vector<128x128xf32>
    %6 = arith.subf %1, %5 : vector<128x128xf32>
    %7 = arith.select %4, %6, %1 : vector<128x128xi1>, vector<128x128xf32>
    %8 = arith.mulf %7, %7 : vector<128x128xf32>
    %cst_2 = arith.constant dense<0.000000e+00> : vector<128xf32>
    %9 = vector.multi_reduction <add>, %8, %cst_2 [1] : vector<128x128xf32> to vector<128xf32>
    %10 = vector.shape_cast %9 : vector<128xf32> to vector<128x1xf32>
    %cst_3 = arith.constant dense<0.000000e+00> : vector<1xf32>
    %11 = vector.multi_reduction <add>, %10, %cst_3 [0] : vector<128x1xf32> to vector<1xf32>
    %12 = vector.shape_cast %11 : vector<1xf32> to vector<1x1xf32>
    %cst_4 = arith.constant 6.10351563E-5 : f32
    %13 = vector.broadcast %cst_4 : f32 to vector<1x1xf32>
    %14 = arith.mulf %12, %13 : vector<1x1xf32>
    %c0_5 = arith.constant 0 : index
    %c0_6 = arith.constant 0 : index
    %15 = vector.load %arg2[%c0_5, %c0_6] : memref<1x1xf32, #tpu.memory_space<vmem>>, vector<1x1xf32>
    tpu.vector_store %arg2[%c0_5, %c0_6], %14 {strides = array<i32>} : memref<1x1xf32, #tpu.memory_space<vmem>>, vector<1x1xf32>,
    return
  }
  func.func @transform_0(%arg0: i32) -> (i32, i32) {
    %c0_i32 = arith.constant 0 : i32
    %c0_i32_0 = arith.constant 0 : i32
    %c0_i32_1 = arith.constant 0 : i32
    return %c0_i32, %c0_i32_0 : i32, i32
  }
  func.func @transform_1(%arg0: i32) -> (i32, i32) {
    %c0_i32 = arith.constant 0 : i32
    %c0_i32_0 = arith.constant 0 : i32
    %c0_i32_1 = arith.constant 0 : i32
    return %c0_i32, %c0_i32_0 : i32, i32
  }
}

</mosaic_0001>

<llo_original>
// kernel: disentangled_transformer_layer.20
$region0: #{disentangled_transformer_layer.20}
  #allocation0 [shape = 'u32[]', space=smem, size = 0x4, offset = 0x4, fixed_abs, tag = 'smem constant byte address 0x4 - core index']
  #allocation1 [shape = 'u32[144,128]{1,0:T(1,128)}', space=vmem, size = 0x12000, scoped, tag = 'internal scratch']
  %s0 = inlined_call_operand.vmem [shape: f32[32,128], index: 0, kind: input, shape index: {}]
  %s1 = inlined_call_operand.vmem [shape: f32[32,128], index: 1, kind: input, shape index: {}]
  %s2 = inlined_call_operand.vmem [shape: f32[1,128], index: 2, kind: input, shape index: {}]
  %s3 = inlined_call_operand.vmem [shape: f32[1,128], index: 3, kind: input, shape index: {}]
  %s4 = inlined_call_operand.vmem [shape: f32[32,128], index: 4, kind: output, shape index: {}]
  %s5 = sld [smem:[#allocation0]]
  $region26: #{disentangled_transformer_layer.20} parent=0
    _
  %s7 = ssub.s32 1, %s5
  %s8 = scalar_select 0, %s7, %s5
  // Predicated region
  $region2: #{disentangled_transformer_layer.20} parent=0 // pred_check
    _
  $region3: #{disentangled_transformer_layer.20} parent=0 // pred_check_branch
    %10 = sbr.rel (0) target = $region5
  $region4: #{disentangled_transformer_layer.20} parent=0 // pred_region
    _
  $region5: #{disentangled_transformer_layer.20} parent=0 // pred_fallthru
    _
  // Predicated region
  $region6: #{disentangled_transformer_layer.20} parent=0 // pred_check
    _
  $region7: #{disentangled_transformer_layer.20} parent=0 // pred_check_branch
    %12 = sbr.rel (0) target = $region9
  $region8: #{disentangled_transformer_layer.20} parent=0 // pred_region
    _
  $region9: #{disentangled_transformer_layer.20} parent=0 // pred_fallthru
    _
  // Predicated region
  $region10: #{disentangled_transformer_layer.20} parent=0 // pred_check
    _
  $region11: #{disentangled_transformer_layer.20} parent=0 // pred_check_branch
    %14 = sbr.rel (0) target = $region13
  $region12: #{disentangled_transformer_layer.20} parent=0 // pred_region
    _
  $region13: #{disentangled_transformer_layer.20} parent=0 // pred_fallthru
    _
  // Predicated region
  $region14: #{disentangled_transformer_layer.20} parent=0 // pred_check
    _
  $region15: #{disentangled_transformer_layer.20} parent=0 // pred_check_branch
    %16 = sbr.rel (0) target = $region17
  $region16: #{disentangled_transformer_layer.20} parent=0 // pred_region
    _
  $region17: #{disentangled_transformer_layer.20} parent=0 // pred_fallthru
    _
  %v17 = vld [vmem:[%s0] sm:$0xff]
  %v18 = vld [vmem:[%s0 + $0x8] sm:$0xff]
  %v19 = vld [vmem:[%s0 + $0x10] sm:$0xff]
  %v20 = vld [vmem:[%s0 + $0x18] sm:$0xff]
  %v21 = vld [vmem:[%s1] sm:$0xff]
  %v22 = vld [vmem:[%s1 + $0x8] sm:$0xff]
  %v23 = vld [vmem:[%s1 + $0x10] sm:$0xff]
  %v24 = vld [vmem:[%s1 + $0x18] sm:$0xff]
  %v25 = vadd.f32 %v17, %v21
  %v26 = vadd.f32 %v18, %v22
  %v27 = vadd.f32 %v19, %v23
  %v28 = vadd.f32 %v20, %v24
  %29 = vadd.xlane.f32.xlu0 %v25
  %v30 = vpop.xlane.xlu0 %29
  %31 = vadd.xlane.f32.xlu0 %v26
  %v32 = vpop.xlane.xlu0 %31
  %33 = vadd.xlane.f32.xlu0 %v27
  %v34 = vpop.xlane.xlu0 %33
  %35 = vadd.xlane.f32.xlu0 %v28
  %v36 = vpop.xlane.xlu0 %35
  %v37 = vrcp.pop 128.0
  %v38 = vmul.f32 %v30, %v37
  %v39 = vmul.f32 %v32, %v37
  %v40 = vmul.f32 %v34, %v37
  %v41 = vmul.f32 %v36, %v37
  %v42 = vsub.f32 %v25, %v38
  %v43 = vsub.f32 %v26, %v39
  %v44 = vsub.f32 %v27, %v40
  %v45 = vsub.f32 %v28, %v41
  %v46 = vmul.f32 %v42, %v42
  %v47 = vmul.f32 %v43, %v43
  %v48 = vmul.f32 %v44, %v44
  %v49 = vmul.f32 %v45, %v45
  %50 = vadd.xlane.f32.xlu0 %v46
  %v51 = vpop.xlane.xlu0 %50
  %52 = vadd.xlane.f32.xlu0 %v47
  %v53 = vpop.xlane.xlu0 %52
  %54 = vadd.xlane.f32.xlu0 %v48
  %v55 = vpop.xlane.xlu0 %54
  %56 = vadd.xlane.f32.xlu0 %v49
  %v57 = vpop.xlane.xlu0 %56
  %v58 = vmul.f32 %v51, %v37
  %v59 = vmul.f32 %v53, %v37
  %v60 = vmul.f32 %v55, %v37
  %v61 = vmul.f32 %v57, %v37
  %v62 = vadd.f32 %v58, 1e-05
  %v63 = vadd.f32 %v59, 1e-05
  %v64 = vadd.f32 %v60, 1e-05
  %v65 = vadd.f32 %v61, 1e-05
  %v66 = vrsqrt.pop %v62
  %v67 = vrsqrt.pop %v63
  %v68 = vrsqrt.pop %v64
  %v69 = vrsqrt.pop %v65
  %v70 = vmul.f32 %v42, %v66
  %v71 = vmul.f32 %v43, %v67
  %v72 = vmul.f32 %v44, %v68
  %v73 = vmul.f32 %v45, %v69
  %v74 = vld [vmem:[%s2] sm:$0x1]
  %v76 = vlaneseq
  %v77 = vshrl.u32 %v76, 7
  %v78 = vsub.s32 0, %v77
  %v79 = vrot.slane %v74, %v78
  %v81 = vmul.f32 %v70, %v79
  %v82 = vmul.f32 %v71, %v79
  %v83 = vmul.f32 %v72, %v79
  %v84 = vmul.f32 %v73, %v79
  %v85 = vld [vmem:[%s3] sm:$0x1]
  %v87 = vlaneseq
  %v88 = vshrl.u32 %v87, 7
  %v89 = vsub.s32 0, %v88
  %v90 = vrot.slane %v85, %v89
  %v92 = vadd.f32 %v81, %v90
  %v93 = vadd.f32 %v82, %v90
  %v94 = vadd.f32 %v83, %v90
  %v95 = vadd.f32 %v84, %v90
  %96 = vst [vmem:[%s4] sm:$0xff] %v92
  %97 = vst [vmem:[%s4 + $0x8] sm:$0xff] %v93
  %98 = vst [vmem:[%s4 + $0x10] sm:$0xff] %v94
  %99 = vst [vmem:[%s4 + $0x18] sm:$0xff] %v95
  // Predicated region
  $region18: #{disentangled_transformer_layer.20} parent=0 // pred_check
    _
  $region19: #{disentangled_transformer_layer.20} parent=0 // pred_check_branch
    %101 = sbr.rel (0) target = $region21
  $region20: #{disentangled_transformer_layer.20} parent=0 // pred_region
    _
  $region21: #{disentangled_transformer_layer.20} parent=0 // pred_fallthru
    _
  // Predicated region
  $region22: #{disentangled_transformer_layer.20} parent=0 // pred_check
    _
  $region23: #{disentangled_transformer_layer.20} parent=0 // pred_check_branch
    %103 = sbr.rel (0) target = $region25
  $region24: #{disentangled_transformer_layer.20} parent=0 // pred_region
    _
  $region25: #{disentangled_transformer_layer.20} parent=0 // pred_fallthru
    _

// kernel: disentangled_transformer_layer.15
$region0: #{disentangled_transformer_layer.15}
  #allocation0 [shape = 'u32[]', space=smem, size = 0x4, offset = 0x4, fixed_abs, tag = 'smem constant byte address 0x4 - core index']
  #allocation1 [shape = 'u32[144,128]{1,0:T(1,128)}', space=vmem, size = 0x12000, scoped, tag = 'internal scratch']
  #allocation2 [shape = 'f32[32,128]{1,0:T(8,128)}', space=vmem, size = 0x4000, scoped, tag = 'scratch operand']
  %s0 = inlined_call_operand.vmem [shape: f32[32,128], index: 0, kind: input, shape index: {}]
  %s1 = inlined_call_operand.hbm [shape: f32[128,128], index: 1, kind: input, shape index: {}]
  %s2 = inlined_call_operand.hbm [shape: f32[1,128], index: 2, kind: input, shape index: {}]
  %s3 = inlined_call_operand.vmem [shape: f32[32,128], index: 3, kind: output, shape index: {}]
  %s4 = sld [smem:[#allocation0]]
  $region38: #{disentangled_transformer_layer.15} parent=0
    _
  %s6 = ssub.s32 1, %s4
  %s7 = scalar_select 0, %s6, %s4
  $region1: #{disentangled_transformer_layer.15} parent=0
    #allocation3 [shape = 'u8[65536]{0}', space=vmem, size = 0x10000, scoped, tag = 'input window, operand 1, single buffered']
    #allocation4 [shape = 's32[1]{0}', space=sflag, size = 0x4, scoped, tag = 'scoped memory for disentangled_transformer_layer.15']
    #allocation5 [shape = 'u8[512]{0}', space=vmem, size = 0x400, scoped, tag = 'input window, operand 2, single buffered']
    #allocation6 [shape = 's32[1]{0}', space=sflag, size = 0x4, scoped, tag = 'scoped memory for disentangled_transformer_layer.15']
    %8 = vsyncpa [#allocation4], 0
    %9 = vsyncpa [#allocation6], 0
    // Predicated region
    $region2: #{disentangled_transformer_layer.15} parent=1 // pred_check
      _
    $region3: #{disentangled_transformer_layer.15} parent=1 // pred_check_branch
      %11 = sbr.rel (0) target = $region5
    $region4: #{disentangled_transformer_layer.15} parent=1 // pred_region
      _
    $region5: #{disentangled_transformer_layer.15} parent=1 // pred_fallthru
      _
    // Predicated region
    $region6: #{disentangled_transformer_layer.15} parent=1 // pred_check
      _
    $region7: #{disentangled_transformer_layer.15} parent=1 // pred_check_branch
      %13 = sbr.rel (0) target = $region9
    $region8: #{disentangled_transformer_layer.15} parent=1 // pred_region
      %s15 = ssub.s32 2048, 2048
      %16 = vsyncadd [#allocation4], %s15
      %s17 = sshll.u32 [#allocation3], 4
      %s18 = int_to_ptr.vmem [resolvable:$true] %s17
      %23 = dma.hbm_to_vmem [thread:$0]  %s1, 2048, %s18, [#allocation4], 128, 128, 8
    $region9: #{disentangled_transformer_layer.15} parent=1 // pred_fallthru
      _
    // Predicated region
    $region10: #{disentangled_transformer_layer.15} parent=1 // pred_check
      _
    $region11: #{disentangled_transformer_layer.15} parent=1 // pred_check_branch
      %25 = sbr.rel (0) target = $region13
    $region12: #{disentangled_transformer_layer.15} parent=1 // pred_region
      %s27 = ssub.s32 16, 16
      %28 = vsyncadd [#allocation6], %s27
      %s30 = sshll.u32 [#allocation5], 4
      %s31 = int_to_ptr.vmem [resolvable:$true] %s30
      %33 = dma.hbm_to_vmem [thread:$0]  %s2, 16, %s31, [#allocation6]
    $region13: #{disentangled_transformer_layer.15} parent=1 // pred_fallthru
      _
    // Predicated region
    $region14: #{disentangled_transformer_layer.15} parent=1 // pred_check
      _
    $region15: #{disentangled_transformer_layer.15} parent=1 // pred_check_branch
      %35 = sbr.rel (0) target = $region17
    $region16: #{disentangled_transformer_layer.15} parent=1 // pred_region
      %36 = dma.done [#allocation4], 2048
    $region17: #{disentangled_transformer_layer.15} parent=1 // pred_fallthru
      _
    // Predicated region
    $region18: #{disentangled_transformer_layer.15} parent=1 // pred_check
      _
    $region19: #{disentangled_transformer_layer.15} parent=1 // pred_check_branch
      %38 = sbr.rel (0) target = $region21
    $region20: #{disentangled_transformer_layer.15} parent=1 // pred_region
      %39 = dma.done [#allocation6], 16
    $region21: #{disentangled_transformer_layer.15} parent=1 // pred_fallthru
      _
    %p40 = scmp.eq.s32.totalorder 0, 0
    // Predicated region
    $region22: #{disentangled_transformer_layer.15} parent=1 // pred_check
      %p41 = pneg %p40
    $region23: #{disentangled_transformer_layer.15} parent=1 // pred_check_branch
      %43 = sbr.rel (%p41) target = $region25
    $region24: #{disentangled_transformer_layer.15} parent=1 // pred_region
      %44 = vst [vmem:[#allocation2] sm:$0xff] 0.0
      %45 = vst [vmem:[#allocation2 + $0x8] sm:$0xff] 0.0
      %46 = vst [vmem:[#allocation2 + $0x10] sm:$0xff] 0.0
      %47 = vst [vmem:[#allocation2 + $0x18] sm:$0xff] 0.0
    $region25: #{disentangled_transformer_layer.15} parent=1 // pred_fallthru
      _
    %v48 = vld [vmem:[#allocation2] sm:$0xff]
    %v49 = vld [vmem:[#allocation2 + $0x8] sm:$0xff]
    %v50 = vld [vmem:[#allocation2 + $0x10] sm:$0xff]
    %v51 = vld [vmem:[#allocation2 + $0x18] sm:$0xff]
    %v52 = vld [vmem:[%s0] sm:$0xff]
    %v53 = vld [vmem:[%s0 + $0x8] sm:$0xff]
    %v54 = vld [vmem:[%s0 + $0x10] sm:$0xff]
    %v55 = vld [vmem:[%s0 + $0x18] sm:$0xff]
    %v56 = vld [vmem:[#allocation3] sm:$0xff]
    %v57 = vld [vmem:[#allocation3 + $0x8] sm:$0xff]
    %v58 = vld [vmem:[#allocation3 + $0x10] sm:$0xff]
    %v59 = vld [vmem:[#allocation3 + $0x18] sm:$0xff]
    %v60 = vld [vmem:[#allocation3 + $0x20] sm:$0xff]
    %v61 = vld [vmem:[#allocation3 + $0x28] sm:$0xff]
    %v62 = vld [vmem:[#allocation3 + $0x30] sm:$0xff]
    %v63 = vld [vmem:[#allocation3 + $0x38] sm:$0xff]
    %v64 = vld [vmem:[#allocation3 + $0x40] sm:$0xff]
    %v65 = vld [vmem:[#allocation3 + $0x48] sm:$0xff]
    %v66 = vld [vmem:[#allocation3 + $0x50] sm:$0xff]
    %v67 = vld [vmem:[#allocation3 + $0x58] sm:$0xff]
    %v68 = vld [vmem:[#allocation3 + $0x60] sm:$0xff]
    %v69 = vld [vmem:[#allocation3 + $0x68] sm:$0xff]
    %v70 = vld [vmem:[#allocation3 + $0x70] sm:$0xff]
    %v71 = vld [vmem:[#allocation3 + $0x78] sm:$0xff]
    %72 = vmatprep.subr.mxu0 0.0
    %73 = vmatpush1.xpose.msra.mxu0 %v71
    %74 = vmatprep.subr.mxu0 0.0
    %75 = vmatpush1.xpose.msra.mxu0 %v70
    %76 = vmatprep.subr.mxu0 0.0
    %77 = vmatpush1.xpose.msra.mxu0 %v69
    %78 = vmatprep.subr.mxu0 0.0
    %79 = vmatpush1.xpose.msra.mxu0 %v68
    %80 = vmatprep.subr.mxu0 0.0
    %81 = vmatpush1.xpose.msra.mxu0 %v67
    %82 = vmatprep.subr.mxu0 0.0
    %83 = vmatpush1.xpose.msra.mxu0 %v66
    %84 = vmatprep.subr.mxu0 0.0
    %85 = vmatpush1.xpose.msra.mxu0 %v65
    %86 = vmatprep.subr.mxu0 0.0
    %87 = vmatpush1.xpose.msra.mxu0 %v64
    %88 = vmatprep.subr.mxu0 0.0
    %89 = vmatpush1.xpose.msra.mxu0 %v63
    %90 = vmatprep.subr.mxu0 0.0
    %91 = vmatpush1.xpose.msra.mxu0 %v62
    %92 = vmatprep.subr.mxu0 0.0
    %93 = vmatpush1.xpose.msra.mxu0 %v61
    %94 = vmatprep.subr.mxu0 0.0
    %95 = vmatpush1.xpose.msra.mxu0 %v60
    %96 = vmatprep.subr.mxu0 0.0
    %97 = vmatpush1.xpose.msra.mxu0 %v59
    %98 = vmatprep.subr.mxu0 0.0
    %99 = vmatpush1.xpose.msra.mxu0 %v58
    %100 = vmatprep.subr.mxu0 0.0
    %101 = vmatpush1.xpose.msra.mxu0 %v57
    %102 = vmatprep.subr.mxu0 0.0
    %103 = vmatpush1.xpose.msra.mxu0 %v56
    %104 = vmatprep.subr.mxu0 0.0
    %105 = vmatpush2.xpose.msra.mxu0 0.0
    %106 = vmatprep.subr.mxu0 0.0
    %107 = vmatpush2.xpose.msra.mxu0 0.0
    %108 = vmatprep.subr.mxu0 0.0
    %109 = vmatpush2.xpose.msra.mxu0 0.0
    %110 = vmatprep.subr.mxu0 0.0
    %111 = vmatpush2.xpose.msra.mxu0 0.0
    %112 = vmatprep.subr.mxu0 0.0
    %113 = vmatpush2.xpose.msra.mxu0 0.0
    %114 = vmatprep.subr.mxu0 0.0
    %115 = vmatpush2.xpose.msra.mxu0 0.0
    %116 = vmatprep.subr.mxu0 0.0
    %117 = vmatpush2.xpose.msra.mxu0 0.0
    %118 = vmatprep.subr.mxu0 0.0
    %119 = vmatpush2.xpose.msra.mxu0 0.0
    %120 = vmatprep.subr.mxu0 0.0
    %121 = vmatpush2.xpose.msra.mxu0 0.0
    %122 = vmatprep.subr.mxu0 0.0
    %123 = vmatpush2.xpose.msra.mxu0 0.0
    %124 = vmatprep.subr.mxu0 0.0
    %125 = vmatpush2.xpose.msra.mxu0 0.0
    %126 = vmatprep.subr.mxu0 0.0
    %127 = vmatpush2.xpose.msra.mxu0 0.0
    %128 = vmatprep.subr.mxu0 0.0
    %129 = vmatpush2.xpose.msra.mxu0 0.0
    %130 = vmatprep.subr.mxu0 0.0
    %131 = vmatpush2.xpose.msra.mxu0 0.0
    %132 = vmatprep.subr.mxu0 0.0
    %133 = vmatpush2.xpose.msra.mxu0 0.0
    %134 = vmatprep.subr.mxu0 0.0
    %135 = vmatpush2.xpose.msra.mxu0 0.0
    %136 = vmatprep.mubr.f32.mxu0 0.0
    %137 = vmatmul.mubr.f32.gmra.mxu0 %v52
    %v138 = vpop.f32.mrf.mxu0
    %v139 = vadd.f32 0.0, %v138
    %v140 = vpop.f32.mrf.mxu0
    %141 = vmatprep.mubr.f32.mxu0 0.0
    %142 = vmatmul.mubr.f32.gmra.mxu0 %v53
    %v143 = vpop.f32.mrf.mxu0
    %v144 = vadd.f32 0.0, %v143
    %v145 = vpop.f32.mrf.mxu0
    %146 = vmatprep.mubr.f32.mxu0 0.0
    %147 = vmatmul.mubr.f32.gmra.mxu0 %v54
    %v148 = vpop.f32.mrf.mxu0
    %v149 = vadd.f32 0.0, %v148
    %v150 = vpop.f32.mrf.mxu0
    %151 = vmatprep.mubr.f32.mxu0 0.0
    %152 = vmatmul.mubr.f32.gmra.mxu0 %v55
    %v153 = vpop.f32.mrf.mxu0
    %v154 = vadd.f32 0.0, %v153
    %v155 = vpop.f32.mrf.mxu0
    %156 = vdwg.mxu0
    %v157 = vadd.f32 %v48, %v139
    %v158 = vadd.f32 %v49, %v144
    %v159 = vadd.f32 %v50, %v149
    %v160 = vadd.f32 %v51, %v154
    %161 = vst [vmem:[#allocation2] sm:$0xff] %v157
    %162 = vst [vmem:[#allocation2 + $0x8] sm:$0xff] %v158
    %163 = vst [vmem:[#allocation2 + $0x10] sm:$0xff] %v159
    %164 = vst [vmem:[#allocation2 + $0x18] sm:$0xff] %v160
    // Predicated region
    $region26: #{disentangled_transformer_layer.15} parent=1 // pred_check
      %p165 = pneg %p40
    $region27: #{disentangled_transformer_layer.15} parent=1 // pred_check_branch
      %167 = sbr.rel (%p165) target = $region29
    $region28: #{disentangled_transformer_layer.15} parent=1 // pred_region
      %v168 = vld [vmem:[#allocation2] sm:$0xff]
      %v169 = vld [vmem:[#allocation2 + $0x8] sm:$0xff]
      %v170 = vld [vmem:[#allocation2 + $0x10] sm:$0xff]
      %v171 = vld [vmem:[#allocation2 + $0x18] sm:$0xff]
      %v172 = vld [vmem:[#allocation5] sm:$0x1]
      %v174 = vlaneseq
      %v175 = vshrl.u32 %v174, 7
      %v176 = vsub.s32 0, %v175
      %v177 = vrot.slane %v172, %v176
      %v179 = vadd.f32 %v168, %v177
      %v180 = vadd.f32 %v169, %v177
      %v181 = vadd.f32 %v170, %v177
      %v182 = vadd.f32 %v171, %v177
      %183 = vst [vmem:[%s3] sm:$0xff] %v179
      %184 = vst [vmem:[%s3 + $0x8] sm:$0xff] %v180
      %185 = vst [vmem:[%s3 + $0x10] sm:$0xff] %v181
      %186 = vst [vmem:[%s3 + $0x18] sm:$0xff] %v182
    $region29: #{disentangled_transformer_layer.15} parent=1 // pred_fallthru
      _
    // Predicated region
    $region30: #{disentangled_transformer_layer.15} parent=1 // pred_check
      _
    $region31: #{disentangled_transformer_layer.15} parent=1 // pred_check_branch
      %188 = sbr.rel (0) target = $region33
    $region32: #{disentangled_transformer_layer.15} parent=1 // pred_region
      _
    $region33: #{disentangled_transformer_layer.15} parent=1 // pred_fallthru
      _
    // Predicated region
    $region34: #{disentangled_transformer_layer.15} parent=1 // pred_check
      _
    $region35: #{disentangled_transformer_layer.15} parent=1 // pred_check_branch
      %190 = sbr.rel (0) target = $region37
    $region36: #{disentangled_transformer_layer.15} parent=1 // pred_region
      _
    $region37: #{disentangled_transformer_layer.15} parent=1 // pred_fallthru
      _
    %191 = vsyncpa [#allocation4], 1
    %192 = vsyncpa [#allocation6], 1

// kernel: disentangled_transformer_layer.16
$region0: #{disentangled_transformer_layer.16}
  #allocation0 [shape = 'u32[]', space=smem, size = 0x4, offset = 0x4, fixed_abs, tag = 'smem constant byte address 0x4 - core index']
  #allocation1 [shape = 'u32[144,128]{1,0:T(1,128)}', space=vmem, size = 0x12000, scoped, tag = 'internal scratch']
  #allocation2 [shape = 'f32[32,128]{1,0:T(8,128)}', space=vmem, size = 0x4000, scoped, tag = 'scratch operand']
  %s0 = inlined_call_operand.vmem [shape: f32[32,128], index: 0, kind: input, shape index: {}]
  %s1 = inlined_call_operand.vmem [shape: f32[128,128], index: 1, kind: input, shape index: {}]
  %s2 = inlined_call_operand.vmem [shape: f32[1,128], index: 2, kind: input, shape index: {}]
  %s3 = inlined_call_operand.vmem [shape: f32[32,128], index: 3, kind: output, shape index: {}]
  %s4 = sld [smem:[#allocation0]]
  $region30: #{disentangled_transformer_layer.16} parent=0
    _
  %s6 = ssub.s32 1, %s4
  %s7 = scalar_select 0, %s6, %s4
  // Predicated region
  $region2: #{disentangled_transformer_layer.16} parent=0 // pred_check
    _
  $region3: #{disentangled_transformer_layer.16} parent=0 // pred_check_branch
    %9 = sbr.rel (0) target = $region5
  $region4: #{disentangled_transformer_layer.16} parent=0 // pred_region
    _
  $region5: #{disentangled_transformer_layer.16} parent=0 // pred_fallthru
    _
  // Predicated region
  $region6: #{disentangled_transformer_layer.16} parent=0 // pred_check
    _
  $region7: #{disentangled_transformer_layer.16} parent=0 // pred_check_branch
    %11 = sbr.rel (0) target = $region9
  $region8: #{disentangled_transformer_layer.16} parent=0 // pred_region
    _
  $region9: #{disentangled_transformer_layer.16} parent=0 // pred_fallthru
    _
  // Predicated region
  $region10: #{disentangled_transformer_layer.16} parent=0 // pred_check
    _
  $region11: #{disentangled_transformer_layer.16} parent=0 // pred_check_branch
    %13 = sbr.rel (0) target = $region13
  $region12: #{disentangled_transformer_layer.16} parent=0 // pred_region
    _
  $region13: #{disentangled_transformer_layer.16} parent=0 // pred_fallthru
    _
  %p14 = scmp.eq.s32.totalorder 0, 0
  // Predicated region
  $region14: #{disentangled_transformer_layer.16} parent=0 // pred_check
    %p15 = pneg %p14
  $region15: #{disentangled_transformer_layer.16} parent=0 // pred_check_branch
    %17 = sbr.rel (%p15) target = $region17
  $region16: #{disentangled_transformer_layer.16} parent=0 // pred_region
    %18 = vst [vmem:[#allocation2] sm:$0xff] 0.0
    %19 = vst [vmem:[#allocation2 + $0x8] sm:$0xff] 0.0
    %20 = vst [vmem:[#allocation2 + $0x10] sm:$0xff] 0.0
    %21 = vst [vmem:[#allocation2 + $0x18] sm:$0xff] 0.0
  $region17: #{disentangled_transformer_layer.16} parent=0 // pred_fallthru
    _
  %v22 = vld [vmem:[#allocation2] sm:$0xff]
  %v23 = vld [vmem:[#allocation2 + $0x8] sm:$0xff]
  %v24 = vld [vmem:[#allocation2 + $0x10] sm:$0xff]
  %v25 = vld [vmem:[#allocation2 + $0x18] sm:$0xff]
  %v26 = vld [vmem:[%s0] sm:$0xff]
  %v27 = vld [vmem:[%s0 + $0x8] sm:$0xff]
  %v28 = vld [vmem:[%s0 + $0x10] sm:$0xff]
  %v29 = vld [vmem:[%s0 + $0x18] sm:$0xff]
  %v30 = vld [vmem:[%s1] sm:$0xff]
  %v31 = vld [vmem:[%s1 + $0x8] sm:$0xff]
  %v32 = vld [vmem:[%s1 + $0x10] sm:$0xff]
  %v33 = vld [vmem:[%s1 + $0x18] sm:$0xff]
  %v34 = vld [vmem:[%s1 + $0x20] sm:$0xff]
  %v35 = vld [vmem:[%s1 + $0x28] sm:$0xff]
  %v36 = vld [vmem:[%s1 + $0x30] sm:$0xff]
  %v37 = vld [vmem:[%s1 + $0x38] sm:$0xff]
  %v38 = vld [vmem:[%s1 + $0x40] sm:$0xff]
  %v39 = vld [vmem:[%s1 + $0x48] sm:$0xff]
  %v40 = vld [vmem:[%s1 + $0x50] sm:$0xff]
  %v41 = vld [vmem:[%s1 + $0x58] sm:$0xff]
  %v42 = vld [vmem:[%s1 + $0x60] sm:$0xff]
  %v43 = vld [vmem:[%s1 + $0x68] sm:$0xff]
  %v44 = vld [vmem:[%s1 + $0x70] sm:$0xff]
  %v45 = vld [vmem:[%s1 + $0x78] sm:$0xff]
  %46 = vmatprep.subr.mxu0 0.0
  %47 = vmatpush1.xpose.msra.mxu0 %v45
  %48 = vmatprep.subr.mxu0 0.0
  %49 = vmatpush1.xpose.msra.mxu0 %v44
  %50 = vmatprep.subr.mxu0 0.0
  %51 = vmatpush1.xpose.msra.mxu0 %v43
  %52 = vmatprep.subr.mxu0 0.0
  %53 = vmatpush1.xpose.msra.mxu0 %v42
  %54 = vmatprep.subr.mxu0 0.0
  %55 = vmatpush1.xpose.msra.mxu0 %v41
  %56 = vmatprep.subr.mxu0 0.0
  %57 = vmatpush1.xpose.msra.mxu0 %v40
  %58 = vmatprep.subr.mxu0 0.0
  %59 = vmatpush1.xpose.msra.mxu0 %v39
  %60 = vmatprep.subr.mxu0 0.0
  %61 = vmatpush1.xpose.msra.mxu0 %v38
  %62 = vmatprep.subr.mxu0 0.0
  %63 = vmatpush1.xpose.msra.mxu0 %v37
  %64 = vmatprep.subr.mxu0 0.0
  %65 = vmatpush1.xpose.msra.mxu0 %v36
  %66 = vmatprep.subr.mxu0 0.0
  %67 = vmatpush1.xpose.msra.mxu0 %v35
  %68 = vmatprep.subr.mxu0 0.0
  %69 = vmatpush1.xpose.msra.mxu0 %v34
  %70 = vmatprep.subr.mxu0 0.0
  %71 = vmatpush1.xpose.msra.mxu0 %v33
  %72 = vmatprep.subr.mxu0 0.0
  %73 = vmatpush1.xpose.msra.mxu0 %v32
  %74 = vmatprep.subr.mxu0 0.0
  %75 = vmatpush1.xpose.msra.mxu0 %v31
  %76 = vmatprep.subr.mxu0 0.0
  %77 = vmatpush1.xpose.msra.mxu0 %v30
  %78 = vmatprep.subr.mxu0 0.0
  %79 = vmatpush2.xpose.msra.mxu0 0.0
  %80 = vmatprep.subr.mxu0 0.0
  %81 = vmatpush2.xpose.msra.mxu0 0.0
  %82 = vmatprep.subr.mxu0 0.0
  %83 = vmatpush2.xpose.msra.mxu0 0.0
  %84 = vmatprep.subr.mxu0 0.0
  %85 = vmatpush2.xpose.msra.mxu0 0.0
  %86 = vmatprep.subr.mxu0 0.0
  %87 = vmatpush2.xpose.msra.mxu0 0.0
  %88 = vmatprep.subr.mxu0 0.0
  %89 = vmatpush2.xpose.msra.mxu0 0.0
  %90 = vmatprep.subr.mxu0 0.0
  %91 = vmatpush2.xpose.msra.mxu0 0.0
  %92 = vmatprep.subr.mxu0 0.0
  %93 = vmatpush2.xpose.msra.mxu0 0.0
  %94 = vmatprep.subr.mxu0 0.0
  %95 = vmatpush2.xpose.msra.mxu0 0.0
  %96 = vmatprep.subr.mxu0 0.0
  %97 = vmatpush2.xpose.msra.mxu0 0.0
  %98 = vmatprep.subr.mxu0 0.0
  %99 = vmatpush2.xpose.msra.mxu0 0.0
  %100 = vmatprep.subr.mxu0 0.0
  %101 = vmatpush2.xpose.msra.mxu0 0.0
  %102 = vmatprep.subr.mxu0 0.0
  %103 = vmatpush2.xpose.msra.mxu0 0.0
  %104 = vmatprep.subr.mxu0 0.0
  %105 = vmatpush2.xpose.msra.mxu0 0.0
  %106 = vmatprep.subr.mxu0 0.0
  %107 = vmatpush2.xpose.msra.mxu0 0.0
  %108 = vmatprep.subr.mxu0 0.0
  %109 = vmatpush2.xpose.msra.mxu0 0.0
  %110 = vmatprep.mubr.f32.mxu0 0.0
  %111 = vmatmul.mubr.f32.gmra.mxu0 %v26
  %v112 = vpop.f32.mrf.mxu0
  %v113 = vadd.f32 0.0, %v112
  %v114 = vpop.f32.mrf.mxu0
  %115 = vmatprep.mubr.f32.mxu0 0.0
  %116 = vmatmul.mubr.f32.gmra.mxu0 %v27
  %v117 = vpop.f32.mrf.mxu0
  %v118 = vadd.f32 0.0, %v117
  %v119 = vpop.f32.mrf.mxu0
  %120 = vmatprep.mubr.f32.mxu0 0.0
  %121 = vmatmul.mubr.f32.gmra.mxu0 %v28
  %v122 = vpop.f32.mrf.mxu0
  %v123 = vadd.f32 0.0, %v122
  %v124 = vpop.f32.mrf.mxu0
  %125 = vmatprep.mubr.f32.mxu0 0.0
  %126 = vmatmul.mubr.f32.gmra.mxu0 %v29
  %v127 = vpop.f32.mrf.mxu0
  %v128 = vadd.f32 0.0, %v127
  %v129 = vpop.f32.mrf.mxu0
  %130 = vdwg.mxu0
  %v131 = vadd.f32 %v22, %v113
  %v132 = vadd.f32 %v23, %v118
  %v133 = vadd.f32 %v24, %v123
  %v134 = vadd.f32 %v25, %v128
  %135 = vst [vmem:[#allocation2] sm:$0xff] %v131
  %136 = vst [vmem:[#allocation2 + $0x8] sm:$0xff] %v132
  %137 = vst [vmem:[#allocation2 + $0x10] sm:$0xff] %v133
  %138 = vst [vmem:[#allocation2 + $0x18] sm:$0xff] %v134
  // Predicated region
  $region18: #{disentangled_transformer_layer.16} parent=0 // pred_check
    %p139 = pneg %p14
  $region19: #{disentangled_transformer_layer.16} parent=0 // pred_check_branch
    %141 = sbr.rel (%p139) target = $region21
  $region20: #{disentangled_transformer_layer.16} parent=0 // pred_region
    %v142 = vld [vmem:[#allocation2] sm:$0xff]
    %v143 = vld [vmem:[#allocation2 + $0x8] sm:$0xff]
    %v144 = vld [vmem:[#allocation2 + $0x10] sm:$0xff]
    %v145 = vld [vmem:[#allocation2 + $0x18] sm:$0xff]
    %v146 = vld [vmem:[%s2] sm:$0x1]
    %v148 = vlaneseq
    %v149 = vshrl.u32 %v148, 7
    %v150 = vsub.s32 0, %v149
    %v151 = vrot.slane %v146, %v150
    %v153 = vadd.f32 %v142, %v151
    %v154 = vadd.f32 %v143, %v151
    %v155 = vadd.f32 %v144, %v151
    %v156 = vadd.f32 %v145, %v151
    %157 = vst [vmem:[%s3] sm:$0xff] %v153
    %158 = vst [vmem:[%s3 + $0x8] sm:$0xff] %v154
    %159 = vst [vmem:[%s3 + $0x10] sm:$0xff] %v155
    %160 = vst [vmem:[%s3 + $0x18] sm:$0xff] %v156
  $region21: #{disentangled_transformer_layer.16} parent=0 // pred_fallthru
    _
  // Predicated region
  $region22: #{disentangled_transformer_layer.16} parent=0 // pred_check
    _
  $region23: #{disentangled_transformer_layer.16} parent=0 // pred_check_branch
    %162 = sbr.rel (0) target = $region25
  $region24: #{disentangled_transformer_layer.16} parent=0 // pred_region
    _
  $region25: #{disentangled_transformer_layer.16} parent=0 // pred_fallthru
    _
  // Predicated region
  $region26: #{disentangled_transformer_layer.16} parent=0 // pred_check
    _
  $region27: #{disentangled_transformer_layer.16} parent=0 // pred_check_branch
    %164 = sbr.rel (0) target = $region29
  $region28: #{disentangled_transformer_layer.16} parent=0 // pred_region
    _
  $region29: #{disentangled_transformer_layer.16} parent=0 // pred_fallthru
    _

// kernel: disentangled_transformer_layer.18
$region0: #{disentangled_transformer_layer.18}
  #allocation0 [shape = 'u32[]', space=smem, size = 0x4, offset = 0x4, fixed_abs, tag = 'smem constant byte address 0x4 - core index']
  #allocation1 [shape = 'u32[144,128]{1,0:T(1,128)}', space=vmem, size = 0x12000, scoped, tag = 'internal scratch']
  %s0 = inlined_call_operand.vmem [shape: f32[32,128], index: 0, kind: input, shape index: {}]
  %s1 = inlined_call_operand.vmem [shape: f32[32,128], index: 1, kind: input, shape index: {}]
  %s2 = inlined_call_operand.vmem [shape: f32[32,128], index: 2, kind: input, shape index: {}]
  %s3 = inlined_call_operand.vmem [shape: f32[32,128], index: 3, kind: output, shape index: {}]
  %s4 = sld [smem:[#allocation0]]
  $region22: #{disentangled_transformer_layer.18} parent=0
    _
  %s6 = ssub.s32 1, %s4
  %s7 = scalar_select 0, %s6, %s4
  // Predicated region
  $region2: #{disentangled_transformer_layer.18} parent=0 // pred_check
    _
  $region3: #{disentangled_transformer_layer.18} parent=0 // pred_check_branch
    %9 = sbr.rel (0) target = $region5
  $region4: #{disentangled_transformer_layer.18} parent=0 // pred_region
    _
  $region5: #{disentangled_transformer_layer.18} parent=0 // pred_fallthru
    _
  // Predicated region
  $region6: #{disentangled_transformer_layer.18} parent=0 // pred_check
    _
  $region7: #{disentangled_transformer_layer.18} parent=0 // pred_check_branch
    %11 = sbr.rel (0) target = $region9
  $region8: #{disentangled_transformer_layer.18} parent=0 // pred_region
    _
  $region9: #{disentangled_transformer_layer.18} parent=0 // pred_fallthru
    _
  // Predicated region
  $region10: #{disentangled_transformer_layer.18} parent=0 // pred_check
    _
  $region11: #{disentangled_transformer_layer.18} parent=0 // pred_check_branch
    %13 = sbr.rel (0) target = $region13
  $region12: #{disentangled_transformer_layer.18} parent=0 // pred_region
    _
  $region13: #{disentangled_transformer_layer.18} parent=0 // pred_fallthru
    _
  %v14 = vld [vmem:[%s0] sm:$0xff]
  %v15 = vld [vmem:[%s0 + $0x8] sm:$0xff]
  %v16 = vld [vmem:[%s0 + $0x10] sm:$0xff]
  %v17 = vld [vmem:[%s0 + $0x18] sm:$0xff]
  %v18 = vld [vmem:[%s1] sm:$0xff]
  %v19 = vld [vmem:[%s1 + $0x8] sm:$0xff]
  %v20 = vld [vmem:[%s1 + $0x10] sm:$0xff]
  %v21 = vld [vmem:[%s1 + $0x18] sm:$0xff]
  %v22 = vld [vmem:[%s2] sm:$0xff]
  %v23 = vld [vmem:[%s2 + $0x8] sm:$0xff]
  %v24 = vld [vmem:[%s2 + $0x10] sm:$0xff]
  %v25 = vld [vmem:[%s2 + $0x18] sm:$0xff]
  %v26 = vmul.f32 %v14, %v18
  %v27 = vmul.f32 %v15, %v19
  %v28 = vmul.f32 %v16, %v20
  %v29 = vmul.f32 %v17, %v21
  %vm30 = vcmask 261120
  %v31 = vsel %vm30, %v26, 0.0
  %32 = vadd.xlane.f32.xlu0 %v31
  %v33 = vpop.xlane.xlu0 %32
  %v34 = vsel %vm30, %v27, 0.0
  %35 = vadd.xlane.f32.xlu0 %v34
  %v36 = vpop.xlane.xlu0 %35
  %v37 = vsel %vm30, %v28, 0.0
  %38 = vadd.xlane.f32.xlu0 %v37
  %v39 = vpop.xlane.xlu0 %38
  %v40 = vsel %vm30, %v29, 0.0
  %41 = vadd.xlane.f32.xlu0 %v40
  %v42 = vpop.xlane.xlu0 %41
  %v43 = vmul.f32 %v33, 0.17677669
  %v44 = vmul.f32 %v36, 0.17677669
  %v45 = vmul.f32 %v39, 0.17677669
  %v46 = vmul.f32 %v42, 0.17677669
  %51 = vrot.lane.b32.xlu0 %v18, 96
  %v52 = vpop.permute.xlu0 %51
  %53 = vrot.lane.b32.xlu0 %v19, 96
  %v54 = vpop.permute.xlu0 %53
  %55 = vrot.lane.b32.xlu0 %v20, 96
  %v56 = vpop.permute.xlu0 %55
  %57 = vrot.lane.b32.xlu0 %v21, 96
  %v58 = vpop.permute.xlu0 %57
  %v63 = vmul.f32 %v14, %v52
  %v64 = vmul.f32 %v15, %v54
  %v65 = vmul.f32 %v16, %v56
  %v66 = vmul.f32 %v17, %v58
  %v67 = vsel %vm30, %v63, 0.0
  %68 = vadd.xlane.f32.xlu0 %v67
  %v69 = vpop.xlane.xlu0 %68
  %v70 = vsel %vm30, %v64, 0.0
  %71 = vadd.xlane.f32.xlu0 %v70
  %v72 = vpop.xlane.xlu0 %71
  %v73 = vsel %vm30, %v65, 0.0
  %74 = vadd.xlane.f32.xlu0 %v73
  %v75 = vpop.xlane.xlu0 %74
  %v76 = vsel %vm30, %v66, 0.0
  %77 = vadd.xlane.f32.xlu0 %v76
  %v78 = vpop.xlane.xlu0 %77
  %v79 = vmul.f32 %v69, 0.17677669
  %v80 = vmul.f32 %v72, 0.17677669
  %v81 = vmul.f32 %v75, 0.17677669
  %v82 = vmul.f32 %v78, 0.17677669
  %83 = vrot.lane.b32.xlu0 %v18, 64
  %v84 = vpop.permute.xlu0 %83
  %85 = vrot.lane.b32.xlu0 %v19, 64
  %v86 = vpop.permute.xlu0 %85
  %87 = vrot.lane.b32.xlu0 %v20, 64
  %v88 = vpop.permute.xlu0 %87
  %89 = vrot.lane.b32.xlu0 %v21, 64
  %v90 = vpop.permute.xlu0 %89
  %v95 = vmul.f32 %v14, %v84
  %v96 = vmul.f32 %v15, %v86
  %v97 = vmul.f32 %v16, %v88
  %v98 = vmul.f32 %v17, %v90
  %v99 = vsel %vm30, %v95, 0.0
  %100 = vadd.xlane.f32.xlu0 %v99
  %v101 = vpop.xlane.xlu0 %100
  %v102 = vsel %vm30, %v96, 0.0
  %103 = vadd.xlane.f32.xlu0 %v102
  %v104 = vpop.xlane.xlu0 %103
  %v105 = vsel %vm30, %v97, 0.0
  %106 = vadd.xlane.f32.xlu0 %v105
  %v107 = vpop.xlane.xlu0 %106
  %v108 = vsel %vm30, %v98, 0.0
  %109 = vadd.xlane.f32.xlu0 %v108
  %v110 = vpop.xlane.xlu0 %109
  %v111 = vmul.f32 %v101, 0.17677669
  %v112 = vmul.f32 %v104, 0.17677669
  %v113 = vmul.f32 %v107, 0.17677669
  %v114 = vmul.f32 %v110, 0.17677669
  %115 = vrot.lane.b32.xlu0 %v18, 32
  %v116 = vpop.permute.xlu0 %115
  %117 = vrot.lane.b32.xlu0 %v19, 32
  %v118 = vpop.permute.xlu0 %117
  %119 = vrot.lane.b32.xlu0 %v20, 32
  %v120 = vpop.permute.xlu0 %119
  %121 = vrot.lane.b32.xlu0 %v21, 32
  %v122 = vpop.permute.xlu0 %121
  %v127 = vmul.f32 %v14, %v116
  %v128 = vmul.f32 %v15, %v118
  %v129 = vmul.f32 %v16, %v120
  %v130 = vmul.f32 %v17, %v122
  %v131 = vsel %vm30, %v127, 0.0
  %132 = vadd.xlane.f32.xlu0 %v131
  %v133 = vpop.xlane.xlu0 %132
  %v134 = vsel %vm30, %v128, 0.0
  %135 = vadd.xlane.f32.xlu0 %v134
  %v136 = vpop.xlane.xlu0 %135
  %v137 = vsel %vm30, %v129, 0.0
  %138 = vadd.xlane.f32.xlu0 %v137
  %v139 = vpop.xlane.xlu0 %138
  %v140 = vsel %vm30, %v130, 0.0
  %141 = vadd.xlane.f32.xlu0 %v140
  %v142 = vpop.xlane.xlu0 %141
  %v143 = vmul.f32 %v133, 0.17677669
  %v144 = vmul.f32 %v136, 0.17677669
  %v145 = vmul.f32 %v139, 0.17677669
  %v146 = vmul.f32 %v142, 0.17677669
  %151 = vrot.lane.b32.xlu0 %v127, 96
  %v152 = vpop.permute.xlu0 %151
  %153 = vrot.lane.b32.xlu0 %v128, 96
  %v154 = vpop.permute.xlu0 %153
  %155 = vrot.lane.b32.xlu0 %v129, 96
  %v156 = vpop.permute.xlu0 %155
  %157 = vrot.lane.b32.xlu0 %v130, 96
  %v158 = vpop.permute.xlu0 %157
  %v163 = vsel %vm30, %v152, 0.0
  %164 = vadd.xlane.f32.xlu0 %v163
  %v165 = vpop.xlane.xlu0 %164
  %v166 = vsel %vm30, %v154, 0.0
  %167 = vadd.xlane.f32.xlu0 %v166
  %v168 = vpop.xlane.xlu0 %167
  %v169 = vsel %vm30, %v156, 0.0
  %170 = vadd.xlane.f32.xlu0 %v169
  %v171 = vpop.xlane.xlu0 %170
  %v172 = vsel %vm30, %v158, 0.0
  %173 = vadd.xlane.f32.xlu0 %v172
  %v174 = vpop.xlane.xlu0 %173
  %v175 = vmul.f32 %v165, 0.17677669
  %v176 = vmul.f32 %v168, 0.17677669
  %v177 = vmul.f32 %v171, 0.17677669
  %v178 = vmul.f32 %v174, 0.17677669
  %183 = vrot.lane.b32.xlu0 %v26, 96
  %v184 = vpop.permute.xlu0 %183
  %185 = vrot.lane.b32.xlu0 %v27, 96
  %v186 = vpop.permute.xlu0 %185
  %187 = vrot.lane.b32.xlu0 %v28, 96
  %v188 = vpop.permute.xlu0 %187
  %189 = vrot.lane.b32.xlu0 %v29, 96
  %v190 = vpop.permute.xlu0 %189
  %v195 = vsel %vm30, %v184, 0.0
  %196 = vadd.xlane.f32.xlu0 %v195
  %v197 = vpop.xlane.xlu0 %196
  %v198 = vsel %vm30, %v186, 0.0
  %199 = vadd.xlane.f32.xlu0 %v198
  %v200 = vpop.xlane.xlu0 %199
  %v201 = vsel %vm30, %v188, 0.0
  %202 = vadd.xlane.f32.xlu0 %v201
  %v203 = vpop.xlane.xlu0 %202
  %v204 = vsel %vm30, %v190, 0.0
  %205 = vadd.xlane.f32.xlu0 %v204
  %v206 = vpop.xlane.xlu0 %205
  %v207 = vmul.f32 %v197, 0.17677669
  %v208 = vmul.f32 %v200, 0.17677669
  %v209 = vmul.f32 %v203, 0.17677669
  %v210 = vmul.f32 %v206, 0.17677669
  %215 = vrot.lane.b32.xlu0 %v63, 96
  %v216 = vpop.permute.xlu0 %215
  %217 = vrot.lane.b32.xlu0 %v64, 96
  %v218 = vpop.permute.xlu0 %217
  %219 = vrot.lane.b32.xlu0 %v65, 96
  %v220 = vpop.permute.xlu0 %219
  %221 = vrot.lane.b32.xlu0 %v66, 96
  %v222 = vpop.permute.xlu0 %221
  %v227 = vsel %vm30, %v216, 0.0
  %228 = vadd.xlane.f32.xlu0 %v227
  %v229 = vpop.xlane.xlu0 %228
  %v230 = vsel %vm30, %v218, 0.0
  %231 = vadd.xlane.f32.xlu0 %v230
  %v232 = vpop.xlane.xlu0 %231
  %v233 = vsel %vm30, %v220, 0.0
  %234 = vadd.xlane.f32.xlu0 %v233
  %v235 = vpop.xlane.xlu0 %234
  %v236 = vsel %vm30, %v222, 0.0
  %237 = vadd.xlane.f32.xlu0 %v236
  %v238 = vpop.xlane.xlu0 %237
  %v239 = vmul.f32 %v229, 0.17677669
  %v240 = vmul.f32 %v232, 0.17677669
  %v241 = vmul.f32 %v235, 0.17677669
  %v242 = vmul.f32 %v238, 0.17677669
  %247 = vrot.lane.b32.xlu0 %v95, 96
  %v248 = vpop.permute.xlu0 %247
  %249 = vrot.lane.b32.xlu0 %v96, 96
  %v250 = vpop.permute.xlu0 %249
  %251 = vrot.lane.b32.xlu0 %v97, 96
  %v252 = vpop.permute.xlu0 %251
  %253 = vrot.lane.b32.xlu0 %v98, 96
  %v254 = vpop.permute.xlu0 %253
  %v259 = vsel %vm30, %v248, 0.0
  %260 = vadd.xlane.f32.xlu0 %v259
  %v261 = vpop.xlane.xlu0 %260
  %v262 = vsel %vm30, %v250, 0.0
  %263 = vadd.xlane.f32.xlu0 %v262
  %v264 = vpop.xlane.xlu0 %263
  %v265 = vsel %vm30, %v252, 0.0
  %266 = vadd.xlane.f32.xlu0 %v265
  %v267 = vpop.xlane.xlu0 %266
  %v268 = vsel %vm30, %v254, 0.0
  %269 = vadd.xlane.f32.xlu0 %v268
  %v270 = vpop.xlane.xlu0 %269
  %v271 = vmul.f32 %v261, 0.17677669
  %v272 = vmul.f32 %v264, 0.17677669
  %v273 = vmul.f32 %v267, 0.17677669
  %v274 = vmul.f32 %v270, 0.17677669
  %275 = vrot.lane.b32.xlu0 %v95, 64
  %v276 = vpop.permute.xlu0 %275
  %277 = vrot.lane.b32.xlu0 %v96, 64
  %v278 = vpop.permute.xlu0 %277
  %279 = vrot.lane.b32.xlu0 %v97, 64
  %v280 = vpop.permute.xlu0 %279
  %281 = vrot.lane.b32.xlu0 %v98, 64
  %v282 = vpop.permute.xlu0 %281
  %v287 = vsel %vm30, %v276, 0.0
  %288 = vadd.xlane.f32.xlu0 %v287
  %v289 = vpop.xlane.xlu0 %288
  %v290 = vsel %vm30, %v278, 0.0
  %291 = vadd.xlane.f32.xlu0 %v290
  %v292 = vpop.xlane.xlu0 %291
  %v293 = vsel %vm30, %v280, 0.0
  %294 = vadd.xlane.f32.xlu0 %v293
  %v295 = vpop.xlane.xlu0 %294
  %v296 = vsel %vm30, %v282, 0.0
  %297 = vadd.xlane.f32.xlu0 %v296
  %v298 = vpop.xlane.xlu0 %297
  %v299 = vmul.f32 %v289, 0.17677669
  %v300 = vmul.f32 %v292, 0.17677669
  %v301 = vmul.f32 %v295, 0.17677669
  %v302 = vmul.f32 %v298, 0.17677669
  %303 = vrot.lane.b32.xlu0 %v127, 64
  %v304 = vpop.permute.xlu0 %303
  %305 = vrot.lane.b32.xlu0 %v128, 64
  %v306 = vpop.permute.xlu0 %305
  %307 = vrot.lane.b32.xlu0 %v129, 64
  %v308 = vpop.permute.xlu0 %307
  %309 = vrot.lane.b32.xlu0 %v130, 64
  %v310 = vpop.permute.xlu0 %309
  %v315 = vsel %vm30, %v304, 0.0
  %316 = vadd.xlane.f32.xlu0 %v315
  %v317 = vpop.xlane.xlu0 %316
  %v318 = vsel %vm30, %v306, 0.0
  %319 = vadd.xlane.f32.xlu0 %v318
  %v320 = vpop.xlane.xlu0 %319
  %v321 = vsel %vm30, %v308, 0.0
  %322 = vadd.xlane.f32.xlu0 %v321
  %v323 = vpop.xlane.xlu0 %322
  %v324 = vsel %vm30, %v310, 0.0
  %325 = vadd.xlane.f32.xlu0 %v324
  %v326 = vpop.xlane.xlu0 %325
  %v327 = vmul.f32 %v317, 0.17677669
  %v328 = vmul.f32 %v320, 0.17677669
  %v329 = vmul.f32 %v323, 0.17677669
  %v330 = vmul.f32 %v326, 0.17677669
  %331 = vrot.lane.b32.xlu0 %v26, 64
  %v332 = vpop.permute.xlu0 %331
  %333 = vrot.lane.b32.xlu0 %v27, 64
  %v334 = vpop.permute.xlu0 %333
  %335 = vrot.lane.b32.xlu0 %v28, 64
  %v336 = vpop.permute.xlu0 %335
  %337 = vrot.lane.b32.xlu0 %v29, 64
  %v338 = vpop.permute.xlu0 %337
  %v343 = vsel %vm30, %v332, 0.0
  %344 = vadd.xlane.f32.xlu0 %v343
  %v345 = vpop.xlane.xlu0 %344
  %v346 = vsel %vm30, %v334, 0.0
  %347 = vadd.xlane.f32.xlu0 %v346
  %v348 = vpop.xlane.xlu0 %347
  %v349 = vsel %vm30, %v336, 0.0
  %350 = vadd.xlane.f32.xlu0 %v349
  %v351 = vpop.xlane.xlu0 %350
  %v352 = vsel %vm30, %v338, 0.0
  %353 = vadd.xlane.f32.xlu0 %v352
  %v354 = vpop.xlane.xlu0 %353
  %v355 = vmul.f32 %v345, 0.17677669
  %v356 = vmul.f32 %v348, 0.17677669
  %v357 = vmul.f32 %v351, 0.17677669
  %v358 = vmul.f32 %v354, 0.17677669
  %359 = vrot.lane.b32.xlu0 %v63, 64
  %v360 = vpop.permute.xlu0 %359
  %361 = vrot.lane.b32.xlu0 %v64, 64
  %v362 = vpop.permute.xlu0 %361
  %363 = vrot.lane.b32.xlu0 %v65, 64
  %v364 = vpop.permute.xlu0 %363
  %365 = vrot.lane.b32.xlu0 %v66, 64
  %v366 = vpop.permute.xlu0 %365
  %v371 = vsel %vm30, %v360, 0.0
  %372 = vadd.xlane.f32.xlu0 %v371
  %v373 = vpop.xlane.xlu0 %372
  %v374 = vsel %vm30, %v362, 0.0
  %375 = vadd.xlane.f32.xlu0 %v374
  %v376 = vpop.xlane.xlu0 %375
  %v377 = vsel %vm30, %v364, 0.0
  %378 = vadd.xlane.f32.xlu0 %v377
  %v379 = vpop.xlane.xlu0 %378
  %v380 = vsel %vm30, %v366, 0.0
  %381 = vadd.xlane.f32.xlu0 %v380
  %v382 = vpop.xlane.xlu0 %381
  %v383 = vmul.f32 %v373, 0.17677669
  %v384 = vmul.f32 %v376, 0.17677669
  %v385 = vmul.f32 %v379, 0.17677669
  %v386 = vmul.f32 %v382, 0.17677669
  %387 = vrot.lane.b32.xlu0 %v63, 32
  %v388 = vpop.permute.xlu0 %387
  %389 = vrot.lane.b32.xlu0 %v64, 32
  %v390 = vpop.permute.xlu0 %389
  %391 = vrot.lane.b32.xlu0 %v65, 32
  %v392 = vpop.permute.xlu0 %391
  %393 = vrot.lane.b32.xlu0 %v66, 32
  %v394 = vpop.permute.xlu0 %393
  %v399 = vsel %vm30, %v388, 0.0
  %400 = vadd.xlane.f32.xlu0 %v399
  %v401 = vpop.xlane.xlu0 %400
  %v402 = vsel %vm30, %v390, 0.0
  %403 = vadd.xlane.f32.xlu0 %v402
  %v404 = vpop.xlane.xlu0 %403
  %v405 = vsel %vm30, %v392, 0.0
  %406 = vadd.xlane.f32.xlu0 %v405
  %v407 = vpop.xlane.xlu0 %406
  %v408 = vsel %vm30, %v394, 0.0
  %409 = vadd.xlane.f32.xlu0 %v408
  %v410 = vpop.xlane.xlu0 %409
  %v411 = vmul.f32 %v401, 0.17677669
  %v412 = vmul.f32 %v404, 0.17677669
  %v413 = vmul.f32 %v407, 0.17677669
  %v414 = vmul.f32 %v410, 0.17677669
  %415 = vrot.lane.b32.xlu0 %v95, 32
  %v416 = vpop.permute.xlu0 %415
  %417 = vrot.lane.b32.xlu0 %v96, 32
  %v418 = vpop.permute.xlu0 %417
  %419 = vrot.lane.b32.xlu0 %v97, 32
  %v420 = vpop.permute.xlu0 %419
  %421 = vrot.lane.b32.xlu0 %v98, 32
  %v422 = vpop.permute.xlu0 %421
  %v427 = vsel %vm30, %v416, 0.0
  %428 = vadd.xlane.f32.xlu0 %v427
  %v429 = vpop.xlane.xlu0 %428
  %v430 = vsel %vm30, %v418, 0.0
  %431 = vadd.xlane.f32.xlu0 %v430
  %v432 = vpop.xlane.xlu0 %431
  %v433 = vsel %vm30, %v420, 0.0
  %434 = vadd.xlane.f32.xlu0 %v433
  %v435 = vpop.xlane.xlu0 %434
  %v436 = vsel %vm30, %v422, 0.0
  %437 = vadd.xlane.f32.xlu0 %v436
  %v438 = vpop.xlane.xlu0 %437
  %v439 = vmul.f32 %v429, 0.17677669
  %v440 = vmul.f32 %v432, 0.17677669
  %v441 = vmul.f32 %v435, 0.17677669
  %v442 = vmul.f32 %v438, 0.17677669
  %443 = vrot.lane.b32.xlu0 %v127, 32
  %v444 = vpop.permute.xlu0 %443
  %445 = vrot.lane.b32.xlu0 %v128, 32
  %v446 = vpop.permute.xlu0 %445
  %447 = vrot.lane.b32.xlu0 %v129, 32
  %v448 = vpop.permute.xlu0 %447
  %449 = vrot.lane.b32.xlu0 %v130, 32
  %v450 = vpop.permute.xlu0 %449
  %v455 = vsel %vm30, %v444, 0.0
  %456 = vadd.xlane.f32.xlu0 %v455
  %v457 = vpop.xlane.xlu0 %456
  %v458 = vsel %vm30, %v446, 0.0
  %459 = vadd.xlane.f32.xlu0 %v458
  %v460 = vpop.xlane.xlu0 %459
  %v461 = vsel %vm30, %v448, 0.0
  %462 = vadd.xlane.f32.xlu0 %v461
  %v463 = vpop.xlane.xlu0 %462
  %v464 = vsel %vm30, %v450, 0.0
  %465 = vadd.xlane.f32.xlu0 %v464
  %v466 = vpop.xlane.xlu0 %465
  %v467 = vmul.f32 %v457, 0.17677669
  %v468 = vmul.f32 %v460, 0.17677669
  %v469 = vmul.f32 %v463, 0.17677669
  %v470 = vmul.f32 %v466, 0.17677669
  %471 = vrot.lane.b32.xlu0 %v26, 32
  %v472 = vpop.permute.xlu0 %471
  %473 = vrot.lane.b32.xlu0 %v27, 32
  %v474 = vpop.permute.xlu0 %473
  %475 = vrot.lane.b32.xlu0 %v28, 32
  %v476 = vpop.permute.xlu0 %475
  %477 = vrot.lane.b32.xlu0 %v29, 32
  %v478 = vpop.permute.xlu0 %477
  %v483 = vsel %vm30, %v472, 0.0
  %484 = vadd.xlane.f32.xlu0 %v483
  %v485 = vpop.xlane.xlu0 %484
  %v486 = vsel %vm30, %v474, 0.0
  %487 = vadd.xlane.f32.xlu0 %v486
  %v488 = vpop.xlane.xlu0 %487
  %v489 = vsel %vm30, %v476, 0.0
  %490 = vadd.xlane.f32.xlu0 %v489
  %v491 = vpop.xlane.xlu0 %490
  %v492 = vsel %vm30, %v478, 0.0
  %493 = vadd.xlane.f32.xlu0 %v492
  %v494 = vpop.xlane.xlu0 %493
  %v495 = vmul.f32 %v485, 0.17677669
  %v496 = vmul.f32 %v488, 0.17677669
  %v497 = vmul.f32 %v491, 0.17677669
  %v498 = vmul.f32 %v494, 0.17677669
  %v499 = vmax.f32 %v43, %v79
  %v500 = vmax.f32 %v44, %v80
  %v501 = vmax.f32 %v45, %v81
  %v502 = vmax.f32 %v46, %v82
  %v503 = vmax.f32 %v499, %v111
  %v504 = vmax.f32 %v500, %v112
  %v505 = vmax.f32 %v501, %v113
  %v506 = vmax.f32 %v502, %v114
  %v507 = vmax.f32 %v503, %v143
  %v508 = vmax.f32 %v504, %v144
  %v509 = vmax.f32 %v505, %v145
  %v510 = vmax.f32 %v506, %v146
  %v511 = vsub.f32 %v43, %v507
  %v512 = vsub.f32 %v44, %v508
  %v513 = vsub.f32 %v45, %v509
  %v514 = vsub.f32 %v46, %v510
  %v515 = vmul.f32 %v511, 1.442695
  %v516 = vpow.pop %v515
  %v517 = vmul.f32 %v512, 1.442695
  %v518 = vpow.pop %v517
  %v519 = vmul.f32 %v513, 1.442695
  %v520 = vpow.pop %v519
  %v521 = vmul.f32 %v514, 1.442695
  %v522 = vpow.pop %v521
  %v523 = vsub.f32 %v79, %v507
  %v524 = vsub.f32 %v80, %v508
  %v525 = vsub.f32 %v81, %v509
  %v526 = vsub.f32 %v82, %v510
  %v527 = vmul.f32 %v523, 1.442695
  %v528 = vpow.pop %v527
  %v529 = vmul.f32 %v524, 1.442695
  %v530 = vpow.pop %v529
  %v531 = vmul.f32 %v525, 1.442695
  %v532 = vpow.pop %v531
  %v533 = vmul.f32 %v526, 1.442695
  %v534 = vpow.pop %v533
  %v535 = vsub.f32 %v111, %v507
  %v536 = vsub.f32 %v112, %v508
  %v537 = vsub.f32 %v113, %v509
  %v538 = vsub.f32 %v114, %v510
  %v539 = vmul.f32 %v535, 1.442695
  %v540 = vpow.pop %v539
  %v541 = vmul.f32 %v536, 1.442695
  %v542 = vpow.pop %v541
  %v543 = vmul.f32 %v537, 1.442695
  %v544 = vpow.pop %v543
  %v545 = vmul.f32 %v538, 1.442695
  %v546 = vpow.pop %v545
  %v547 = vsub.f32 %v143, %v507
  %v548 = vsub.f32 %v144, %v508
  %v549 = vsub.f32 %v145, %v509
  %v550 = vsub.f32 %v146, %v510
  %v551 = vmul.f32 %v547, 1.442695
  %v552 = vpow.pop %v551
  %v553 = vmul.f32 %v548, 1.442695
  %v554 = vpow.pop %v553
  %v555 = vmul.f32 %v549, 1.442695
  %v556 = vpow.pop %v555
  %v557 = vmul.f32 %v550, 1.442695
  %v558 = vpow.pop %v557
  %v559 = vadd.f32 %v516, %v528
  %v560 = vadd.f32 %v518, %v530
  %v561 = vadd.f32 %v520, %v532
  %v562 = vadd.f32 %v522, %v534
  %v563 = vadd.f32 %v559, %v540
  %v564 = vadd.f32 %v560, %v542
  %v565 = vadd.f32 %v561, %v544
  %v566 = vadd.f32 %v562, %v546
  %v567 = vadd.f32 %v563, %v552
  %v568 = vadd.f32 %v564, %v554
  %v569 = vadd.f32 %v565, %v556
  %v570 = vadd.f32 %v566, %v558
  %v571 = vrcp.pop %v567
  %v572 = vmul.f32 1.0, %v571
  %v573 = vrcp.pop %v568
  %v574 = vmul.f32 1.0, %v573
  %v575 = vrcp.pop %v569
  %v576 = vmul.f32 1.0, %v575
  %v577 = vrcp.pop %v570
  %v578 = vmul.f32 1.0, %v577
  %v579 = vmul.f32 %v516, %v572
  %v580 = vmul.f32 %v518, %v574
  %v581 = vmul.f32 %v520, %v576
  %v582 = vmul.f32 %v522, %v578
  %v583 = vmul.f32 %v579, %v22
  %v584 = vmul.f32 %v580, %v23
  %v585 = vmul.f32 %v581, %v24
  %v586 = vmul.f32 %v582, %v25
  %v587 = vmul.f32 %v528, %v572
  %v588 = vmul.f32 %v530, %v574
  %v589 = vmul.f32 %v532, %v576
  %v590 = vmul.f32 %v534, %v578
  %v591 = vmul.f32 %v587, %v22
  %v592 = vmul.f32 %v588, %v23
  %v593 = vmul.f32 %v589, %v24
  %v594 = vmul.f32 %v590, %v25
  %599 = vrot.lane.b32.xlu0 %v591, 96
  %v600 = vpop.permute.xlu0 %599
  %601 = vrot.lane.b32.xlu0 %v592, 96
  %v602 = vpop.permute.xlu0 %601
  %603 = vrot.lane.b32.xlu0 %v593, 96
  %v604 = vpop.permute.xlu0 %603
  %605 = vrot.lane.b32.xlu0 %v594, 96
  %v606 = vpop.permute.xlu0 %605
  %v611 = vadd.f32 %v583, %v600
  %v612 = vadd.f32 %v584, %v602
  %v613 = vadd.f32 %v585, %v604
  %v614 = vadd.f32 %v586, %v606
  %v615 = vmul.f32 %v540, %v572
  %v616 = vmul.f32 %v542, %v574
  %v617 = vmul.f32 %v544, %v576
  %v618 = vmul.f32 %v546, %v578
  %v619 = vmul.f32 %v615, %v22
  %v620 = vmul.f32 %v616, %v23
  %v621 = vmul.f32 %v617, %v24
  %v622 = vmul.f32 %v618, %v25
  %627 = vrot.lane.b32.xlu0 %v619, 64
  %v628 = vpop.permute.xlu0 %627
  %629 = vrot.lane.b32.xlu0 %v620, 64
  %v630 = vpop.permute.xlu0 %629
  %631 = vrot.lane.b32.xlu0 %v621, 64
  %v632 = vpop.permute.xlu0 %631
  %633 = vrot.lane.b32.xlu0 %v622, 64
  %v634 = vpop.permute.xlu0 %633
  %v639 = vadd.f32 %v611, %v628
  %v640 = vadd.f32 %v612, %v630
  %v641 = vadd.f32 %v613, %v632
  %v642 = vadd.f32 %v614, %v634
  %v643 = vmul.f32 %v552, %v572
  %v644 = vmul.f32 %v554, %v574
  %v645 = vmul.f32 %v556, %v576
  %v646 = vmul.f32 %v558, %v578
  %v647 = vmul.f32 %v643, %v22
  %v648 = vmul.f32 %v644, %v23
  %v649 = vmul.f32 %v645, %v24
  %v650 = vmul.f32 %v646, %v25
  %655 = vrot.lane.b32.xlu0 %v647, 32
  %v656 = vpop.permute.xlu0 %655
  %657 = vrot.lane.b32.xlu0 %v648, 32
  %v658 = vpop.permute.xlu0 %657
  %659 = vrot.lane.b32.xlu0 %v649, 32
  %v660 = vpop.permute.xlu0 %659
  %661 = vrot.lane.b32.xlu0 %v650, 32
  %v662 = vpop.permute.xlu0 %661
  %v667 = vadd.f32 %v639, %v656
  %v668 = vadd.f32 %v640, %v658
  %v669 = vadd.f32 %v641, %v660
  %v670 = vadd.f32 %v642, %v662
  %v671 = vmax.f32 %v175, %v207
  %v672 = vmax.f32 %v176, %v208
  %v673 = vmax.f32 %v177, %v209
  %v674 = vmax.f32 %v178, %v210
  %v675 = vmax.f32 %v671, %v239
  %v676 = vmax.f32 %v672, %v240
  %v677 = vmax.f32 %v673, %v241
  %v678 = vmax.f32 %v674, %v242
  %v679 = vmax.f32 %v675, %v271
  %v680 = vmax.f32 %v676, %v272
  %v681 = vmax.f32 %v677, %v273
  %v682 = vmax.f32 %v678, %v274
  %v683 = vsub.f32 %v175, %v679
  %v684 = vsub.f32 %v176, %v680
  %v685 = vsub.f32 %v177, %v681
  %v686 = vsub.f32 %v178, %v682
  %v687 = vmul.f32 %v683, 1.442695
  %v688 = vpow.pop %v687
  %v689 = vmul.f32 %v684, 1.442695
  %v690 = vpow.pop %v689
  %v691 = vmul.f32 %v685, 1.442695
  %v692 = vpow.pop %v691
  %v693 = vmul.f32 %v686, 1.442695
  %v694 = vpow.pop %v693
  %v695 = vsub.f32 %v207, %v679
  %v696 = vsub.f32 %v208, %v680
  %v697 = vsub.f32 %v209, %v681
  %v698 = vsub.f32 %v210, %v682
  %v699 = vmul.f32 %v695, 1.442695
  %v700 = vpow.pop %v699
  %v701 = vmul.f32 %v696, 1.442695
  %v702 = vpow.pop %v701
  %v703 = vmul.f32 %v697, 1.442695
  %v704 = vpow.pop %v703
  %v705 = vmul.f32 %v698, 1.442695
  %v706 = vpow.pop %v705
  %v707 = vsub.f32 %v239, %v679
  %v708 = vsub.f32 %v240, %v680
  %v709 = vsub.f32 %v241, %v681
  %v710 = vsub.f32 %v242, %v682
  %v711 = vmul.f32 %v707, 1.442695
  %v712 = vpow.pop %v711
  %v713 = vmul.f32 %v708, 1.442695
  %v714 = vpow.pop %v713
  %v715 = vmul.f32 %v709, 1.442695
  %v716 = vpow.pop %v715
  %v717 = vmul.f32 %v710, 1.442695
  %v718 = vpow.pop %v717
  %v719 = vsub.f32 %v271, %v679
  %v720 = vsub.f32 %v272, %v680
  %v721 = vsub.f32 %v273, %v681
  %v722 = vsub.f32 %v274, %v682
  %v723 = vmul.f32 %v719, 1.442695
  %v724 = vpow.pop %v723
  %v725 = vmul.f32 %v720, 1.442695
  %v726 = vpow.pop %v725
  %v727 = vmul.f32 %v721, 1.442695
  %v728 = vpow.pop %v727
  %v729 = vmul.f32 %v722, 1.442695
  %v730 = vpow.pop %v729
  %v731 = vadd.f32 %v688, %v700
  %v732 = vadd.f32 %v690, %v702
  %v733 = vadd.f32 %v692, %v704
  %v734 = vadd.f32 %v694, %v706
  %v735 = vadd.f32 %v731, %v712
  %v736 = vadd.f32 %v732, %v714
  %v737 = vadd.f32 %v733, %v716
  %v738 = vadd.f32 %v734, %v718
  %v739 = vadd.f32 %v735, %v724
  %v740 = vadd.f32 %v736, %v726
  %v741 = vadd.f32 %v737, %v728
  %v742 = vadd.f32 %v738, %v730
  %v743 = vrcp.pop %v739
  %v744 = vmul.f32 1.0, %v743
  %v745 = vrcp.pop %v740
  %v746 = vmul.f32 1.0, %v745
  %v747 = vrcp.pop %v741
  %v748 = vmul.f32 1.0, %v747
  %v749 = vrcp.pop %v742
  %v750 = vmul.f32 1.0, %v749
  %v751 = vmul.f32 %v688, %v744
  %v752 = vmul.f32 %v690, %v746
  %v753 = vmul.f32 %v692, %v748
  %v754 = vmul.f32 %v694, %v750
  %v755 = vmul.f32 %v751, %v22
  %v756 = vmul.f32 %v752, %v23
  %v757 = vmul.f32 %v753, %v24
  %v758 = vmul.f32 %v754, %v25
  %v759 = vmul.f32 %v700, %v744
  %v760 = vmul.f32 %v702, %v746
  %v761 = vmul.f32 %v704, %v748
  %v762 = vmul.f32 %v706, %v750
  %v763 = vmul.f32 %v759, %v22
  %v764 = vmul.f32 %v760, %v23
  %v765 = vmul.f32 %v761, %v24
  %v766 = vmul.f32 %v762, %v25
  %771 = vrot.lane.b32.xlu0 %v763, 96
  %v772 = vpop.permute.xlu0 %771
  %773 = vrot.lane.b32.xlu0 %v764, 96
  %v774 = vpop.permute.xlu0 %773
  %775 = vrot.lane.b32.xlu0 %v765, 96
  %v776 = vpop.permute.xlu0 %775
  %777 = vrot.lane.b32.xlu0 %v766, 96
  %v778 = vpop.permute.xlu0 %777
  %v783 = vadd.f32 %v755, %v772
  %v784 = vadd.f32 %v756, %v774
  %v785 = vadd.f32 %v757, %v776
  %v786 = vadd.f32 %v758, %v778
  %v787 = vmul.f32 %v712, %v744
  %v788 = vmul.f32 %v714, %v746
  %v789 = vmul.f32 %v716, %v748
  %v790 = vmul.f32 %v718, %v750
  %v791 = vmul.f32 %v787, %v22
  %v792 = vmul.f32 %v788, %v23
  %v793 = vmul.f32 %v789, %v24
  %v794 = vmul.f32 %v790, %v25
  %799 = vrot.lane.b32.xlu0 %v791, 64
  %v800 = vpop.permute.xlu0 %799
  %801 = vrot.lane.b32.xlu0 %v792, 64
  %v802 = vpop.permute.xlu0 %801
  %803 = vrot.lane.b32.xlu0 %v793, 64
  %v804 = vpop.permute.xlu0 %803
  %805 = vrot.lane.b32.xlu0 %v794, 64
  %v806 = vpop.permute.xlu0 %805
  %v811 = vadd.f32 %v783, %v800
  %v812 = vadd.f32 %v784, %v802
  %v813 = vadd.f32 %v785, %v804
  %v814 = vadd.f32 %v786, %v806
  %v815 = vmul.f32 %v724, %v744
  %v816 = vmul.f32 %v726, %v746
  %v817 = vmul.f32 %v728, %v748
  %v818 = vmul.f32 %v730, %v750
  %v819 = vmul.f32 %v815, %v22
  %v820 = vmul.f32 %v816, %v23
  %v821 = vmul.f32 %v817, %v24
  %v822 = vmul.f32 %v818, %v25
  %827 = vrot.lane.b32.xlu0 %v819, 32
  %v828 = vpop.permute.xlu0 %827
  %829 = vrot.lane.b32.xlu0 %v820, 32
  %v830 = vpop.permute.xlu0 %829
  %831 = vrot.lane.b32.xlu0 %v821, 32
  %v832 = vpop.permute.xlu0 %831
  %833 = vrot.lane.b32.xlu0 %v822, 32
  %v834 = vpop.permute.xlu0 %833
  %v839 = vadd.f32 %v811, %v828
  %v840 = vadd.f32 %v812, %v830
  %v841 = vadd.f32 %v813, %v832
  %v842 = vadd.f32 %v814, %v834
  %v843 = vmax.f32 %v299, %v327
  %v844 = vmax.f32 %v300, %v328
  %v845 = vmax.f32 %v301, %v329
  %v846 = vmax.f32 %v302, %v330
  %v847 = vmax.f32 %v843, %v355
  %v848 = vmax.f32 %v844, %v356
  %v849 = vmax.f32 %v845, %v357
  %v850 = vmax.f32 %v846, %v358
  %v851 = vmax.f32 %v847, %v383
  %v852 = vmax.f32 %v848, %v384
  %v853 = vmax.f32 %v849, %v385
  %v854 = vmax.f32 %v850, %v386
  %v855 = vsub.f32 %v299, %v851
  %v856 = vsub.f32 %v300, %v852
  %v857 = vsub.f32 %v301, %v853
  %v858 = vsub.f32 %v302, %v854
  %v859 = vmul.f32 %v855, 1.442695
  %v860 = vpow.pop %v859
  %v861 = vmul.f32 %v856, 1.442695
  %v862 = vpow.pop %v861
  %v863 = vmul.f32 %v857, 1.442695
  %v864 = vpow.pop %v863
  %v865 = vmul.f32 %v858, 1.442695
  %v866 = vpow.pop %v865
  %v867 = vsub.f32 %v327, %v851
  %v868 = vsub.f32 %v328, %v852
  %v869 = vsub.f32 %v329, %v853
  %v870 = vsub.f32 %v330, %v854
  %v871 = vmul.f32 %v867, 1.442695
  %v872 = vpow.pop %v871
  %v873 = vmul.f32 %v868, 1.442695
  %v874 = vpow.pop %v873
  %v875 = vmul.f32 %v869, 1.442695
  %v876 = vpow.pop %v875
  %v877 = vmul.f32 %v870, 1.442695
  %v878 = vpow.pop %v877
  %v879 = vsub.f32 %v355, %v851
  %v880 = vsub.f32 %v356, %v852
  %v881 = vsub.f32 %v357, %v853
  %v882 = vsub.f32 %v358, %v854
  %v883 = vmul.f32 %v879, 1.442695
  %v884 = vpow.pop %v883
  %v885 = vmul.f32 %v880, 1.442695
  %v886 = vpow.pop %v885
  %v887 = vmul.f32 %v881, 1.442695
  %v888 = vpow.pop %v887
  %v889 = vmul.f32 %v882, 1.442695
  %v890 = vpow.pop %v889
  %v891 = vsub.f32 %v383, %v851
  %v892 = vsub.f32 %v384, %v852
  %v893 = vsub.f32 %v385, %v853
  %v894 = vsub.f32 %v386, %v854
  %v895 = vmul.f32 %v891, 1.442695
  %v896 = vpow.pop %v895
  %v897 = vmul.f32 %v892, 1.442695
  %v898 = vpow.pop %v897
  %v899 = vmul.f32 %v893, 1.442695
  %v900 = vpow.pop %v899
  %v901 = vmul.f32 %v894, 1.442695
  %v902 = vpow.pop %v901
  %v903 = vadd.f32 %v860, %v872
  %v904 = vadd.f32 %v862, %v874
  %v905 = vadd.f32 %v864, %v876
  %v906 = vadd.f32 %v866, %v878
  %v907 = vadd.f32 %v903, %v884
  %v908 = vadd.f32 %v904, %v886
  %v909 = vadd.f32 %v905, %v888
  %v910 = vadd.f32 %v906, %v890
  %v911 = vadd.f32 %v907, %v896
  %v912 = vadd.f32 %v908, %v898
  %v913 = vadd.f32 %v909, %v900
  %v914 = vadd.f32 %v910, %v902
  %v915 = vrcp.pop %v911
  %v916 = vmul.f32 1.0, %v915
  %v917 = vrcp.pop %v912
  %v918 = vmul.f32 1.0, %v917
  %v919 = vrcp.pop %v913
  %v920 = vmul.f32 1.0, %v919
  %v921 = vrcp.pop %v914
  %v922 = vmul.f32 1.0, %v921
  %v923 = vmul.f32 %v860, %v916
  %v924 = vmul.f32 %v862, %v918
  %v925 = vmul.f32 %v864, %v920
  %v926 = vmul.f32 %v866, %v922
  %v927 = vmul.f32 %v923, %v22
  %v928 = vmul.f32 %v924, %v23
  %v929 = vmul.f32 %v925, %v24
  %v930 = vmul.f32 %v926, %v25
  %v931 = vmul.f32 %v872, %v916
  %v932 = vmul.f32 %v874, %v918
  %v933 = vmul.f32 %v876, %v920
  %v934 = vmul.f32 %v878, %v922
  %v935 = vmul.f32 %v931, %v22
  %v936 = vmul.f32 %v932, %v23
  %v937 = vmul.f32 %v933, %v24
  %v938 = vmul.f32 %v934, %v25
  %943 = vrot.lane.b32.xlu0 %v935, 96
  %v944 = vpop.permute.xlu0 %943
  %945 = vrot.lane.b32.xlu0 %v936, 96
  %v946 = vpop.permute.xlu0 %945
  %947 = vrot.lane.b32.xlu0 %v937, 96
  %v948 = vpop.permute.xlu0 %947
  %949 = vrot.lane.b32.xlu0 %v938, 96
  %v950 = vpop.permute.xlu0 %949
  %v955 = vadd.f32 %v927, %v944
  %v956 = vadd.f32 %v928, %v946
  %v957 = vadd.f32 %v929, %v948
  %v958 = vadd.f32 %v930, %v950
  %v959 = vmul.f32 %v884, %v916
  %v960 = vmul.f32 %v886, %v918
  %v961 = vmul.f32 %v888, %v920
  %v962 = vmul.f32 %v890, %v922
  %v963 = vmul.f32 %v959, %v22
  %v964 = vmul.f32 %v960, %v23
  %v965 = vmul.f32 %v961, %v24
  %v966 = vmul.f32 %v962, %v25
  %971 = vrot.lane.b32.xlu0 %v963, 64
  %v972 = vpop.permute.xlu0 %971
  %973 = vrot.lane.b32.xlu0 %v964, 64
  %v974 = vpop.permute.xlu0 %973
  %975 = vrot.lane.b32.xlu0 %v965, 64
  %v976 = vpop.permute.xlu0 %975
  %977 = vrot.lane.b32.xlu0 %v966, 64
  %v978 = vpop.permute.xlu0 %977
  %v983 = vadd.f32 %v955, %v972
  %v984 = vadd.f32 %v956, %v974
  %v985 = vadd.f32 %v957, %v976
  %v986 = vadd.f32 %v958, %v978
  %v987 = vmul.f32 %v896, %v916
  %v988 = vmul.f32 %v898, %v918
  %v989 = vmul.f32 %v900, %v920
  %v990 = vmul.f32 %v902, %v922
  %v991 = vmul.f32 %v987, %v22
  %v992 = vmul.f32 %v988, %v23
  %v993 = vmul.f32 %v989, %v24
  %v994 = vmul.f32 %v990, %v25
  %999 = vrot.lane.b32.xlu0 %v991, 32
  %v1000 = vpop.permute.xlu0 %999
  %1001 = vrot.lane.b32.xlu0 %v992, 32
  %v1002 = vpop.permute.xlu0 %1001
  %1003 = vrot.lane.b32.xlu0 %v993, 32
  %v1004 = vpop.permute.xlu0 %1003
  %1005 = vrot.lane.b32.xlu0 %v994, 32
  %v1006 = vpop.permute.xlu0 %1005
  %v1011 = vadd.f32 %v983, %v1000
  %v1012 = vadd.f32 %v984, %v1002
  %v1013 = vadd.f32 %v985, %v1004
  %v1014 = vadd.f32 %v986, %v1006
  %v1015 = vmax.f32 %v411, %v439
  %v1016 = vmax.f32 %v412, %v440
  %v1017 = vmax.f32 %v413, %v441
  %v1018 = vmax.f32 %v414, %v442
  %v1019 = vmax.f32 %v1015, %v467
  %v1020 = vmax.f32 %v1016, %v468
  %v1021 = vmax.f32 %v1017, %v469
  %v1022 = vmax.f32 %v1018, %v470
  %v1023 = vmax.f32 %v1019, %v495
  %v1024 = vmax.f32 %v1020, %v496
  %v1025 = vmax.f32 %v1021, %v497
  %v1026 = vmax.f32 %v1022, %v498
  %v1027 = vsub.f32 %v411, %v1023
  %v1028 = vsub.f32 %v412, %v1024
  %v1029 = vsub.f32 %v413, %v1025
  %v1030 = vsub.f32 %v414, %v1026
  %v1031 = vmul.f32 %v1027, 1.442695
  %v1032 = vpow.pop %v1031
  %v1033 = vmul.f32 %v1028, 1.442695
  %v1034 = vpow.pop %v1033
  %v1035 = vmul.f32 %v1029, 1.442695
  %v1036 = vpow.pop %v1035
  %v1037 = vmul.f32 %v1030, 1.442695
  %v1038 = vpow.pop %v1037
  %v1039 = vsub.f32 %v439, %v1023
  %v1040 = vsub.f32 %v440, %v1024
  %v1041 = vsub.f32 %v441, %v1025
  %v1042 = vsub.f32 %v442, %v1026
  %v1043 = vmul.f32 %v1039, 1.442695
  %v1044 = vpow.pop %v1043
  %v1045 = vmul.f32 %v1040, 1.442695
  %v1046 = vpow.pop %v1045
  %v1047 = vmul.f32 %v1041, 1.442695
  %v1048 = vpow.pop %v1047
  %v1049 = vmul.f32 %v1042, 1.442695
  %v1050 = vpow.pop %v1049
  %v1051 = vsub.f32 %v467, %v1023
  %v1052 = vsub.f32 %v468, %v1024
  %v1053 = vsub.f32 %v469, %v1025
  %v1054 = vsub.f32 %v470, %v1026
  %v1055 = vmul.f32 %v1051, 1.442695
  %v1056 = vpow.pop %v1055
  %v1057 = vmul.f32 %v1052, 1.442695
  %v1058 = vpow.pop %v1057
  %v1059 = vmul.f32 %v1053, 1.442695
  %v1060 = vpow.pop %v1059
  %v1061 = vmul.f32 %v1054, 1.442695
  %v1062 = vpow.pop %v1061
  %v1063 = vsub.f32 %v495, %v1023
  %v1064 = vsub.f32 %v496, %v1024
  %v1065 = vsub.f32 %v497, %v1025
  %v1066 = vsub.f32 %v498, %v1026
  %v1067 = vmul.f32 %v1063, 1.442695
  %v1068 = vpow.pop %v1067
  %v1069 = vmul.f32 %v1064, 1.442695
  %v1070 = vpow.pop %v1069
  %v1071 = vmul.f32 %v1065, 1.442695
  %v1072 = vpow.pop %v1071
  %v1073 = vmul.f32 %v1066, 1.442695
  %v1074 = vpow.pop %v1073
  %v1075 = vadd.f32 %v1032, %v1044
  %v1076 = vadd.f32 %v1034, %v1046
  %v1077 = vadd.f32 %v1036, %v1048
  %v1078 = vadd.f32 %v1038, %v1050
  %v1079 = vadd.f32 %v1075, %v1056
  %v1080 = vadd.f32 %v1076, %v1058
  %v1081 = vadd.f32 %v1077, %v1060
  %v1082 = vadd.f32 %v1078, %v1062
  %v1083 = vadd.f32 %v1079, %v1068
  %v1084 = vadd.f32 %v1080, %v1070
  %v1085 = vadd.f32 %v1081, %v1072
  %v1086 = vadd.f32 %v1082, %v1074
  %v1087 = vrcp.pop %v1083
  %v1088 = vmul.f32 1.0, %v1087
  %v1089 = vrcp.pop %v1084
  %v1090 = vmul.f32 1.0, %v1089
  %v1091 = vrcp.pop %v1085
  %v1092 = vmul.f32 1.0, %v1091
  %v1093 = vrcp.pop %v1086
  %v1094 = vmul.f32 1.0, %v1093
  %v1095 = vmul.f32 %v1032, %v1088
  %v1096 = vmul.f32 %v1034, %v1090
  %v1097 = vmul.f32 %v1036, %v1092
  %v1098 = vmul.f32 %v1038, %v1094
  %v1099 = vmul.f32 %v1095, %v22
  %v1100 = vmul.f32 %v1096, %v23
  %v1101 = vmul.f32 %v1097, %v24
  %v1102 = vmul.f32 %v1098, %v25
  %v1103 = vmul.f32 %v1044, %v1088
  %v1104 = vmul.f32 %v1046, %v1090
  %v1105 = vmul.f32 %v1048, %v1092
  %v1106 = vmul.f32 %v1050, %v1094
  %v1107 = vmul.f32 %v1103, %v22
  %v1108 = vmul.f32 %v1104, %v23
  %v1109 = vmul.f32 %v1105, %v24
  %v1110 = vmul.f32 %v1106, %v25
  %1115 = vrot.lane.b32.xlu0 %v1107, 96
  %v1116 = vpop.permute.xlu0 %1115
  %1117 = vrot.lane.b32.xlu0 %v1108, 96
  %v1118 = vpop.permute.xlu0 %1117
  %1119 = vrot.lane.b32.xlu0 %v1109, 96
  %v1120 = vpop.permute.xlu0 %1119
  %1121 = vrot.lane.b32.xlu0 %v1110, 96
  %v1122 = vpop.permute.xlu0 %1121
  %v1127 = vadd.f32 %v1099, %v1116
  %v1128 = vadd.f32 %v1100, %v1118
  %v1129 = vadd.f32 %v1101, %v1120
  %v1130 = vadd.f32 %v1102, %v1122
  %v1131 = vmul.f32 %v1056, %v1088
  %v1132 = vmul.f32 %v1058, %v1090
  %v1133 = vmul.f32 %v1060, %v1092
  %v1134 = vmul.f32 %v1062, %v1094
  %v1135 = vmul.f32 %v1131, %v22
  %v1136 = vmul.f32 %v1132, %v23
  %v1137 = vmul.f32 %v1133, %v24
  %v1138 = vmul.f32 %v1134, %v25
  %1143 = vrot.lane.b32.xlu0 %v1135, 64
  %v1144 = vpop.permute.xlu0 %1143
  %1145 = vrot.lane.b32.xlu0 %v1136, 64
  %v1146 = vpop.permute.xlu0 %1145
  %1147 = vrot.lane.b32.xlu0 %v1137, 64
  %v1148 = vpop.permute.xlu0 %1147
  %1149 = vrot.lane.b32.xlu0 %v1138, 64
  %v1150 = vpop.permute.xlu0 %1149
  %v1155 = vadd.f32 %v1127, %v1144
  %v1156 = vadd.f32 %v1128, %v1146
  %v1157 = vadd.f32 %v1129, %v1148
  %v1158 = vadd.f32 %v1130, %v1150
  %v1159 = vmul.f32 %v1068, %v1088
  %v1160 = vmul.f32 %v1070, %v1090
  %v1161 = vmul.f32 %v1072, %v1092
  %v1162 = vmul.f32 %v1074, %v1094
  %v1163 = vmul.f32 %v1159, %v22
  %v1164 = vmul.f32 %v1160, %v23
  %v1165 = vmul.f32 %v1161, %v24
  %v1166 = vmul.f32 %v1162, %v25
  %1171 = vrot.lane.b32.xlu0 %v1163, 32
  %v1172 = vpop.permute.xlu0 %1171
  %1173 = vrot.lane.b32.xlu0 %v1164, 32
  %v1174 = vpop.permute.xlu0 %1173
  %1175 = vrot.lane.b32.xlu0 %v1165, 32
  %v1176 = vpop.permute.xlu0 %1175
  %1177 = vrot.lane.b32.xlu0 %v1166, 32
  %v1178 = vpop.permute.xlu0 %1177
  %v1183 = vadd.f32 %v1155, %v1172
  %v1184 = vadd.f32 %v1156, %v1174
  %v1185 = vadd.f32 %v1157, %v1176
  %v1186 = vadd.f32 %v1158, %v1178
  %1191 = vrot.lane.b32.xlu0 %v839, 32
  %v1192 = vpop.permute.xlu0 %1191
  %1193 = vrot.lane.b32.xlu0 %v840, 32
  %v1194 = vpop.permute.xlu0 %1193
  %1195 = vrot.lane.b32.xlu0 %v841, 32
  %v1196 = vpop.permute.xlu0 %1195
  %1197 = vrot.lane.b32.xlu0 %v842, 32
  %v1198 = vpop.permute.xlu0 %1197
  %1207 = vrot.lane.b32.xlu0 %v1011, 64
  %v1208 = vpop.permute.xlu0 %1207
  %1209 = vrot.lane.b32.xlu0 %v1012, 64
  %v1210 = vpop.permute.xlu0 %1209
  %1211 = vrot.lane.b32.xlu0 %v1013, 64
  %v1212 = vpop.permute.xlu0 %1211
  %1213 = vrot.lane.b32.xlu0 %v1014, 64
  %v1214 = vpop.permute.xlu0 %1213
  %1223 = vrot.lane.b32.xlu0 %v1183, 96
  %v1224 = vpop.permute.xlu0 %1223
  %1225 = vrot.lane.b32.xlu0 %v1184, 96
  %v1226 = vpop.permute.xlu0 %1225
  %1227 = vrot.lane.b32.xlu0 %v1185, 96
  %v1228 = vpop.permute.xlu0 %1227
  %1229 = vrot.lane.b32.xlu0 %v1186, 96
  %v1230 = vpop.permute.xlu0 %1229
  %v1235 = vsel %vm30, %v667, %v1192
  %v1236 = vsel %vm30, %v668, %v1194
  %v1237 = vsel %vm30, %v669, %v1196
  %v1238 = vsel %vm30, %v670, %v1198
  %vm1239 = vcmask 523264
  %v1240 = vsel %vm1239, %v1235, %v1208
  %v1241 = vsel %vm1239, %v1236, %v1210
  %v1242 = vsel %vm1239, %v1237, %v1212
  %v1243 = vsel %vm1239, %v1238, %v1214
  %vm1244 = vcmask 785408
  %v1245 = vsel %vm1244, %v1240, %v1224
  %v1246 = vsel %vm1244, %v1241, %v1226
  %v1247 = vsel %vm1244, %v1242, %v1228
  %v1248 = vsel %vm1244, %v1243, %v1230
  %1249 = vst [vmem:[%s3] sm:$0xff] %v1245
  %1250 = vst [vmem:[%s3 + $0x8] sm:$0xff] %v1246
  %1251 = vst [vmem:[%s3 + $0x10] sm:$0xff] %v1247
  %1252 = vst [vmem:[%s3 + $0x18] sm:$0xff] %v1248
  // Predicated region
  $region14: #{disentangled_transformer_layer.18} parent=0 // pred_check
    _
  $region15: #{disentangled_transformer_layer.18} parent=0 // pred_check_branch
    %1254 = sbr.rel (0) target = $region17
  $region16: #{disentangled_transformer_layer.18} parent=0 // pred_region
    _
  $region17: #{disentangled_transformer_layer.18} parent=0 // pred_fallthru
    _
  // Predicated region
  $region18: #{disentangled_transformer_layer.18} parent=0 // pred_check
    _
  $region19: #{disentangled_transformer_layer.18} parent=0 // pred_check_branch
    %1256 = sbr.rel (0) target = $region21
  $region20: #{disentangled_transformer_layer.18} parent=0 // pred_region
    _
  $region21: #{disentangled_transformer_layer.18} parent=0 // pred_fallthru
    _

// kernel: disentangled_transformer_layer.23
$region0: #{disentangled_transformer_layer.23}
  #allocation0 [shape = 'u32[]', space=smem, size = 0x4, offset = 0x4, fixed_abs, tag = 'smem constant byte address 0x4 - core index']
  #allocation1 [shape = 'u32[144,128]{1,0:T(1,128)}', space=vmem, size = 0x12000, scoped, tag = 'internal scratch']
  %s0 = inlined_call_operand.vmem [shape: f32[32,128], index: 0, kind: input, shape index: {}]
  %s1 = inlined_call_operand.vmem [shape: f32[32,128], index: 1, kind: input, shape index: {}]
  %s2 = inlined_call_operand.vmem [shape: f32[1,128], index: 2, kind: input, shape index: {}]
  %s3 = inlined_call_operand.vmem [shape: f32[1,128], index: 3, kind: input, shape index: {}]
  %s4 = inlined_call_operand.hbm [shape: f32[32,128], index: 4, kind: output, shape index: {}]
  %s5 = sld [smem:[#allocation0]]
  $region26: #{disentangled_transformer_layer.23} parent=0
    _
  %s7 = ssub.s32 1, %s5
  %s8 = scalar_select 0, %s7, %s5
  $region1: #{disentangled_transformer_layer.23} parent=0
    #allocation2 [shape = 'u8[16384]{0}', space=vmem, size = 0x4000, scoped, tag = 'output window, operand 0, single buffered']
    #allocation3 [shape = 's32[1]{0}', space=sflag, size = 0x4, scoped, tag = 'scoped memory for disentangled_transformer_layer.23']
    %9 = vsyncpa [#allocation3], 0
    // Predicated region
    $region2: #{disentangled_transformer_layer.23} parent=1 // pred_check
      _
    $region3: #{disentangled_transformer_layer.23} parent=1 // pred_check_branch
      %11 = sbr.rel (0) target = $region5
    $region4: #{disentangled_transformer_layer.23} parent=1 // pred_region
      _
    $region5: #{disentangled_transformer_layer.23} parent=1 // pred_fallthru
      _
    // Predicated region
    $region6: #{disentangled_transformer_layer.23} parent=1 // pred_check
      _
    $region7: #{disentangled_transformer_layer.23} parent=1 // pred_check_branch
      %13 = sbr.rel (0) target = $region9
    $region8: #{disentangled_transformer_layer.23} parent=1 // pred_region
      _
    $region9: #{disentangled_transformer_layer.23} parent=1 // pred_fallthru
      _
    // Predicated region
    $region10: #{disentangled_transformer_layer.23} parent=1 // pred_check
      _
    $region11: #{disentangled_transformer_layer.23} parent=1 // pred_check_branch
      %15 = sbr.rel (0) target = $region13
    $region12: #{disentangled_transformer_layer.23} parent=1 // pred_region
      _
    $region13: #{disentangled_transformer_layer.23} parent=1 // pred_fallthru
      _
    // Predicated region
    $region14: #{disentangled_transformer_layer.23} parent=1 // pred_check
      _
    $region15: #{disentangled_transformer_layer.23} parent=1 // pred_check_branch
      %17 = sbr.rel (0) target = $region17
    $region16: #{disentangled_transformer_layer.23} parent=1 // pred_region
      _
    $region17: #{disentangled_transformer_layer.23} parent=1 // pred_fallthru
      _
    %v18 = vld [vmem:[%s0] sm:$0xff]
    %v19 = vld [vmem:[%s0 + $0x8] sm:$0xff]
    %v20 = vld [vmem:[%s0 + $0x10] sm:$0xff]
    %v21 = vld [vmem:[%s0 + $0x18] sm:$0xff]
    %v22 = vld [vmem:[%s1] sm:$0xff]
    %v23 = vld [vmem:[%s1 + $0x8] sm:$0xff]
    %v24 = vld [vmem:[%s1 + $0x10] sm:$0xff]
    %v25 = vld [vmem:[%s1 + $0x18] sm:$0xff]
    %v26 = vadd.f32 %v18, %v22
    %v27 = vadd.f32 %v19, %v23
    %v28 = vadd.f32 %v20, %v24
    %v29 = vadd.f32 %v21, %v25
    %30 = vadd.xlane.f32.xlu0 %v26
    %v31 = vpop.xlane.xlu0 %30
    %32 = vadd.xlane.f32.xlu0 %v27
    %v33 = vpop.xlane.xlu0 %32
    %34 = vadd.xlane.f32.xlu0 %v28
    %v35 = vpop.xlane.xlu0 %34
    %36 = vadd.xlane.f32.xlu0 %v29
    %v37 = vpop.xlane.xlu0 %36
    %v38 = vrcp.pop 128.0
    %v39 = vmul.f32 %v31, %v38
    %v40 = vmul.f32 %v33, %v38
    %v41 = vmul.f32 %v35, %v38
    %v42 = vmul.f32 %v37, %v38
    %v43 = vsub.f32 %v26, %v39
    %v44 = vsub.f32 %v27, %v40
    %v45 = vsub.f32 %v28, %v41
    %v46 = vsub.f32 %v29, %v42
    %v47 = vmul.f32 %v43, %v43
    %v48 = vmul.f32 %v44, %v44
    %v49 = vmul.f32 %v45, %v45
    %v50 = vmul.f32 %v46, %v46
    %51 = vadd.xlane.f32.xlu0 %v47
    %v52 = vpop.xlane.xlu0 %51
    %53 = vadd.xlane.f32.xlu0 %v48
    %v54 = vpop.xlane.xlu0 %53
    %55 = vadd.xlane.f32.xlu0 %v49
    %v56 = vpop.xlane.xlu0 %55
    %57 = vadd.xlane.f32.xlu0 %v50
    %v58 = vpop.xlane.xlu0 %57
    %v59 = vmul.f32 %v52, %v38
    %v60 = vmul.f32 %v54, %v38
    %v61 = vmul.f32 %v56, %v38
    %v62 = vmul.f32 %v58, %v38
    %v63 = vadd.f32 %v59, 1e-05
    %v64 = vadd.f32 %v60, 1e-05
    %v65 = vadd.f32 %v61, 1e-05
    %v66 = vadd.f32 %v62, 1e-05
    %v67 = vrsqrt.pop %v63
    %v68 = vrsqrt.pop %v64
    %v69 = vrsqrt.pop %v65
    %v70 = vrsqrt.pop %v66
    %v71 = vmul.f32 %v43, %v67
    %v72 = vmul.f32 %v44, %v68
    %v73 = vmul.f32 %v45, %v69
    %v74 = vmul.f32 %v46, %v70
    %v75 = vld [vmem:[%s2] sm:$0x1]
    %v77 = vlaneseq
    %v78 = vshrl.u32 %v77, 7
    %v79 = vsub.s32 0, %v78
    %v80 = vrot.slane %v75, %v79
    %v82 = vmul.f32 %v71, %v80
    %v83 = vmul.f32 %v72, %v80
    %v84 = vmul.f32 %v73, %v80
    %v85 = vmul.f32 %v74, %v80
    %v86 = vld [vmem:[%s3] sm:$0x1]
    %v88 = vlaneseq
    %v89 = vshrl.u32 %v88, 7
    %v90 = vsub.s32 0, %v89
    %v91 = vrot.slane %v86, %v90
    %v93 = vadd.f32 %v82, %v91
    %v94 = vadd.f32 %v83, %v91
    %v95 = vadd.f32 %v84, %v91
    %v96 = vadd.f32 %v85, %v91
    %97 = vst [vmem:[#allocation2] sm:$0xff] %v93
    %98 = vst [vmem:[#allocation2 + $0x8] sm:$0xff] %v94
    %99 = vst [vmem:[#allocation2 + $0x10] sm:$0xff] %v95
    %100 = vst [vmem:[#allocation2 + $0x18] sm:$0xff] %v96
    // Predicated region
    $region18: #{disentangled_transformer_layer.23} parent=1 // pred_check
      _
    $region19: #{disentangled_transformer_layer.23} parent=1 // pred_check_branch
      %102 = sbr.rel (0) target = $region21
    $region20: #{disentangled_transformer_layer.23} parent=1 // pred_region
      %s104 = ssub.s32 512, 512
      %105 = vsyncadd [#allocation3], %s104
      %s106 = sshll.u32 [#allocation2], 4
      %s107 = int_to_ptr.vmem [resolvable:$true] %s106
      %112 = dma.vmem_to_hbm [thread:$0]  %s107, 512, %s4, [#allocation3], 128, 128, 8
    $region21: #{disentangled_transformer_layer.23} parent=1 // pred_fallthru
      _
    // Predicated region
    $region22: #{disentangled_transformer_layer.23} parent=1 // pred_check
      _
    $region23: #{disentangled_transformer_layer.23} parent=1 // pred_check_branch
      %114 = sbr.rel (0) target = $region25
    $region24: #{disentangled_transformer_layer.23} parent=1 // pred_region
      %115 = dma.done [#allocation3], 512
    $region25: #{disentangled_transformer_layer.23} parent=1 // pred_fallthru
      _
    %116 = vsyncpa [#allocation3], 1

// kernel: disentangled_transformer_layer.21
$region0: #{disentangled_transformer_layer.21}
  #allocation0 [shape = 'u32[]', space=smem, size = 0x4, offset = 0x4, fixed_abs, tag = 'smem constant byte address 0x4 - core index']
  #allocation1 [shape = 'u32[144,128]{1,0:T(1,128)}', space=vmem, size = 0x12000, scoped, tag = 'internal scratch']
  #allocation2 [shape = 'f32[32,256]{1,0:T(8,128)}', space=vmem, size = 0x8000, scoped, tag = 'scratch operand']
  %s0 = inlined_call_operand.vmem [shape: f32[32,128], index: 0, kind: input, shape index: {}]
  %s1 = inlined_call_operand.vmem [shape: f32[512,128], index: 1, kind: input, shape index: {}]
  %s2 = inlined_call_operand.vmem [shape: f32[1,512], index: 2, kind: input, shape index: {}]
  %s3 = inlined_call_operand.vmem [shape: f32[32,512], index: 3, kind: output, shape index: {}]
  %s4 = sld [smem:[#allocation0]]
  $region72: #{disentangled_transformer_layer.21} parent=0
    _
  %s6 = ssub.s32 1, %s4
  %s7 = scalar_select 0, %s6, %s4
  $region1: #{disentangled_transformer_layer.21} parent=0
    #allocation3 [shape = 'u8[65536]{0}', space=vmem, size = 0x10000, scoped, tag = 'output window, operand 0']
    loop: start=0, step=1, limit=4
    $region2: #{disentangled_transformer_layer.21} parent=1 // loop_pre_header
      _
    $region3: #{disentangled_transformer_layer.21} parent=1 // loop_header
      %s9 = sphi 0, %s13
      %p10 = scmp.ge.s32.totalorder %s9, 4
      %s16 = sphi 0, %s35
      %s17 = sphi 0, %s31
      %s18 = sphi 0, %s27
      %s19 = sphi 0, %s16
      %s20 = sphi 0, %s17
      %s21 = sphi 0, %s18
      %s22 = sphi 0, %s19
      %s23 = sphi 0, %s20
      %s24 = sphi 0, %s21
      %s40 = sphi 0, %s42
      %s43 = sphi 0, %s40
      %s44 = sphi 0, %s43
      %s60 = sphi 0, %s44
      %s68 = sphi 0, %s70
      %s71 = sphi 0, %s68
      %s72 = sphi 0, %s71
      %s88 = sphi 0, %s72
      %s94 = sphi 0, %s96
      %s97 = sphi 0, %s94
      %s98 = sphi 0, %s97
      %s114 = sphi 0, %s98
      %s122 = sphi 0, %s124
      %s125 = sphi 0, %s122
      %s126 = sphi 0, %s125
      %s142 = sphi 0, %s126
    $region4: #{disentangled_transformer_layer.21} parent=1 // loop_header_branch
      %12 = sbr.rel (%p10) target = $region8
    $region5: #{disentangled_transformer_layer.21} parent=1 // loop_body
      %s14 = ssub.s32 %s9, 1
      %s15 = ssub.s32 %s9, 2
      %s25 = sadd.s32 1, %s18
      %p26 = scmp.ge.s32.totalorder %s25, 1
      %s27 = scalar_select %p26, 0, %s25
      %s28 = sadd.s32 1, %s17
      %s29 = scalar_select %p26, %s28, %s17
      %p30 = scmp.ge.s32.totalorder %s29, 2
      %s31 = scalar_select %p30, 0, %s29
      %s32 = sadd.s32 1, %s16
      %s33 = scalar_select %p30, %s32, %s16
      %p34 = scmp.ge.s32.totalorder %s33, 1
      %s35 = scalar_select %p34, 0, %s33
      %s36 = ssub.s32 %s16, %s35
      %s37 = ssub.s32 %s18, %s27
      %s38 = sor.u32 %s36, %s37
      %p39 = scmp.eq.s32.totalorder %s38, 0
      %s41 = sadd.s32 %s40, 1
      %s42 = scalar_select %p39, %s40, %s41
      %p45 = pneg %p39
      %p46 = scmp.eq.s32.totalorder %s9, 1
      %p47 = por %p45, %p46
      %p48 = scmp.ne.s32.totalorder %s40, %s43
      %p49 = scmp.eq.s32.totalorder %s9, 0
      %p50 = por %p48, %p49
      %p51 = scmp.ne.s32.totalorder %s40, %s43
      %p52 = scmp.eq.s32.totalorder %s14, 1
      %p53 = por %p51, %p52
      %p54 = scmp.ne.s32.totalorder %s43, %s44
      %p55 = scmp.eq.s32.totalorder %s14, 0
      %p56 = por %p54, %p55
      %p57 = scmp.ne.s32.totalorder %s43, %s44
      %p58 = scmp.eq.s32.totalorder %s15, 1
      %p59 = por %p57, %p58
      %p61 = scmp.ne.s32.totalorder %s44, %s60
      %p62 = scmp.eq.s32.totalorder %s15, 0
      %p63 = por %p61, %p62
      %s64 = ssub.s32 %s17, %s31
      %s65 = ssub.s32 %s18, %s27
      %s66 = sor.u32 %s64, %s65
      %p67 = scmp.eq.s32.totalorder %s66, 0
      %s69 = sadd.s32 %s68, 1
      %s70 = scalar_select %p67, %s68, %s69
      %p73 = pneg %p67
      %p74 = scmp.eq.s32.totalorder %s9, 1
      %p75 = por %p73, %p74
      %p76 = scmp.ne.s32.totalorder %s68, %s71
      %p77 = scmp.eq.s32.totalorder %s9, 0
      %p78 = por %p76, %p77
      %p79 = scmp.ne.s32.totalorder %s68, %s71
      %p80 = scmp.eq.s32.totalorder %s14, 1
      %p81 = por %p79, %p80
      %p82 = scmp.ne.s32.totalorder %s71, %s72
      %p83 = scmp.eq.s32.totalorder %s14, 0
      %p84 = por %p82, %p83
      %p85 = scmp.ne.s32.totalorder %s71, %s72
      %p86 = scmp.eq.s32.totalorder %s15, 1
      %p87 = por %p85, %p86
      %p89 = scmp.ne.s32.totalorder %s72, %s88
      %p90 = scmp.eq.s32.totalorder %s15, 0
      %p91 = por %p89, %p90
      %s92 = ssub.s32 %s17, %s31
      %p93 = scmp.eq.s32.totalorder %s92, 0
      %s95 = sadd.s32 %s94, 1
      %s96 = scalar_select %p93, %s94, %s95
      %p99 = pneg %p93
      %p100 = scmp.eq.s32.totalorder %s9, 1
      %p101 = por %p99, %p100
      %p102 = scmp.ne.s32.totalorder %s94, %s97
      %p103 = scmp.eq.s32.totalorder %s9, 0
      %p104 = por %p102, %p103
      %p105 = scmp.ne.s32.totalorder %s94, %s97
      %p106 = scmp.eq.s32.totalorder %s14, 1
      %p107 = por %p105, %p106
      %p108 = scmp.ne.s32.totalorder %s97, %s98
      %p109 = scmp.eq.s32.totalorder %s14, 0
      %p110 = por %p108, %p109
      %p111 = scmp.ne.s32.totalorder %s97, %s98
      %p112 = scmp.eq.s32.totalorder %s15, 1
      %p113 = por %p111, %p112
      %p115 = scmp.ne.s32.totalorder %s98, %s114
      %p116 = scmp.eq.s32.totalorder %s15, 0
      %p117 = por %p115, %p116
      %s118 = ssub.s32 %s16, %s35
      %s119 = ssub.s32 %s17, %s31
      %s120 = sor.u32 %s118, %s119
      %p121 = scmp.eq.s32.totalorder %s120, 0
      %s123 = sadd.s32 %s122, 1
      %s124 = scalar_select %p121, %s122, %s123
      %p127 = pneg %p121
      %p128 = scmp.eq.s32.totalorder %s9, 1
      %p129 = por %p127, %p128
      %p130 = scmp.ne.s32.totalorder %s122, %s125
      %p131 = scmp.eq.s32.totalorder %s9, 0
      %p132 = por %p130, %p131
      %p133 = scmp.ne.s32.totalorder %s122, %s125
      %p134 = scmp.eq.s32.totalorder %s14, 1
      %p135 = por %p133, %p134
      %p136 = scmp.ne.s32.totalorder %s125, %s126
      %p137 = scmp.eq.s32.totalorder %s14, 0
      %p138 = por %p136, %p137
      %p139 = scmp.ne.s32.totalorder %s125, %s126
      %p140 = scmp.eq.s32.totalorder %s15, 1
      %p141 = por %p139, %p140
      %p143 = scmp.ne.s32.totalorder %s126, %s142
      %p144 = scmp.eq.s32.totalorder %s15, 0
      %p145 = por %p143, %p144
      %p146 = scmp.le.s32.totalorder 1, %s9
      %p147 = scmp.lt.s32.totalorder %s9, 3
      %p148 = pnand %p146, %p147
      %p149 = pneg %p148
      // Predicated region
      $region9: #{disentangled_transformer_layer.21} parent=5 // pred_check
        _
      $region10: #{disentangled_transformer_layer.21} parent=5 // pred_check_branch
        %151 = sbr.rel (%p148) target = $region12
      $region11: #{disentangled_transformer_layer.21} parent=5 // pred_region
        %s152 = ssub.s32 %s9, 1
        // Predicated region
        $region13: #{disentangled_transformer_layer.21} parent=11 // pred_check
          %p153 = pneg %p56
        $region14: #{disentangled_transformer_layer.21} parent=11 // pred_check_branch
          %155 = sbr.rel (%p153) target = $region16
        $region15: #{disentangled_transformer_layer.21} parent=11 // pred_region
          %s156 = smul.u32 4, %s19
          %p157 = scmp.lt.s32.totalorder %s156, 3
          %s158 = scalar_select %p157, %s156, 3
          %p159 = scmp.lt.s32.totalorder %s21, 0
          %s160 = scalar_select %p159, %s21, 0
          %s161 = sadd.s32 %s160, %s158
          %s162 = smul.addr %s161, 8
          %s163 = scalar_lea.vmem %s0, %s162
          %s164 = smul.u32 4, %s19
        $region16: #{disentangled_transformer_layer.21} parent=11 // pred_fallthru
          _
      $region12: #{disentangled_transformer_layer.21} parent=5 // pred_fallthru
        _
      %p165 = scmp.lt.s32.totalorder %s9, 2
      // Predicated region
      $region17: #{disentangled_transformer_layer.21} parent=5 // pred_check
        %p166 = pneg %p165
      $region18: #{disentangled_transformer_layer.21} parent=5 // pred_check_branch
        %168 = sbr.rel (%p166) target = $region20
      $region19: #{disentangled_transformer_layer.21} parent=5 // pred_region
        // Predicated region
        $region21: #{disentangled_transformer_layer.21} parent=19 // pred_check
          %p169 = pneg %p78
        $region22: #{disentangled_transformer_layer.21} parent=19 // pred_check_branch
          %171 = sbr.rel (%p169) target = $region24
        $region23: #{disentangled_transformer_layer.21} parent=19 // pred_region
          %s172 = smul.u32 32, %s17
          %p173 = scmp.lt.s32.totalorder %s172, 63
          %s174 = scalar_select %p173, %s172, 63
          %p175 = scmp.lt.s32.totalorder %s18, 0
          %s176 = scalar_select %p175, %s18, 0
          %s177 = sadd.s32 %s176, %s174
          %s178 = smul.addr %s177, 8
          %s179 = scalar_lea.vmem %s1, %s178
          %s180 = smul.u32 32, %s17
        $region24: #{disentangled_transformer_layer.21} parent=19 // pred_fallthru
          _
        // Predicated region
        $region25: #{disentangled_transformer_layer.21} parent=19 // pred_check
          %p181 = pneg %p104
        $region26: #{disentangled_transformer_layer.21} parent=19 // pred_check_branch
          %183 = sbr.rel (%p181) target = $region28
        $region27: #{disentangled_transformer_layer.21} parent=19 // pred_region
          %s184 = smul.u32 2, %s17
          %p185 = scmp.lt.s32.totalorder %s184, 3
          %s186 = scalar_select %p185, %s184, 3
          %s187 = scalar_lea.vmem %s2, %s186
          %s188 = smul.u32 2, %s17
        $region28: #{disentangled_transformer_layer.21} parent=19 // pred_fallthru
          _
      $region20: #{disentangled_transformer_layer.21} parent=5 // pred_fallthru
        _
      %p189 = scmp.le.s32.totalorder 1, %s9
      %p190 = scmp.lt.s32.totalorder %s9, 3
      %p191 = pnand %p189, %p190
      %p192 = pneg %p191
      // Predicated region
      $region29: #{disentangled_transformer_layer.21} parent=5 // pred_check
        _
      $region30: #{disentangled_transformer_layer.21} parent=5 // pred_check_branch
        %194 = sbr.rel (%p191) target = $region32
      $region31: #{disentangled_transformer_layer.21} parent=5 // pred_region
        %s195 = ssub.s32 %s9, 1
        %s196 = smul.u32 4, %s19
        %p197 = scmp.lt.s32.totalorder %s196, 3
        %s198 = scalar_select %p197, %s196, 3
        %p199 = scmp.lt.s32.totalorder %s21, 0
        %s200 = scalar_select %p199, %s21, 0
        %s201 = sadd.s32 %s200, %s198
        %s202 = smul.addr %s201, 8
        %s203 = scalar_lea.vmem %s0, %s202
        %p204 = pneg %p56
        %p205 = pneg %p53
        %s206 = smul.u32 32, %s20
        %p207 = scmp.lt.s32.totalorder %s206, 63
        %s208 = scalar_select %p207, %s206, 63
        %p209 = scmp.lt.s32.totalorder %s21, 0
        %s210 = scalar_select %p209, %s21, 0
        %s211 = sadd.s32 %s210, %s208
        %s212 = smul.addr %s211, 8
        %s213 = scalar_lea.vmem %s1, %s212
        %p214 = pneg %p84
        %p215 = pneg %p81
        %s216 = smul.u32 2, %s20
        %p217 = scmp.lt.s32.totalorder %s216, 3
        %s218 = scalar_select %p217, %s216, 3
        %s219 = scalar_lea.vmem %s2, %s218
        %p220 = pneg %p110
        %p221 = pneg %p107
        %p222 = pneg %p138
        %p223 = pneg %p135
        %s224 = sand.u32 %s125, 1
        %s225 = sand.u32 %s125, 1
        %s226 = smul.addr %s225, 64
        %s227 = scalar_lea.vmem [#allocation3], %s226
        %s228 = smul.u32 4, %s19
        %p229 = scmp.lt.s32.totalorder %s228, 3
        %s230 = scalar_select %p229, %s228, 3
        %p231 = scmp.lt.s32.totalorder %s21, 0
        %s232 = scalar_select %p231, %s21, 0
        %s233 = sadd.s32 %s232, %s230
        %s234 = smul.addr %s233, 8
        %s235 = scalar_lea.vmem %s0, %s234
        %s236 = smul.u32 4, %s19
        %s237 = smul.u32 32, %s20
        %p238 = scmp.lt.s32.totalorder %s237, 63
        %s239 = scalar_select %p238, %s237, 63
        %p240 = scmp.lt.s32.totalorder %s21, 0
        %s241 = scalar_select %p240, %s21, 0
        %s242 = sadd.s32 %s241, %s239
        %s243 = smul.addr %s242, 8
        %s244 = scalar_lea.vmem %s1, %s243
        %s245 = smul.u32 32, %s20
        %s246 = smul.u32 2, %s20
        %p247 = scmp.lt.s32.totalorder %s246, 3
        %s248 = scalar_select %p247, %s246, 3
        %s249 = scalar_lea.vmem %s2, %s248
        %s250 = smul.u32 2, %s20
        %s251 = smul.u32 4, %s19
        %s252 = smul.u32 2, %s20
        %p253 = scmp.eq.s32.totalorder %s21, 0
        // Predicated region
        $region33: #{disentangled_transformer_layer.21} parent=31 // pred_check
          %p254 = pneg %p253
        $region34: #{disentangled_transformer_layer.21} parent=31 // pred_check_branch
          %256 = sbr.rel (%p254) target = $region36
        $region35: #{disentangled_transformer_layer.21} parent=31 // pred_region
          %257 = vst [vmem:[#allocation2] sm:$0xff] 0.0
          %258 = vst [vmem:[#allocation2 + $0x8] sm:$0xff] 0.0
          %259 = vst [vmem:[#allocation2 + $0x10] sm:$0xff] 0.0
          %260 = vst [vmem:[#allocation2 + $0x18] sm:$0xff] 0.0
          %261 = vst [vmem:[#allocation2 + $0x20] sm:$0xff] 0.0
          %262 = vst [vmem:[#allocation2 + $0x28] sm:$0xff] 0.0
          %263 = vst [vmem:[#allocation2 + $0x30] sm:$0xff] 0.0
          %264 = vst [vmem:[#allocation2 + $0x38] sm:$0xff] 0.0
        $region36: #{disentangled_transformer_layer.21} parent=31 // pred_fallthru
          _
        %v265 = vld [vmem:[#allocation2] sm:$0xff]
        %v266 = vld [vmem:[#allocation2 + $0x8] sm:$0xff]
        %v267 = vld [vmem:[#allocation2 + $0x10] sm:$0xff]
        %v268 = vld [vmem:[#allocation2 + $0x18] sm:$0xff]
        %v269 = vld [vmem:[#allocation2 + $0x20] sm:$0xff]
        %v270 = vld [vmem:[#allocation2 + $0x28] sm:$0xff]
        %v271 = vld [vmem:[#allocation2 + $0x30] sm:$0xff]
        %v272 = vld [vmem:[#allocation2 + $0x38] sm:$0xff]
        %v273 = vld [vmem:[%s235] sm:$0xff]
        %v274 = vld [vmem:[%s235 + $0x8] sm:$0xff]
        %v275 = vld [vmem:[%s235 + $0x10] sm:$0xff]
        %v276 = vld [vmem:[%s235 + $0x18] sm:$0xff]
        %v277 = vld [vmem:[%s244] sm:$0xff]
        %v278 = vld [vmem:[%s244 + $0x8] sm:$0xff]
        %v279 = vld [vmem:[%s244 + $0x10] sm:$0xff]
        %v280 = vld [vmem:[%s244 + $0x18] sm:$0xff]
        %v281 = vld [vmem:[%s244 + $0x20] sm:$0xff]
        %v282 = vld [vmem:[%s244 + $0x28] sm:$0xff]
        %v283 = vld [vmem:[%s244 + $0x30] sm:$0xff]
        %v284 = vld [vmem:[%s244 + $0x38] sm:$0xff]
        %v285 = vld [vmem:[%s244 + $0x40] sm:$0xff]
        %v286 = vld [vmem:[%s244 + $0x48] sm:$0xff]
        %v287 = vld [vmem:[%s244 + $0x50] sm:$0xff]
        %v288 = vld [vmem:[%s244 + $0x58] sm:$0xff]
        %v289 = vld [vmem:[%s244 + $0x60] sm:$0xff]
        %v290 = vld [vmem:[%s244 + $0x68] sm:$0xff]
        %v291 = vld [vmem:[%s244 + $0x70] sm:$0xff]
        %v292 = vld [vmem:[%s244 + $0x78] sm:$0xff]
        %v293 = vld [vmem:[%s244 + $0x80] sm:$0xff]
        %v294 = vld [vmem:[%s244 + $0x88] sm:$0xff]
        %v295 = vld [vmem:[%s244 + $0x90] sm:$0xff]
        %v296 = vld [vmem:[%s244 + $0x98] sm:$0xff]
        %v297 = vld [vmem:[%s244 + $0xa0] sm:$0xff]
        %v298 = vld [vmem:[%s244 + $0xa8] sm:$0xff]
        %v299 = vld [vmem:[%s244 + $0xb0] sm:$0xff]
        %v300 = vld [vmem:[%s244 + $0xb8] sm:$0xff]
        %v301 = vld [vmem:[%s244 + $0xc0] sm:$0xff]
        %v302 = vld [vmem:[%s244 + $0xc8] sm:$0xff]
        %v303 = vld [vmem:[%s244 + $0xd0] sm:$0xff]
        %v304 = vld [vmem:[%s244 + $0xd8] sm:$0xff]
        %v305 = vld [vmem:[%s244 + $0xe0] sm:$0xff]
        %v306 = vld [vmem:[%s244 + $0xe8] sm:$0xff]
        %v307 = vld [vmem:[%s244 + $0xf0] sm:$0xff]
        %v308 = vld [vmem:[%s244 + $0xf8] sm:$0xff]
        %309 = vmatprep.subr.mxu0 0.0
        %310 = vmatpush1.xpose.msra.mxu0 %v292
        %311 = vmatprep.subr.mxu0 0.0
        %312 = vmatpush1.xpose.msra.mxu0 %v291
        %313 = vmatprep.subr.mxu0 0.0
        %314 = vmatpush1.xpose.msra.mxu0 %v290
        %315 = vmatprep.subr.mxu0 0.0
        %316 = vmatpush1.xpose.msra.mxu0 %v289
        %317 = vmatprep.subr.mxu0 0.0
        %318 = vmatpush1.xpose.msra.mxu0 %v288
        %319 = vmatprep.subr.mxu0 0.0
        %320 = vmatpush1.xpose.msra.mxu0 %v287
        %321 = vmatprep.subr.mxu0 0.0
        %322 = vmatpush1.xpose.msra.mxu0 %v286
        %323 = vmatprep.subr.mxu0 0.0
        %324 = vmatpush1.xpose.msra.mxu0 %v285
        %325 = vmatprep.subr.mxu0 0.0
        %326 = vmatpush1.xpose.msra.mxu0 %v284
        %327 = vmatprep.subr.mxu0 0.0
        %328 = vmatpush1.xpose.msra.mxu0 %v283
        %329 = vmatprep.subr.mxu0 0.0
        %330 = vmatpush1.xpose.msra.mxu0 %v282
        %331 = vmatprep.subr.mxu0 0.0
        %332 = vmatpush1.xpose.msra.mxu0 %v281
        %333 = vmatprep.subr.mxu0 0.0
        %334 = vmatpush1.xpose.msra.mxu0 %v280
        %335 = vmatprep.subr.mxu0 0.0
        %336 = vmatpush1.xpose.msra.mxu0 %v279
        %337 = vmatprep.subr.mxu0 0.0
        %338 = vmatpush1.xpose.msra.mxu0 %v278
        %339 = vmatprep.subr.mxu0 0.0
        %340 = vmatpush1.xpose.msra.mxu0 %v277
        %341 = vmatprep.subr.mxu0 0.0
        %342 = vmatpush2.xpose.msra.mxu0 %v308
        %343 = vmatprep.subr.mxu0 0.0
        %344 = vmatpush2.xpose.msra.mxu0 %v307
        %345 = vmatprep.subr.mxu0 0.0
        %346 = vmatpush2.xpose.msra.mxu0 %v306
        %347 = vmatprep.subr.mxu0 0.0
        %348 = vmatpush2.xpose.msra.mxu0 %v305
        %349 = vmatprep.subr.mxu0 0.0
        %350 = vmatpush2.xpose.msra.mxu0 %v304
        %351 = vmatprep.subr.mxu0 0.0
        %352 = vmatpush2.xpose.msra.mxu0 %v303
        %353 = vmatprep.subr.mxu0 0.0
        %354 = vmatpush2.xpose.msra.mxu0 %v302
        %355 = vmatprep.subr.mxu0 0.0
        %356 = vmatpush2.xpose.msra.mxu0 %v301
        %357 = vmatprep.subr.mxu0 0.0
        %358 = vmatpush2.xpose.msra.mxu0 %v300
        %359 = vmatprep.subr.mxu0 0.0
        %360 = vmatpush2.xpose.msra.mxu0 %v299
        %361 = vmatprep.subr.mxu0 0.0
        %362 = vmatpush2.xpose.msra.mxu0 %v298
        %363 = vmatprep.subr.mxu0 0.0
        %364 = vmatpush2.xpose.msra.mxu0 %v297
        %365 = vmatprep.subr.mxu0 0.0
        %366 = vmatpush2.xpose.msra.mxu0 %v296
        %367 = vmatprep.subr.mxu0 0.0
        %368 = vmatpush2.xpose.msra.mxu0 %v295
        %369 = vmatprep.subr.mxu0 0.0
        %370 = vmatpush2.xpose.msra.mxu0 %v294
        %371 = vmatprep.subr.mxu0 0.0
        %372 = vmatpush2.xpose.msra.mxu0 %v293
        %373 = vmatprep.mubr.f32.mxu0 0.0
        %374 = vmatmul.mubr.f32.gmra.mxu0 %v273
        %v375 = vpop.f32.mrf.mxu0
        %v376 = vadd.f32 0.0, %v375
        %v377 = vpop.f32.mrf.mxu0
        %v378 = vadd.f32 0.0, %v377
        %379 = vmatprep.mubr.f32.mxu0 0.0
        %380 = vmatmul.mubr.f32.gmra.mxu0 %v274
        %v381 = vpop.f32.mrf.mxu0
        %v382 = vadd.f32 0.0, %v381
        %v383 = vpop.f32.mrf.mxu0
        %v384 = vadd.f32 0.0, %v383
        %385 = vmatprep.mubr.f32.mxu0 0.0
        %386 = vmatmul.mubr.f32.gmra.mxu0 %v275
        %v387 = vpop.f32.mrf.mxu0
        %v388 = vadd.f32 0.0, %v387
        %v389 = vpop.f32.mrf.mxu0
        %v390 = vadd.f32 0.0, %v389
        %391 = vmatprep.mubr.f32.mxu0 0.0
        %392 = vmatmul.mubr.f32.gmra.mxu0 %v276
        %v393 = vpop.f32.mrf.mxu0
        %v394 = vadd.f32 0.0, %v393
        %v395 = vpop.f32.mrf.mxu0
        %v396 = vadd.f32 0.0, %v395
        %397 = vdwg.mxu0
        %v398 = vadd.f32 %v265, %v376
        %v399 = vadd.f32 %v266, %v378
        %v400 = vadd.f32 %v267, %v382
        %v401 = vadd.f32 %v268, %v384
        %v402 = vadd.f32 %v269, %v388
        %v403 = vadd.f32 %v270, %v390
        %v404 = vadd.f32 %v271, %v394
        %v405 = vadd.f32 %v272, %v396
        %406 = vst [vmem:[#allocation2] sm:$0xff] %v398
        %407 = vst [vmem:[#allocation2 + $0x8] sm:$0xff] %v399
        %408 = vst [vmem:[#allocation2 + $0x10] sm:$0xff] %v400
        %409 = vst [vmem:[#allocation2 + $0x18] sm:$0xff] %v401
        %410 = vst [vmem:[#allocation2 + $0x20] sm:$0xff] %v402
        %411 = vst [vmem:[#allocation2 + $0x28] sm:$0xff] %v403
        %412 = vst [vmem:[#allocation2 + $0x30] sm:$0xff] %v404
        %413 = vst [vmem:[#allocation2 + $0x38] sm:$0xff] %v405
        // Predicated region
        $region37: #{disentangled_transformer_layer.21} parent=31 // pred_check
          %p414 = pneg %p253
        $region38: #{disentangled_transformer_layer.21} parent=31 // pred_check_branch
          %416 = sbr.rel (%p414) target = $region40
        $region39: #{disentangled_transformer_layer.21} parent=31 // pred_region
          %v417 = vld [vmem:[#allocation2] sm:$0xff]
          %v418 = vld [vmem:[#allocation2 + $0x8] sm:$0xff]
          %v419 = vld [vmem:[#allocation2 + $0x10] sm:$0xff]
          %v420 = vld [vmem:[#allocation2 + $0x18] sm:$0xff]
          %v421 = vld [vmem:[#allocation2 + $0x20] sm:$0xff]
          %v422 = vld [vmem:[#allocation2 + $0x28] sm:$0xff]
          %v423 = vld [vmem:[#allocation2 + $0x30] sm:$0xff]
          %v424 = vld [vmem:[#allocation2 + $0x38] sm:$0xff]
          %v425 = vld [vmem:[%s249] sm:$0x3]
          %v427 = vlaneseq
          %v428 = vshrl.u32 %v427, 7
          %v429 = vsub.s32 0, %v428
          %v430 = vrot.slane %v425, %v429
          %v431 = vlaneseq
          %v432 = vshrl.u32 %v431, 7
          %v433 = vsub.s32 1, %v432
          %v434 = vrot.slane %v425, %v433
          %v437 = vadd.f32 %v417, %v430
          %v438 = vadd.f32 %v418, %v434
          %v439 = vadd.f32 %v419, %v430
          %v440 = vadd.f32 %v420, %v434
          %v441 = vadd.f32 %v421, %v430
          %v442 = vadd.f32 %v422, %v434
          %v443 = vadd.f32 %v423, %v430
          %v444 = vadd.f32 %v424, %v434
          %v445 = vmul.f32 %v437, 0.5
          %v446 = vmul.f32 %v438, 0.5
          %v447 = vmul.f32 %v439, 0.5
          %v448 = vmul.f32 %v440, 0.5
          %v449 = vmul.f32 %v441, 0.5
          %v450 = vmul.f32 %v442, 0.5
          %v451 = vmul.f32 %v443, 0.5
          %v452 = vmul.f32 %v444, 0.5
          %v453 = vmul.f32 %v437, %v437
          %v454 = vmul.f32 %v438, %v438
          %v455 = vmul.f32 %v439, %v439
          %v456 = vmul.f32 %v440, %v440
          %v457 = vmul.f32 %v441, %v441
          %v458 = vmul.f32 %v442, %v442
          %v459 = vmul.f32 %v443, %v443
          %v460 = vmul.f32 %v444, %v444
          %v461 = vmul.f32 %v453, %v437
          %v462 = vmul.f32 %v454, %v438
          %v463 = vmul.f32 %v455, %v439
          %v464 = vmul.f32 %v456, %v440
          %v465 = vmul.f32 %v457, %v441
          %v466 = vmul.f32 %v458, %v442
          %v467 = vmul.f32 %v459, %v443
          %v468 = vmul.f32 %v460, %v444
          %v469 = vmul.f32 %v461, 0.044715
          %v470 = vmul.f32 %v462, 0.044715
          %v471 = vmul.f32 %v463, 0.044715
          %v472 = vmul.f32 %v464, 0.044715
          %v473 = vmul.f32 %v465, 0.044715
          %v474 = vmul.f32 %v466, 0.044715
          %v475 = vmul.f32 %v467, 0.044715
          %v476 = vmul.f32 %v468, 0.044715
          %v477 = vadd.f32 %v437, %v469
          %v478 = vadd.f32 %v438, %v470
          %v479 = vadd.f32 %v439, %v471
          %v480 = vadd.f32 %v440, %v472
          %v481 = vadd.f32 %v441, %v473
          %v482 = vadd.f32 %v442, %v474
          %v483 = vadd.f32 %v443, %v475
          %v484 = vadd.f32 %v444, %v476
          %v485 = vmul.f32 %v477, 0.7978846
          %v486 = vmul.f32 %v478, 0.7978846
          %v487 = vmul.f32 %v479, 0.7978846
          %v488 = vmul.f32 %v480, 0.7978846
          %v489 = vmul.f32 %v481, 0.7978846
          %v490 = vmul.f32 %v482, 0.7978846
          %v491 = vmul.f32 %v483, 0.7978846
          %v492 = vmul.f32 %v484, 0.7978846
          %v493 = vtanh.pop %v485
          %v494 = vtanh.pop %v486
          %v495 = vtanh.pop %v487
          %v496 = vtanh.pop %v488
          %v497 = vtanh.pop %v489
          %v498 = vtanh.pop %v490
          %v499 = vtanh.pop %v491
          %v500 = vtanh.pop %v492
          %v501 = vadd.f32 %v493, 1.0
          %v502 = vadd.f32 %v494, 1.0
          %v503 = vadd.f32 %v495, 1.0
          %v504 = vadd.f32 %v496, 1.0
          %v505 = vadd.f32 %v497, 1.0
          %v506 = vadd.f32 %v498, 1.0
          %v507 = vadd.f32 %v499, 1.0
          %v508 = vadd.f32 %v500, 1.0
          %v509 = vmul.f32 %v445, %v501
          %v510 = vmul.f32 %v446, %v502
          %v511 = vmul.f32 %v447, %v503
          %v512 = vmul.f32 %v448, %v504
          %v513 = vmul.f32 %v449, %v505
          %v514 = vmul.f32 %v450, %v506
          %v515 = vmul.f32 %v451, %v507
          %v516 = vmul.f32 %v452, %v508
          %517 = vst [vmem:[%s227] sm:$0xff] %v509
          %518 = vst [vmem:[%s227 + $0x8] sm:$0xff] %v510
          %519 = vst [vmem:[%s227 + $0x10] sm:$0xff] %v511
          %520 = vst [vmem:[%s227 + $0x18] sm:$0xff] %v512
          %521 = vst [vmem:[%s227 + $0x20] sm:$0xff] %v513
          %522 = vst [vmem:[%s227 + $0x28] sm:$0xff] %v514
          %523 = vst [vmem:[%s227 + $0x30] sm:$0xff] %v515
          %524 = vst [vmem:[%s227 + $0x38] sm:$0xff] %v516
        $region40: #{disentangled_transformer_layer.21} parent=31 // pred_fallthru
          _
        %s525 = sand.u32 %s125, 1
        %s526 = sand.u32 %s125, 1
        %s527 = smul.addr %s526, 64
        %s528 = scalar_lea.vmem [#allocation3], %s527
        // Predicated region
        $region41: #{disentangled_transformer_layer.21} parent=31 // pred_check
          %p529 = pneg %p135
        $region42: #{disentangled_transformer_layer.21} parent=31 // pred_check_branch
          %531 = sbr.rel (%p529) target = $region44
        $region43: #{disentangled_transformer_layer.21} parent=31 // pred_region
          %s532 = smul.u32 4, %s19
          %s533 = smul.u32 2, %s20
          %s534 = smul.addr %s532, 4
          %s535 = sadd.s32 %s533, %s534
          %s536 = smul.addr %s535, 8
          %s537 = scalar_lea.vmem %s3, %s536
          // Predicated region
          $region45: #{disentangled_transformer_layer.21} parent=43 // pred_check
            _
          $region46: #{disentangled_transformer_layer.21} parent=43 // pred_check_branch
            %539 = sbr.rel (0) target = $region48
          $region47: #{disentangled_transformer_layer.21} parent=43 // pred_region
            // Predicated region
            $region49: #{disentangled_transformer_layer.21} parent=47 // pred_check
              _
            $region50: #{disentangled_transformer_layer.21} parent=47 // pred_check_branch
              %541 = sbr.rel (0) target = $region52
            $region51: #{disentangled_transformer_layer.21} parent=47 // pred_region
              loop: start=0, step=1, limit=1
              $region53: #{disentangled_transformer_layer.21} parent=51 // loop_pre_header
                _
              $region54: #{disentangled_transformer_layer.21} parent=51 // loop_header
                %s543 = sphi 0, %s547
                %p544 = scmp.ge.s32.totalorder %s543, 1
                %s548 = sphi %s528, %s528
                %s549 = sphi %s537, %s537
              $region55: #{disentangled_transformer_layer.21} parent=51 // loop_header_branch
                %546 = sbr.rel (%p544) target = $region59
              $region56: #{disentangled_transformer_layer.21} parent=51 // loop_body
                %v550 = vld [vmem:[%s548] sm:$0xff]
                %551 = vst [vmem:[%s549] sm:$0xff] %v550
                %v552 = vld [vmem:[%s548 + $0x8] sm:$0xff]
                %553 = vst [vmem:[%s549 + $0x8] sm:$0xff] %v552
                %v554 = vld [vmem:[%s548 + $0x10] sm:$0xff]
                %555 = vst [vmem:[%s549 + $0x20] sm:$0xff] %v554
                %v556 = vld [vmem:[%s548 + $0x18] sm:$0xff]
                %557 = vst [vmem:[%s549 + $0x28] sm:$0xff] %v556
                %v558 = vld [vmem:[%s548 + $0x20] sm:$0xff]
                %559 = vst [vmem:[%s549 + $0x40] sm:$0xff] %v558
                %v560 = vld [vmem:[%s548 + $0x28] sm:$0xff]
                %561 = vst [vmem:[%s549 + $0x48] sm:$0xff] %v560
                %v562 = vld [vmem:[%s548 + $0x30] sm:$0xff]
                %563 = vst [vmem:[%s549 + $0x60] sm:$0xff] %v562
                %v564 = vld [vmem:[%s548 + $0x38] sm:$0xff]
                %565 = vst [vmem:[%s549 + $0x68] sm:$0xff] %v564
              $region57: #{disentangled_transformer_layer.21} parent=51 // loop_footer
                %s547 = sadd.s32 1, %s543
              $region58: #{disentangled_transformer_layer.21} parent=51 // loop_footer_branch
                %542 = sbr.rel target = $region54
              $region59: #{disentangled_transformer_layer.21} parent=51 // loop_exit
                _
            $region52: #{disentangled_transformer_layer.21} parent=47 // pred_fallthru
              _
            // Predicated region
            $region60: #{disentangled_transformer_layer.21} parent=47 // pred_check
              _
            $region61: #{disentangled_transformer_layer.21} parent=47 // pred_check_branch
              %567 = sbr.rel target = $region63
            $region62: #{disentangled_transformer_layer.21} parent=47 // pred_region
              _
            $region63: #{disentangled_transformer_layer.21} parent=47 // pred_fallthru
              _
          $region48: #{disentangled_transformer_layer.21} parent=43 // pred_fallthru
            _
          %568 = vnop
        $region44: #{disentangled_transformer_layer.21} parent=31 // pred_fallthru
          _
      $region32: #{disentangled_transformer_layer.21} parent=5 // pred_fallthru
        _
      %p569 = scmp.le.s32.totalorder 2, %s9
      // Predicated region
      $region64: #{disentangled_transformer_layer.21} parent=5 // pred_check
        %p570 = pneg %p569
      $region65: #{disentangled_transformer_layer.21} parent=5 // pred_check_branch
        %572 = sbr.rel (%p570) target = $region67
      $region66: #{disentangled_transformer_layer.21} parent=5 // pred_region
        %s573 = ssub.s32 %s9, 2
        // Predicated region
        $region68: #{disentangled_transformer_layer.21} parent=66 // pred_check
          %p574 = pneg %p141
        $region69: #{disentangled_transformer_layer.21} parent=66 // pred_check_branch
          %576 = sbr.rel (%p574) target = $region71
        $region70: #{disentangled_transformer_layer.21} parent=66 // pred_region
          %s577 = sand.u32 %s126, 1
          %s578 = sand.u32 %s126, 1
          %s579 = smul.addr %s578, 64
          %s580 = scalar_lea.vmem [#allocation3], %s579
        $region71: #{disentangled_transformer_layer.21} parent=66 // pred_fallthru
          _
      $region67: #{disentangled_transformer_layer.21} parent=5 // pred_fallthru
        _
    $region6: #{disentangled_transformer_layer.21} parent=1 // loop_footer
      %s13 = sadd.s32 1, %s9
    $region7: #{disentangled_transformer_layer.21} parent=1 // loop_footer_branch
      %8 = sbr.rel target = $region3
    $region8: #{disentangled_transformer_layer.21} parent=1 // loop_exit
      _

// kernel: disentangled_transformer_layer.22
$region0: #{disentangled_transformer_layer.22}
  #allocation0 [shape = 'u32[]', space=smem, size = 0x4, offset = 0x4, fixed_abs, tag = 'smem constant byte address 0x4 - core index']
  #allocation1 [shape = 'u32[144,128]{1,0:T(1,128)}', space=vmem, size = 0x12000, scoped, tag = 'internal scratch']
  #allocation2 [shape = 'f32[32,128]{1,0:T(8,128)}', space=vmem, size = 0x4000, scoped, tag = 'scratch operand']
  %s0 = inlined_call_operand.vmem [shape: f32[32,512], index: 0, kind: input, shape index: {}]
  %s1 = inlined_call_operand.vmem [shape: f32[128,512], index: 1, kind: input, shape index: {}]
  %s2 = inlined_call_operand.vmem [shape: f32[1,128], index: 2, kind: input, shape index: {}]
  %s3 = inlined_call_operand.vmem [shape: f32[32,128], index: 3, kind: output, shape index: {}]
  %s4 = sld [smem:[#allocation0]]
  $region30: #{disentangled_transformer_layer.22} parent=0
    _
  %s6 = ssub.s32 1, %s4
  %s7 = scalar_select 0, %s6, %s4
  // Predicated region
  $region2: #{disentangled_transformer_layer.22} parent=0 // pred_check
    _
  $region3: #{disentangled_transformer_layer.22} parent=0 // pred_check_branch
    %9 = sbr.rel (0) target = $region5
  $region4: #{disentangled_transformer_layer.22} parent=0 // pred_region
    _
  $region5: #{disentangled_transformer_layer.22} parent=0 // pred_fallthru
    _
  // Predicated region
  $region6: #{disentangled_transformer_layer.22} parent=0 // pred_check
    _
  $region7: #{disentangled_transformer_layer.22} parent=0 // pred_check_branch
    %11 = sbr.rel (0) target = $region9
  $region8: #{disentangled_transformer_layer.22} parent=0 // pred_region
    _
  $region9: #{disentangled_transformer_layer.22} parent=0 // pred_fallthru
    _
  // Predicated region
  $region10: #{disentangled_transformer_layer.22} parent=0 // pred_check
    _
  $region11: #{disentangled_transformer_layer.22} parent=0 // pred_check_branch
    %13 = sbr.rel (0) target = $region13
  $region12: #{disentangled_transformer_layer.22} parent=0 // pred_region
    _
  $region13: #{disentangled_transformer_layer.22} parent=0 // pred_fallthru
    _
  %p14 = scmp.eq.s32.totalorder 0, 0
  // Predicated region
  $region14: #{disentangled_transformer_layer.22} parent=0 // pred_check
    %p15 = pneg %p14
  $region15: #{disentangled_transformer_layer.22} parent=0 // pred_check_branch
    %17 = sbr.rel (%p15) target = $region17
  $region16: #{disentangled_transformer_layer.22} parent=0 // pred_region
    %18 = vst [vmem:[#allocation2] sm:$0xff] 0.0
    %19 = vst [vmem:[#allocation2 + $0x8] sm:$0xff] 0.0
    %20 = vst [vmem:[#allocation2 + $0x10] sm:$0xff] 0.0
    %21 = vst [vmem:[#allocation2 + $0x18] sm:$0xff] 0.0
  $region17: #{disentangled_transformer_layer.22} parent=0 // pred_fallthru
    _
  %v22 = vld [vmem:[#allocation2] sm:$0xff]
  %v23 = vld [vmem:[#allocation2 + $0x8] sm:$0xff]
  %v24 = vld [vmem:[#allocation2 + $0x10] sm:$0xff]
  %v25 = vld [vmem:[#allocation2 + $0x18] sm:$0xff]
  %v26 = vld [vmem:[%s0] sm:$0xff]
  %v27 = vld [vmem:[%s0 + $0x8] sm:$0xff]
  %v28 = vld [vmem:[%s0 + $0x10] sm:$0xff]
  %v29 = vld [vmem:[%s0 + $0x18] sm:$0xff]
  %v30 = vld [vmem:[%s0 + $0x20] sm:$0xff]
  %v31 = vld [vmem:[%s0 + $0x28] sm:$0xff]
  %v32 = vld [vmem:[%s0 + $0x30] sm:$0xff]
  %v33 = vld [vmem:[%s0 + $0x38] sm:$0xff]
  %v34 = vld [vmem:[%s0 + $0x40] sm:$0xff]
  %v35 = vld [vmem:[%s0 + $0x48] sm:$0xff]
  %v36 = vld [vmem:[%s0 + $0x50] sm:$0xff]
  %v37 = vld [vmem:[%s0 + $0x58] sm:$0xff]
  %v38 = vld [vmem:[%s0 + $0x60] sm:$0xff]
  %v39 = vld [vmem:[%s0 + $0x68] sm:$0xff]
  %v40 = vld [vmem:[%s0 + $0x70] sm:$0xff]
  %v41 = vld [vmem:[%s0 + $0x78] sm:$0xff]
  %v42 = vld [vmem:[%s1] sm:$0xff]
  %v43 = vld [vmem:[%s1 + $0x8] sm:$0xff]
  %v44 = vld [vmem:[%s1 + $0x10] sm:$0xff]
  %v45 = vld [vmem:[%s1 + $0x18] sm:$0xff]
  %v46 = vld [vmem:[%s1 + $0x20] sm:$0xff]
  %v47 = vld [vmem:[%s1 + $0x28] sm:$0xff]
  %v48 = vld [vmem:[%s1 + $0x30] sm:$0xff]
  %v49 = vld [vmem:[%s1 + $0x38] sm:$0xff]
  %v50 = vld [vmem:[%s1 + $0x40] sm:$0xff]
  %v51 = vld [vmem:[%s1 + $0x48] sm:$0xff]
  %v52 = vld [vmem:[%s1 + $0x50] sm:$0xff]
  %v53 = vld [vmem:[%s1 + $0x58] sm:$0xff]
  %v54 = vld [vmem:[%s1 + $0x60] sm:$0xff]
  %v55 = vld [vmem:[%s1 + $0x68] sm:$0xff]
  %v56 = vld [vmem:[%s1 + $0x70] sm:$0xff]
  %v57 = vld [vmem:[%s1 + $0x78] sm:$0xff]
  %v58 = vld [vmem:[%s1 + $0x80] sm:$0xff]
  %v59 = vld [vmem:[%s1 + $0x88] sm:$0xff]
  %v60 = vld [vmem:[%s1 + $0x90] sm:$0xff]
  %v61 = vld [vmem:[%s1 + $0x98] sm:$0xff]
  %v62 = vld [vmem:[%s1 + $0xa0] sm:$0xff]
  %v63 = vld [vmem:[%s1 + $0xa8] sm:$0xff]
  %v64 = vld [vmem:[%s1 + $0xb0] sm:$0xff]
  %v65 = vld [vmem:[%s1 + $0xb8] sm:$0xff]
  %v66 = vld [vmem:[%s1 + $0xc0] sm:$0xff]
  %v67 = vld [vmem:[%s1 + $0xc8] sm:$0xff]
  %v68 = vld [vmem:[%s1 + $0xd0] sm:$0xff]
  %v69 = vld [vmem:[%s1 + $0xd8] sm:$0xff]
  %v70 = vld [vmem:[%s1 + $0xe0] sm:$0xff]
  %v71 = vld [vmem:[%s1 + $0xe8] sm:$0xff]
  %v72 = vld [vmem:[%s1 + $0xf0] sm:$0xff]
  %v73 = vld [vmem:[%s1 + $0xf8] sm:$0xff]
  %v74 = vld [vmem:[%s1 + $0x100] sm:$0xff]
  %v75 = vld [vmem:[%s1 + $0x108] sm:$0xff]
  %v76 = vld [vmem:[%s1 + $0x110] sm:$0xff]
  %v77 = vld [vmem:[%s1 + $0x118] sm:$0xff]
  %v78 = vld [vmem:[%s1 + $0x120] sm:$0xff]
  %v79 = vld [vmem:[%s1 + $0x128] sm:$0xff]
  %v80 = vld [vmem:[%s1 + $0x130] sm:$0xff]
  %v81 = vld [vmem:[%s1 + $0x138] sm:$0xff]
  %v82 = vld [vmem:[%s1 + $0x140] sm:$0xff]
  %v83 = vld [vmem:[%s1 + $0x148] sm:$0xff]
  %v84 = vld [vmem:[%s1 + $0x150] sm:$0xff]
  %v85 = vld [vmem:[%s1 + $0x158] sm:$0xff]
  %v86 = vld [vmem:[%s1 + $0x160] sm:$0xff]
  %v87 = vld [vmem:[%s1 + $0x168] sm:$0xff]
  %v88 = vld [vmem:[%s1 + $0x170] sm:$0xff]
  %v89 = vld [vmem:[%s1 + $0x178] sm:$0xff]
  %v90 = vld [vmem:[%s1 + $0x180] sm:$0xff]
  %v91 = vld [vmem:[%s1 + $0x188] sm:$0xff]
  %v92 = vld [vmem:[%s1 + $0x190] sm:$0xff]
  %v93 = vld [vmem:[%s1 + $0x198] sm:$0xff]
  %v94 = vld [vmem:[%s1 + $0x1a0] sm:$0xff]
  %v95 = vld [vmem:[%s1 + $0x1a8] sm:$0xff]
  %v96 = vld [vmem:[%s1 + $0x1b0] sm:$0xff]
  %v97 = vld [vmem:[%s1 + $0x1b8] sm:$0xff]
  %v98 = vld [vmem:[%s1 + $0x1c0] sm:$0xff]
  %v99 = vld [vmem:[%s1 + $0x1c8] sm:$0xff]
  %v100 = vld [vmem:[%s1 + $0x1d0] sm:$0xff]
  %v101 = vld [vmem:[%s1 + $0x1d8] sm:$0xff]
  %v102 = vld [vmem:[%s1 + $0x1e0] sm:$0xff]
  %v103 = vld [vmem:[%s1 + $0x1e8] sm:$0xff]
  %v104 = vld [vmem:[%s1 + $0x1f0] sm:$0xff]
  %v105 = vld [vmem:[%s1 + $0x1f8] sm:$0xff]
  %106 = vmatprep.subr.mxu0 %v103
  %107 = vmatpush1.xpose.msra.mxu0 %v102
  %108 = vmatprep.subr.mxu0 %v99
  %109 = vmatpush1.xpose.msra.mxu0 %v98
  %110 = vmatprep.subr.mxu0 %v95
  %111 = vmatpush1.xpose.msra.mxu0 %v94
  %112 = vmatprep.subr.mxu0 %v91
  %113 = vmatpush1.xpose.msra.mxu0 %v90
  %114 = vmatprep.subr.mxu0 %v87
  %115 = vmatpush1.xpose.msra.mxu0 %v86
  %116 = vmatprep.subr.mxu0 %v83
  %117 = vmatpush1.xpose.msra.mxu0 %v82
  %118 = vmatprep.subr.mxu0 %v79
  %119 = vmatpush1.xpose.msra.mxu0 %v78
  %120 = vmatprep.subr.mxu0 %v75
  %121 = vmatpush1.xpose.msra.mxu0 %v74
  %122 = vmatprep.subr.mxu0 %v71
  %123 = vmatpush1.xpose.msra.mxu0 %v70
  %124 = vmatprep.subr.mxu0 %v67
  %125 = vmatpush1.xpose.msra.mxu0 %v66
  %126 = vmatprep.subr.mxu0 %v63
  %127 = vmatpush1.xpose.msra.mxu0 %v62
  %128 = vmatprep.subr.mxu0 %v59
  %129 = vmatpush1.xpose.msra.mxu0 %v58
  %130 = vmatprep.subr.mxu0 %v55
  %131 = vmatpush1.xpose.msra.mxu0 %v54
  %132 = vmatprep.subr.mxu0 %v51
  %133 = vmatpush1.xpose.msra.mxu0 %v50
  %134 = vmatprep.subr.mxu0 %v47
  %135 = vmatpush1.xpose.msra.mxu0 %v46
  %136 = vmatprep.subr.mxu0 %v43
  %137 = vmatpush1.xpose.msra.mxu0 %v42
  %138 = vmatprep.subr.mxu0 0.0
  %139 = vmatpush2.xpose.msra.mxu0 0.0
  %140 = vmatprep.subr.mxu0 0.0
  %141 = vmatpush2.xpose.msra.mxu0 0.0
  %142 = vmatprep.subr.mxu0 0.0
  %143 = vmatpush2.xpose.msra.mxu0 0.0
  %144 = vmatprep.subr.mxu0 0.0
  %145 = vmatpush2.xpose.msra.mxu0 0.0
  %146 = vmatprep.subr.mxu0 0.0
  %147 = vmatpush2.xpose.msra.mxu0 0.0
  %148 = vmatprep.subr.mxu0 0.0
  %149 = vmatpush2.xpose.msra.mxu0 0.0
  %150 = vmatprep.subr.mxu0 0.0
  %151 = vmatpush2.xpose.msra.mxu0 0.0
  %152 = vmatprep.subr.mxu0 0.0
  %153 = vmatpush2.xpose.msra.mxu0 0.0
  %154 = vmatprep.subr.mxu0 0.0
  %155 = vmatpush2.xpose.msra.mxu0 0.0
  %156 = vmatprep.subr.mxu0 0.0
  %157 = vmatpush2.xpose.msra.mxu0 0.0
  %158 = vmatprep.subr.mxu0 0.0
  %159 = vmatpush2.xpose.msra.mxu0 0.0
  %160 = vmatprep.subr.mxu0 0.0
  %161 = vmatpush2.xpose.msra.mxu0 0.0
  %162 = vmatprep.subr.mxu0 0.0
  %163 = vmatpush2.xpose.msra.mxu0 0.0
  %164 = vmatprep.subr.mxu0 0.0
  %165 = vmatpush2.xpose.msra.mxu0 0.0
  %166 = vmatprep.subr.mxu0 0.0
  %167 = vmatpush2.xpose.msra.mxu0 0.0
  %168 = vmatprep.subr.mxu0 0.0
  %169 = vmatpush2.xpose.msra.mxu0 0.0
  %170 = vmatprep.mubr.f32.mxu0 %v27
  %171 = vmatmul.mubr.f32.gmra.mxu0 %v26
  %v172 = vpop.f32.mrf.mxu0
  %v173 = vadd.f32 0.0, %v172
  %v174 = vpop.f32.mrf.mxu0
  %175 = vmatprep.mubr.f32.mxu0 %v31
  %176 = vmatmul.mubr.f32.gmra.mxu0 %v30
  %v177 = vpop.f32.mrf.mxu0
  %v178 = vadd.f32 0.0, %v177
  %v179 = vpop.f32.mrf.mxu0
  %180 = vmatprep.mubr.f32.mxu0 %v35
  %181 = vmatmul.mubr.f32.gmra.mxu0 %v34
  %v182 = vpop.f32.mrf.mxu0
  %v183 = vadd.f32 0.0, %v182
  %v184 = vpop.f32.mrf.mxu0
  %185 = vmatprep.mubr.f32.mxu0 %v39
  %186 = vmatmul.mubr.f32.gmra.mxu0 %v38
  %v187 = vpop.f32.mrf.mxu0
  %v188 = vadd.f32 0.0, %v187
  %v189 = vpop.f32.mrf.mxu0
  %190 = vdwg.mxu0
  %191 = vmatprep.subr.mxu0 %v105
  %192 = vmatpush1.xpose.msra.mxu0 %v104
  %193 = vmatprep.subr.mxu0 %v101
  %194 = vmatpush1.xpose.msra.mxu0 %v100
  %195 = vmatprep.subr.mxu0 %v97
  %196 = vmatpush1.xpose.msra.mxu0 %v96
  %197 = vmatprep.subr.mxu0 %v93
  %198 = vmatpush1.xpose.msra.mxu0 %v92
  %199 = vmatprep.subr.mxu0 %v89
  %200 = vmatpush1.xpose.msra.mxu0 %v88
  %201 = vmatprep.subr.mxu0 %v85
  %202 = vmatpush1.xpose.msra.mxu0 %v84
  %203 = vmatprep.subr.mxu0 %v81
  %204 = vmatpush1.xpose.msra.mxu0 %v80
  %205 = vmatprep.subr.mxu0 %v77
  %206 = vmatpush1.xpose.msra.mxu0 %v76
  %207 = vmatprep.subr.mxu0 %v73
  %208 = vmatpush1.xpose.msra.mxu0 %v72
  %209 = vmatprep.subr.mxu0 %v69
  %210 = vmatpush1.xpose.msra.mxu0 %v68
  %211 = vmatprep.subr.mxu0 %v65
  %212 = vmatpush1.xpose.msra.mxu0 %v64
  %213 = vmatprep.subr.mxu0 %v61
  %214 = vmatpush1.xpose.msra.mxu0 %v60
  %215 = vmatprep.subr.mxu0 %v57
  %216 = vmatpush1.xpose.msra.mxu0 %v56
  %217 = vmatprep.subr.mxu0 %v53
  %218 = vmatpush1.xpose.msra.mxu0 %v52
  %219 = vmatprep.subr.mxu0 %v49
  %220 = vmatpush1.xpose.msra.mxu0 %v48
  %221 = vmatprep.subr.mxu0 %v45
  %222 = vmatpush1.xpose.msra.mxu0 %v44
  %223 = vmatprep.subr.mxu0 0.0
  %224 = vmatpush2.xpose.msra.mxu0 0.0
  %225 = vmatprep.subr.mxu0 0.0
  %226 = vmatpush2.xpose.msra.mxu0 0.0
  %227 = vmatprep.subr.mxu0 0.0
  %228 = vmatpush2.xpose.msra.mxu0 0.0
  %229 = vmatprep.subr.mxu0 0.0
  %230 = vmatpush2.xpose.msra.mxu0 0.0
  %231 = vmatprep.subr.mxu0 0.0
  %232 = vmatpush2.xpose.msra.mxu0 0.0
  %233 = vmatprep.subr.mxu0 0.0
  %234 = vmatpush2.xpose.msra.mxu0 0.0
  %235 = vmatprep.subr.mxu0 0.0
  %236 = vmatpush2.xpose.msra.mxu0 0.0
  %237 = vmatprep.subr.mxu0 0.0
  %238 = vmatpush2.xpose.msra.mxu0 0.0
  %239 = vmatprep.subr.mxu0 0.0
  %240 = vmatpush2.xpose.msra.mxu0 0.0
  %241 = vmatprep.subr.mxu0 0.0
  %242 = vmatpush2.xpose.msra.mxu0 0.0
  %243 = vmatprep.subr.mxu0 0.0
  %244 = vmatpush2.xpose.msra.mxu0 0.0
  %245 = vmatprep.subr.mxu0 0.0
  %246 = vmatpush2.xpose.msra.mxu0 0.0
  %247 = vmatprep.subr.mxu0 0.0
  %248 = vmatpush2.xpose.msra.mxu0 0.0
  %249 = vmatprep.subr.mxu0 0.0
  %250 = vmatpush2.xpose.msra.mxu0 0.0
  %251 = vmatprep.subr.mxu0 0.0
  %252 = vmatpush2.xpose.msra.mxu0 0.0
  %253 = vmatprep.subr.mxu0 0.0
  %254 = vmatpush2.xpose.msra.mxu0 0.0
  %255 = vmatprep.mubr.f32.mxu0 %v29
  %256 = vmatmul.mubr.f32.gmra.mxu0 %v28
  %v257 = vpop.f32.mrf.mxu0
  %v258 = vadd.f32 %v173, %v257
  %v259 = vpop.f32.mrf.mxu0
  %260 = vmatprep.mubr.f32.mxu0 %v33
  %261 = vmatmul.mubr.f32.gmra.mxu0 %v32
  %v262 = vpop.f32.mrf.mxu0
  %v263 = vadd.f32 %v178, %v262
  %v264 = vpop.f32.mrf.mxu0
  %265 = vmatprep.mubr.f32.mxu0 %v37
  %266 = vmatmul.mubr.f32.gmra.mxu0 %v36
  %v267 = vpop.f32.mrf.mxu0
  %v268 = vadd.f32 %v183, %v267
  %v269 = vpop.f32.mrf.mxu0
  %270 = vmatprep.mubr.f32.mxu0 %v41
  %271 = vmatmul.mubr.f32.gmra.mxu0 %v40
  %v272 = vpop.f32.mrf.mxu0
  %v273 = vadd.f32 %v188, %v272
  %v274 = vpop.f32.mrf.mxu0
  %275 = vdwg.mxu0
  %v276 = vadd.f32 %v22, %v258
  %v277 = vadd.f32 %v23, %v263
  %v278 = vadd.f32 %v24, %v268
  %v279 = vadd.f32 %v25, %v273
  %280 = vst [vmem:[#allocation2] sm:$0xff] %v276
  %281 = vst [vmem:[#allocation2 + $0x8] sm:$0xff] %v277
  %282 = vst [vmem:[#allocation2 + $0x10] sm:$0xff] %v278
  %283 = vst [vmem:[#allocation2 + $0x18] sm:$0xff] %v279
  // Predicated region
  $region18: #{disentangled_transformer_layer.22} parent=0 // pred_check
    %p284 = pneg %p14
  $region19: #{disentangled_transformer_layer.22} parent=0 // pred_check_branch
    %286 = sbr.rel (%p284) target = $region21
  $region20: #{disentangled_transformer_layer.22} parent=0 // pred_region
    %v287 = vld [vmem:[#allocation2] sm:$0xff]
    %v288 = vld [vmem:[#allocation2 + $0x8] sm:$0xff]
    %v289 = vld [vmem:[#allocation2 + $0x10] sm:$0xff]
    %v290 = vld [vmem:[#allocation2 + $0x18] sm:$0xff]
    %v291 = vld [vmem:[%s2] sm:$0x1]
    %v293 = vlaneseq
    %v294 = vshrl.u32 %v293, 7
    %v295 = vsub.s32 0, %v294
    %v296 = vrot.slane %v291, %v295
    %v298 = vadd.f32 %v287, %v296
    %v299 = vadd.f32 %v288, %v296
    %v300 = vadd.f32 %v289, %v296
    %v301 = vadd.f32 %v290, %v296
    %302 = vst [vmem:[%s3] sm:$0xff] %v298
    %303 = vst [vmem:[%s3 + $0x8] sm:$0xff] %v299
    %304 = vst [vmem:[%s3 + $0x10] sm:$0xff] %v300
    %305 = vst [vmem:[%s3 + $0x18] sm:$0xff] %v301
  $region21: #{disentangled_transformer_layer.22} parent=0 // pred_fallthru
    _
  // Predicated region
  $region22: #{disentangled_transformer_layer.22} parent=0 // pred_check
    _
  $region23: #{disentangled_transformer_layer.22} parent=0 // pred_check_branch
    %307 = sbr.rel (0) target = $region25
  $region24: #{disentangled_transformer_layer.22} parent=0 // pred_region
    _
  $region25: #{disentangled_transformer_layer.22} parent=0 // pred_fallthru
    _
  // Predicated region
  $region26: #{disentangled_transformer_layer.22} parent=0 // pred_check
    _
  $region27: #{disentangled_transformer_layer.22} parent=0 // pred_check_branch
    %309 = sbr.rel (0) target = $region29
  $region28: #{disentangled_transformer_layer.22} parent=0 // pred_region
    _
  $region29: #{disentangled_transformer_layer.22} parent=0 // pred_fallthru
    _

// kernel: disentangled_transformer_layer.25
$region0: #{disentangled_transformer_layer.25}
  #allocation0 [shape = 'u32[]', space=smem, size = 0x4, offset = 0x4, fixed_abs, tag = 'smem constant byte address 0x4 - core index']
  #allocation1 [shape = 'u32[144,128]{1,0:T(1,128)}', space=vmem, size = 0x12000, scoped, tag = 'internal scratch']
  %s0 = inlined_call_operand.vmem [shape: f32[128,128], index: 0, kind: input, shape index: {}]
  %s1 = inlined_call_operand.hbm [shape: f32[1,1], index: 1, kind: output, shape index: {}]
  %s2 = sld [smem:[#allocation0]]
  $region14: #{disentangled_transformer_layer.25} parent=0
    _
  %s4 = ssub.s32 1, %s2
  %s5 = scalar_select 0, %s4, %s2
  $region1: #{disentangled_transformer_layer.25} parent=0
    #allocation2 [shape = 'u8[512]{0}', space=vmem, size = 0x400, scoped, tag = 'output window, operand 0, single buffered']
    #allocation3 [shape = 's32[1]{0}', space=sflag, size = 0x4, scoped, tag = 'scoped memory for disentangled_transformer_layer.25']
    %6 = vsyncpa [#allocation3], 0
    // Predicated region
    $region2: #{disentangled_transformer_layer.25} parent=1 // pred_check
      _
    $region3: #{disentangled_transformer_layer.25} parent=1 // pred_check_branch
      %8 = sbr.rel (0) target = $region5
    $region4: #{disentangled_transformer_layer.25} parent=1 // pred_region
      _
    $region5: #{disentangled_transformer_layer.25} parent=1 // pred_fallthru
      _
    %v9 = vld [vmem:[%s0] sm:$0xff]
    %v10 = vld [vmem:[%s0 + $0x8] sm:$0xff]
    %v11 = vld [vmem:[%s0 + $0x10] sm:$0xff]
    %v12 = vld [vmem:[%s0 + $0x18] sm:$0xff]
    %v13 = vld [vmem:[%s0 + $0x20] sm:$0xff]
    %v14 = vld [vmem:[%s0 + $0x28] sm:$0xff]
    %v15 = vld [vmem:[%s0 + $0x30] sm:$0xff]
    %v16 = vld [vmem:[%s0 + $0x38] sm:$0xff]
    %v17 = vld [vmem:[%s0 + $0x40] sm:$0xff]
    %v18 = vld [vmem:[%s0 + $0x48] sm:$0xff]
    %v19 = vld [vmem:[%s0 + $0x50] sm:$0xff]
    %v20 = vld [vmem:[%s0 + $0x58] sm:$0xff]
    %v21 = vld [vmem:[%s0 + $0x60] sm:$0xff]
    %v22 = vld [vmem:[%s0 + $0x68] sm:$0xff]
    %v23 = vld [vmem:[%s0 + $0x70] sm:$0xff]
    %v24 = vld [vmem:[%s0 + $0x78] sm:$0xff]
    %25 = vmatprep.subr.mxu0 0.0
    %26 = vmatpush1.xpose.msra.mxu0 %v24
    %27 = vmatprep.subr.mxu0 0.0
    %28 = vmatpush1.xpose.msra.mxu0 %v23
    %29 = vmatprep.subr.mxu0 0.0
    %30 = vmatpush1.xpose.msra.mxu0 %v22
    %31 = vmatprep.subr.mxu0 0.0
    %32 = vmatpush1.xpose.msra.mxu0 %v21
    %33 = vmatprep.subr.mxu0 0.0
    %34 = vmatpush1.xpose.msra.mxu0 %v20
    %35 = vmatprep.subr.mxu0 0.0
    %36 = vmatpush1.xpose.msra.mxu0 %v19
    %37 = vmatprep.subr.mxu0 0.0
    %38 = vmatpush1.xpose.msra.mxu0 %v18
    %39 = vmatprep.subr.mxu0 0.0
    %40 = vmatpush1.xpose.msra.mxu0 %v17
    %41 = vmatprep.subr.mxu0 0.0
    %42 = vmatpush1.xpose.msra.mxu0 %v16
    %43 = vmatprep.subr.mxu0 0.0
    %44 = vmatpush1.xpose.msra.mxu0 %v15
    %45 = vmatprep.subr.mxu0 0.0
    %46 = vmatpush1.xpose.msra.mxu0 %v14
    %47 = vmatprep.subr.mxu0 0.0
    %48 = vmatpush1.xpose.msra.mxu0 %v13
    %49 = vmatprep.subr.mxu0 0.0
    %50 = vmatpush1.xpose.msra.mxu0 %v12
    %51 = vmatprep.subr.mxu0 0.0
    %52 = vmatpush1.xpose.msra.mxu0 %v11
    %53 = vmatprep.subr.mxu0 0.0
    %54 = vmatpush1.xpose.msra.mxu0 %v10
    %55 = vmatprep.subr.mxu0 0.0
    %56 = vmatpush1.xpose.msra.mxu0 %v9
    %57 = vmatprep.subr.mxu0 0.0
    %58 = vmatpush2.xpose.msra.mxu0 0.0
    %59 = vmatprep.subr.mxu0 0.0
    %60 = vmatpush2.xpose.msra.mxu0 0.0
    %61 = vmatprep.subr.mxu0 0.0
    %62 = vmatpush2.xpose.msra.mxu0 0.0
    %63 = vmatprep.subr.mxu0 0.0
    %64 = vmatpush2.xpose.msra.mxu0 0.0
    %65 = vmatprep.subr.mxu0 0.0
    %66 = vmatpush2.xpose.msra.mxu0 0.0
    %67 = vmatprep.subr.mxu0 0.0
    %68 = vmatpush2.xpose.msra.mxu0 0.0
    %69 = vmatprep.subr.mxu0 0.0
    %70 = vmatpush2.xpose.msra.mxu0 0.0
    %71 = vmatprep.subr.mxu0 0.0
    %72 = vmatpush2.xpose.msra.mxu0 0.0
    %73 = vmatprep.subr.mxu0 0.0
    %74 = vmatpush2.xpose.msra.mxu0 0.0
    %75 = vmatprep.subr.mxu0 0.0
    %76 = vmatpush2.xpose.msra.mxu0 0.0
    %77 = vmatprep.subr.mxu0 0.0
    %78 = vmatpush2.xpose.msra.mxu0 0.0
    %79 = vmatprep.subr.mxu0 0.0
    %80 = vmatpush2.xpose.msra.mxu0 0.0
    %81 = vmatprep.subr.mxu0 0.0
    %82 = vmatpush2.xpose.msra.mxu0 0.0
    %83 = vmatprep.subr.mxu0 0.0
    %84 = vmatpush2.xpose.msra.mxu0 0.0
    %85 = vmatprep.subr.mxu0 0.0
    %86 = vmatpush2.xpose.msra.mxu0 0.0
    %87 = vmatprep.subr.mxu0 0.0
    %88 = vmatpush2.xpose.msra.mxu0 0.0
    %89 = vmatprep.mubr.f32.mxu0 0.0
    %90 = vmatmul.mubr.f32.gmra.mxu0 %v9
    %v91 = vpop.f32.mrf.mxu0
    %v92 = vadd.f32 0.0, %v91
    %v93 = vpop.f32.mrf.mxu0
    %94 = vmatprep.mubr.f32.mxu0 0.0
    %95 = vmatmul.mubr.f32.gmra.mxu0 %v10
    %v96 = vpop.f32.mrf.mxu0
    %v97 = vadd.f32 0.0, %v96
    %v98 = vpop.f32.mrf.mxu0
    %99 = vmatprep.mubr.f32.mxu0 0.0
    %100 = vmatmul.mubr.f32.gmra.mxu0 %v11
    %v101 = vpop.f32.mrf.mxu0
    %v102 = vadd.f32 0.0, %v101
    %v103 = vpop.f32.mrf.mxu0
    %104 = vmatprep.mubr.f32.mxu0 0.0
    %105 = vmatmul.mubr.f32.gmra.mxu0 %v12
    %v106 = vpop.f32.mrf.mxu0
    %v107 = vadd.f32 0.0, %v106
    %v108 = vpop.f32.mrf.mxu0
    %109 = vmatprep.mubr.f32.mxu0 0.0
    %110 = vmatmul.mubr.f32.gmra.mxu0 %v13
    %v111 = vpop.f32.mrf.mxu0
    %v112 = vadd.f32 0.0, %v111
    %v113 = vpop.f32.mrf.mxu0
    %114 = vmatprep.mubr.f32.mxu0 0.0
    %115 = vmatmul.mubr.f32.gmra.mxu0 %v14
    %v116 = vpop.f32.mrf.mxu0
    %v117 = vadd.f32 0.0, %v116
    %v118 = vpop.f32.mrf.mxu0
    %119 = vmatprep.mubr.f32.mxu0 0.0
    %120 = vmatmul.mubr.f32.gmra.mxu0 %v15
    %v121 = vpop.f32.mrf.mxu0
    %v122 = vadd.f32 0.0, %v121
    %v123 = vpop.f32.mrf.mxu0
    %124 = vmatprep.mubr.f32.mxu0 0.0
    %125 = vmatmul.mubr.f32.gmra.mxu0 %v16
    %v126 = vpop.f32.mrf.mxu0
    %v127 = vadd.f32 0.0, %v126
    %v128 = vpop.f32.mrf.mxu0
    %129 = vmatprep.mubr.f32.mxu0 0.0
    %130 = vmatmul.mubr.f32.gmra.mxu0 %v17
    %v131 = vpop.f32.mrf.mxu0
    %v132 = vadd.f32 0.0, %v131
    %v133 = vpop.f32.mrf.mxu0
    %134 = vmatprep.mubr.f32.mxu0 0.0
    %135 = vmatmul.mubr.f32.gmra.mxu0 %v18
    %v136 = vpop.f32.mrf.mxu0
    %v137 = vadd.f32 0.0, %v136
    %v138 = vpop.f32.mrf.mxu0
    %139 = vmatprep.mubr.f32.mxu0 0.0
    %140 = vmatmul.mubr.f32.gmra.mxu0 %v19
    %v141 = vpop.f32.mrf.mxu0
    %v142 = vadd.f32 0.0, %v141
    %v143 = vpop.f32.mrf.mxu0
    %144 = vmatprep.mubr.f32.mxu0 0.0
    %145 = vmatmul.mubr.f32.gmra.mxu0 %v20
    %v146 = vpop.f32.mrf.mxu0
    %v147 = vadd.f32 0.0, %v146
    %v148 = vpop.f32.mrf.mxu0
    %149 = vmatprep.mubr.f32.mxu0 0.0
    %150 = vmatmul.mubr.f32.gmra.mxu0 %v21
    %v151 = vpop.f32.mrf.mxu0
    %v152 = vadd.f32 0.0, %v151
    %v153 = vpop.f32.mrf.mxu0
    %154 = vmatprep.mubr.f32.mxu0 0.0
    %155 = vmatmul.mubr.f32.gmra.mxu0 %v22
    %v156 = vpop.f32.mrf.mxu0
    %v157 = vadd.f32 0.0, %v156
    %v158 = vpop.f32.mrf.mxu0
    %159 = vmatprep.mubr.f32.mxu0 0.0
    %160 = vmatmul.mubr.f32.gmra.mxu0 %v23
    %v161 = vpop.f32.mrf.mxu0
    %v162 = vadd.f32 0.0, %v161
    %v163 = vpop.f32.mrf.mxu0
    %164 = vmatprep.mubr.f32.mxu0 0.0
    %165 = vmatmul.mubr.f32.gmra.mxu0 %v24
    %v166 = vpop.f32.mrf.mxu0
    %v167 = vadd.f32 0.0, %v166
    %v168 = vpop.f32.mrf.mxu0
    %169 = vdwg.mxu0
    %v170 = vlaneseq
    %v171 = vshrl.u32 %v170, 7
    %v172 = vadd.s32 %v171, 8
    %v173 = vadd.s32 %v171, 16
    %v174 = vadd.s32 %v171, 24
    %v175 = vadd.s32 %v171, 32
    %v176 = vadd.s32 %v171, 40
    %v177 = vadd.s32 %v171, 48
    %v178 = vadd.s32 %v171, 56
    %v179 = vadd.s32 %v171, 64
    %v180 = vadd.s32 %v171, 72
    %v181 = vadd.s32 %v171, 80
    %v182 = vadd.s32 %v171, 88
    %v183 = vadd.s32 %v171, 96
    %v184 = vadd.s32 %v171, 104
    %v185 = vadd.s32 %v171, 112
    %v186 = vadd.s32 %v171, 120
    %v187 = vlaneseq
    %v188 = vand.u32 %v187, 127
    %vm189 = vcmp.eq.s32.totalorder %v171, %v188
    %vm190 = vcmp.eq.s32.totalorder %v172, %v188
    %vm191 = vcmp.eq.s32.totalorder %v173, %v188
    %vm192 = vcmp.eq.s32.totalorder %v174, %v188
    %vm193 = vcmp.eq.s32.totalorder %v175, %v188
    %vm194 = vcmp.eq.s32.totalorder %v176, %v188
    %vm195 = vcmp.eq.s32.totalorder %v177, %v188
    %vm196 = vcmp.eq.s32.totalorder %v178, %v188
    %vm197 = vcmp.eq.s32.totalorder %v179, %v188
    %vm198 = vcmp.eq.s32.totalorder %v180, %v188
    %vm199 = vcmp.eq.s32.totalorder %v181, %v188
    %vm200 = vcmp.eq.s32.totalorder %v182, %v188
    %vm201 = vcmp.eq.s32.totalorder %v183, %v188
    %vm202 = vcmp.eq.s32.totalorder %v184, %v188
    %vm203 = vcmp.eq.s32.totalorder %v185, %v188
    %vm204 = vcmp.eq.s32.totalorder %v186, %v188
    %v205 = vsub.f32 %v92, 1.0
    %v206 = vsub.f32 %v97, 1.0
    %v207 = vsub.f32 %v102, 1.0
    %v208 = vsub.f32 %v107, 1.0
    %v209 = vsub.f32 %v112, 1.0
    %v210 = vsub.f32 %v117, 1.0
    %v211 = vsub.f32 %v122, 1.0
    %v212 = vsub.f32 %v127, 1.0
    %v213 = vsub.f32 %v132, 1.0
    %v214 = vsub.f32 %v137, 1.0
    %v215 = vsub.f32 %v142, 1.0
    %v216 = vsub.f32 %v147, 1.0
    %v217 = vsub.f32 %v152, 1.0
    %v218 = vsub.f32 %v157, 1.0
    %v219 = vsub.f32 %v162, 1.0
    %v220 = vsub.f32 %v167, 1.0
    %v221 = vsel %vm189, %v205, %v92
    %v222 = vsel %vm190, %v206, %v97
    %v223 = vsel %vm191, %v207, %v102
    %v224 = vsel %vm192, %v208, %v107
    %v225 = vsel %vm193, %v209, %v112
    %v226 = vsel %vm194, %v210, %v117
    %v227 = vsel %vm195, %v211, %v122
    %v228 = vsel %vm196, %v212, %v127
    %v229 = vsel %vm197, %v213, %v132
    %v230 = vsel %vm198, %v214, %v137
    %v231 = vsel %vm199, %v215, %v142
    %v232 = vsel %vm200, %v216, %v147
    %v233 = vsel %vm201, %v217, %v152
    %v234 = vsel %vm202, %v218, %v157
    %v235 = vsel %vm203, %v219, %v162
    %v236 = vsel %vm204, %v220, %v167
    %v237 = vmul.f32 %v221, %v221
    %v238 = vmul.f32 %v222, %v222
    %v239 = vmul.f32 %v223, %v223
    %v240 = vmul.f32 %v224, %v224
    %v241 = vmul.f32 %v225, %v225
    %v242 = vmul.f32 %v226, %v226
    %v243 = vmul.f32 %v227, %v227
    %v244 = vmul.f32 %v228, %v228
    %v245 = vmul.f32 %v229, %v229
    %v246 = vmul.f32 %v230, %v230
    %v247 = vmul.f32 %v231, %v231
    %v248 = vmul.f32 %v232, %v232
    %v249 = vmul.f32 %v233, %v233
    %v250 = vmul.f32 %v234, %v234
    %v251 = vmul.f32 %v235, %v235
    %v252 = vmul.f32 %v236, %v236
    %253 = vadd.xlane.f32.xlu0 %v237
    %v254 = vpop.xlane.xlu0 %253
    %255 = vadd.xlane.f32.xlu0 %v238
    %v256 = vpop.xlane.xlu0 %255
    %257 = vadd.xlane.f32.xlu0 %v239
    %v258 = vpop.xlane.xlu0 %257
    %259 = vadd.xlane.f32.xlu0 %v240
    %v260 = vpop.xlane.xlu0 %259
    %261 = vadd.xlane.f32.xlu0 %v241
    %v262 = vpop.xlane.xlu0 %261
    %263 = vadd.xlane.f32.xlu0 %v242
    %v264 = vpop.xlane.xlu0 %263
    %265 = vadd.xlane.f32.xlu0 %v243
    %v266 = vpop.xlane.xlu0 %265
    %267 = vadd.xlane.f32.xlu0 %v244
    %v268 = vpop.xlane.xlu0 %267
    %269 = vadd.xlane.f32.xlu0 %v245
    %v270 = vpop.xlane.xlu0 %269
    %271 = vadd.xlane.f32.xlu0 %v246
    %v272 = vpop.xlane.xlu0 %271
    %273 = vadd.xlane.f32.xlu0 %v247
    %v274 = vpop.xlane.xlu0 %273
    %275 = vadd.xlane.f32.xlu0 %v248
    %v276 = vpop.xlane.xlu0 %275
    %277 = vadd.xlane.f32.xlu0 %v249
    %v278 = vpop.xlane.xlu0 %277
    %279 = vadd.xlane.f32.xlu0 %v250
    %v280 = vpop.xlane.xlu0 %279
    %281 = vadd.xlane.f32.xlu0 %v251
    %v282 = vpop.xlane.xlu0 %281
    %283 = vadd.xlane.f32.xlu0 %v252
    %v284 = vpop.xlane.xlu0 %283
    %v285 = vadd.f32 %v254, %v256
    %v286 = vadd.f32 %v285, %v258
    %v287 = vadd.f32 %v286, %v260
    %v288 = vadd.f32 %v287, %v262
    %v289 = vadd.f32 %v288, %v264
    %v290 = vadd.f32 %v289, %v266
    %v291 = vadd.f32 %v290, %v268
    %v292 = vadd.f32 %v291, %v270
    %v293 = vadd.f32 %v292, %v272
    %v294 = vadd.f32 %v293, %v274
    %v295 = vadd.f32 %v294, %v276
    %v296 = vadd.f32 %v295, %v278
    %v297 = vadd.f32 %v296, %v280
    %v298 = vadd.f32 %v297, %v282
    %v299 = vadd.f32 %v298, %v284
    %v300 = vrot.slane %v299, 4
    %v301 = vadd.f32 %v299, %v300
    %v302 = vrot.slane %v301, 2
    %v303 = vadd.f32 %v301, %v302
    %v304 = vrot.slane %v303, 1
    %v305 = vadd.f32 %v303, %v304
    %v306 = vmul.f32 %v305, 6.1035156e-05
    %vm307 = vcmask 0
    %308 = vst.msk [vmem:[#allocation2] sm:$0x1] %vm307, %v306
    // Predicated region
    $region6: #{disentangled_transformer_layer.25} parent=1 // pred_check
      _
    $region7: #{disentangled_transformer_layer.25} parent=1 // pred_check_branch
      %310 = sbr.rel (0) target = $region9
    $region8: #{disentangled_transformer_layer.25} parent=1 // pred_region
      %s312 = ssub.s32 16, 16
      %313 = vsyncadd [#allocation3], %s312
      %s315 = sshll.u32 [#allocation2], 4
      %s316 = int_to_ptr.vmem [resolvable:$true] %s315
      %318 = dma.vmem_to_hbm [thread:$0]  %s316, 16, %s1, [#allocation3]
    $region9: #{disentangled_transformer_layer.25} parent=1 // pred_fallthru
      _
    // Predicated region
    $region10: #{disentangled_transformer_layer.25} parent=1 // pred_check
      _
    $region11: #{disentangled_transformer_layer.25} parent=1 // pred_check_branch
      %320 = sbr.rel (0) target = $region13
    $region12: #{disentangled_transformer_layer.25} parent=1 // pred_region
      %321 = dma.done [#allocation3], 16
    $region13: #{disentangled_transformer_layer.25} parent=1 // pred_fallthru
      _
    %322 = vsyncpa [#allocation3], 1

// kernel: disentangled_transformer_layer.29
$region0: #{disentangled_transformer_layer.29}
  #allocation0 [shape = 'u32[]', space=smem, size = 0x4, offset = 0x4, fixed_abs, tag = 'smem constant byte address 0x4 - core index']
  #allocation1 [shape = 'u32[144,128]{1,0:T(1,128)}', space=vmem, size = 0x12000, scoped, tag = 'internal scratch']
  %s0 = inlined_call_operand.vmem [shape: f32[128,512], index: 0, kind: input, shape index: {}]
  %s1 = inlined_call_operand.hbm [shape: f32[1,1], index: 1, kind: output, shape index: {}]
  %s2 = sld [smem:[#allocation0]]
  $region14: #{disentangled_transformer_layer.29} parent=0
    _
  %s4 = ssub.s32 1, %s2
  %s5 = scalar_select 0, %s4, %s2
  $region1: #{disentangled_transformer_layer.29} parent=0
    #allocation2 [shape = 'u8[512]{0}', space=vmem, size = 0x400, scoped, tag = 'output window, operand 0, single buffered']
    #allocation3 [shape = 's32[1]{0}', space=sflag, size = 0x4, scoped, tag = 'scoped memory for disentangled_transformer_layer.29']
    %6 = vsyncpa [#allocation3], 0
    // Predicated region
    $region2: #{disentangled_transformer_layer.29} parent=1 // pred_check
      _
    $region3: #{disentangled_transformer_layer.29} parent=1 // pred_check_branch
      %8 = sbr.rel (0) target = $region5
    $region4: #{disentangled_transformer_layer.29} parent=1 // pred_region
      _
    $region5: #{disentangled_transformer_layer.29} parent=1 // pred_fallthru
      _
    %v9 = vld [vmem:[%s0] sm:$0xff]
    %v10 = vld [vmem:[%s0 + $0x8] sm:$0xff]
    %v11 = vld [vmem:[%s0 + $0x10] sm:$0xff]
    %v12 = vld [vmem:[%s0 + $0x18] sm:$0xff]
    %v13 = vld [vmem:[%s0 + $0x20] sm:$0xff]
    %v14 = vld [vmem:[%s0 + $0x28] sm:$0xff]
    %v15 = vld [vmem:[%s0 + $0x30] sm:$0xff]
    %v16 = vld [vmem:[%s0 + $0x38] sm:$0xff]
    %v17 = vld [vmem:[%s0 + $0x40] sm:$0xff]
    %v18 = vld [vmem:[%s0 + $0x48] sm:$0xff]
    %v19 = vld [vmem:[%s0 + $0x50] sm:$0xff]
    %v20 = vld [vmem:[%s0 + $0x58] sm:$0xff]
    %v21 = vld [vmem:[%s0 + $0x60] sm:$0xff]
    %v22 = vld [vmem:[%s0 + $0x68] sm:$0xff]
    %v23 = vld [vmem:[%s0 + $0x70] sm:$0xff]
    %v24 = vld [vmem:[%s0 + $0x78] sm:$0xff]
    %v25 = vld [vmem:[%s0 + $0x80] sm:$0xff]
    %v26 = vld [vmem:[%s0 + $0x88] sm:$0xff]
    %v27 = vld [vmem:[%s0 + $0x90] sm:$0xff]
    %v28 = vld [vmem:[%s0 + $0x98] sm:$0xff]
    %v29 = vld [vmem:[%s0 + $0xa0] sm:$0xff]
    %v30 = vld [vmem:[%s0 + $0xa8] sm:$0xff]
    %v31 = vld [vmem:[%s0 + $0xb0] sm:$0xff]
    %v32 = vld [vmem:[%s0 + $0xb8] sm:$0xff]
    %v33 = vld [vmem:[%s0 + $0xc0] sm:$0xff]
    %v34 = vld [vmem:[%s0 + $0xc8] sm:$0xff]
    %v35 = vld [vmem:[%s0 + $0xd0] sm:$0xff]
    %v36 = vld [vmem:[%s0 + $0xd8] sm:$0xff]
    %v37 = vld [vmem:[%s0 + $0xe0] sm:$0xff]
    %v38 = vld [vmem:[%s0 + $0xe8] sm:$0xff]
    %v39 = vld [vmem:[%s0 + $0xf0] sm:$0xff]
    %v40 = vld [vmem:[%s0 + $0xf8] sm:$0xff]
    %v41 = vld [vmem:[%s0 + $0x100] sm:$0xff]
    %v42 = vld [vmem:[%s0 + $0x108] sm:$0xff]
    %v43 = vld [vmem:[%s0 + $0x110] sm:$0xff]
    %v44 = vld [vmem:[%s0 + $0x118] sm:$0xff]
    %v45 = vld [vmem:[%s0 + $0x120] sm:$0xff]
    %v46 = vld [vmem:[%s0 + $0x128] sm:$0xff]
    %v47 = vld [vmem:[%s0 + $0x130] sm:$0xff]
    %v48 = vld [vmem:[%s0 + $0x138] sm:$0xff]
    %v49 = vld [vmem:[%s0 + $0x140] sm:$0xff]
    %v50 = vld [vmem:[%s0 + $0x148] sm:$0xff]
    %v51 = vld [vmem:[%s0 + $0x150] sm:$0xff]
    %v52 = vld [vmem:[%s0 + $0x158] sm:$0xff]
    %v53 = vld [vmem:[%s0 + $0x160] sm:$0xff]
    %v54 = vld [vmem:[%s0 + $0x168] sm:$0xff]
    %v55 = vld [vmem:[%s0 + $0x170] sm:$0xff]
    %v56 = vld [vmem:[%s0 + $0x178] sm:$0xff]
    %v57 = vld [vmem:[%s0 + $0x180] sm:$0xff]
    %v58 = vld [vmem:[%s0 + $0x188] sm:$0xff]
    %v59 = vld [vmem:[%s0 + $0x190] sm:$0xff]
    %v60 = vld [vmem:[%s0 + $0x198] sm:$0xff]
    %v61 = vld [vmem:[%s0 + $0x1a0] sm:$0xff]
    %v62 = vld [vmem:[%s0 + $0x1a8] sm:$0xff]
    %v63 = vld [vmem:[%s0 + $0x1b0] sm:$0xff]
    %v64 = vld [vmem:[%s0 + $0x1b8] sm:$0xff]
    %v65 = vld [vmem:[%s0 + $0x1c0] sm:$0xff]
    %v66 = vld [vmem:[%s0 + $0x1c8] sm:$0xff]
    %v67 = vld [vmem:[%s0 + $0x1d0] sm:$0xff]
    %v68 = vld [vmem:[%s0 + $0x1d8] sm:$0xff]
    %v69 = vld [vmem:[%s0 + $0x1e0] sm:$0xff]
    %v70 = vld [vmem:[%s0 + $0x1e8] sm:$0xff]
    %v71 = vld [vmem:[%s0 + $0x1f0] sm:$0xff]
    %v72 = vld [vmem:[%s0 + $0x1f8] sm:$0xff]
    %73 = vmatprep.subr.mxu0 %v70
    %74 = vmatpush1.xpose.msra.mxu0 %v69
    %75 = vmatprep.subr.mxu0 %v66
    %76 = vmatpush1.xpose.msra.mxu0 %v65
    %77 = vmatprep.subr.mxu0 %v62
    %78 = vmatpush1.xpose.msra.mxu0 %v61
    %79 = vmatprep.subr.mxu0 %v58
    %80 = vmatpush1.xpose.msra.mxu0 %v57
    %81 = vmatprep.subr.mxu0 %v54
    %82 = vmatpush1.xpose.msra.mxu0 %v53
    %83 = vmatprep.subr.mxu0 %v50
    %84 = vmatpush1.xpose.msra.mxu0 %v49
    %85 = vmatprep.subr.mxu0 %v46
    %86 = vmatpush1.xpose.msra.mxu0 %v45
    %87 = vmatprep.subr.mxu0 %v42
    %88 = vmatpush1.xpose.msra.mxu0 %v41
    %89 = vmatprep.subr.mxu0 %v38
    %90 = vmatpush1.xpose.msra.mxu0 %v37
    %91 = vmatprep.subr.mxu0 %v34
    %92 = vmatpush1.xpose.msra.mxu0 %v33
    %93 = vmatprep.subr.mxu0 %v30
    %94 = vmatpush1.xpose.msra.mxu0 %v29
    %95 = vmatprep.subr.mxu0 %v26
    %96 = vmatpush1.xpose.msra.mxu0 %v25
    %97 = vmatprep.subr.mxu0 %v22
    %98 = vmatpush1.xpose.msra.mxu0 %v21
    %99 = vmatprep.subr.mxu0 %v18
    %100 = vmatpush1.xpose.msra.mxu0 %v17
    %101 = vmatprep.subr.mxu0 %v14
    %102 = vmatpush1.xpose.msra.mxu0 %v13
    %103 = vmatprep.subr.mxu0 %v10
    %104 = vmatpush1.xpose.msra.mxu0 %v9
    %105 = vmatprep.subr.mxu0 0.0
    %106 = vmatpush2.xpose.msra.mxu0 0.0
    %107 = vmatprep.subr.mxu0 0.0
    %108 = vmatpush2.xpose.msra.mxu0 0.0
    %109 = vmatprep.subr.mxu0 0.0
    %110 = vmatpush2.xpose.msra.mxu0 0.0
    %111 = vmatprep.subr.mxu0 0.0
    %112 = vmatpush2.xpose.msra.mxu0 0.0
    %113 = vmatprep.subr.mxu0 0.0
    %114 = vmatpush2.xpose.msra.mxu0 0.0
    %115 = vmatprep.subr.mxu0 0.0
    %116 = vmatpush2.xpose.msra.mxu0 0.0
    %117 = vmatprep.subr.mxu0 0.0
    %118 = vmatpush2.xpose.msra.mxu0 0.0
    %119 = vmatprep.subr.mxu0 0.0
    %120 = vmatpush2.xpose.msra.mxu0 0.0
    %121 = vmatprep.subr.mxu0 0.0
    %122 = vmatpush2.xpose.msra.mxu0 0.0
    %123 = vmatprep.subr.mxu0 0.0
    %124 = vmatpush2.xpose.msra.mxu0 0.0
    %125 = vmatprep.subr.mxu0 0.0
    %126 = vmatpush2.xpose.msra.mxu0 0.0
    %127 = vmatprep.subr.mxu0 0.0
    %128 = vmatpush2.xpose.msra.mxu0 0.0
    %129 = vmatprep.subr.mxu0 0.0
    %130 = vmatpush2.xpose.msra.mxu0 0.0
    %131 = vmatprep.subr.mxu0 0.0
    %132 = vmatpush2.xpose.msra.mxu0 0.0
    %133 = vmatprep.subr.mxu0 0.0
    %134 = vmatpush2.xpose.msra.mxu0 0.0
    %135 = vmatprep.subr.mxu0 0.0
    %136 = vmatpush2.xpose.msra.mxu0 0.0
    %137 = vmatprep.mubr.f32.mxu0 %v10
    %138 = vmatmul.mubr.f32.gmra.mxu0 %v9
    %v139 = vpop.f32.mrf.mxu0
    %v140 = vadd.f32 0.0, %v139
    %v141 = vpop.f32.mrf.mxu0
    %142 = vmatprep.mubr.f32.mxu0 %v14
    %143 = vmatmul.mubr.f32.gmra.mxu0 %v13
    %v144 = vpop.f32.mrf.mxu0
    %v145 = vadd.f32 0.0, %v144
    %v146 = vpop.f32.mrf.mxu0
    %147 = vmatprep.mubr.f32.mxu0 %v18
    %148 = vmatmul.mubr.f32.gmra.mxu0 %v17
    %v149 = vpop.f32.mrf.mxu0
    %v150 = vadd.f32 0.0, %v149
    %v151 = vpop.f32.mrf.mxu0
    %152 = vmatprep.mubr.f32.mxu0 %v22
    %153 = vmatmul.mubr.f32.gmra.mxu0 %v21
    %v154 = vpop.f32.mrf.mxu0
    %v155 = vadd.f32 0.0, %v154
    %v156 = vpop.f32.mrf.mxu0
    %157 = vmatprep.mubr.f32.mxu0 %v26
    %158 = vmatmul.mubr.f32.gmra.mxu0 %v25
    %v159 = vpop.f32.mrf.mxu0
    %v160 = vadd.f32 0.0, %v159
    %v161 = vpop.f32.mrf.mxu0
    %162 = vmatprep.mubr.f32.mxu0 %v30
    %163 = vmatmul.mubr.f32.gmra.mxu0 %v29
    %v164 = vpop.f32.mrf.mxu0
    %v165 = vadd.f32 0.0, %v164
    %v166 = vpop.f32.mrf.mxu0
    %167 = vmatprep.mubr.f32.mxu0 %v34
    %168 = vmatmul.mubr.f32.gmra.mxu0 %v33
    %v169 = vpop.f32.mrf.mxu0
    %v170 = vadd.f32 0.0, %v169
    %v171 = vpop.f32.mrf.mxu0
    %172 = vmatprep.mubr.f32.mxu0 %v38
    %173 = vmatmul.mubr.f32.gmra.mxu0 %v37
    %v174 = vpop.f32.mrf.mxu0
    %v175 = vadd.f32 0.0, %v174
    %v176 = vpop.f32.mrf.mxu0
    %177 = vmatprep.mubr.f32.mxu0 %v42
    %178 = vmatmul.mubr.f32.gmra.mxu0 %v41
    %v179 = vpop.f32.mrf.mxu0
    %v180 = vadd.f32 0.0, %v179
    %v181 = vpop.f32.mrf.mxu0
    %182 = vmatprep.mubr.f32.mxu0 %v46
    %183 = vmatmul.mubr.f32.gmra.mxu0 %v45
    %v184 = vpop.f32.mrf.mxu0
    %v185 = vadd.f32 0.0, %v184
    %v186 = vpop.f32.mrf.mxu0
    %187 = vmatprep.mubr.f32.mxu0 %v50
    %188 = vmatmul.mubr.f32.gmra.mxu0 %v49
    %v189 = vpop.f32.mrf.mxu0
    %v190 = vadd.f32 0.0, %v189
    %v191 = vpop.f32.mrf.mxu0
    %192 = vmatprep.mubr.f32.mxu0 %v54
    %193 = vmatmul.mubr.f32.gmra.mxu0 %v53
    %v194 = vpop.f32.mrf.mxu0
    %v195 = vadd.f32 0.0, %v194
    %v196 = vpop.f32.mrf.mxu0
    %197 = vmatprep.mubr.f32.mxu0 %v58
    %198 = vmatmul.mubr.f32.gmra.mxu0 %v57
    %v199 = vpop.f32.mrf.mxu0
    %v200 = vadd.f32 0.0, %v199
    %v201 = vpop.f32.mrf.mxu0
    %202 = vmatprep.mubr.f32.mxu0 %v62
    %203 = vmatmul.mubr.f32.gmra.mxu0 %v61
    %v204 = vpop.f32.mrf.mxu0
    %v205 = vadd.f32 0.0, %v204
    %v206 = vpop.f32.mrf.mxu0
    %207 = vmatprep.mubr.f32.mxu0 %v66
    %208 = vmatmul.mubr.f32.gmra.mxu0 %v65
    %v209 = vpop.f32.mrf.mxu0
    %v210 = vadd.f32 0.0, %v209
    %v211 = vpop.f32.mrf.mxu0
    %212 = vmatprep.mubr.f32.mxu0 %v70
    %213 = vmatmul.mubr.f32.gmra.mxu0 %v69
    %v214 = vpop.f32.mrf.mxu0
    %v215 = vadd.f32 0.0, %v214
    %v216 = vpop.f32.mrf.mxu0
    %217 = vdwg.mxu0
    %218 = vmatprep.subr.mxu0 %v72
    %219 = vmatpush1.xpose.msra.mxu0 %v71
    %220 = vmatprep.subr.mxu0 %v68
    %221 = vmatpush1.xpose.msra.mxu0 %v67
    %222 = vmatprep.subr.mxu0 %v64
    %223 = vmatpush1.xpose.msra.mxu0 %v63
    %224 = vmatprep.subr.mxu0 %v60
    %225 = vmatpush1.xpose.msra.mxu0 %v59
    %226 = vmatprep.subr.mxu0 %v56
    %227 = vmatpush1.xpose.msra.mxu0 %v55
    %228 = vmatprep.subr.mxu0 %v52
    %229 = vmatpush1.xpose.msra.mxu0 %v51
    %230 = vmatprep.subr.mxu0 %v48
    %231 = vmatpush1.xpose.msra.mxu0 %v47
    %232 = vmatprep.subr.mxu0 %v44
    %233 = vmatpush1.xpose.msra.mxu0 %v43
    %234 = vmatprep.subr.mxu0 %v40
    %235 = vmatpush1.xpose.msra.mxu0 %v39
    %236 = vmatprep.subr.mxu0 %v36
    %237 = vmatpush1.xpose.msra.mxu0 %v35
    %238 = vmatprep.subr.mxu0 %v32
    %239 = vmatpush1.xpose.msra.mxu0 %v31
    %240 = vmatprep.subr.mxu0 %v28
    %241 = vmatpush1.xpose.msra.mxu0 %v27
    %242 = vmatprep.subr.mxu0 %v24
    %243 = vmatpush1.xpose.msra.mxu0 %v23
    %244 = vmatprep.subr.mxu0 %v20
    %245 = vmatpush1.xpose.msra.mxu0 %v19
    %246 = vmatprep.subr.mxu0 %v16
    %247 = vmatpush1.xpose.msra.mxu0 %v15
    %248 = vmatprep.subr.mxu0 %v12
    %249 = vmatpush1.xpose.msra.mxu0 %v11
    %250 = vmatprep.subr.mxu0 0.0
    %251 = vmatpush2.xpose.msra.mxu0 0.0
    %252 = vmatprep.subr.mxu0 0.0
    %253 = vmatpush2.xpose.msra.mxu0 0.0
    %254 = vmatprep.subr.mxu0 0.0
    %255 = vmatpush2.xpose.msra.mxu0 0.0
    %256 = vmatprep.subr.mxu0 0.0
    %257 = vmatpush2.xpose.msra.mxu0 0.0
    %258 = vmatprep.subr.mxu0 0.0
    %259 = vmatpush2.xpose.msra.mxu0 0.0
    %260 = vmatprep.subr.mxu0 0.0
    %261 = vmatpush2.xpose.msra.mxu0 0.0
    %262 = vmatprep.subr.mxu0 0.0
    %263 = vmatpush2.xpose.msra.mxu0 0.0
    %264 = vmatprep.subr.mxu0 0.0
    %265 = vmatpush2.xpose.msra.mxu0 0.0
    %266 = vmatprep.subr.mxu0 0.0
    %267 = vmatpush2.xpose.msra.mxu0 0.0
    %268 = vmatprep.subr.mxu0 0.0
    %269 = vmatpush2.xpose.msra.mxu0 0.0
    %270 = vmatprep.subr.mxu0 0.0
    %271 = vmatpush2.xpose.msra.mxu0 0.0
    %272 = vmatprep.subr.mxu0 0.0
    %273 = vmatpush2.xpose.msra.mxu0 0.0
    %274 = vmatprep.subr.mxu0 0.0
    %275 = vmatpush2.xpose.msra.mxu0 0.0
    %276 = vmatprep.subr.mxu0 0.0
    %277 = vmatpush2.xpose.msra.mxu0 0.0
    %278 = vmatprep.subr.mxu0 0.0
    %279 = vmatpush2.xpose.msra.mxu0 0.0
    %280 = vmatprep.subr.mxu0 0.0
    %281 = vmatpush2.xpose.msra.mxu0 0.0
    %282 = vmatprep.mubr.f32.mxu0 %v12
    %283 = vmatmul.mubr.f32.gmra.mxu0 %v11
    %v284 = vpop.f32.mrf.mxu0
    %v285 = vadd.f32 %v140, %v284
    %v286 = vpop.f32.mrf.mxu0
    %287 = vmatprep.mubr.f32.mxu0 %v16
    %288 = vmatmul.mubr.f32.gmra.mxu0 %v15
    %v289 = vpop.f32.mrf.mxu0
    %v290 = vadd.f32 %v145, %v289
    %v291 = vpop.f32.mrf.mxu0
    %292 = vmatprep.mubr.f32.mxu0 %v20
    %293 = vmatmul.mubr.f32.gmra.mxu0 %v19
    %v294 = vpop.f32.mrf.mxu0
    %v295 = vadd.f32 %v150, %v294
    %v296 = vpop.f32.mrf.mxu0
    %297 = vmatprep.mubr.f32.mxu0 %v24
    %298 = vmatmul.mubr.f32.gmra.mxu0 %v23
    %v299 = vpop.f32.mrf.mxu0
    %v300 = vadd.f32 %v155, %v299
    %v301 = vpop.f32.mrf.mxu0
    %302 = vmatprep.mubr.f32.mxu0 %v28
    %303 = vmatmul.mubr.f32.gmra.mxu0 %v27
    %v304 = vpop.f32.mrf.mxu0
    %v305 = vadd.f32 %v160, %v304
    %v306 = vpop.f32.mrf.mxu0
    %307 = vmatprep.mubr.f32.mxu0 %v32
    %308 = vmatmul.mubr.f32.gmra.mxu0 %v31
    %v309 = vpop.f32.mrf.mxu0
    %v310 = vadd.f32 %v165, %v309
    %v311 = vpop.f32.mrf.mxu0
    %312 = vmatprep.mubr.f32.mxu0 %v36
    %313 = vmatmul.mubr.f32.gmra.mxu0 %v35
    %v314 = vpop.f32.mrf.mxu0
    %v315 = vadd.f32 %v170, %v314
    %v316 = vpop.f32.mrf.mxu0
    %317 = vmatprep.mubr.f32.mxu0 %v40
    %318 = vmatmul.mubr.f32.gmra.mxu0 %v39
    %v319 = vpop.f32.mrf.mxu0
    %v320 = vadd.f32 %v175, %v319
    %v321 = vpop.f32.mrf.mxu0
    %322 = vmatprep.mubr.f32.mxu0 %v44
    %323 = vmatmul.mubr.f32.gmra.mxu0 %v43
    %v324 = vpop.f32.mrf.mxu0
    %v325 = vadd.f32 %v180, %v324
    %v326 = vpop.f32.mrf.mxu0
    %327 = vmatprep.mubr.f32.mxu0 %v48
    %328 = vmatmul.mubr.f32.gmra.mxu0 %v47
    %v329 = vpop.f32.mrf.mxu0
    %v330 = vadd.f32 %v185, %v329
    %v331 = vpop.f32.mrf.mxu0
    %332 = vmatprep.mubr.f32.mxu0 %v52
    %333 = vmatmul.mubr.f32.gmra.mxu0 %v51
    %v334 = vpop.f32.mrf.mxu0
    %v335 = vadd.f32 %v190, %v334
    %v336 = vpop.f32.mrf.mxu0
    %337 = vmatprep.mubr.f32.mxu0 %v56
    %338 = vmatmul.mubr.f32.gmra.mxu0 %v55
    %v339 = vpop.f32.mrf.mxu0
    %v340 = vadd.f32 %v195, %v339
    %v341 = vpop.f32.mrf.mxu0
    %342 = vmatprep.mubr.f32.mxu0 %v60
    %343 = vmatmul.mubr.f32.gmra.mxu0 %v59
    %v344 = vpop.f32.mrf.mxu0
    %v345 = vadd.f32 %v200, %v344
    %v346 = vpop.f32.mrf.mxu0
    %347 = vmatprep.mubr.f32.mxu0 %v64
    %348 = vmatmul.mubr.f32.gmra.mxu0 %v63
    %v349 = vpop.f32.mrf.mxu0
    %v350 = vadd.f32 %v205, %v349
    %v351 = vpop.f32.mrf.mxu0
    %352 = vmatprep.mubr.f32.mxu0 %v68
    %353 = vmatmul.mubr.f32.gmra.mxu0 %v67
    %v354 = vpop.f32.mrf.mxu0
    %v355 = vadd.f32 %v210, %v354
    %v356 = vpop.f32.mrf.mxu0
    %357 = vmatprep.mubr.f32.mxu0 %v72
    %358 = vmatmul.mubr.f32.gmra.mxu0 %v71
    %v359 = vpop.f32.mrf.mxu0
    %v360 = vadd.f32 %v215, %v359
    %v361 = vpop.f32.mrf.mxu0
    %362 = vdwg.mxu0
    %v363 = vlaneseq
    %v364 = vshrl.u32 %v363, 7
    %v365 = vadd.s32 %v364, 8
    %v366 = vadd.s32 %v364, 16
    %v367 = vadd.s32 %v364, 24
    %v368 = vadd.s32 %v364, 32
    %v369 = vadd.s32 %v364, 40
    %v370 = vadd.s32 %v364, 48
    %v371 = vadd.s32 %v364, 56
    %v372 = vadd.s32 %v364, 64
    %v373 = vadd.s32 %v364, 72
    %v374 = vadd.s32 %v364, 80
    %v375 = vadd.s32 %v364, 88
    %v376 = vadd.s32 %v364, 96
    %v377 = vadd.s32 %v364, 104
    %v378 = vadd.s32 %v364, 112
    %v379 = vadd.s32 %v364, 120
    %v380 = vlaneseq
    %v381 = vand.u32 %v380, 127
    %vm382 = vcmp.eq.s32.totalorder %v364, %v381
    %vm383 = vcmp.eq.s32.totalorder %v365, %v381
    %vm384 = vcmp.eq.s32.totalorder %v366, %v381
    %vm385 = vcmp.eq.s32.totalorder %v367, %v381
    %vm386 = vcmp.eq.s32.totalorder %v368, %v381
    %vm387 = vcmp.eq.s32.totalorder %v369, %v381
    %vm388 = vcmp.eq.s32.totalorder %v370, %v381
    %vm389 = vcmp.eq.s32.totalorder %v371, %v381
    %vm390 = vcmp.eq.s32.totalorder %v372, %v381
    %vm391 = vcmp.eq.s32.totalorder %v373, %v381
    %vm392 = vcmp.eq.s32.totalorder %v374, %v381
    %vm393 = vcmp.eq.s32.totalorder %v375, %v381
    %vm394 = vcmp.eq.s32.totalorder %v376, %v381
    %vm395 = vcmp.eq.s32.totalorder %v377, %v381
    %vm396 = vcmp.eq.s32.totalorder %v378, %v381
    %vm397 = vcmp.eq.s32.totalorder %v379, %v381
    %v398 = vsub.f32 %v285, 1.0
    %v399 = vsub.f32 %v290, 1.0
    %v400 = vsub.f32 %v295, 1.0
    %v401 = vsub.f32 %v300, 1.0
    %v402 = vsub.f32 %v305, 1.0
    %v403 = vsub.f32 %v310, 1.0
    %v404 = vsub.f32 %v315, 1.0
    %v405 = vsub.f32 %v320, 1.0
    %v406 = vsub.f32 %v325, 1.0
    %v407 = vsub.f32 %v330, 1.0
    %v408 = vsub.f32 %v335, 1.0
    %v409 = vsub.f32 %v340, 1.0
    %v410 = vsub.f32 %v345, 1.0
    %v411 = vsub.f32 %v350, 1.0
    %v412 = vsub.f32 %v355, 1.0
    %v413 = vsub.f32 %v360, 1.0
    %v414 = vsel %vm382, %v398, %v285
    %v415 = vsel %vm383, %v399, %v290
    %v416 = vsel %vm384, %v400, %v295
    %v417 = vsel %vm385, %v401, %v300
    %v418 = vsel %vm386, %v402, %v305
    %v419 = vsel %vm387, %v403, %v310
    %v420 = vsel %vm388, %v404, %v315
    %v421 = vsel %vm389, %v405, %v320
    %v422 = vsel %vm390, %v406, %v325
    %v423 = vsel %vm391, %v407, %v330
    %v424 = vsel %vm392, %v408, %v335
    %v425 = vsel %vm393, %v409, %v340
    %v426 = vsel %vm394, %v410, %v345
    %v427 = vsel %vm395, %v411, %v350
    %v428 = vsel %vm396, %v412, %v355
    %v429 = vsel %vm397, %v413, %v360
    %v430 = vmul.f32 %v414, %v414
    %v431 = vmul.f32 %v415, %v415
    %v432 = vmul.f32 %v416, %v416
    %v433 = vmul.f32 %v417, %v417
    %v434 = vmul.f32 %v418, %v418
    %v435 = vmul.f32 %v419, %v419
    %v436 = vmul.f32 %v420, %v420
    %v437 = vmul.f32 %v421, %v421
    %v438 = vmul.f32 %v422, %v422
    %v439 = vmul.f32 %v423, %v423
    %v440 = vmul.f32 %v424, %v424
    %v441 = vmul.f32 %v425, %v425
    %v442 = vmul.f32 %v426, %v426
    %v443 = vmul.f32 %v427, %v427
    %v444 = vmul.f32 %v428, %v428
    %v445 = vmul.f32 %v429, %v429
    %446 = vadd.xlane.f32.xlu0 %v430
    %v447 = vpop.xlane.xlu0 %446
    %448 = vadd.xlane.f32.xlu0 %v431
    %v449 = vpop.xlane.xlu0 %448
    %450 = vadd.xlane.f32.xlu0 %v432
    %v451 = vpop.xlane.xlu0 %450
    %452 = vadd.xlane.f32.xlu0 %v433
    %v453 = vpop.xlane.xlu0 %452
    %454 = vadd.xlane.f32.xlu0 %v434
    %v455 = vpop.xlane.xlu0 %454
    %456 = vadd.xlane.f32.xlu0 %v435
    %v457 = vpop.xlane.xlu0 %456
    %458 = vadd.xlane.f32.xlu0 %v436
    %v459 = vpop.xlane.xlu0 %458
    %460 = vadd.xlane.f32.xlu0 %v437
    %v461 = vpop.xlane.xlu0 %460
    %462 = vadd.xlane.f32.xlu0 %v438
    %v463 = vpop.xlane.xlu0 %462
    %464 = vadd.xlane.f32.xlu0 %v439
    %v465 = vpop.xlane.xlu0 %464
    %466 = vadd.xlane.f32.xlu0 %v440
    %v467 = vpop.xlane.xlu0 %466
    %468 = vadd.xlane.f32.xlu0 %v441
    %v469 = vpop.xlane.xlu0 %468
    %470 = vadd.xlane.f32.xlu0 %v442
    %v471 = vpop.xlane.xlu0 %470
    %472 = vadd.xlane.f32.xlu0 %v443
    %v473 = vpop.xlane.xlu0 %472
    %474 = vadd.xlane.f32.xlu0 %v444
    %v475 = vpop.xlane.xlu0 %474
    %476 = vadd.xlane.f32.xlu0 %v445
    %v477 = vpop.xlane.xlu0 %476
    %v478 = vadd.f32 %v447, %v449
    %v479 = vadd.f32 %v478, %v451
    %v480 = vadd.f32 %v479, %v453
    %v481 = vadd.f32 %v480, %v455
    %v482 = vadd.f32 %v481, %v457
    %v483 = vadd.f32 %v482, %v459
    %v484 = vadd.f32 %v483, %v461
    %v485 = vadd.f32 %v484, %v463
    %v486 = vadd.f32 %v485, %v465
    %v487 = vadd.f32 %v486, %v467
    %v488 = vadd.f32 %v487, %v469
    %v489 = vadd.f32 %v488, %v471
    %v490 = vadd.f32 %v489, %v473
    %v491 = vadd.f32 %v490, %v475
    %v492 = vadd.f32 %v491, %v477
    %v493 = vrot.slane %v492, 4
    %v494 = vadd.f32 %v492, %v493
    %v495 = vrot.slane %v494, 2
    %v496 = vadd.f32 %v494, %v495
    %v497 = vrot.slane %v496, 1
    %v498 = vadd.f32 %v496, %v497
    %v499 = vmul.f32 %v498, 6.1035156e-05
    %vm500 = vcmask 0
    %501 = vst.msk [vmem:[#allocation2] sm:$0x1] %vm500, %v499
    // Predicated region
    $region6: #{disentangled_transformer_layer.29} parent=1 // pred_check
      _
    $region7: #{disentangled_transformer_layer.29} parent=1 // pred_check_branch
      %503 = sbr.rel (0) target = $region9
    $region8: #{disentangled_transformer_layer.29} parent=1 // pred_region
      %s505 = ssub.s32 16, 16
      %506 = vsyncadd [#allocation3], %s505
      %s508 = sshll.u32 [#allocation2], 4
      %s509 = int_to_ptr.vmem [resolvable:$true] %s508
      %511 = dma.vmem_to_hbm [thread:$0]  %s509, 16, %s1, [#allocation3]
    $region9: #{disentangled_transformer_layer.29} parent=1 // pred_fallthru
      _
    // Predicated region
    $region10: #{disentangled_transformer_layer.29} parent=1 // pred_check
      _
    $region11: #{disentangled_transformer_layer.29} parent=1 // pred_check_branch
      %513 = sbr.rel (0) target = $region13
    $region12: #{disentangled_transformer_layer.29} parent=1 // pred_region
      %514 = dma.done [#allocation3], 16
    $region13: #{disentangled_transformer_layer.29} parent=1 // pred_fallthru
      _
    %515 = vsyncpa [#allocation3], 1

// kernel: disentangled_transformer_layer.28
$region0: #{disentangled_transformer_layer.28}
  #allocation0 [shape = 'u32[]', space=smem, size = 0x4, offset = 0x4, fixed_abs, tag = 'smem constant byte address 0x4 - core index']
  #allocation1 [shape = 'u32[144,128]{1,0:T(1,128)}', space=vmem, size = 0x12000, scoped, tag = 'internal scratch']
  %s0 = inlined_call_operand.vmem [shape: f32[512,128], index: 0, kind: input, shape index: {}]
  %s1 = inlined_call_operand.hbm [shape: f32[1,1], index: 1, kind: output, shape index: {}]
  %s2 = sld [smem:[#allocation0]]
  $region14: #{disentangled_transformer_layer.28} parent=0
    _
  %s4 = ssub.s32 1, %s2
  %s5 = scalar_select 0, %s4, %s2
  $region1: #{disentangled_transformer_layer.28} parent=0
    #allocation2 [shape = 'u8[512]{0}', space=vmem, size = 0x400, scoped, tag = 'output window, operand 0, single buffered']
    #allocation3 [shape = 's32[1]{0}', space=sflag, size = 0x4, scoped, tag = 'scoped memory for disentangled_transformer_layer.28']
    %6 = vsyncpa [#allocation3], 0
    // Predicated region
    $region2: #{disentangled_transformer_layer.28} parent=1 // pred_check
      _
    $region3: #{disentangled_transformer_layer.28} parent=1 // pred_check_branch
      %8 = sbr.rel (0) target = $region5
    $region4: #{disentangled_transformer_layer.28} parent=1 // pred_region
      _
    $region5: #{disentangled_transformer_layer.28} parent=1 // pred_fallthru
      _
    %v9 = vld [vmem:[%s0] sm:$0xff]
    %v10 = vld [vmem:[%s0 + $0x8] sm:$0xff]
    %v11 = vld [vmem:[%s0 + $0x10] sm:$0xff]
    %v12 = vld [vmem:[%s0 + $0x18] sm:$0xff]
    %v13 = vld [vmem:[%s0 + $0x20] sm:$0xff]
    %v14 = vld [vmem:[%s0 + $0x28] sm:$0xff]
    %v15 = vld [vmem:[%s0 + $0x30] sm:$0xff]
    %v16 = vld [vmem:[%s0 + $0x38] sm:$0xff]
    %v17 = vld [vmem:[%s0 + $0x40] sm:$0xff]
    %v18 = vld [vmem:[%s0 + $0x48] sm:$0xff]
    %v19 = vld [vmem:[%s0 + $0x50] sm:$0xff]
    %v20 = vld [vmem:[%s0 + $0x58] sm:$0xff]
    %v21 = vld [vmem:[%s0 + $0x60] sm:$0xff]
    %v22 = vld [vmem:[%s0 + $0x68] sm:$0xff]
    %v23 = vld [vmem:[%s0 + $0x70] sm:$0xff]
    %v24 = vld [vmem:[%s0 + $0x78] sm:$0xff]
    %v25 = vld [vmem:[%s0 + $0x80] sm:$0xff]
    %v26 = vld [vmem:[%s0 + $0x88] sm:$0xff]
    %v27 = vld [vmem:[%s0 + $0x90] sm:$0xff]
    %v28 = vld [vmem:[%s0 + $0x98] sm:$0xff]
    %v29 = vld [vmem:[%s0 + $0xa0] sm:$0xff]
    %v30 = vld [vmem:[%s0 + $0xa8] sm:$0xff]
    %v31 = vld [vmem:[%s0 + $0xb0] sm:$0xff]
    %v32 = vld [vmem:[%s0 + $0xb8] sm:$0xff]
    %v33 = vld [vmem:[%s0 + $0xc0] sm:$0xff]
    %v34 = vld [vmem:[%s0 + $0xc8] sm:$0xff]
    %v35 = vld [vmem:[%s0 + $0xd0] sm:$0xff]
    %v36 = vld [vmem:[%s0 + $0xd8] sm:$0xff]
    %v37 = vld [vmem:[%s0 + $0xe0] sm:$0xff]
    %v38 = vld [vmem:[%s0 + $0xe8] sm:$0xff]
    %v39 = vld [vmem:[%s0 + $0xf0] sm:$0xff]
    %v40 = vld [vmem:[%s0 + $0xf8] sm:$0xff]
    %v41 = vld [vmem:[%s0 + $0x100] sm:$0xff]
    %v42 = vld [vmem:[%s0 + $0x108] sm:$0xff]
    %v43 = vld [vmem:[%s0 + $0x110] sm:$0xff]
    %v44 = vld [vmem:[%s0 + $0x118] sm:$0xff]
    %v45 = vld [vmem:[%s0 + $0x120] sm:$0xff]
    %v46 = vld [vmem:[%s0 + $0x128] sm:$0xff]
    %v47 = vld [vmem:[%s0 + $0x130] sm:$0xff]
    %v48 = vld [vmem:[%s0 + $0x138] sm:$0xff]
    %v49 = vld [vmem:[%s0 + $0x140] sm:$0xff]
    %v50 = vld [vmem:[%s0 + $0x148] sm:$0xff]
    %v51 = vld [vmem:[%s0 + $0x150] sm:$0xff]
    %v52 = vld [vmem:[%s0 + $0x158] sm:$0xff]
    %v53 = vld [vmem:[%s0 + $0x160] sm:$0xff]
    %v54 = vld [vmem:[%s0 + $0x168] sm:$0xff]
    %v55 = vld [vmem:[%s0 + $0x170] sm:$0xff]
    %v56 = vld [vmem:[%s0 + $0x178] sm:$0xff]
    %v57 = vld [vmem:[%s0 + $0x180] sm:$0xff]
    %v58 = vld [vmem:[%s0 + $0x188] sm:$0xff]
    %v59 = vld [vmem:[%s0 + $0x190] sm:$0xff]
    %v60 = vld [vmem:[%s0 + $0x198] sm:$0xff]
    %v61 = vld [vmem:[%s0 + $0x1a0] sm:$0xff]
    %v62 = vld [vmem:[%s0 + $0x1a8] sm:$0xff]
    %v63 = vld [vmem:[%s0 + $0x1b0] sm:$0xff]
    %v64 = vld [vmem:[%s0 + $0x1b8] sm:$0xff]
    %v65 = vld [vmem:[%s0 + $0x1c0] sm:$0xff]
    %v66 = vld [vmem:[%s0 + $0x1c8] sm:$0xff]
    %v67 = vld [vmem:[%s0 + $0x1d0] sm:$0xff]
    %v68 = vld [vmem:[%s0 + $0x1d8] sm:$0xff]
    %v69 = vld [vmem:[%s0 + $0x1e0] sm:$0xff]
    %v70 = vld [vmem:[%s0 + $0x1e8] sm:$0xff]
    %v71 = vld [vmem:[%s0 + $0x1f0] sm:$0xff]
    %v72 = vld [vmem:[%s0 + $0x1f8] sm:$0xff]
    %73 = vmatprep.subr.mxu0 0.0
    %74 = vmatpush1.xpose.msra.mxu0 %v24
    %75 = vmatprep.subr.mxu0 0.0
    %76 = vmatpush1.xpose.msra.mxu0 %v23
    %77 = vmatprep.subr.mxu0 0.0
    %78 = vmatpush1.xpose.msra.mxu0 %v22
    %79 = vmatprep.subr.mxu0 0.0
    %80 = vmatpush1.xpose.msra.mxu0 %v21
    %81 = vmatprep.subr.mxu0 0.0
    %82 = vmatpush1.xpose.msra.mxu0 %v20
    %83 = vmatprep.subr.mxu0 0.0
    %84 = vmatpush1.xpose.msra.mxu0 %v19
    %85 = vmatprep.subr.mxu0 0.0
    %86 = vmatpush1.xpose.msra.mxu0 %v18
    %87 = vmatprep.subr.mxu0 0.0
    %88 = vmatpush1.xpose.msra.mxu0 %v17
    %89 = vmatprep.subr.mxu0 0.0
    %90 = vmatpush1.xpose.msra.mxu0 %v16
    %91 = vmatprep.subr.mxu0 0.0
    %92 = vmatpush1.xpose.msra.mxu0 %v15
    %93 = vmatprep.subr.mxu0 0.0
    %94 = vmatpush1.xpose.msra.mxu0 %v14
    %95 = vmatprep.subr.mxu0 0.0
    %96 = vmatpush1.xpose.msra.mxu0 %v13
    %97 = vmatprep.subr.mxu0 0.0
    %98 = vmatpush1.xpose.msra.mxu0 %v12
    %99 = vmatprep.subr.mxu0 0.0
    %100 = vmatpush1.xpose.msra.mxu0 %v11
    %101 = vmatprep.subr.mxu0 0.0
    %102 = vmatpush1.xpose.msra.mxu0 %v10
    %103 = vmatprep.subr.mxu0 0.0
    %104 = vmatpush1.xpose.msra.mxu0 %v9
    %105 = vmatprep.subr.mxu0 0.0
    %106 = vmatpush2.xpose.msra.mxu0 %v40
    %107 = vmatprep.subr.mxu0 0.0
    %108 = vmatpush2.xpose.msra.mxu0 %v39
    %109 = vmatprep.subr.mxu0 0.0
    %110 = vmatpush2.xpose.msra.mxu0 %v38
    %111 = vmatprep.subr.mxu0 0.0
    %112 = vmatpush2.xpose.msra.mxu0 %v37
    %113 = vmatprep.subr.mxu0 0.0
    %114 = vmatpush2.xpose.msra.mxu0 %v36
    %115 = vmatprep.subr.mxu0 0.0
    %116 = vmatpush2.xpose.msra.mxu0 %v35
    %117 = vmatprep.subr.mxu0 0.0
    %118 = vmatpush2.xpose.msra.mxu0 %v34
    %119 = vmatprep.subr.mxu0 0.0
    %120 = vmatpush2.xpose.msra.mxu0 %v33
    %121 = vmatprep.subr.mxu0 0.0
    %122 = vmatpush2.xpose.msra.mxu0 %v32
    %123 = vmatprep.subr.mxu0 0.0
    %124 = vmatpush2.xpose.msra.mxu0 %v31
    %125 = vmatprep.subr.mxu0 0.0
    %126 = vmatpush2.xpose.msra.mxu0 %v30
    %127 = vmatprep.subr.mxu0 0.0
    %128 = vmatpush2.xpose.msra.mxu0 %v29
    %129 = vmatprep.subr.mxu0 0.0
    %130 = vmatpush2.xpose.msra.mxu0 %v28
    %131 = vmatprep.subr.mxu0 0.0
    %132 = vmatpush2.xpose.msra.mxu0 %v27
    %133 = vmatprep.subr.mxu0 0.0
    %134 = vmatpush2.xpose.msra.mxu0 %v26
    %135 = vmatprep.subr.mxu0 0.0
    %136 = vmatpush2.xpose.msra.mxu0 %v25
    %137 = vmatprep.mubr.f32.mxu0 0.0
    %138 = vmatmul.mubr.f32.gmra.mxu0 %v9
    %v139 = vpop.f32.mrf.mxu0
    %v140 = vadd.f32 0.0, %v139
    %v141 = vpop.f32.mrf.mxu0
    %v142 = vadd.f32 0.0, %v141
    %143 = vmatprep.mubr.f32.mxu0 0.0
    %144 = vmatmul.mubr.f32.gmra.mxu0 %v10
    %v145 = vpop.f32.mrf.mxu0
    %v146 = vadd.f32 0.0, %v145
    %v147 = vpop.f32.mrf.mxu0
    %v148 = vadd.f32 0.0, %v147
    %149 = vmatprep.mubr.f32.mxu0 0.0
    %150 = vmatmul.mubr.f32.gmra.mxu0 %v11
    %v151 = vpop.f32.mrf.mxu0
    %v152 = vadd.f32 0.0, %v151
    %v153 = vpop.f32.mrf.mxu0
    %v154 = vadd.f32 0.0, %v153
    %155 = vmatprep.mubr.f32.mxu0 0.0
    %156 = vmatmul.mubr.f32.gmra.mxu0 %v12
    %v157 = vpop.f32.mrf.mxu0
    %v158 = vadd.f32 0.0, %v157
    %v159 = vpop.f32.mrf.mxu0
    %v160 = vadd.f32 0.0, %v159
    %161 = vmatprep.mubr.f32.mxu0 0.0
    %162 = vmatmul.mubr.f32.gmra.mxu0 %v13
    %v163 = vpop.f32.mrf.mxu0
    %v164 = vadd.f32 0.0, %v163
    %v165 = vpop.f32.mrf.mxu0
    %v166 = vadd.f32 0.0, %v165
    %167 = vmatprep.mubr.f32.mxu0 0.0
    %168 = vmatmul.mubr.f32.gmra.mxu0 %v14
    %v169 = vpop.f32.mrf.mxu0
    %v170 = vadd.f32 0.0, %v169
    %v171 = vpop.f32.mrf.mxu0
    %v172 = vadd.f32 0.0, %v171
    %173 = vmatprep.mubr.f32.mxu0 0.0
    %174 = vmatmul.mubr.f32.gmra.mxu0 %v15
    %v175 = vpop.f32.mrf.mxu0
    %v176 = vadd.f32 0.0, %v175
    %v177 = vpop.f32.mrf.mxu0
    %v178 = vadd.f32 0.0, %v177
    %179 = vmatprep.mubr.f32.mxu0 0.0
    %180 = vmatmul.mubr.f32.gmra.mxu0 %v16
    %v181 = vpop.f32.mrf.mxu0
    %v182 = vadd.f32 0.0, %v181
    %v183 = vpop.f32.mrf.mxu0
    %v184 = vadd.f32 0.0, %v183
    %185 = vmatprep.mubr.f32.mxu0 0.0
    %186 = vmatmul.mubr.f32.gmra.mxu0 %v17
    %v187 = vpop.f32.mrf.mxu0
    %v188 = vadd.f32 0.0, %v187
    %v189 = vpop.f32.mrf.mxu0
    %v190 = vadd.f32 0.0, %v189
    %191 = vmatprep.mubr.f32.mxu0 0.0
    %192 = vmatmul.mubr.f32.gmra.mxu0 %v18
    %v193 = vpop.f32.mrf.mxu0
    %v194 = vadd.f32 0.0, %v193
    %v195 = vpop.f32.mrf.mxu0
    %v196 = vadd.f32 0.0, %v195
    %197 = vmatprep.mubr.f32.mxu0 0.0
    %198 = vmatmul.mubr.f32.gmra.mxu0 %v19
    %v199 = vpop.f32.mrf.mxu0
    %v200 = vadd.f32 0.0, %v199
    %v201 = vpop.f32.mrf.mxu0
    %v202 = vadd.f32 0.0, %v201
    %203 = vmatprep.mubr.f32.mxu0 0.0
    %204 = vmatmul.mubr.f32.gmra.mxu0 %v20
    %v205 = vpop.f32.mrf.mxu0
    %v206 = vadd.f32 0.0, %v205
    %v207 = vpop.f32.mrf.mxu0
    %v208 = vadd.f32 0.0, %v207
    %209 = vmatprep.mubr.f32.mxu0 0.0
    %210 = vmatmul.mubr.f32.gmra.mxu0 %v21
    %v211 = vpop.f32.mrf.mxu0
    %v212 = vadd.f32 0.0, %v211
    %v213 = vpop.f32.mrf.mxu0
    %v214 = vadd.f32 0.0, %v213
    %215 = vmatprep.mubr.f32.mxu0 0.0
    %216 = vmatmul.mubr.f32.gmra.mxu0 %v22
    %v217 = vpop.f32.mrf.mxu0
    %v218 = vadd.f32 0.0, %v217
    %v219 = vpop.f32.mrf.mxu0
    %v220 = vadd.f32 0.0, %v219
    %221 = vmatprep.mubr.f32.mxu0 0.0
    %222 = vmatmul.mubr.f32.gmra.mxu0 %v23
    %v223 = vpop.f32.mrf.mxu0
    %v224 = vadd.f32 0.0, %v223
    %v225 = vpop.f32.mrf.mxu0
    %v226 = vadd.f32 0.0, %v225
    %227 = vmatprep.mubr.f32.mxu0 0.0
    %228 = vmatmul.mubr.f32.gmra.mxu0 %v24
    %v229 = vpop.f32.mrf.mxu0
    %v230 = vadd.f32 0.0, %v229
    %v231 = vpop.f32.mrf.mxu0
    %v232 = vadd.f32 0.0, %v231
    %233 = vmatprep.mubr.f32.mxu0 0.0
    %234 = vmatmul.mubr.f32.gmra.mxu0 %v25
    %v235 = vpop.f32.mrf.mxu0
    %v236 = vadd.f32 0.0, %v235
    %v237 = vpop.f32.mrf.mxu0
    %v238 = vadd.f32 0.0, %v237
    %239 = vmatprep.mubr.f32.mxu0 0.0
    %240 = vmatmul.mubr.f32.gmra.mxu0 %v26
    %v241 = vpop.f32.mrf.mxu0
    %v242 = vadd.f32 0.0, %v241
    %v243 = vpop.f32.mrf.mxu0
    %v244 = vadd.f32 0.0, %v243
    %245 = vmatprep.mubr.f32.mxu0 0.0
    %246 = vmatmul.mubr.f32.gmra.mxu0 %v27
    %v247 = vpop.f32.mrf.mxu0
    %v248 = vadd.f32 0.0, %v247
    %v249 = vpop.f32.mrf.mxu0
    %v250 = vadd.f32 0.0, %v249
    %251 = vmatprep.mubr.f32.mxu0 0.0
    %252 = vmatmul.mubr.f32.gmra.mxu0 %v28
    %v253 = vpop.f32.mrf.mxu0
    %v254 = vadd.f32 0.0, %v253
    %v255 = vpop.f32.mrf.mxu0
    %v256 = vadd.f32 0.0, %v255
    %257 = vmatprep.mubr.f32.mxu0 0.0
    %258 = vmatmul.mubr.f32.gmra.mxu0 %v29
    %v259 = vpop.f32.mrf.mxu0
    %v260 = vadd.f32 0.0, %v259
    %v261 = vpop.f32.mrf.mxu0
    %v262 = vadd.f32 0.0, %v261
    %263 = vmatprep.mubr.f32.mxu0 0.0
    %264 = vmatmul.mubr.f32.gmra.mxu0 %v30
    %v265 = vpop.f32.mrf.mxu0
    %v266 = vadd.f32 0.0, %v265
    %v267 = vpop.f32.mrf.mxu0
    %v268 = vadd.f32 0.0, %v267
    %269 = vmatprep.mubr.f32.mxu0 0.0
    %270 = vmatmul.mubr.f32.gmra.mxu0 %v31
    %v271 = vpop.f32.mrf.mxu0
    %v272 = vadd.f32 0.0, %v271
    %v273 = vpop.f32.mrf.mxu0
    %v274 = vadd.f32 0.0, %v273
    %275 = vmatprep.mubr.f32.mxu0 0.0
    %276 = vmatmul.mubr.f32.gmra.mxu0 %v32
    %v277 = vpop.f32.mrf.mxu0
    %v278 = vadd.f32 0.0, %v277
    %v279 = vpop.f32.mrf.mxu0
    %v280 = vadd.f32 0.0, %v279
    %281 = vmatprep.mubr.f32.mxu0 0.0
    %282 = vmatmul.mubr.f32.gmra.mxu0 %v33
    %v283 = vpop.f32.mrf.mxu0
    %v284 = vadd.f32 0.0, %v283
    %v285 = vpop.f32.mrf.mxu0
    %v286 = vadd.f32 0.0, %v285
    %287 = vmatprep.mubr.f32.mxu0 0.0
    %288 = vmatmul.mubr.f32.gmra.mxu0 %v34
    %v289 = vpop.f32.mrf.mxu0
    %v290 = vadd.f32 0.0, %v289
    %v291 = vpop.f32.mrf.mxu0
    %v292 = vadd.f32 0.0, %v291
    %293 = vmatprep.mubr.f32.mxu0 0.0
    %294 = vmatmul.mubr.f32.gmra.mxu0 %v35
    %v295 = vpop.f32.mrf.mxu0
    %v296 = vadd.f32 0.0, %v295
    %v297 = vpop.f32.mrf.mxu0
    %v298 = vadd.f32 0.0, %v297
    %299 = vmatprep.mubr.f32.mxu0 0.0
    %300 = vmatmul.mubr.f32.gmra.mxu0 %v36
    %v301 = vpop.f32.mrf.mxu0
    %v302 = vadd.f32 0.0, %v301
    %v303 = vpop.f32.mrf.mxu0
    %v304 = vadd.f32 0.0, %v303
    %305 = vmatprep.mubr.f32.mxu0 0.0
    %306 = vmatmul.mubr.f32.gmra.mxu0 %v37
    %v307 = vpop.f32.mrf.mxu0
    %v308 = vadd.f32 0.0, %v307
    %v309 = vpop.f32.mrf.mxu0
    %v310 = vadd.f32 0.0, %v309
    %311 = vmatprep.mubr.f32.mxu0 0.0
    %312 = vmatmul.mubr.f32.gmra.mxu0 %v38
    %v313 = vpop.f32.mrf.mxu0
    %v314 = vadd.f32 0.0, %v313
    %v315 = vpop.f32.mrf.mxu0
    %v316 = vadd.f32 0.0, %v315
    %317 = vmatprep.mubr.f32.mxu0 0.0
    %318 = vmatmul.mubr.f32.gmra.mxu0 %v39
    %v319 = vpop.f32.mrf.mxu0
    %v320 = vadd.f32 0.0, %v319
    %v321 = vpop.f32.mrf.mxu0
    %v322 = vadd.f32 0.0, %v321
    %323 = vmatprep.mubr.f32.mxu0 0.0
    %324 = vmatmul.mubr.f32.gmra.mxu0 %v40
    %v325 = vpop.f32.mrf.mxu0
    %v326 = vadd.f32 0.0, %v325
    %v327 = vpop.f32.mrf.mxu0
    %v328 = vadd.f32 0.0, %v327
    %329 = vmatprep.mubr.f32.mxu0 0.0
    %330 = vmatmul.mubr.f32.gmra.mxu0 %v41
    %v331 = vpop.f32.mrf.mxu0
    %v332 = vadd.f32 0.0, %v331
    %v333 = vpop.f32.mrf.mxu0
    %v334 = vadd.f32 0.0, %v333
    %335 = vmatprep.mubr.f32.mxu0 0.0
    %336 = vmatmul.mubr.f32.gmra.mxu0 %v42
    %v337 = vpop.f32.mrf.mxu0
    %v338 = vadd.f32 0.0, %v337
    %v339 = vpop.f32.mrf.mxu0
    %v340 = vadd.f32 0.0, %v339
    %341 = vmatprep.mubr.f32.mxu0 0.0
    %342 = vmatmul.mubr.f32.gmra.mxu0 %v43
    %v343 = vpop.f32.mrf.mxu0
    %v344 = vadd.f32 0.0, %v343
    %v345 = vpop.f32.mrf.mxu0
    %v346 = vadd.f32 0.0, %v345
    %347 = vmatprep.mubr.f32.mxu0 0.0
    %348 = vmatmul.mubr.f32.gmra.mxu0 %v44
    %v349 = vpop.f32.mrf.mxu0
    %v350 = vadd.f32 0.0, %v349
    %v351 = vpop.f32.mrf.mxu0
    %v352 = vadd.f32 0.0, %v351
    %353 = vmatprep.mubr.f32.mxu0 0.0
    %354 = vmatmul.mubr.f32.gmra.mxu0 %v45
    %v355 = vpop.f32.mrf.mxu0
    %v356 = vadd.f32 0.0, %v355
    %v357 = vpop.f32.mrf.mxu0
    %v358 = vadd.f32 0.0, %v357
    %359 = vmatprep.mubr.f32.mxu0 0.0
    %360 = vmatmul.mubr.f32.gmra.mxu0 %v46
    %v361 = vpop.f32.mrf.mxu0
    %v362 = vadd.f32 0.0, %v361
    %v363 = vpop.f32.mrf.mxu0
    %v364 = vadd.f32 0.0, %v363
    %365 = vmatprep.mubr.f32.mxu0 0.0
    %366 = vmatmul.mubr.f32.gmra.mxu0 %v47
    %v367 = vpop.f32.mrf.mxu0
    %v368 = vadd.f32 0.0, %v367
    %v369 = vpop.f32.mrf.mxu0
    %v370 = vadd.f32 0.0, %v369
    %371 = vmatprep.mubr.f32.mxu0 0.0
    %372 = vmatmul.mubr.f32.gmra.mxu0 %v48
    %v373 = vpop.f32.mrf.mxu0
    %v374 = vadd.f32 0.0, %v373
    %v375 = vpop.f32.mrf.mxu0
    %v376 = vadd.f32 0.0, %v375
    %377 = vmatprep.mubr.f32.mxu0 0.0
    %378 = vmatmul.mubr.f32.gmra.mxu0 %v49
    %v379 = vpop.f32.mrf.mxu0
    %v380 = vadd.f32 0.0, %v379
    %v381 = vpop.f32.mrf.mxu0
    %v382 = vadd.f32 0.0, %v381
    %383 = vmatprep.mubr.f32.mxu0 0.0
    %384 = vmatmul.mubr.f32.gmra.mxu0 %v50
    %v385 = vpop.f32.mrf.mxu0
    %v386 = vadd.f32 0.0, %v385
    %v387 = vpop.f32.mrf.mxu0
    %v388 = vadd.f32 0.0, %v387
    %389 = vmatprep.mubr.f32.mxu0 0.0
    %390 = vmatmul.mubr.f32.gmra.mxu0 %v51
    %v391 = vpop.f32.mrf.mxu0
    %v392 = vadd.f32 0.0, %v391
    %v393 = vpop.f32.mrf.mxu0
    %v394 = vadd.f32 0.0, %v393
    %395 = vmatprep.mubr.f32.mxu0 0.0
    %396 = vmatmul.mubr.f32.gmra.mxu0 %v52
    %v397 = vpop.f32.mrf.mxu0
    %v398 = vadd.f32 0.0, %v397
    %v399 = vpop.f32.mrf.mxu0
    %v400 = vadd.f32 0.0, %v399
    %401 = vmatprep.mubr.f32.mxu0 0.0
    %402 = vmatmul.mubr.f32.gmra.mxu0 %v53
    %v403 = vpop.f32.mrf.mxu0
    %v404 = vadd.f32 0.0, %v403
    %v405 = vpop.f32.mrf.mxu0
    %v406 = vadd.f32 0.0, %v405
    %407 = vmatprep.mubr.f32.mxu0 0.0
    %408 = vmatmul.mubr.f32.gmra.mxu0 %v54
    %v409 = vpop.f32.mrf.mxu0
    %v410 = vadd.f32 0.0, %v409
    %v411 = vpop.f32.mrf.mxu0
    %v412 = vadd.f32 0.0, %v411
    %413 = vmatprep.mubr.f32.mxu0 0.0
    %414 = vmatmul.mubr.f32.gmra.mxu0 %v55
    %v415 = vpop.f32.mrf.mxu0
    %v416 = vadd.f32 0.0, %v415
    %v417 = vpop.f32.mrf.mxu0
    %v418 = vadd.f32 0.0, %v417
    %419 = vmatprep.mubr.f32.mxu0 0.0
    %420 = vmatmul.mubr.f32.gmra.mxu0 %v56
    %v421 = vpop.f32.mrf.mxu0
    %v422 = vadd.f32 0.0, %v421
    %v423 = vpop.f32.mrf.mxu0
    %v424 = vadd.f32 0.0, %v423
    %425 = vmatprep.mubr.f32.mxu0 0.0
    %426 = vmatmul.mubr.f32.gmra.mxu0 %v57
    %v427 = vpop.f32.mrf.mxu0
    %v428 = vadd.f32 0.0, %v427
    %v429 = vpop.f32.mrf.mxu0
    %v430 = vadd.f32 0.0, %v429
    %431 = vmatprep.mubr.f32.mxu0 0.0
    %432 = vmatmul.mubr.f32.gmra.mxu0 %v58
    %v433 = vpop.f32.mrf.mxu0
    %v434 = vadd.f32 0.0, %v433
    %v435 = vpop.f32.mrf.mxu0
    %v436 = vadd.f32 0.0, %v435
    %437 = vmatprep.mubr.f32.mxu0 0.0
    %438 = vmatmul.mubr.f32.gmra.mxu0 %v59
    %v439 = vpop.f32.mrf.mxu0
    %v440 = vadd.f32 0.0, %v439
    %v441 = vpop.f32.mrf.mxu0
    %v442 = vadd.f32 0.0, %v441
    %443 = vmatprep.mubr.f32.mxu0 0.0
    %444 = vmatmul.mubr.f32.gmra.mxu0 %v60
    %v445 = vpop.f32.mrf.mxu0
    %v446 = vadd.f32 0.0, %v445
    %v447 = vpop.f32.mrf.mxu0
    %v448 = vadd.f32 0.0, %v447
    %449 = vmatprep.mubr.f32.mxu0 0.0
    %450 = vmatmul.mubr.f32.gmra.mxu0 %v61
    %v451 = vpop.f32.mrf.mxu0
    %v452 = vadd.f32 0.0, %v451
    %v453 = vpop.f32.mrf.mxu0
    %v454 = vadd.f32 0.0, %v453
    %455 = vmatprep.mubr.f32.mxu0 0.0
    %456 = vmatmul.mubr.f32.gmra.mxu0 %v62
    %v457 = vpop.f32.mrf.mxu0
    %v458 = vadd.f32 0.0, %v457
    %v459 = vpop.f32.mrf.mxu0
    %v460 = vadd.f32 0.0, %v459
    %461 = vmatprep.mubr.f32.mxu0 0.0
    %462 = vmatmul.mubr.f32.gmra.mxu0 %v63
    %v463 = vpop.f32.mrf.mxu0
    %v464 = vadd.f32 0.0, %v463
    %v465 = vpop.f32.mrf.mxu0
    %v466 = vadd.f32 0.0, %v465
    %467 = vmatprep.mubr.f32.mxu0 0.0
    %468 = vmatmul.mubr.f32.gmra.mxu0 %v64
    %v469 = vpop.f32.mrf.mxu0
    %v470 = vadd.f32 0.0, %v469
    %v471 = vpop.f32.mrf.mxu0
    %v472 = vadd.f32 0.0, %v471
    %473 = vmatprep.mubr.f32.mxu0 0.0
    %474 = vmatmul.mubr.f32.gmra.mxu0 %v65
    %v475 = vpop.f32.mrf.mxu0
    %v476 = vadd.f32 0.0, %v475
    %v477 = vpop.f32.mrf.mxu0
    %v478 = vadd.f32 0.0, %v477
    %479 = vmatprep.mubr.f32.mxu0 0.0
    %480 = vmatmul.mubr.f32.gmra.mxu0 %v66
    %v481 = vpop.f32.mrf.mxu0
    %v482 = vadd.f32 0.0, %v481
    %v483 = vpop.f32.mrf.mxu0
    %v484 = vadd.f32 0.0, %v483
    %485 = vmatprep.mubr.f32.mxu0 0.0
    %486 = vmatmul.mubr.f32.gmra.mxu0 %v67
    %v487 = vpop.f32.mrf.mxu0
    %v488 = vadd.f32 0.0, %v487
    %v489 = vpop.f32.mrf.mxu0
    %v490 = vadd.f32 0.0, %v489
    %491 = vmatprep.mubr.f32.mxu0 0.0
    %492 = vmatmul.mubr.f32.gmra.mxu0 %v68
    %v493 = vpop.f32.mrf.mxu0
    %v494 = vadd.f32 0.0, %v493
    %v495 = vpop.f32.mrf.mxu0
    %v496 = vadd.f32 0.0, %v495
    %497 = vmatprep.mubr.f32.mxu0 0.0
    %498 = vmatmul.mubr.f32.gmra.mxu0 %v69
    %v499 = vpop.f32.mrf.mxu0
    %v500 = vadd.f32 0.0, %v499
    %v501 = vpop.f32.mrf.mxu0
    %v502 = vadd.f32 0.0, %v501
    %503 = vmatprep.mubr.f32.mxu0 0.0
    %504 = vmatmul.mubr.f32.gmra.mxu0 %v70
    %v505 = vpop.f32.mrf.mxu0
    %v506 = vadd.f32 0.0, %v505
    %v507 = vpop.f32.mrf.mxu0
    %v508 = vadd.f32 0.0, %v507
    %509 = vmatprep.mubr.f32.mxu0 0.0
    %510 = vmatmul.mubr.f32.gmra.mxu0 %v71
    %v511 = vpop.f32.mrf.mxu0
    %v512 = vadd.f32 0.0, %v511
    %v513 = vpop.f32.mrf.mxu0
    %v514 = vadd.f32 0.0, %v513
    %515 = vmatprep.mubr.f32.mxu0 0.0
    %516 = vmatmul.mubr.f32.gmra.mxu0 %v72
    %v517 = vpop.f32.mrf.mxu0
    %v518 = vadd.f32 0.0, %v517
    %v519 = vpop.f32.mrf.mxu0
    %v520 = vadd.f32 0.0, %v519
    %521 = vdwg.mxu0
    %522 = vmatprep.subr.mxu0 0.0
    %523 = vmatpush1.xpose.msra.mxu0 %v56
    %524 = vmatprep.subr.mxu0 0.0
    %525 = vmatpush1.xpose.msra.mxu0 %v55
    %526 = vmatprep.subr.mxu0 0.0
    %527 = vmatpush1.xpose.msra.mxu0 %v54
    %528 = vmatprep.subr.mxu0 0.0
    %529 = vmatpush1.xpose.msra.mxu0 %v53
    %530 = vmatprep.subr.mxu0 0.0
    %531 = vmatpush1.xpose.msra.mxu0 %v52
    %532 = vmatprep.subr.mxu0 0.0
    %533 = vmatpush1.xpose.msra.mxu0 %v51
    %534 = vmatprep.subr.mxu0 0.0
    %535 = vmatpush1.xpose.msra.mxu0 %v50
    %536 = vmatprep.subr.mxu0 0.0
    %537 = vmatpush1.xpose.msra.mxu0 %v49
    %538 = vmatprep.subr.mxu0 0.0
    %539 = vmatpush1.xpose.msra.mxu0 %v48
    %540 = vmatprep.subr.mxu0 0.0
    %541 = vmatpush1.xpose.msra.mxu0 %v47
    %542 = vmatprep.subr.mxu0 0.0
    %543 = vmatpush1.xpose.msra.mxu0 %v46
    %544 = vmatprep.subr.mxu0 0.0
    %545 = vmatpush1.xpose.msra.mxu0 %v45
    %546 = vmatprep.subr.mxu0 0.0
    %547 = vmatpush1.xpose.msra.mxu0 %v44
    %548 = vmatprep.subr.mxu0 0.0
    %549 = vmatpush1.xpose.msra.mxu0 %v43
    %550 = vmatprep.subr.mxu0 0.0
    %551 = vmatpush1.xpose.msra.mxu0 %v42
    %552 = vmatprep.subr.mxu0 0.0
    %553 = vmatpush1.xpose.msra.mxu0 %v41
    %554 = vmatprep.subr.mxu0 0.0
    %555 = vmatpush2.xpose.msra.mxu0 %v72
    %556 = vmatprep.subr.mxu0 0.0
    %557 = vmatpush2.xpose.msra.mxu0 %v71
    %558 = vmatprep.subr.mxu0 0.0
    %559 = vmatpush2.xpose.msra.mxu0 %v70
    %560 = vmatprep.subr.mxu0 0.0
    %561 = vmatpush2.xpose.msra.mxu0 %v69
    %562 = vmatprep.subr.mxu0 0.0
    %563 = vmatpush2.xpose.msra.mxu0 %v68
    %564 = vmatprep.subr.mxu0 0.0
    %565 = vmatpush2.xpose.msra.mxu0 %v67
    %566 = vmatprep.subr.mxu0 0.0
    %567 = vmatpush2.xpose.msra.mxu0 %v66
    %568 = vmatprep.subr.mxu0 0.0
    %569 = vmatpush2.xpose.msra.mxu0 %v65
    %570 = vmatprep.subr.mxu0 0.0
    %571 = vmatpush2.xpose.msra.mxu0 %v64
    %572 = vmatprep.subr.mxu0 0.0
    %573 = vmatpush2.xpose.msra.mxu0 %v63
    %574 = vmatprep.subr.mxu0 0.0
    %575 = vmatpush2.xpose.msra.mxu0 %v62
    %576 = vmatprep.subr.mxu0 0.0
    %577 = vmatpush2.xpose.msra.mxu0 %v61
    %578 = vmatprep.subr.mxu0 0.0
    %579 = vmatpush2.xpose.msra.mxu0 %v60
    %580 = vmatprep.subr.mxu0 0.0
    %581 = vmatpush2.xpose.msra.mxu0 %v59
    %582 = vmatprep.subr.mxu0 0.0
    %583 = vmatpush2.xpose.msra.mxu0 %v58
    %584 = vmatprep.subr.mxu0 0.0
    %585 = vmatpush2.xpose.msra.mxu0 %v57
    %586 = vmatprep.mubr.f32.mxu0 0.0
    %587 = vmatmul.mubr.f32.gmra.mxu0 %v9
    %v588 = vpop.f32.mrf.mxu0
    %v589 = vadd.f32 0.0, %v588
    %v590 = vpop.f32.mrf.mxu0
    %v591 = vadd.f32 0.0, %v590
    %592 = vmatprep.mubr.f32.mxu0 0.0
    %593 = vmatmul.mubr.f32.gmra.mxu0 %v10
    %v594 = vpop.f32.mrf.mxu0
    %v595 = vadd.f32 0.0, %v594
    %v596 = vpop.f32.mrf.mxu0
    %v597 = vadd.f32 0.0, %v596
    %598 = vmatprep.mubr.f32.mxu0 0.0
    %599 = vmatmul.mubr.f32.gmra.mxu0 %v11
    %v600 = vpop.f32.mrf.mxu0
    %v601 = vadd.f32 0.0, %v600
    %v602 = vpop.f32.mrf.mxu0
    %v603 = vadd.f32 0.0, %v602
    %604 = vmatprep.mubr.f32.mxu0 0.0
    %605 = vmatmul.mubr.f32.gmra.mxu0 %v12
    %v606 = vpop.f32.mrf.mxu0
    %v607 = vadd.f32 0.0, %v606
    %v608 = vpop.f32.mrf.mxu0
    %v609 = vadd.f32 0.0, %v608
    %610 = vmatprep.mubr.f32.mxu0 0.0
    %611 = vmatmul.mubr.f32.gmra.mxu0 %v13
    %v612 = vpop.f32.mrf.mxu0
    %v613 = vadd.f32 0.0, %v612
    %v614 = vpop.f32.mrf.mxu0
    %v615 = vadd.f32 0.0, %v614
    %616 = vmatprep.mubr.f32.mxu0 0.0
    %617 = vmatmul.mubr.f32.gmra.mxu0 %v14
    %v618 = vpop.f32.mrf.mxu0
    %v619 = vadd.f32 0.0, %v618
    %v620 = vpop.f32.mrf.mxu0
    %v621 = vadd.f32 0.0, %v620
    %622 = vmatprep.mubr.f32.mxu0 0.0
    %623 = vmatmul.mubr.f32.gmra.mxu0 %v15
    %v624 = vpop.f32.mrf.mxu0
    %v625 = vadd.f32 0.0, %v624
    %v626 = vpop.f32.mrf.mxu0
    %v627 = vadd.f32 0.0, %v626
    %628 = vmatprep.mubr.f32.mxu0 0.0
    %629 = vmatmul.mubr.f32.gmra.mxu0 %v16
    %v630 = vpop.f32.mrf.mxu0
    %v631 = vadd.f32 0.0, %v630
    %v632 = vpop.f32.mrf.mxu0
    %v633 = vadd.f32 0.0, %v632
    %634 = vmatprep.mubr.f32.mxu0 0.0
    %635 = vmatmul.mubr.f32.gmra.mxu0 %v17
    %v636 = vpop.f32.mrf.mxu0
    %v637 = vadd.f32 0.0, %v636
    %v638 = vpop.f32.mrf.mxu0
    %v639 = vadd.f32 0.0, %v638
    %640 = vmatprep.mubr.f32.mxu0 0.0
    %641 = vmatmul.mubr.f32.gmra.mxu0 %v18
    %v642 = vpop.f32.mrf.mxu0
    %v643 = vadd.f32 0.0, %v642
    %v644 = vpop.f32.mrf.mxu0
    %v645 = vadd.f32 0.0, %v644
    %646 = vmatprep.mubr.f32.mxu0 0.0
    %647 = vmatmul.mubr.f32.gmra.mxu0 %v19
    %v648 = vpop.f32.mrf.mxu0
    %v649 = vadd.f32 0.0, %v648
    %v650 = vpop.f32.mrf.mxu0
    %v651 = vadd.f32 0.0, %v650
    %652 = vmatprep.mubr.f32.mxu0 0.0
    %653 = vmatmul.mubr.f32.gmra.mxu0 %v20
    %v654 = vpop.f32.mrf.mxu0
    %v655 = vadd.f32 0.0, %v654
    %v656 = vpop.f32.mrf.mxu0
    %v657 = vadd.f32 0.0, %v656
    %658 = vmatprep.mubr.f32.mxu0 0.0
    %659 = vmatmul.mubr.f32.gmra.mxu0 %v21
    %v660 = vpop.f32.mrf.mxu0
    %v661 = vadd.f32 0.0, %v660
    %v662 = vpop.f32.mrf.mxu0
    %v663 = vadd.f32 0.0, %v662
    %664 = vmatprep.mubr.f32.mxu0 0.0
    %665 = vmatmul.mubr.f32.gmra.mxu0 %v22
    %v666 = vpop.f32.mrf.mxu0
    %v667 = vadd.f32 0.0, %v666
    %v668 = vpop.f32.mrf.mxu0
    %v669 = vadd.f32 0.0, %v668
    %670 = vmatprep.mubr.f32.mxu0 0.0
    %671 = vmatmul.mubr.f32.gmra.mxu0 %v23
    %v672 = vpop.f32.mrf.mxu0
    %v673 = vadd.f32 0.0, %v672
    %v674 = vpop.f32.mrf.mxu0
    %v675 = vadd.f32 0.0, %v674
    %676 = vmatprep.mubr.f32.mxu0 0.0
    %677 = vmatmul.mubr.f32.gmra.mxu0 %v24
    %v678 = vpop.f32.mrf.mxu0
    %v679 = vadd.f32 0.0, %v678
    %v680 = vpop.f32.mrf.mxu0
    %v681 = vadd.f32 0.0, %v680
    %682 = vmatprep.mubr.f32.mxu0 0.0
    %683 = vmatmul.mubr.f32.gmra.mxu0 %v25
    %v684 = vpop.f32.mrf.mxu0
    %v685 = vadd.f32 0.0, %v684
    %v686 = vpop.f32.mrf.mxu0
    %v687 = vadd.f32 0.0, %v686
    %688 = vmatprep.mubr.f32.mxu0 0.0
    %689 = vmatmul.mubr.f32.gmra.mxu0 %v26
    %v690 = vpop.f32.mrf.mxu0
    %v691 = vadd.f32 0.0, %v690
    %v692 = vpop.f32.mrf.mxu0
    %v693 = vadd.f32 0.0, %v692
    %694 = vmatprep.mubr.f32.mxu0 0.0
    %695 = vmatmul.mubr.f32.gmra.mxu0 %v27
    %v696 = vpop.f32.mrf.mxu0
    %v697 = vadd.f32 0.0, %v696
    %v698 = vpop.f32.mrf.mxu0
    %v699 = vadd.f32 0.0, %v698
    %700 = vmatprep.mubr.f32.mxu0 0.0
    %701 = vmatmul.mubr.f32.gmra.mxu0 %v28
    %v702 = vpop.f32.mrf.mxu0
    %v703 = vadd.f32 0.0, %v702
    %v704 = vpop.f32.mrf.mxu0
    %v705 = vadd.f32 0.0, %v704
    %706 = vmatprep.mubr.f32.mxu0 0.0
    %707 = vmatmul.mubr.f32.gmra.mxu0 %v29
    %v708 = vpop.f32.mrf.mxu0
    %v709 = vadd.f32 0.0, %v708
    %v710 = vpop.f32.mrf.mxu0
    %v711 = vadd.f32 0.0, %v710
    %712 = vmatprep.mubr.f32.mxu0 0.0
    %713 = vmatmul.mubr.f32.gmra.mxu0 %v30
    %v714 = vpop.f32.mrf.mxu0
    %v715 = vadd.f32 0.0, %v714
    %v716 = vpop.f32.mrf.mxu0
    %v717 = vadd.f32 0.0, %v716
    %718 = vmatprep.mubr.f32.mxu0 0.0
    %719 = vmatmul.mubr.f32.gmra.mxu0 %v31
    %v720 = vpop.f32.mrf.mxu0
    %v721 = vadd.f32 0.0, %v720
    %v722 = vpop.f32.mrf.mxu0
    %v723 = vadd.f32 0.0, %v722
    %724 = vmatprep.mubr.f32.mxu0 0.0
    %725 = vmatmul.mubr.f32.gmra.mxu0 %v32
    %v726 = vpop.f32.mrf.mxu0
    %v727 = vadd.f32 0.0, %v726
    %v728 = vpop.f32.mrf.mxu0
    %v729 = vadd.f32 0.0, %v728
    %730 = vmatprep.mubr.f32.mxu0 0.0
    %731 = vmatmul.mubr.f32.gmra.mxu0 %v33
    %v732 = vpop.f32.mrf.mxu0
    %v733 = vadd.f32 0.0, %v732
    %v734 = vpop.f32.mrf.mxu0
    %v735 = vadd.f32 0.0, %v734
    %736 = vmatprep.mubr.f32.mxu0 0.0
    %737 = vmatmul.mubr.f32.gmra.mxu0 %v34
    %v738 = vpop.f32.mrf.mxu0
    %v739 = vadd.f32 0.0, %v738
    %v740 = vpop.f32.mrf.mxu0
    %v741 = vadd.f32 0.0, %v740
    %742 = vmatprep.mubr.f32.mxu0 0.0
    %743 = vmatmul.mubr.f32.gmra.mxu0 %v35
    %v744 = vpop.f32.mrf.mxu0
    %v745 = vadd.f32 0.0, %v744
    %v746 = vpop.f32.mrf.mxu0
    %v747 = vadd.f32 0.0, %v746
    %748 = vmatprep.mubr.f32.mxu0 0.0
    %749 = vmatmul.mubr.f32.gmra.mxu0 %v36
    %v750 = vpop.f32.mrf.mxu0
    %v751 = vadd.f32 0.0, %v750
    %v752 = vpop.f32.mrf.mxu0
    %v753 = vadd.f32 0.0, %v752
    %754 = vmatprep.mubr.f32.mxu0 0.0
    %755 = vmatmul.mubr.f32.gmra.mxu0 %v37
    %v756 = vpop.f32.mrf.mxu0
    %v757 = vadd.f32 0.0, %v756
    %v758 = vpop.f32.mrf.mxu0
    %v759 = vadd.f32 0.0, %v758
    %760 = vmatprep.mubr.f32.mxu0 0.0
    %761 = vmatmul.mubr.f32.gmra.mxu0 %v38
    %v762 = vpop.f32.mrf.mxu0
    %v763 = vadd.f32 0.0, %v762
    %v764 = vpop.f32.mrf.mxu0
    %v765 = vadd.f32 0.0, %v764
    %766 = vmatprep.mubr.f32.mxu0 0.0
    %767 = vmatmul.mubr.f32.gmra.mxu0 %v39
    %v768 = vpop.f32.mrf.mxu0
    %v769 = vadd.f32 0.0, %v768
    %v770 = vpop.f32.mrf.mxu0
    %v771 = vadd.f32 0.0, %v770
    %772 = vmatprep.mubr.f32.mxu0 0.0
    %773 = vmatmul.mubr.f32.gmra.mxu0 %v40
    %v774 = vpop.f32.mrf.mxu0
    %v775 = vadd.f32 0.0, %v774
    %v776 = vpop.f32.mrf.mxu0
    %v777 = vadd.f32 0.0, %v776
    %778 = vmatprep.mubr.f32.mxu0 0.0
    %779 = vmatmul.mubr.f32.gmra.mxu0 %v41
    %v780 = vpop.f32.mrf.mxu0
    %v781 = vadd.f32 0.0, %v780
    %v782 = vpop.f32.mrf.mxu0
    %v783 = vadd.f32 0.0, %v782
    %784 = vmatprep.mubr.f32.mxu0 0.0
    %785 = vmatmul.mubr.f32.gmra.mxu0 %v42
    %v786 = vpop.f32.mrf.mxu0
    %v787 = vadd.f32 0.0, %v786
    %v788 = vpop.f32.mrf.mxu0
    %v789 = vadd.f32 0.0, %v788
    %790 = vmatprep.mubr.f32.mxu0 0.0
    %791 = vmatmul.mubr.f32.gmra.mxu0 %v43
    %v792 = vpop.f32.mrf.mxu0
    %v793 = vadd.f32 0.0, %v792
    %v794 = vpop.f32.mrf.mxu0
    %v795 = vadd.f32 0.0, %v794
    %796 = vmatprep.mubr.f32.mxu0 0.0
    %797 = vmatmul.mubr.f32.gmra.mxu0 %v44
    %v798 = vpop.f32.mrf.mxu0
    %v799 = vadd.f32 0.0, %v798
    %v800 = vpop.f32.mrf.mxu0
    %v801 = vadd.f32 0.0, %v800
    %802 = vmatprep.mubr.f32.mxu0 0.0
    %803 = vmatmul.mubr.f32.gmra.mxu0 %v45
    %v804 = vpop.f32.mrf.mxu0
    %v805 = vadd.f32 0.0, %v804
    %v806 = vpop.f32.mrf.mxu0
    %v807 = vadd.f32 0.0, %v806
    %808 = vmatprep.mubr.f32.mxu0 0.0
    %809 = vmatmul.mubr.f32.gmra.mxu0 %v46
    %v810 = vpop.f32.mrf.mxu0
    %v811 = vadd.f32 0.0, %v810
    %v812 = vpop.f32.mrf.mxu0
    %v813 = vadd.f32 0.0, %v812
    %814 = vmatprep.mubr.f32.mxu0 0.0
    %815 = vmatmul.mubr.f32.gmra.mxu0 %v47
    %v816 = vpop.f32.mrf.mxu0
    %v817 = vadd.f32 0.0, %v816
    %v818 = vpop.f32.mrf.mxu0
    %v819 = vadd.f32 0.0, %v818
    %820 = vmatprep.mubr.f32.mxu0 0.0
    %821 = vmatmul.mubr.f32.gmra.mxu0 %v48
    %v822 = vpop.f32.mrf.mxu0
    %v823 = vadd.f32 0.0, %v822
    %v824 = vpop.f32.mrf.mxu0
    %v825 = vadd.f32 0.0, %v824
    %826 = vmatprep.mubr.f32.mxu0 0.0
    %827 = vmatmul.mubr.f32.gmra.mxu0 %v49
    %v828 = vpop.f32.mrf.mxu0
    %v829 = vadd.f32 0.0, %v828
    %v830 = vpop.f32.mrf.mxu0
    %v831 = vadd.f32 0.0, %v830
    %832 = vmatprep.mubr.f32.mxu0 0.0
    %833 = vmatmul.mubr.f32.gmra.mxu0 %v50
    %v834 = vpop.f32.mrf.mxu0
    %v835 = vadd.f32 0.0, %v834
    %v836 = vpop.f32.mrf.mxu0
    %v837 = vadd.f32 0.0, %v836
    %838 = vmatprep.mubr.f32.mxu0 0.0
    %839 = vmatmul.mubr.f32.gmra.mxu0 %v51
    %v840 = vpop.f32.mrf.mxu0
    %v841 = vadd.f32 0.0, %v840
    %v842 = vpop.f32.mrf.mxu0
    %v843 = vadd.f32 0.0, %v842
    %844 = vmatprep.mubr.f32.mxu0 0.0
    %845 = vmatmul.mubr.f32.gmra.mxu0 %v52
    %v846 = vpop.f32.mrf.mxu0
    %v847 = vadd.f32 0.0, %v846
    %v848 = vpop.f32.mrf.mxu0
    %v849 = vadd.f32 0.0, %v848
    %850 = vmatprep.mubr.f32.mxu0 0.0
    %851 = vmatmul.mubr.f32.gmra.mxu0 %v53
    %v852 = vpop.f32.mrf.mxu0
    %v853 = vadd.f32 0.0, %v852
    %v854 = vpop.f32.mrf.mxu0
    %v855 = vadd.f32 0.0, %v854
    %856 = vmatprep.mubr.f32.mxu0 0.0
    %857 = vmatmul.mubr.f32.gmra.mxu0 %v54
    %v858 = vpop.f32.mrf.mxu0
    %v859 = vadd.f32 0.0, %v858
    %v860 = vpop.f32.mrf.mxu0
    %v861 = vadd.f32 0.0, %v860
    %862 = vmatprep.mubr.f32.mxu0 0.0
    %863 = vmatmul.mubr.f32.gmra.mxu0 %v55
    %v864 = vpop.f32.mrf.mxu0
    %v865 = vadd.f32 0.0, %v864
    %v866 = vpop.f32.mrf.mxu0
    %v867 = vadd.f32 0.0, %v866
    %868 = vmatprep.mubr.f32.mxu0 0.0
    %869 = vmatmul.mubr.f32.gmra.mxu0 %v56
    %v870 = vpop.f32.mrf.mxu0
    %v871 = vadd.f32 0.0, %v870
    %v872 = vpop.f32.mrf.mxu0
    %v873 = vadd.f32 0.0, %v872
    %874 = vmatprep.mubr.f32.mxu0 0.0
    %875 = vmatmul.mubr.f32.gmra.mxu0 %v57
    %v876 = vpop.f32.mrf.mxu0
    %v877 = vadd.f32 0.0, %v876
    %v878 = vpop.f32.mrf.mxu0
    %v879 = vadd.f32 0.0, %v878
    %880 = vmatprep.mubr.f32.mxu0 0.0
    %881 = vmatmul.mubr.f32.gmra.mxu0 %v58
    %v882 = vpop.f32.mrf.mxu0
    %v883 = vadd.f32 0.0, %v882
    %v884 = vpop.f32.mrf.mxu0
    %v885 = vadd.f32 0.0, %v884
    %886 = vmatprep.mubr.f32.mxu0 0.0
    %887 = vmatmul.mubr.f32.gmra.mxu0 %v59
    %v888 = vpop.f32.mrf.mxu0
    %v889 = vadd.f32 0.0, %v888
    %v890 = vpop.f32.mrf.mxu0
    %v891 = vadd.f32 0.0, %v890
    %892 = vmatprep.mubr.f32.mxu0 0.0
    %893 = vmatmul.mubr.f32.gmra.mxu0 %v60
    %v894 = vpop.f32.mrf.mxu0
    %v895 = vadd.f32 0.0, %v894
    %v896 = vpop.f32.mrf.mxu0
    %v897 = vadd.f32 0.0, %v896
    %898 = vmatprep.mubr.f32.mxu0 0.0
    %899 = vmatmul.mubr.f32.gmra.mxu0 %v61
    %v900 = vpop.f32.mrf.mxu0
    %v901 = vadd.f32 0.0, %v900
    %v902 = vpop.f32.mrf.mxu0
    %v903 = vadd.f32 0.0, %v902
    %904 = vmatprep.mubr.f32.mxu0 0.0
    %905 = vmatmul.mubr.f32.gmra.mxu0 %v62
    %v906 = vpop.f32.mrf.mxu0
    %v907 = vadd.f32 0.0, %v906
    %v908 = vpop.f32.mrf.mxu0
    %v909 = vadd.f32 0.0, %v908
    %910 = vmatprep.mubr.f32.mxu0 0.0
    %911 = vmatmul.mubr.f32.gmra.mxu0 %v63
    %v912 = vpop.f32.mrf.mxu0
    %v913 = vadd.f32 0.0, %v912
    %v914 = vpop.f32.mrf.mxu0
    %v915 = vadd.f32 0.0, %v914
    %916 = vmatprep.mubr.f32.mxu0 0.0
    %917 = vmatmul.mubr.f32.gmra.mxu0 %v64
    %v918 = vpop.f32.mrf.mxu0
    %v919 = vadd.f32 0.0, %v918
    %v920 = vpop.f32.mrf.mxu0
    %v921 = vadd.f32 0.0, %v920
    %922 = vmatprep.mubr.f32.mxu0 0.0
    %923 = vmatmul.mubr.f32.gmra.mxu0 %v65
    %v924 = vpop.f32.mrf.mxu0
    %v925 = vadd.f32 0.0, %v924
    %v926 = vpop.f32.mrf.mxu0
    %v927 = vadd.f32 0.0, %v926
    %928 = vmatprep.mubr.f32.mxu0 0.0
    %929 = vmatmul.mubr.f32.gmra.mxu0 %v66
    %v930 = vpop.f32.mrf.mxu0
    %v931 = vadd.f32 0.0, %v930
    %v932 = vpop.f32.mrf.mxu0
    %v933 = vadd.f32 0.0, %v932
    %934 = vmatprep.mubr.f32.mxu0 0.0
    %935 = vmatmul.mubr.f32.gmra.mxu0 %v67
    %v936 = vpop.f32.mrf.mxu0
    %v937 = vadd.f32 0.0, %v936
    %v938 = vpop.f32.mrf.mxu0
    %v939 = vadd.f32 0.0, %v938
    %940 = vmatprep.mubr.f32.mxu0 0.0
    %941 = vmatmul.mubr.f32.gmra.mxu0 %v68
    %v942 = vpop.f32.mrf.mxu0
    %v943 = vadd.f32 0.0, %v942
    %v944 = vpop.f32.mrf.mxu0
    %v945 = vadd.f32 0.0, %v944
    %946 = vmatprep.mubr.f32.mxu0 0.0
    %947 = vmatmul.mubr.f32.gmra.mxu0 %v69
    %v948 = vpop.f32.mrf.mxu0
    %v949 = vadd.f32 0.0, %v948
    %v950 = vpop.f32.mrf.mxu0
    %v951 = vadd.f32 0.0, %v950
    %952 = vmatprep.mubr.f32.mxu0 0.0
    %953 = vmatmul.mubr.f32.gmra.mxu0 %v70
    %v954 = vpop.f32.mrf.mxu0
    %v955 = vadd.f32 0.0, %v954
    %v956 = vpop.f32.mrf.mxu0
    %v957 = vadd.f32 0.0, %v956
    %958 = vmatprep.mubr.f32.mxu0 0.0
    %959 = vmatmul.mubr.f32.gmra.mxu0 %v71
    %v960 = vpop.f32.mrf.mxu0
    %v961 = vadd.f32 0.0, %v960
    %v962 = vpop.f32.mrf.mxu0
    %v963 = vadd.f32 0.0, %v962
    %964 = vmatprep.mubr.f32.mxu0 0.0
    %965 = vmatmul.mubr.f32.gmra.mxu0 %v72
    %v966 = vpop.f32.mrf.mxu0
    %v967 = vadd.f32 0.0, %v966
    %v968 = vpop.f32.mrf.mxu0
    %v969 = vadd.f32 0.0, %v968
    %970 = vdwg.mxu0
    %v971 = vlaneseq
    %v972 = vshrl.u32 %v971, 7
    %v973 = vadd.s32 %v972, 8
    %v974 = vadd.s32 %v972, 16
    %v975 = vadd.s32 %v972, 24
    %v976 = vadd.s32 %v972, 32
    %v977 = vadd.s32 %v972, 40
    %v978 = vadd.s32 %v972, 48
    %v979 = vadd.s32 %v972, 56
    %v980 = vadd.s32 %v972, 64
    %v981 = vadd.s32 %v972, 72
    %v982 = vadd.s32 %v972, 80
    %v983 = vadd.s32 %v972, 88
    %v984 = vadd.s32 %v972, 96
    %v985 = vadd.s32 %v972, 104
    %v986 = vadd.s32 %v972, 112
    %v987 = vadd.s32 %v972, 120
    %v988 = vadd.s32 %v972, 128
    %v989 = vadd.s32 %v972, 136
    %v990 = vadd.s32 %v972, 144
    %v991 = vadd.s32 %v972, 152
    %v992 = vadd.s32 %v972, 160
    %v993 = vadd.s32 %v972, 168
    %v994 = vadd.s32 %v972, 176
    %v995 = vadd.s32 %v972, 184
    %v996 = vadd.s32 %v972, 192
    %v997 = vadd.s32 %v972, 200
    %v998 = vadd.s32 %v972, 208
    %v999 = vadd.s32 %v972, 216
    %v1000 = vadd.s32 %v972, 224
    %v1001 = vadd.s32 %v972, 232
    %v1002 = vadd.s32 %v972, 240
    %v1003 = vadd.s32 %v972, 248
    %v1004 = vadd.s32 %v972, 256
    %v1005 = vadd.s32 %v972, 264
    %v1006 = vadd.s32 %v972, 272
    %v1007 = vadd.s32 %v972, 280
    %v1008 = vadd.s32 %v972, 288
    %v1009 = vadd.s32 %v972, 296
    %v1010 = vadd.s32 %v972, 304
    %v1011 = vadd.s32 %v972, 312
    %v1012 = vadd.s32 %v972, 320
    %v1013 = vadd.s32 %v972, 328
    %v1014 = vadd.s32 %v972, 336
    %v1015 = vadd.s32 %v972, 344
    %v1016 = vadd.s32 %v972, 352
    %v1017 = vadd.s32 %v972, 360
    %v1018 = vadd.s32 %v972, 368
    %v1019 = vadd.s32 %v972, 376
    %v1020 = vadd.s32 %v972, 384
    %v1021 = vadd.s32 %v972, 392
    %v1022 = vadd.s32 %v972, 400
    %v1023 = vadd.s32 %v972, 408
    %v1024 = vadd.s32 %v972, 416
    %v1025 = vadd.s32 %v972, 424
    %v1026 = vadd.s32 %v972, 432
    %v1027 = vadd.s32 %v972, 440
    %v1028 = vadd.s32 %v972, 448
    %v1029 = vadd.s32 %v972, 456
    %v1030 = vadd.s32 %v972, 464
    %v1031 = vadd.s32 %v972, 472
    %v1032 = vadd.s32 %v972, 480
    %v1033 = vadd.s32 %v972, 488
    %v1034 = vadd.s32 %v972, 496
    %v1035 = vadd.s32 %v972, 504
    %v1036 = vlaneseq
    %v1037 = vand.u32 %v1036, 127
    %v1038 = vadd.s32 %v1037, 128
    %v1039 = vadd.s32 %v1037, 256
    %v1040 = vadd.s32 %v1037, 384
    %vm1041 = vcmp.eq.s32.totalorder %v972, %v1037
    %vm1042 = vcmp.eq.s32.totalorder %v972, %v1038
    %vm1043 = vcmp.eq.s32.totalorder %v972, %v1039
    %vm1044 = vcmp.eq.s32.totalorder %v972, %v1040
    %vm1045 = vcmp.eq.s32.totalorder %v973, %v1037
    %vm1046 = vcmp.eq.s32.totalorder %v973, %v1038
    %vm1047 = vcmp.eq.s32.totalorder %v973, %v1039
    %vm1048 = vcmp.eq.s32.totalorder %v973, %v1040
    %vm1049 = vcmp.eq.s32.totalorder %v974, %v1037
    %vm1050 = vcmp.eq.s32.totalorder %v974, %v1038
    %vm1051 = vcmp.eq.s32.totalorder %v974, %v1039
    %vm1052 = vcmp.eq.s32.totalorder %v974, %v1040
    %vm1053 = vcmp.eq.s32.totalorder %v975, %v1037
    %vm1054 = vcmp.eq.s32.totalorder %v975, %v1038
    %vm1055 = vcmp.eq.s32.totalorder %v975, %v1039
    %vm1056 = vcmp.eq.s32.totalorder %v975, %v1040
    %vm1057 = vcmp.eq.s32.totalorder %v976, %v1037
    %vm1058 = vcmp.eq.s32.totalorder %v976, %v1038
    %vm1059 = vcmp.eq.s32.totalorder %v976, %v1039
    %vm1060 = vcmp.eq.s32.totalorder %v976, %v1040
    %vm1061 = vcmp.eq.s32.totalorder %v977, %v1037
    %vm1062 = vcmp.eq.s32.totalorder %v977, %v1038
    %vm1063 = vcmp.eq.s32.totalorder %v977, %v1039
    %vm1064 = vcmp.eq.s32.totalorder %v977, %v1040
    %vm1065 = vcmp.eq.s32.totalorder %v978, %v1037
    %vm1066 = vcmp.eq.s32.totalorder %v978, %v1038
    %vm1067 = vcmp.eq.s32.totalorder %v978, %v1039
    %vm1068 = vcmp.eq.s32.totalorder %v978, %v1040
    %vm1069 = vcmp.eq.s32.totalorder %v979, %v1037
    %vm1070 = vcmp.eq.s32.totalorder %v979, %v1038
    %vm1071 = vcmp.eq.s32.totalorder %v979, %v1039
    %vm1072 = vcmp.eq.s32.totalorder %v979, %v1040
    %vm1073 = vcmp.eq.s32.totalorder %v980, %v1037
    %vm1074 = vcmp.eq.s32.totalorder %v980, %v1038
    %vm1075 = vcmp.eq.s32.totalorder %v980, %v1039
    %vm1076 = vcmp.eq.s32.totalorder %v980, %v1040
    %vm1077 = vcmp.eq.s32.totalorder %v981, %v1037
    %vm1078 = vcmp.eq.s32.totalorder %v981, %v1038
    %vm1079 = vcmp.eq.s32.totalorder %v981, %v1039
    %vm1080 = vcmp.eq.s32.totalorder %v981, %v1040
    %vm1081 = vcmp.eq.s32.totalorder %v982, %v1037
    %vm1082 = vcmp.eq.s32.totalorder %v982, %v1038
    %vm1083 = vcmp.eq.s32.totalorder %v982, %v1039
    %vm1084 = vcmp.eq.s32.totalorder %v982, %v1040
    %vm1085 = vcmp.eq.s32.totalorder %v983, %v1037
    %vm1086 = vcmp.eq.s32.totalorder %v983, %v1038
    %vm1087 = vcmp.eq.s32.totalorder %v983, %v1039
    %vm1088 = vcmp.eq.s32.totalorder %v983, %v1040
    %vm1089 = vcmp.eq.s32.totalorder %v984, %v1037
    %vm1090 = vcmp.eq.s32.totalorder %v984, %v1038
    %vm1091 = vcmp.eq.s32.totalorder %v984, %v1039
    %vm1092 = vcmp.eq.s32.totalorder %v984, %v1040
    %vm1093 = vcmp.eq.s32.totalorder %v985, %v1037
    %vm1094 = vcmp.eq.s32.totalorder %v985, %v1038
    %vm1095 = vcmp.eq.s32.totalorder %v985, %v1039
    %vm1096 = vcmp.eq.s32.totalorder %v985, %v1040
    %vm1097 = vcmp.eq.s32.totalorder %v986, %v1037
    %vm1098 = vcmp.eq.s32.totalorder %v986, %v1038
    %vm1099 = vcmp.eq.s32.totalorder %v986, %v1039
    %vm1100 = vcmp.eq.s32.totalorder %v986, %v1040
    %vm1101 = vcmp.eq.s32.totalorder %v987, %v1037
    %vm1102 = vcmp.eq.s32.totalorder %v987, %v1038
    %vm1103 = vcmp.eq.s32.totalorder %v987, %v1039
    %vm1104 = vcmp.eq.s32.totalorder %v987, %v1040
    %vm1105 = vcmp.eq.s32.totalorder %v988, %v1037
    %vm1106 = vcmp.eq.s32.totalorder %v988, %v1038
    %vm1107 = vcmp.eq.s32.totalorder %v988, %v1039
    %vm1108 = vcmp.eq.s32.totalorder %v988, %v1040
    %vm1109 = vcmp.eq.s32.totalorder %v989, %v1037
    %vm1110 = vcmp.eq.s32.totalorder %v989, %v1038
    %vm1111 = vcmp.eq.s32.totalorder %v989, %v1039
    %vm1112 = vcmp.eq.s32.totalorder %v989, %v1040
    %vm1113 = vcmp.eq.s32.totalorder %v990, %v1037
    %vm1114 = vcmp.eq.s32.totalorder %v990, %v1038
    %vm1115 = vcmp.eq.s32.totalorder %v990, %v1039
    %vm1116 = vcmp.eq.s32.totalorder %v990, %v1040
    %vm1117 = vcmp.eq.s32.totalorder %v991, %v1037
    %vm1118 = vcmp.eq.s32.totalorder %v991, %v1038
    %vm1119 = vcmp.eq.s32.totalorder %v991, %v1039
    %vm1120 = vcmp.eq.s32.totalorder %v991, %v1040
    %vm1121 = vcmp.eq.s32.totalorder %v992, %v1037
    %vm1122 = vcmp.eq.s32.totalorder %v992, %v1038
    %vm1123 = vcmp.eq.s32.totalorder %v992, %v1039
    %vm1124 = vcmp.eq.s32.totalorder %v992, %v1040
    %vm1125 = vcmp.eq.s32.totalorder %v993, %v1037
    %vm1126 = vcmp.eq.s32.totalorder %v993, %v1038
    %vm1127 = vcmp.eq.s32.totalorder %v993, %v1039
    %vm1128 = vcmp.eq.s32.totalorder %v993, %v1040
    %vm1129 = vcmp.eq.s32.totalorder %v994, %v1037
    %vm1130 = vcmp.eq.s32.totalorder %v994, %v1038
    %vm1131 = vcmp.eq.s32.totalorder %v994, %v1039
    %vm1132 = vcmp.eq.s32.totalorder %v994, %v1040
    %vm1133 = vcmp.eq.s32.totalorder %v995, %v1037
    %vm1134 = vcmp.eq.s32.totalorder %v995, %v1038
    %vm1135 = vcmp.eq.s32.totalorder %v995, %v1039
    %vm1136 = vcmp.eq.s32.totalorder %v995, %v1040
    %vm1137 = vcmp.eq.s32.totalorder %v996, %v1037
    %vm1138 = vcmp.eq.s32.totalorder %v996, %v1038
    %vm1139 = vcmp.eq.s32.totalorder %v996, %v1039
    %vm1140 = vcmp.eq.s32.totalorder %v996, %v1040
    %vm1141 = vcmp.eq.s32.totalorder %v997, %v1037
    %vm1142 = vcmp.eq.s32.totalorder %v997, %v1038
    %vm1143 = vcmp.eq.s32.totalorder %v997, %v1039
    %vm1144 = vcmp.eq.s32.totalorder %v997, %v1040
    %vm1145 = vcmp.eq.s32.totalorder %v998, %v1037
    %vm1146 = vcmp.eq.s32.totalorder %v998, %v1038
    %vm1147 = vcmp.eq.s32.totalorder %v998, %v1039
    %vm1148 = vcmp.eq.s32.totalorder %v998, %v1040
    %vm1149 = vcmp.eq.s32.totalorder %v999, %v1037
    %vm1150 = vcmp.eq.s32.totalorder %v999, %v1038
    %vm1151 = vcmp.eq.s32.totalorder %v999, %v1039
    %vm1152 = vcmp.eq.s32.totalorder %v999, %v1040
    %vm1153 = vcmp.eq.s32.totalorder %v1000, %v1037
    %vm1154 = vcmp.eq.s32.totalorder %v1000, %v1038
    %vm1155 = vcmp.eq.s32.totalorder %v1000, %v1039
    %vm1156 = vcmp.eq.s32.totalorder %v1000, %v1040
    %vm1157 = vcmp.eq.s32.totalorder %v1001, %v1037
    %vm1158 = vcmp.eq.s32.totalorder %v1001, %v1038
    %vm1159 = vcmp.eq.s32.totalorder %v1001, %v1039
    %vm1160 = vcmp.eq.s32.totalorder %v1001, %v1040
    %vm1161 = vcmp.eq.s32.totalorder %v1002, %v1037
    %vm1162 = vcmp.eq.s32.totalorder %v1002, %v1038
    %vm1163 = vcmp.eq.s32.totalorder %v1002, %v1039
    %vm1164 = vcmp.eq.s32.totalorder %v1002, %v1040
    %vm1165 = vcmp.eq.s32.totalorder %v1003, %v1037
    %vm1166 = vcmp.eq.s32.totalorder %v1003, %v1038
    %vm1167 = vcmp.eq.s32.totalorder %v1003, %v1039
    %vm1168 = vcmp.eq.s32.totalorder %v1003, %v1040
    %vm1169 = vcmp.eq.s32.totalorder %v1004, %v1037
    %vm1170 = vcmp.eq.s32.totalorder %v1004, %v1038
    %vm1171 = vcmp.eq.s32.totalorder %v1004, %v1039
    %vm1172 = vcmp.eq.s32.totalorder %v1004, %v1040
    %vm1173 = vcmp.eq.s32.totalorder %v1005, %v1037
    %vm1174 = vcmp.eq.s32.totalorder %v1005, %v1038
    %vm1175 = vcmp.eq.s32.totalorder %v1005, %v1039
    %vm1176 = vcmp.eq.s32.totalorder %v1005, %v1040
    %vm1177 = vcmp.eq.s32.totalorder %v1006, %v1037
    %vm1178 = vcmp.eq.s32.totalorder %v1006, %v1038
    %vm1179 = vcmp.eq.s32.totalorder %v1006, %v1039
    %vm1180 = vcmp.eq.s32.totalorder %v1006, %v1040
    %vm1181 = vcmp.eq.s32.totalorder %v1007, %v1037
    %vm1182 = vcmp.eq.s32.totalorder %v1007, %v1038
    %vm1183 = vcmp.eq.s32.totalorder %v1007, %v1039
    %vm1184 = vcmp.eq.s32.totalorder %v1007, %v1040
    %vm1185 = vcmp.eq.s32.totalorder %v1008, %v1037
    %vm1186 = vcmp.eq.s32.totalorder %v1008, %v1038
    %vm1187 = vcmp.eq.s32.totalorder %v1008, %v1039
    %vm1188 = vcmp.eq.s32.totalorder %v1008, %v1040
    %vm1189 = vcmp.eq.s32.totalorder %v1009, %v1037
    %vm1190 = vcmp.eq.s32.totalorder %v1009, %v1038
    %vm1191 = vcmp.eq.s32.totalorder %v1009, %v1039
    %vm1192 = vcmp.eq.s32.totalorder %v1009, %v1040
    %vm1193 = vcmp.eq.s32.totalorder %v1010, %v1037
    %vm1194 = vcmp.eq.s32.totalorder %v1010, %v1038
    %vm1195 = vcmp.eq.s32.totalorder %v1010, %v1039
    %vm1196 = vcmp.eq.s32.totalorder %v1010, %v1040
    %vm1197 = vcmp.eq.s32.totalorder %v1011, %v1037
    %vm1198 = vcmp.eq.s32.totalorder %v1011, %v1038
    %vm1199 = vcmp.eq.s32.totalorder %v1011, %v1039
    %vm1200 = vcmp.eq.s32.totalorder %v1011, %v1040
    %vm1201 = vcmp.eq.s32.totalorder %v1012, %v1037
    %vm1202 = vcmp.eq.s32.totalorder %v1012, %v1038
    %vm1203 = vcmp.eq.s32.totalorder %v1012, %v1039
    %vm1204 = vcmp.eq.s32.totalorder %v1012, %v1040
    %vm1205 = vcmp.eq.s32.totalorder %v1013, %v1037
    %vm1206 = vcmp.eq.s32.totalorder %v1013, %v1038
    %vm1207 = vcmp.eq.s32.totalorder %v1013, %v1039
    %vm1208 = vcmp.eq.s32.totalorder %v1013, %v1040
    %vm1209 = vcmp.eq.s32.totalorder %v1014, %v1037
    %vm1210 = vcmp.eq.s32.totalorder %v1014, %v1038
    %vm1211 = vcmp.eq.s32.totalorder %v1014, %v1039
    %vm1212 = vcmp.eq.s32.totalorder %v1014, %v1040
    %vm1213 = vcmp.eq.s32.totalorder %v1015, %v1037
    %vm1214 = vcmp.eq.s32.totalorder %v1015, %v1038
    %vm1215 = vcmp.eq.s32.totalorder %v1015, %v1039
    %vm1216 = vcmp.eq.s32.totalorder %v1015, %v1040
    %vm1217 = vcmp.eq.s32.totalorder %v1016, %v1037
    %vm1218 = vcmp.eq.s32.totalorder %v1016, %v1038
    %vm1219 = vcmp.eq.s32.totalorder %v1016, %v1039
    %vm1220 = vcmp.eq.s32.totalorder %v1016, %v1040
    %vm1221 = vcmp.eq.s32.totalorder %v1017, %v1037
    %vm1222 = vcmp.eq.s32.totalorder %v1017, %v1038
    %vm1223 = vcmp.eq.s32.totalorder %v1017, %v1039
    %vm1224 = vcmp.eq.s32.totalorder %v1017, %v1040
    %vm1225 = vcmp.eq.s32.totalorder %v1018, %v1037
    %vm1226 = vcmp.eq.s32.totalorder %v1018, %v1038
    %vm1227 = vcmp.eq.s32.totalorder %v1018, %v1039
    %vm1228 = vcmp.eq.s32.totalorder %v1018, %v1040
    %vm1229 = vcmp.eq.s32.totalorder %v1019, %v1037
    %vm1230 = vcmp.eq.s32.totalorder %v1019, %v1038
    %vm1231 = vcmp.eq.s32.totalorder %v1019, %v1039
    %vm1232 = vcmp.eq.s32.totalorder %v1019, %v1040
    %vm1233 = vcmp.eq.s32.totalorder %v1020, %v1037
    %vm1234 = vcmp.eq.s32.totalorder %v1020, %v1038
    %vm1235 = vcmp.eq.s32.totalorder %v1020, %v1039
    %vm1236 = vcmp.eq.s32.totalorder %v1020, %v1040
    %vm1237 = vcmp.eq.s32.totalorder %v1021, %v1037
    %vm1238 = vcmp.eq.s32.totalorder %v1021, %v1038
    %vm1239 = vcmp.eq.s32.totalorder %v1021, %v1039
    %vm1240 = vcmp.eq.s32.totalorder %v1021, %v1040
    %vm1241 = vcmp.eq.s32.totalorder %v1022, %v1037
    %vm1242 = vcmp.eq.s32.totalorder %v1022, %v1038
    %vm1243 = vcmp.eq.s32.totalorder %v1022, %v1039
    %vm1244 = vcmp.eq.s32.totalorder %v1022, %v1040
    %vm1245 = vcmp.eq.s32.totalorder %v1023, %v1037
    %vm1246 = vcmp.eq.s32.totalorder %v1023, %v1038
    %vm1247 = vcmp.eq.s32.totalorder %v1023, %v1039
    %vm1248 = vcmp.eq.s32.totalorder %v1023, %v1040
    %vm1249 = vcmp.eq.s32.totalorder %v1024, %v1037
    %vm1250 = vcmp.eq.s32.totalorder %v1024, %v1038
    %vm1251 = vcmp.eq.s32.totalorder %v1024, %v1039
    %vm1252 = vcmp.eq.s32.totalorder %v1024, %v1040
    %vm1253 = vcmp.eq.s32.totalorder %v1025, %v1037
    %vm1254 = vcmp.eq.s32.totalorder %v1025, %v1038
    %vm1255 = vcmp.eq.s32.totalorder %v1025, %v1039
    %vm1256 = vcmp.eq.s32.totalorder %v1025, %v1040
    %vm1257 = vcmp.eq.s32.totalorder %v1026, %v1037
    %vm1258 = vcmp.eq.s32.totalorder %v1026, %v1038
    %vm1259 = vcmp.eq.s32.totalorder %v1026, %v1039
    %vm1260 = vcmp.eq.s32.totalorder %v1026, %v1040
    %vm1261 = vcmp.eq.s32.totalorder %v1027, %v1037
    %vm1262 = vcmp.eq.s32.totalorder %v1027, %v1038
    %vm1263 = vcmp.eq.s32.totalorder %v1027, %v1039
    %vm1264 = vcmp.eq.s32.totalorder %v1027, %v1040
    %vm1265 = vcmp.eq.s32.totalorder %v1028, %v1037
    %vm1266 = vcmp.eq.s32.totalorder %v1028, %v1038
    %vm1267 = vcmp.eq.s32.totalorder %v1028, %v1039
    %vm1268 = vcmp.eq.s32.totalorder %v1028, %v1040
    %vm1269 = vcmp.eq.s32.totalorder %v1029, %v1037
    %vm1270 = vcmp.eq.s32.totalorder %v1029, %v1038
    %vm1271 = vcmp.eq.s32.totalorder %v1029, %v1039
    %vm1272 = vcmp.eq.s32.totalorder %v1029, %v1040
    %vm1273 = vcmp.eq.s32.totalorder %v1030, %v1037
    %vm1274 = vcmp.eq.s32.totalorder %v1030, %v1038
    %vm1275 = vcmp.eq.s32.totalorder %v1030, %v1039
    %vm1276 = vcmp.eq.s32.totalorder %v1030, %v1040
    %vm1277 = vcmp.eq.s32.totalorder %v1031, %v1037
    %vm1278 = vcmp.eq.s32.totalorder %v1031, %v1038
    %vm1279 = vcmp.eq.s32.totalorder %v1031, %v1039
    %vm1280 = vcmp.eq.s32.totalorder %v1031, %v1040
    %vm1281 = vcmp.eq.s32.totalorder %v1032, %v1037
    %vm1282 = vcmp.eq.s32.totalorder %v1032, %v1038
    %vm1283 = vcmp.eq.s32.totalorder %v1032, %v1039
    %vm1284 = vcmp.eq.s32.totalorder %v1032, %v1040
    %vm1285 = vcmp.eq.s32.totalorder %v1033, %v1037
    %vm1286 = vcmp.eq.s32.totalorder %v1033, %v1038
    %vm1287 = vcmp.eq.s32.totalorder %v1033, %v1039
    %vm1288 = vcmp.eq.s32.totalorder %v1033, %v1040
    %vm1289 = vcmp.eq.s32.totalorder %v1034, %v1037
    %vm1290 = vcmp.eq.s32.totalorder %v1034, %v1038
    %vm1291 = vcmp.eq.s32.totalorder %v1034, %v1039
    %vm1292 = vcmp.eq.s32.totalorder %v1034, %v1040
    %vm1293 = vcmp.eq.s32.totalorder %v1035, %v1037
    %vm1294 = vcmp.eq.s32.totalorder %v1035, %v1038
    %vm1295 = vcmp.eq.s32.totalorder %v1035, %v1039
    %vm1296 = vcmp.eq.s32.totalorder %v1035, %v1040
    %v1297 = vsub.f32 %v140, 1.0
    %v1298 = vsub.f32 %v142, 1.0
    %v1299 = vsub.f32 %v589, 1.0
    %v1300 = vsub.f32 %v591, 1.0
    %v1301 = vsub.f32 %v146, 1.0
    %v1302 = vsub.f32 %v148, 1.0
    %v1303 = vsub.f32 %v595, 1.0
    %v1304 = vsub.f32 %v597, 1.0
    %v1305 = vsub.f32 %v152, 1.0
    %v1306 = vsub.f32 %v154, 1.0
    %v1307 = vsub.f32 %v601, 1.0
    %v1308 = vsub.f32 %v603, 1.0
    %v1309 = vsub.f32 %v158, 1.0
    %v1310 = vsub.f32 %v160, 1.0
    %v1311 = vsub.f32 %v607, 1.0
    %v1312 = vsub.f32 %v609, 1.0
    %v1313 = vsub.f32 %v164, 1.0
    %v1314 = vsub.f32 %v166, 1.0
    %v1315 = vsub.f32 %v613, 1.0
    %v1316 = vsub.f32 %v615, 1.0
    %v1317 = vsub.f32 %v170, 1.0
    %v1318 = vsub.f32 %v172, 1.0
    %v1319 = vsub.f32 %v619, 1.0
    %v1320 = vsub.f32 %v621, 1.0
    %v1321 = vsub.f32 %v176, 1.0
    %v1322 = vsub.f32 %v178, 1.0
    %v1323 = vsub.f32 %v625, 1.0
    %v1324 = vsub.f32 %v627, 1.0
    %v1325 = vsub.f32 %v182, 1.0
    %v1326 = vsub.f32 %v184, 1.0
    %v1327 = vsub.f32 %v631, 1.0
    %v1328 = vsub.f32 %v633, 1.0
    %v1329 = vsub.f32 %v188, 1.0
    %v1330 = vsub.f32 %v190, 1.0
    %v1331 = vsub.f32 %v637, 1.0
    %v1332 = vsub.f32 %v639, 1.0
    %v1333 = vsub.f32 %v194, 1.0
    %v1334 = vsub.f32 %v196, 1.0
    %v1335 = vsub.f32 %v643, 1.0
    %v1336 = vsub.f32 %v645, 1.0
    %v1337 = vsub.f32 %v200, 1.0
    %v1338 = vsub.f32 %v202, 1.0
    %v1339 = vsub.f32 %v649, 1.0
    %v1340 = vsub.f32 %v651, 1.0
    %v1341 = vsub.f32 %v206, 1.0
    %v1342 = vsub.f32 %v208, 1.0
    %v1343 = vsub.f32 %v655, 1.0
    %v1344 = vsub.f32 %v657, 1.0
    %v1345 = vsub.f32 %v212, 1.0
    %v1346 = vsub.f32 %v214, 1.0
    %v1347 = vsub.f32 %v661, 1.0
    %v1348 = vsub.f32 %v663, 1.0
    %v1349 = vsub.f32 %v218, 1.0
    %v1350 = vsub.f32 %v220, 1.0
    %v1351 = vsub.f32 %v667, 1.0
    %v1352 = vsub.f32 %v669, 1.0
    %v1353 = vsub.f32 %v224, 1.0
    %v1354 = vsub.f32 %v226, 1.0
    %v1355 = vsub.f32 %v673, 1.0
    %v1356 = vsub.f32 %v675, 1.0
    %v1357 = vsub.f32 %v230, 1.0
    %v1358 = vsub.f32 %v232, 1.0
    %v1359 = vsub.f32 %v679, 1.0
    %v1360 = vsub.f32 %v681, 1.0
    %v1361 = vsub.f32 %v236, 1.0
    %v1362 = vsub.f32 %v238, 1.0
    %v1363 = vsub.f32 %v685, 1.0
    %v1364 = vsub.f32 %v687, 1.0
    %v1365 = vsub.f32 %v242, 1.0
    %v1366 = vsub.f32 %v244, 1.0
    %v1367 = vsub.f32 %v691, 1.0
    %v1368 = vsub.f32 %v693, 1.0
    %v1369 = vsub.f32 %v248, 1.0
    %v1370 = vsub.f32 %v250, 1.0
    %v1371 = vsub.f32 %v697, 1.0
    %v1372 = vsub.f32 %v699, 1.0
    %v1373 = vsub.f32 %v254, 1.0
    %v1374 = vsub.f32 %v256, 1.0
    %v1375 = vsub.f32 %v703, 1.0
    %v1376 = vsub.f32 %v705, 1.0
    %v1377 = vsub.f32 %v260, 1.0
    %v1378 = vsub.f32 %v262, 1.0
    %v1379 = vsub.f32 %v709, 1.0
    %v1380 = vsub.f32 %v711, 1.0
    %v1381 = vsub.f32 %v266, 1.0
    %v1382 = vsub.f32 %v268, 1.0
    %v1383 = vsub.f32 %v715, 1.0
    %v1384 = vsub.f32 %v717, 1.0
    %v1385 = vsub.f32 %v272, 1.0
    %v1386 = vsub.f32 %v274, 1.0
    %v1387 = vsub.f32 %v721, 1.0
    %v1388 = vsub.f32 %v723, 1.0
    %v1389 = vsub.f32 %v278, 1.0
    %v1390 = vsub.f32 %v280, 1.0
    %v1391 = vsub.f32 %v727, 1.0
    %v1392 = vsub.f32 %v729, 1.0
    %v1393 = vsub.f32 %v284, 1.0
    %v1394 = vsub.f32 %v286, 1.0
    %v1395 = vsub.f32 %v733, 1.0
    %v1396 = vsub.f32 %v735, 1.0
    %v1397 = vsub.f32 %v290, 1.0
    %v1398 = vsub.f32 %v292, 1.0
    %v1399 = vsub.f32 %v739, 1.0
    %v1400 = vsub.f32 %v741, 1.0
    %v1401 = vsub.f32 %v296, 1.0
    %v1402 = vsub.f32 %v298, 1.0
    %v1403 = vsub.f32 %v745, 1.0
    %v1404 = vsub.f32 %v747, 1.0
    %v1405 = vsub.f32 %v302, 1.0
    %v1406 = vsub.f32 %v304, 1.0
    %v1407 = vsub.f32 %v751, 1.0
    %v1408 = vsub.f32 %v753, 1.0
    %v1409 = vsub.f32 %v308, 1.0
    %v1410 = vsub.f32 %v310, 1.0
    %v1411 = vsub.f32 %v757, 1.0
    %v1412 = vsub.f32 %v759, 1.0
    %v1413 = vsub.f32 %v314, 1.0
    %v1414 = vsub.f32 %v316, 1.0
    %v1415 = vsub.f32 %v763, 1.0
    %v1416 = vsub.f32 %v765, 1.0
    %v1417 = vsub.f32 %v320, 1.0
    %v1418 = vsub.f32 %v322, 1.0
    %v1419 = vsub.f32 %v769, 1.0
    %v1420 = vsub.f32 %v771, 1.0
    %v1421 = vsub.f32 %v326, 1.0
    %v1422 = vsub.f32 %v328, 1.0
    %v1423 = vsub.f32 %v775, 1.0
    %v1424 = vsub.f32 %v777, 1.0
    %v1425 = vsub.f32 %v332, 1.0
    %v1426 = vsub.f32 %v334, 1.0
    %v1427 = vsub.f32 %v781, 1.0
    %v1428 = vsub.f32 %v783, 1.0
    %v1429 = vsub.f32 %v338, 1.0
    %v1430 = vsub.f32 %v340, 1.0
    %v1431 = vsub.f32 %v787, 1.0
    %v1432 = vsub.f32 %v789, 1.0
    %v1433 = vsub.f32 %v344, 1.0
    %v1434 = vsub.f32 %v346, 1.0
    %v1435 = vsub.f32 %v793, 1.0
    %v1436 = vsub.f32 %v795, 1.0
    %v1437 = vsub.f32 %v350, 1.0
    %v1438 = vsub.f32 %v352, 1.0
    %v1439 = vsub.f32 %v799, 1.0
    %v1440 = vsub.f32 %v801, 1.0
    %v1441 = vsub.f32 %v356, 1.0
    %v1442 = vsub.f32 %v358, 1.0
    %v1443 = vsub.f32 %v805, 1.0
    %v1444 = vsub.f32 %v807, 1.0
    %v1445 = vsub.f32 %v362, 1.0
    %v1446 = vsub.f32 %v364, 1.0
    %v1447 = vsub.f32 %v811, 1.0
    %v1448 = vsub.f32 %v813, 1.0
    %v1449 = vsub.f32 %v368, 1.0
    %v1450 = vsub.f32 %v370, 1.0
    %v1451 = vsub.f32 %v817, 1.0
    %v1452 = vsub.f32 %v819, 1.0
    %v1453 = vsub.f32 %v374, 1.0
    %v1454 = vsub.f32 %v376, 1.0
    %v1455 = vsub.f32 %v823, 1.0
    %v1456 = vsub.f32 %v825, 1.0
    %v1457 = vsub.f32 %v380, 1.0
    %v1458 = vsub.f32 %v382, 1.0
    %v1459 = vsub.f32 %v829, 1.0
    %v1460 = vsub.f32 %v831, 1.0
    %v1461 = vsub.f32 %v386, 1.0
    %v1462 = vsub.f32 %v388, 1.0
    %v1463 = vsub.f32 %v835, 1.0
    %v1464 = vsub.f32 %v837, 1.0
    %v1465 = vsub.f32 %v392, 1.0
    %v1466 = vsub.f32 %v394, 1.0
    %v1467 = vsub.f32 %v841, 1.0
    %v1468 = vsub.f32 %v843, 1.0
    %v1469 = vsub.f32 %v398, 1.0
    %v1470 = vsub.f32 %v400, 1.0
    %v1471 = vsub.f32 %v847, 1.0
    %v1472 = vsub.f32 %v849, 1.0
    %v1473 = vsub.f32 %v404, 1.0
    %v1474 = vsub.f32 %v406, 1.0
    %v1475 = vsub.f32 %v853, 1.0
    %v1476 = vsub.f32 %v855, 1.0
    %v1477 = vsub.f32 %v410, 1.0
    %v1478 = vsub.f32 %v412, 1.0
    %v1479 = vsub.f32 %v859, 1.0
    %v1480 = vsub.f32 %v861, 1.0
    %v1481 = vsub.f32 %v416, 1.0
    %v1482 = vsub.f32 %v418, 1.0
    %v1483 = vsub.f32 %v865, 1.0
    %v1484 = vsub.f32 %v867, 1.0
    %v1485 = vsub.f32 %v422, 1.0
    %v1486 = vsub.f32 %v424, 1.0
    %v1487 = vsub.f32 %v871, 1.0
    %v1488 = vsub.f32 %v873, 1.0
    %v1489 = vsub.f32 %v428, 1.0
    %v1490 = vsub.f32 %v430, 1.0
    %v1491 = vsub.f32 %v877, 1.0
    %v1492 = vsub.f32 %v879, 1.0
    %v1493 = vsub.f32 %v434, 1.0
    %v1494 = vsub.f32 %v436, 1.0
    %v1495 = vsub.f32 %v883, 1.0
    %v1496 = vsub.f32 %v885, 1.0
    %v1497 = vsub.f32 %v440, 1.0
    %v1498 = vsub.f32 %v442, 1.0
    %v1499 = vsub.f32 %v889, 1.0
    %v1500 = vsub.f32 %v891, 1.0
    %v1501 = vsub.f32 %v446, 1.0
    %v1502 = vsub.f32 %v448, 1.0
    %v1503 = vsub.f32 %v895, 1.0
    %v1504 = vsub.f32 %v897, 1.0
    %v1505 = vsub.f32 %v452, 1.0
    %v1506 = vsub.f32 %v454, 1.0
    %v1507 = vsub.f32 %v901, 1.0
    %v1508 = vsub.f32 %v903, 1.0
    %v1509 = vsub.f32 %v458, 1.0
    %v1510 = vsub.f32 %v460, 1.0
    %v1511 = vsub.f32 %v907, 1.0
    %v1512 = vsub.f32 %v909, 1.0
    %v1513 = vsub.f32 %v464, 1.0
    %v1514 = vsub.f32 %v466, 1.0
    %v1515 = vsub.f32 %v913, 1.0
    %v1516 = vsub.f32 %v915, 1.0
    %v1517 = vsub.f32 %v470, 1.0
    %v1518 = vsub.f32 %v472, 1.0
    %v1519 = vsub.f32 %v919, 1.0
    %v1520 = vsub.f32 %v921, 1.0
    %v1521 = vsub.f32 %v476, 1.0
    %v1522 = vsub.f32 %v478, 1.0
    %v1523 = vsub.f32 %v925, 1.0
    %v1524 = vsub.f32 %v927, 1.0
    %v1525 = vsub.f32 %v482, 1.0
    %v1526 = vsub.f32 %v484, 1.0
    %v1527 = vsub.f32 %v931, 1.0
    %v1528 = vsub.f32 %v933, 1.0
    %v1529 = vsub.f32 %v488, 1.0
    %v1530 = vsub.f32 %v490, 1.0
    %v1531 = vsub.f32 %v937, 1.0
    %v1532 = vsub.f32 %v939, 1.0
    %v1533 = vsub.f32 %v494, 1.0
    %v1534 = vsub.f32 %v496, 1.0
    %v1535 = vsub.f32 %v943, 1.0
    %v1536 = vsub.f32 %v945, 1.0
    %v1537 = vsub.f32 %v500, 1.0
    %v1538 = vsub.f32 %v502, 1.0
    %v1539 = vsub.f32 %v949, 1.0
    %v1540 = vsub.f32 %v951, 1.0
    %v1541 = vsub.f32 %v506, 1.0
    %v1542 = vsub.f32 %v508, 1.0
    %v1543 = vsub.f32 %v955, 1.0
    %v1544 = vsub.f32 %v957, 1.0
    %v1545 = vsub.f32 %v512, 1.0
    %v1546 = vsub.f32 %v514, 1.0
    %v1547 = vsub.f32 %v961, 1.0
    %v1548 = vsub.f32 %v963, 1.0
    %v1549 = vsub.f32 %v518, 1.0
    %v1550 = vsub.f32 %v520, 1.0
    %v1551 = vsub.f32 %v967, 1.0
    %v1552 = vsub.f32 %v969, 1.0
    %v1553 = vsel %vm1041, %v1297, %v140
    %v1554 = vsel %vm1042, %v1298, %v142
    %v1555 = vsel %vm1043, %v1299, %v589
    %v1556 = vsel %vm1044, %v1300, %v591
    %v1557 = vsel %vm1045, %v1301, %v146
    %v1558 = vsel %vm1046, %v1302, %v148
    %v1559 = vsel %vm1047, %v1303, %v595
    %v1560 = vsel %vm1048, %v1304, %v597
    %v1561 = vsel %vm1049, %v1305, %v152
    %v1562 = vsel %vm1050, %v1306, %v154
    %v1563 = vsel %vm1051, %v1307, %v601
    %v1564 = vsel %vm1052, %v1308, %v603
    %v1565 = vsel %vm1053, %v1309, %v158
    %v1566 = vsel %vm1054, %v1310, %v160
    %v1567 = vsel %vm1055, %v1311, %v607
    %v1568 = vsel %vm1056, %v1312, %v609
    %v1569 = vsel %vm1057, %v1313, %v164
    %v1570 = vsel %vm1058, %v1314, %v166
    %v1571 = vsel %vm1059, %v1315, %v613
    %v1572 = vsel %vm1060, %v1316, %v615
    %v1573 = vsel %vm1061, %v1317, %v170
    %v1574 = vsel %vm1062, %v1318, %v172
    %v1575 = vsel %vm1063, %v1319, %v619
    %v1576 = vsel %vm1064, %v1320, %v621
    %v1577 = vsel %vm1065, %v1321, %v176
    %v1578 = vsel %vm1066, %v1322, %v178
    %v1579 = vsel %vm1067, %v1323, %v625
    %v1580 = vsel %vm1068, %v1324, %v627
    %v1581 = vsel %vm1069, %v1325, %v182
    %v1582 = vsel %vm1070, %v1326, %v184
    %v1583 = vsel %vm1071, %v1327, %v631
    %v1584 = vsel %vm1072, %v1328, %v633
    %v1585 = vsel %vm1073, %v1329, %v188
    %v1586 = vsel %vm1074, %v1330, %v190
    %v1587 = vsel %vm1075, %v1331, %v637
    %v1588 = vsel %vm1076, %v1332, %v639
    %v1589 = vsel %vm1077, %v1333, %v194
    %v1590 = vsel %vm1078, %v1334, %v196
    %v1591 = vsel %vm1079, %v1335, %v643
    %v1592 = vsel %vm1080, %v1336, %v645
    %v1593 = vsel %vm1081, %v1337, %v200
    %v1594 = vsel %vm1082, %v1338, %v202
    %v1595 = vsel %vm1083, %v1339, %v649
    %v1596 = vsel %vm1084, %v1340, %v651
    %v1597 = vsel %vm1085, %v1341, %v206
    %v1598 = vsel %vm1086, %v1342, %v208
    %v1599 = vsel %vm1087, %v1343, %v655
    %v1600 = vsel %vm1088, %v1344, %v657
    %v1601 = vsel %vm1089, %v1345, %v212
    %v1602 = vsel %vm1090, %v1346, %v214
    %v1603 = vsel %vm1091, %v1347, %v661
    %v1604 = vsel %vm1092, %v1348, %v663
    %v1605 = vsel %vm1093, %v1349, %v218
    %v1606 = vsel %vm1094, %v1350, %v220
    %v1607 = vsel %vm1095, %v1351, %v667
    %v1608 = vsel %vm1096, %v1352, %v669
    %v1609 = vsel %vm1097, %v1353, %v224
    %v1610 = vsel %vm1098, %v1354, %v226
    %v1611 = vsel %vm1099, %v1355, %v673
    %v1612 = vsel %vm1100, %v1356, %v675
    %v1613 = vsel %vm1101, %v1357, %v230
    %v1614 = vsel %vm1102, %v1358, %v232
    %v1615 = vsel %vm1103, %v1359, %v679
    %v1616 = vsel %vm1104, %v1360, %v681
    %v1617 = vsel %vm1105, %v1361, %v236
    %v1618 = vsel %vm1106, %v1362, %v238
    %v1619 = vsel %vm1107, %v1363, %v685
    %v1620 = vsel %vm1108, %v1364, %v687
    %v1621 = vsel %vm1109, %v1365, %v242
    %v1622 = vsel %vm1110, %v1366, %v244
    %v1623 = vsel %vm1111, %v1367, %v691
    %v1624 = vsel %vm1112, %v1368, %v693
    %v1625 = vsel %vm1113, %v1369, %v248
    %v1626 = vsel %vm1114, %v1370, %v250
    %v1627 = vsel %vm1115, %v1371, %v697
    %v1628 = vsel %vm1116, %v1372, %v699
    %v1629 = vsel %vm1117, %v1373, %v254
    %v1630 = vsel %vm1118, %v1374, %v256
    %v1631 = vsel %vm1119, %v1375, %v703
    %v1632 = vsel %vm1120, %v1376, %v705
    %v1633 = vsel %vm1121, %v1377, %v260
    %v1634 = vsel %vm1122, %v1378, %v262
    %v1635 = vsel %vm1123, %v1379, %v709
    %v1636 = vsel %vm1124, %v1380, %v711
    %v1637 = vsel %vm1125, %v1381, %v266
    %v1638 = vsel %vm1126, %v1382, %v268
    %v1639 = vsel %vm1127, %v1383, %v715
    %v1640 = vsel %vm1128, %v1384, %v717
    %v1641 = vsel %vm1129, %v1385, %v272
    %v1642 = vsel %vm1130, %v1386, %v274
    %v1643 = vsel %vm1131, %v1387, %v721
    %v1644 = vsel %vm1132, %v1388, %v723
    %v1645 = vsel %vm1133, %v1389, %v278
    %v1646 = vsel %vm1134, %v1390, %v280
    %v1647 = vsel %vm1135, %v1391, %v727
    %v1648 = vsel %vm1136, %v1392, %v729
    %v1649 = vsel %vm1137, %v1393, %v284
    %v1650 = vsel %vm1138, %v1394, %v286
    %v1651 = vsel %vm1139, %v1395, %v733
    %v1652 = vsel %vm1140, %v1396, %v735
    %v1653 = vsel %vm1141, %v1397, %v290
    %v1654 = vsel %vm1142, %v1398, %v292
    %v1655 = vsel %vm1143, %v1399, %v739
    %v1656 = vsel %vm1144, %v1400, %v741
    %v1657 = vsel %vm1145, %v1401, %v296
    %v1658 = vsel %vm1146, %v1402, %v298
    %v1659 = vsel %vm1147, %v1403, %v745
    %v1660 = vsel %vm1148, %v1404, %v747
    %v1661 = vsel %vm1149, %v1405, %v302
    %v1662 = vsel %vm1150, %v1406, %v304
    %v1663 = vsel %vm1151, %v1407, %v751
    %v1664 = vsel %vm1152, %v1408, %v753
    %v1665 = vsel %vm1153, %v1409, %v308
    %v1666 = vsel %vm1154, %v1410, %v310
    %v1667 = vsel %vm1155, %v1411, %v757
    %v1668 = vsel %vm1156, %v1412, %v759
    %v1669 = vsel %vm1157, %v1413, %v314
    %v1670 = vsel %vm1158, %v1414, %v316
    %v1671 = vsel %vm1159, %v1415, %v763
    %v1672 = vsel %vm1160, %v1416, %v765
    %v1673 = vsel %vm1161, %v1417, %v320
    %v1674 = vsel %vm1162, %v1418, %v322
    %v1675 = vsel %vm1163, %v1419, %v769
    %v1676 = vsel %vm1164, %v1420, %v771
    %v1677 = vsel %vm1165, %v1421, %v326
    %v1678 = vsel %vm1166, %v1422, %v328
    %v1679 = vsel %vm1167, %v1423, %v775
    %v1680 = vsel %vm1168, %v1424, %v777
    %v1681 = vsel %vm1169, %v1425, %v332
    %v1682 = vsel %vm1170, %v1426, %v334
    %v1683 = vsel %vm1171, %v1427, %v781
    %v1684 = vsel %vm1172, %v1428, %v783
    %v1685 = vsel %vm1173, %v1429, %v338
    %v1686 = vsel %vm1174, %v1430, %v340
    %v1687 = vsel %vm1175, %v1431, %v787
    %v1688 = vsel %vm1176, %v1432, %v789
    %v1689 = vsel %vm1177, %v1433, %v344
    %v1690 = vsel %vm1178, %v1434, %v346
    %v1691 = vsel %vm1179, %v1435, %v793
    %v1692 = vsel %vm1180, %v1436, %v795
    %v1693 = vsel %vm1181, %v1437, %v350
    %v1694 = vsel %vm1182, %v1438, %v352
    %v1695 = vsel %vm1183, %v1439, %v799
    %v1696 = vsel %vm1184, %v1440, %v801
    %v1697 = vsel %vm1185, %v1441, %v356
    %v1698 = vsel %vm1186, %v1442, %v358
    %v1699 = vsel %vm1187, %v1443, %v805
    %v1700 = vsel %vm1188, %v1444, %v807
    %v1701 = vsel %vm1189, %v1445, %v362
    %v1702 = vsel %vm1190, %v1446, %v364
    %v1703 = vsel %vm1191, %v1447, %v811
    %v1704 = vsel %vm1192, %v1448, %v813
    %v1705 = vsel %vm1193, %v1449, %v368
    %v1706 = vsel %vm1194, %v1450, %v370
    %v1707 = vsel %vm1195, %v1451, %v817
    %v1708 = vsel %vm1196, %v1452, %v819
    %v1709 = vsel %vm1197, %v1453, %v374
    %v1710 = vsel %vm1198, %v1454, %v376
    %v1711 = vsel %vm1199, %v1455, %v823
    %v1712 = vsel %vm1200, %v1456, %v825
    %v1713 = vsel %vm1201, %v1457, %v380
    %v1714 = vsel %vm1202, %v1458, %v382
    %v1715 = vsel %vm1203, %v1459, %v829
    %v1716 = vsel %vm1204, %v1460, %v831
    %v1717 = vsel %vm1205, %v1461, %v386
    %v1718 = vsel %vm1206, %v1462, %v388
    %v1719 = vsel %vm1207, %v1463, %v835
    %v1720 = vsel %vm1208, %v1464, %v837
    %v1721 = vsel %vm1209, %v1465, %v392
    %v1722 = vsel %vm1210, %v1466, %v394
    %v1723 = vsel %vm1211, %v1467, %v841
    %v1724 = vsel %vm1212, %v1468, %v843
    %v1725 = vsel %vm1213, %v1469, %v398
    %v1726 = vsel %vm1214, %v1470, %v400
    %v1727 = vsel %vm1215, %v1471, %v847
    %v1728 = vsel %vm1216, %v1472, %v849
    %v1729 = vsel %vm1217, %v1473, %v404
    %v1730 = vsel %vm1218, %v1474, %v406
    %v1731 = vsel %vm1219, %v1475, %v853
    %v1732 = vsel %vm1220, %v1476, %v855
    %v1733 = vsel %vm1221, %v1477, %v410
    %v1734 = vsel %vm1222, %v1478, %v412
    %v1735 = vsel %vm1223, %v1479, %v859
    %v1736 = vsel %vm1224, %v1480, %v861
    %v1737 = vsel %vm1225, %v1481, %v416
    %v1738 = vsel %vm1226, %v1482, %v418
    %v1739 = vsel %vm1227, %v1483, %v865
    %v1740 = vsel %vm1228, %v1484, %v867
    %v1741 = vsel %vm1229, %v1485, %v422
    %v1742 = vsel %vm1230, %v1486, %v424
    %v1743 = vsel %vm1231, %v1487, %v871
    %v1744 = vsel %vm1232, %v1488, %v873
    %v1745 = vsel %vm1233, %v1489, %v428
    %v1746 = vsel %vm1234, %v1490, %v430
    %v1747 = vsel %vm1235, %v1491, %v877
    %v1748 = vsel %vm1236, %v1492, %v879
    %v1749 = vsel %vm1237, %v1493, %v434
    %v1750 = vsel %vm1238, %v1494, %v436
    %v1751 = vsel %vm1239, %v1495, %v883
    %v1752 = vsel %vm1240, %v1496, %v885
    %v1753 = vsel %vm1241, %v1497, %v440
    %v1754 = vsel %vm1242, %v1498, %v442
    %v1755 = vsel %vm1243, %v1499, %v889
    %v1756 = vsel %vm1244, %v1500, %v891
    %v1757 = vsel %vm1245, %v1501, %v446
    %v1758 = vsel %vm1246, %v1502, %v448
    %v1759 = vsel %vm1247, %v1503, %v895
    %v1760 = vsel %vm1248, %v1504, %v897
    %v1761 = vsel %vm1249, %v1505, %v452
    %v1762 = vsel %vm1250, %v1506, %v454
    %v1763 = vsel %vm1251, %v1507, %v901
    %v1764 = vsel %vm1252, %v1508, %v903
    %v1765 = vsel %vm1253, %v1509, %v458
    %v1766 = vsel %vm1254, %v1510, %v460
    %v1767 = vsel %vm1255, %v1511, %v907
    %v1768 = vsel %vm1256, %v1512, %v909
    %v1769 = vsel %vm1257, %v1513, %v464
    %v1770 = vsel %vm1258, %v1514, %v466
    %v1771 = vsel %vm1259, %v1515, %v913
    %v1772 = vsel %vm1260, %v1516, %v915
    %v1773 = vsel %vm1261, %v1517, %v470
    %v1774 = vsel %vm1262, %v1518, %v472
    %v1775 = vsel %vm1263, %v1519, %v919
    %v1776 = vsel %vm1264, %v1520, %v921
    %v1777 = vsel %vm1265, %v1521, %v476
    %v1778 = vsel %vm1266, %v1522, %v478
    %v1779 = vsel %vm1267, %v1523, %v925
    %v1780 = vsel %vm1268, %v1524, %v927
    %v1781 = vsel %vm1269, %v1525, %v482
    %v1782 = vsel %vm1270, %v1526, %v484
    %v1783 = vsel %vm1271, %v1527, %v931
    %v1784 = vsel %vm1272, %v1528, %v933
    %v1785 = vsel %vm1273, %v1529, %v488
    %v1786 = vsel %vm1274, %v1530, %v490
    %v1787 = vsel %vm1275, %v1531, %v937
    %v1788 = vsel %vm1276, %v1532, %v939
    %v1789 = vsel %vm1277, %v1533, %v494
    %v1790 = vsel %vm1278, %v1534, %v496
    %v1791 = vsel %vm1279, %v1535, %v943
    %v1792 = vsel %vm1280, %v1536, %v945
    %v1793 = vsel %vm1281, %v1537, %v500
    %v1794 = vsel %vm1282, %v1538, %v502
    %v1795 = vsel %vm1283, %v1539, %v949
    %v1796 = vsel %vm1284, %v1540, %v951
    %v1797 = vsel %vm1285, %v1541, %v506
    %v1798 = vsel %vm1286, %v1542, %v508
    %v1799 = vsel %vm1287, %v1543, %v955
    %v1800 = vsel %vm1288, %v1544, %v957
    %v1801 = vsel %vm1289, %v1545, %v512
    %v1802 = vsel %vm1290, %v1546, %v514
    %v1803 = vsel %vm1291, %v1547, %v961
    %v1804 = vsel %vm1292, %v1548, %v963
    %v1805 = vsel %vm1293, %v1549, %v518
    %v1806 = vsel %vm1294, %v1550, %v520
    %v1807 = vsel %vm1295, %v1551, %v967
    %v1808 = vsel %vm1296, %v1552, %v969
    %v1809 = vmul.f32 %v1553, %v1553
    %v1810 = vmul.f32 %v1554, %v1554
    %v1811 = vmul.f32 %v1555, %v1555
    %v1812 = vmul.f32 %v1556, %v1556
    %v1813 = vmul.f32 %v1557, %v1557
    %v1814 = vmul.f32 %v1558, %v1558
    %v1815 = vmul.f32 %v1559, %v1559
    %v1816 = vmul.f32 %v1560, %v1560
    %v1817 = vmul.f32 %v1561, %v1561
    %v1818 = vmul.f32 %v1562, %v1562
    %v1819 = vmul.f32 %v1563, %v1563
    %v1820 = vmul.f32 %v1564, %v1564
    %v1821 = vmul.f32 %v1565, %v1565
    %v1822 = vmul.f32 %v1566, %v1566
    %v1823 = vmul.f32 %v1567, %v1567
    %v1824 = vmul.f32 %v1568, %v1568
    %v1825 = vmul.f32 %v1569, %v1569
    %v1826 = vmul.f32 %v1570, %v1570
    %v1827 = vmul.f32 %v1571, %v1571
    %v1828 = vmul.f32 %v1572, %v1572
    %v1829 = vmul.f32 %v1573, %v1573
    %v1830 = vmul.f32 %v1574, %v1574
    %v1831 = vmul.f32 %v1575, %v1575
    %v1832 = vmul.f32 %v1576, %v1576
    %v1833 = vmul.f32 %v1577, %v1577
    %v1834 = vmul.f32 %v1578, %v1578
    %v1835 = vmul.f32 %v1579, %v1579
    %v1836 = vmul.f32 %v1580, %v1580
    %v1837 = vmul.f32 %v1581, %v1581
    %v1838 = vmul.f32 %v1582, %v1582
    %v1839 = vmul.f32 %v1583, %v1583
    %v1840 = vmul.f32 %v1584, %v1584
    %v1841 = vmul.f32 %v1585, %v1585
    %v1842 = vmul.f32 %v1586, %v1586
    %v1843 = vmul.f32 %v1587, %v1587
    %v1844 = vmul.f32 %v1588, %v1588
    %v1845 = vmul.f32 %v1589, %v1589
    %v1846 = vmul.f32 %v1590, %v1590
    %v1847 = vmul.f32 %v1591, %v1591
    %v1848 = vmul.f32 %v1592, %v1592
    %v1849 = vmul.f32 %v1593, %v1593
    %v1850 = vmul.f32 %v1594, %v1594
    %v1851 = vmul.f32 %v1595, %v1595
    %v1852 = vmul.f32 %v1596, %v1596
    %v1853 = vmul.f32 %v1597, %v1597
    %v1854 = vmul.f32 %v1598, %v1598
    %v1855 = vmul.f32 %v1599, %v1599
    %v1856 = vmul.f32 %v1600, %v1600
    %v1857 = vmul.f32 %v1601, %v1601
    %v1858 = vmul.f32 %v1602, %v1602
    %v1859 = vmul.f32 %v1603, %v1603
    %v1860 = vmul.f32 %v1604, %v1604
    %v1861 = vmul.f32 %v1605, %v1605
    %v1862 = vmul.f32 %v1606, %v1606
    %v1863 = vmul.f32 %v1607, %v1607
    %v1864 = vmul.f32 %v1608, %v1608
    %v1865 = vmul.f32 %v1609, %v1609
    %v1866 = vmul.f32 %v1610, %v1610
    %v1867 = vmul.f32 %v1611, %v1611
    %v1868 = vmul.f32 %v1612, %v1612
    %v1869 = vmul.f32 %v1613, %v1613
    %v1870 = vmul.f32 %v1614, %v1614
    %v1871 = vmul.f32 %v1615, %v1615
    %v1872 = vmul.f32 %v1616, %v1616
    %v1873 = vmul.f32 %v1617, %v1617
    %v1874 = vmul.f32 %v1618, %v1618
    %v1875 = vmul.f32 %v1619, %v1619
    %v1876 = vmul.f32 %v1620, %v1620
    %v1877 = vmul.f32 %v1621, %v1621
    %v1878 = vmul.f32 %v1622, %v1622
    %v1879 = vmul.f32 %v1623, %v1623
    %v1880 = vmul.f32 %v1624, %v1624
    %v1881 = vmul.f32 %v1625, %v1625
    %v1882 = vmul.f32 %v1626, %v1626
    %v1883 = vmul.f32 %v1627, %v1627
    %v1884 = vmul.f32 %v1628, %v1628
    %v1885 = vmul.f32 %v1629, %v1629
    %v1886 = vmul.f32 %v1630, %v1630
    %v1887 = vmul.f32 %v1631, %v1631
    %v1888 = vmul.f32 %v1632, %v1632
    %v1889 = vmul.f32 %v1633, %v1633
    %v1890 = vmul.f32 %v1634, %v1634
    %v1891 = vmul.f32 %v1635, %v1635
    %v1892 = vmul.f32 %v1636, %v1636
    %v1893 = vmul.f32 %v1637, %v1637
    %v1894 = vmul.f32 %v1638, %v1638
    %v1895 = vmul.f32 %v1639, %v1639
    %v1896 = vmul.f32 %v1640, %v1640
    %v1897 = vmul.f32 %v1641, %v1641
    %v1898 = vmul.f32 %v1642, %v1642
    %v1899 = vmul.f32 %v1643, %v1643
    %v1900 = vmul.f32 %v1644, %v1644
    %v1901 = vmul.f32 %v1645, %v1645
    %v1902 = vmul.f32 %v1646, %v1646
    %v1903 = vmul.f32 %v1647, %v1647
    %v1904 = vmul.f32 %v1648, %v1648
    %v1905 = vmul.f32 %v1649, %v1649
    %v1906 = vmul.f32 %v1650, %v1650
    %v1907 = vmul.f32 %v1651, %v1651
    %v1908 = vmul.f32 %v1652, %v1652
    %v1909 = vmul.f32 %v1653, %v1653
    %v1910 = vmul.f32 %v1654, %v1654
    %v1911 = vmul.f32 %v1655, %v1655
    %v1912 = vmul.f32 %v1656, %v1656
    %v1913 = vmul.f32 %v1657, %v1657
    %v1914 = vmul.f32 %v1658, %v1658
    %v1915 = vmul.f32 %v1659, %v1659
    %v1916 = vmul.f32 %v1660, %v1660
    %v1917 = vmul.f32 %v1661, %v1661
    %v1918 = vmul.f32 %v1662, %v1662
    %v1919 = vmul.f32 %v1663, %v1663
    %v1920 = vmul.f32 %v1664, %v1664
    %v1921 = vmul.f32 %v1665, %v1665
    %v1922 = vmul.f32 %v1666, %v1666
    %v1923 = vmul.f32 %v1667, %v1667
    %v1924 = vmul.f32 %v1668, %v1668
    %v1925 = vmul.f32 %v1669, %v1669
    %v1926 = vmul.f32 %v1670, %v1670
    %v1927 = vmul.f32 %v1671, %v1671
    %v1928 = vmul.f32 %v1672, %v1672
    %v1929 = vmul.f32 %v1673, %v1673
    %v1930 = vmul.f32 %v1674, %v1674
    %v1931 = vmul.f32 %v1675, %v1675
    %v1932 = vmul.f32 %v1676, %v1676
    %v1933 = vmul.f32 %v1677, %v1677
    %v1934 = vmul.f32 %v1678, %v1678
    %v1935 = vmul.f32 %v1679, %v1679
    %v1936 = vmul.f32 %v1680, %v1680
    %v1937 = vmul.f32 %v1681, %v1681
    %v1938 = vmul.f32 %v1682, %v1682
    %v1939 = vmul.f32 %v1683, %v1683
    %v1940 = vmul.f32 %v1684, %v1684
    %v1941 = vmul.f32 %v1685, %v1685
    %v1942 = vmul.f32 %v1686, %v1686
    %v1943 = vmul.f32 %v1687, %v1687
    %v1944 = vmul.f32 %v1688, %v1688
    %v1945 = vmul.f32 %v1689, %v1689
    %v1946 = vmul.f32 %v1690, %v1690
    %v1947 = vmul.f32 %v1691, %v1691
    %v1948 = vmul.f32 %v1692, %v1692
    %v1949 = vmul.f32 %v1693, %v1693
    %v1950 = vmul.f32 %v1694, %v1694
    %v1951 = vmul.f32 %v1695, %v1695
    %v1952 = vmul.f32 %v1696, %v1696
    %v1953 = vmul.f32 %v1697, %v1697
    %v1954 = vmul.f32 %v1698, %v1698
    %v1955 = vmul.f32 %v1699, %v1699
    %v1956 = vmul.f32 %v1700, %v1700
    %v1957 = vmul.f32 %v1701, %v1701
    %v1958 = vmul.f32 %v1702, %v1702
    %v1959 = vmul.f32 %v1703, %v1703
    %v1960 = vmul.f32 %v1704, %v1704
    %v1961 = vmul.f32 %v1705, %v1705
    %v1962 = vmul.f32 %v1706, %v1706
    %v1963 = vmul.f32 %v1707, %v1707
    %v1964 = vmul.f32 %v1708, %v1708
    %v1965 = vmul.f32 %v1709, %v1709
    %v1966 = vmul.f32 %v1710, %v1710
    %v1967 = vmul.f32 %v1711, %v1711
    %v1968 = vmul.f32 %v1712, %v1712
    %v1969 = vmul.f32 %v1713, %v1713
    %v1970 = vmul.f32 %v1714, %v1714
    %v1971 = vmul.f32 %v1715, %v1715
    %v1972 = vmul.f32 %v1716, %v1716
    %v1973 = vmul.f32 %v1717, %v1717
    %v1974 = vmul.f32 %v1718, %v1718
    %v1975 = vmul.f32 %v1719, %v1719
    %v1976 = vmul.f32 %v1720, %v1720
    %v1977 = vmul.f32 %v1721, %v1721
    %v1978 = vmul.f32 %v1722, %v1722
    %v1979 = vmul.f32 %v1723, %v1723
    %v1980 = vmul.f32 %v1724, %v1724
    %v1981 = vmul.f32 %v1725, %v1725
    %v1982 = vmul.f32 %v1726, %v1726
    %v1983 = vmul.f32 %v1727, %v1727
    %v1984 = vmul.f32 %v1728, %v1728
    %v1985 = vmul.f32 %v1729, %v1729
    %v1986 = vmul.f32 %v1730, %v1730
    %v1987 = vmul.f32 %v1731, %v1731
    %v1988 = vmul.f32 %v1732, %v1732
    %v1989 = vmul.f32 %v1733, %v1733
    %v1990 = vmul.f32 %v1734, %v1734
    %v1991 = vmul.f32 %v1735, %v1735
    %v1992 = vmul.f32 %v1736, %v1736
    %v1993 = vmul.f32 %v1737, %v1737
    %v1994 = vmul.f32 %v1738, %v1738
    %v1995 = vmul.f32 %v1739, %v1739
    %v1996 = vmul.f32 %v1740, %v1740
    %v1997 = vmul.f32 %v1741, %v1741
    %v1998 = vmul.f32 %v1742, %v1742
    %v1999 = vmul.f32 %v1743, %v1743
    %v2000 = vmul.f32 %v1744, %v1744
    %v2001 = vmul.f32 %v1745, %v1745
    %v2002 = vmul.f32 %v1746, %v1746
    %v2003 = vmul.f32 %v1747, %v1747
    %v2004 = vmul.f32 %v1748, %v1748
    %v2005 = vmul.f32 %v1749, %v1749
    %v2006 = vmul.f32 %v1750, %v1750
    %v2007 = vmul.f32 %v1751, %v1751
    %v2008 = vmul.f32 %v1752, %v1752
    %v2009 = vmul.f32 %v1753, %v1753
    %v2010 = vmul.f32 %v1754, %v1754
    %v2011 = vmul.f32 %v1755, %v1755
    %v2012 = vmul.f32 %v1756, %v1756
    %v2013 = vmul.f32 %v1757, %v1757
    %v2014 = vmul.f32 %v1758, %v1758
    %v2015 = vmul.f32 %v1759, %v1759
    %v2016 = vmul.f32 %v1760, %v1760
    %v2017 = vmul.f32 %v1761, %v1761
    %v2018 = vmul.f32 %v1762, %v1762
    %v2019 = vmul.f32 %v1763, %v1763
    %v2020 = vmul.f32 %v1764, %v1764
    %v2021 = vmul.f32 %v1765, %v1765
    %v2022 = vmul.f32 %v1766, %v1766
    %v2023 = vmul.f32 %v1767, %v1767
    %v2024 = vmul.f32 %v1768, %v1768
    %v2025 = vmul.f32 %v1769, %v1769
    %v2026 = vmul.f32 %v1770, %v1770
    %v2027 = vmul.f32 %v1771, %v1771
    %v2028 = vmul.f32 %v1772, %v1772
    %v2029 = vmul.f32 %v1773, %v1773
    %v2030 = vmul.f32 %v1774, %v1774
    %v2031 = vmul.f32 %v1775, %v1775
    %v2032 = vmul.f32 %v1776, %v1776
    %v2033 = vmul.f32 %v1777, %v1777
    %v2034 = vmul.f32 %v1778, %v1778
    %v2035 = vmul.f32 %v1779, %v1779
    %v2036 = vmul.f32 %v1780, %v1780
    %v2037 = vmul.f32 %v1781, %v1781
    %v2038 = vmul.f32 %v1782, %v1782
    %v2039 = vmul.f32 %v1783, %v1783
    %v2040 = vmul.f32 %v1784, %v1784
    %v2041 = vmul.f32 %v1785, %v1785
    %v2042 = vmul.f32 %v1786, %v1786
    %v2043 = vmul.f32 %v1787, %v1787
    %v2044 = vmul.f32 %v1788, %v1788
    %v2045 = vmul.f32 %v1789, %v1789
    %v2046 = vmul.f32 %v1790, %v1790
    %v2047 = vmul.f32 %v1791, %v1791
    %v2048 = vmul.f32 %v1792, %v1792
    %v2049 = vmul.f32 %v1793, %v1793
    %v2050 = vmul.f32 %v1794, %v1794
    %v2051 = vmul.f32 %v1795, %v1795
    %v2052 = vmul.f32 %v1796, %v1796
    %v2053 = vmul.f32 %v1797, %v1797
    %v2054 = vmul.f32 %v1798, %v1798
    %v2055 = vmul.f32 %v1799, %v1799
    %v2056 = vmul.f32 %v1800, %v1800
    %v2057 = vmul.f32 %v1801, %v1801
    %v2058 = vmul.f32 %v1802, %v1802
    %v2059 = vmul.f32 %v1803, %v1803
    %v2060 = vmul.f32 %v1804, %v1804
    %v2061 = vmul.f32 %v1805, %v1805
    %v2062 = vmul.f32 %v1806, %v1806
    %v2063 = vmul.f32 %v1807, %v1807
    %v2064 = vmul.f32 %v1808, %v1808
    %v2065 = vadd.f32 %v1809, %v1810
    %v2066 = vadd.f32 %v2065, %v1811
    %v2067 = vadd.f32 %v2066, %v1812
    %2068 = vadd.xlane.f32.xlu0 %v2067
    %v2069 = vpop.xlane.xlu0 %2068
    %v2070 = vadd.f32 %v1813, %v1814
    %v2071 = vadd.f32 %v2070, %v1815
    %v2072 = vadd.f32 %v2071, %v1816
    %2073 = vadd.xlane.f32.xlu0 %v2072
    %v2074 = vpop.xlane.xlu0 %2073
    %v2075 = vadd.f32 %v1817, %v1818
    %v2076 = vadd.f32 %v2075, %v1819
    %v2077 = vadd.f32 %v2076, %v1820
    %2078 = vadd.xlane.f32.xlu0 %v2077
    %v2079 = vpop.xlane.xlu0 %2078
    %v2080 = vadd.f32 %v1821, %v1822
    %v2081 = vadd.f32 %v2080, %v1823
    %v2082 = vadd.f32 %v2081, %v1824
    %2083 = vadd.xlane.f32.xlu0 %v2082
    %v2084 = vpop.xlane.xlu0 %2083
    %v2085 = vadd.f32 %v1825, %v1826
    %v2086 = vadd.f32 %v2085, %v1827
    %v2087 = vadd.f32 %v2086, %v1828
    %2088 = vadd.xlane.f32.xlu0 %v2087
    %v2089 = vpop.xlane.xlu0 %2088
    %v2090 = vadd.f32 %v1829, %v1830
    %v2091 = vadd.f32 %v2090, %v1831
    %v2092 = vadd.f32 %v2091, %v1832
    %2093 = vadd.xlane.f32.xlu0 %v2092
    %v2094 = vpop.xlane.xlu0 %2093
    %v2095 = vadd.f32 %v1833, %v1834
    %v2096 = vadd.f32 %v2095, %v1835
    %v2097 = vadd.f32 %v2096, %v1836
    %2098 = vadd.xlane.f32.xlu0 %v2097
    %v2099 = vpop.xlane.xlu0 %2098
    %v2100 = vadd.f32 %v1837, %v1838
    %v2101 = vadd.f32 %v2100, %v1839
    %v2102 = vadd.f32 %v2101, %v1840
    %2103 = vadd.xlane.f32.xlu0 %v2102
    %v2104 = vpop.xlane.xlu0 %2103
    %v2105 = vadd.f32 %v1841, %v1842
    %v2106 = vadd.f32 %v2105, %v1843
    %v2107 = vadd.f32 %v2106, %v1844
    %2108 = vadd.xlane.f32.xlu0 %v2107
    %v2109 = vpop.xlane.xlu0 %2108
    %v2110 = vadd.f32 %v1845, %v1846
    %v2111 = vadd.f32 %v2110, %v1847
    %v2112 = vadd.f32 %v2111, %v1848
    %2113 = vadd.xlane.f32.xlu0 %v2112
    %v2114 = vpop.xlane.xlu0 %2113
    %v2115 = vadd.f32 %v1849, %v1850
    %v2116 = vadd.f32 %v2115, %v1851
    %v2117 = vadd.f32 %v2116, %v1852
    %2118 = vadd.xlane.f32.xlu0 %v2117
    %v2119 = vpop.xlane.xlu0 %2118
    %v2120 = vadd.f32 %v1853, %v1854
    %v2121 = vadd.f32 %v2120, %v1855
    %v2122 = vadd.f32 %v2121, %v1856
    %2123 = vadd.xlane.f32.xlu0 %v2122
    %v2124 = vpop.xlane.xlu0 %2123
    %v2125 = vadd.f32 %v1857, %v1858
    %v2126 = vadd.f32 %v2125, %v1859
    %v2127 = vadd.f32 %v2126, %v1860
    %2128 = vadd.xlane.f32.xlu0 %v2127
    %v2129 = vpop.xlane.xlu0 %2128
    %v2130 = vadd.f32 %v1861, %v1862
    %v2131 = vadd.f32 %v2130, %v1863
    %v2132 = vadd.f32 %v2131, %v1864
    %2133 = vadd.xlane.f32.xlu0 %v2132
    %v2134 = vpop.xlane.xlu0 %2133
    %v2135 = vadd.f32 %v1865, %v1866
    %v2136 = vadd.f32 %v2135, %v1867
    %v2137 = vadd.f32 %v2136, %v1868
    %2138 = vadd.xlane.f32.xlu0 %v2137
    %v2139 = vpop.xlane.xlu0 %2138
    %v2140 = vadd.f32 %v1869, %v1870
    %v2141 = vadd.f32 %v2140, %v1871
    %v2142 = vadd.f32 %v2141, %v1872
    %2143 = vadd.xlane.f32.xlu0 %v2142
    %v2144 = vpop.xlane.xlu0 %2143
    %v2145 = vadd.f32 %v1873, %v1874
    %v2146 = vadd.f32 %v2145, %v1875
    %v2147 = vadd.f32 %v2146, %v1876
    %2148 = vadd.xlane.f32.xlu0 %v2147
    %v2149 = vpop.xlane.xlu0 %2148
    %v2150 = vadd.f32 %v1877, %v1878
    %v2151 = vadd.f32 %v2150, %v1879
    %v2152 = vadd.f32 %v2151, %v1880
    %2153 = vadd.xlane.f32.xlu0 %v2152
    %v2154 = vpop.xlane.xlu0 %2153
    %v2155 = vadd.f32 %v1881, %v1882
    %v2156 = vadd.f32 %v2155, %v1883
    %v2157 = vadd.f32 %v2156, %v1884
    %2158 = vadd.xlane.f32.xlu0 %v2157
    %v2159 = vpop.xlane.xlu0 %2158
    %v2160 = vadd.f32 %v1885, %v1886
    %v2161 = vadd.f32 %v2160, %v1887
    %v2162 = vadd.f32 %v2161, %v1888
    %2163 = vadd.xlane.f32.xlu0 %v2162
    %v2164 = vpop.xlane.xlu0 %2163
    %v2165 = vadd.f32 %v1889, %v1890
    %v2166 = vadd.f32 %v2165, %v1891
    %v2167 = vadd.f32 %v2166, %v1892
    %2168 = vadd.xlane.f32.xlu0 %v2167
    %v2169 = vpop.xlane.xlu0 %2168
    %v2170 = vadd.f32 %v1893, %v1894
    %v2171 = vadd.f32 %v2170, %v1895
    %v2172 = vadd.f32 %v2171, %v1896
    %2173 = vadd.xlane.f32.xlu0 %v2172
    %v2174 = vpop.xlane.xlu0 %2173
    %v2175 = vadd.f32 %v1897, %v1898
    %v2176 = vadd.f32 %v2175, %v1899
    %v2177 = vadd.f32 %v2176, %v1900
    %2178 = vadd.xlane.f32.xlu0 %v2177
    %v2179 = vpop.xlane.xlu0 %2178
    %v2180 = vadd.f32 %v1901, %v1902
    %v2181 = vadd.f32 %v2180, %v1903
    %v2182 = vadd.f32 %v2181, %v1904
    %2183 = vadd.xlane.f32.xlu0 %v2182
    %v2184 = vpop.xlane.xlu0 %2183
    %v2185 = vadd.f32 %v1905, %v1906
    %v2186 = vadd.f32 %v2185, %v1907
    %v2187 = vadd.f32 %v2186, %v1908
    %2188 = vadd.xlane.f32.xlu0 %v2187
    %v2189 = vpop.xlane.xlu0 %2188
    %v2190 = vadd.f32 %v1909, %v1910
    %v2191 = vadd.f32 %v2190, %v1911
    %v2192 = vadd.f32 %v2191, %v1912
    %2193 = vadd.xlane.f32.xlu0 %v2192
    %v2194 = vpop.xlane.xlu0 %2193
    %v2195 = vadd.f32 %v1913, %v1914
    %v2196 = vadd.f32 %v2195, %v1915
    %v2197 = vadd.f32 %v2196, %v1916
    %2198 = vadd.xlane.f32.xlu0 %v2197
    %v2199 = vpop.xlane.xlu0 %2198
    %v2200 = vadd.f32 %v1917, %v1918
    %v2201 = vadd.f32 %v2200, %v1919
    %v2202 = vadd.f32 %v2201, %v1920
    %2203 = vadd.xlane.f32.xlu0 %v2202
    %v2204 = vpop.xlane.xlu0 %2203
    %v2205 = vadd.f32 %v1921, %v1922
    %v2206 = vadd.f32 %v2205, %v1923
    %v2207 = vadd.f32 %v2206, %v1924
    %2208 = vadd.xlane.f32.xlu0 %v2207
    %v2209 = vpop.xlane.xlu0 %2208
    %v2210 = vadd.f32 %v1925, %v1926
    %v2211 = vadd.f32 %v2210, %v1927
    %v2212 = vadd.f32 %v2211, %v1928
    %2213 = vadd.xlane.f32.xlu0 %v2212
    %v2214 = vpop.xlane.xlu0 %2213
    %v2215 = vadd.f32 %v1929, %v1930
    %v2216 = vadd.f32 %v2215, %v1931
    %v2217 = vadd.f32 %v2216, %v1932
    %2218 = vadd.xlane.f32.xlu0 %v2217
    %v2219 = vpop.xlane.xlu0 %2218
    %v2220 = vadd.f32 %v1933, %v1934
    %v2221 = vadd.f32 %v2220, %v1935
    %v2222 = vadd.f32 %v2221, %v1936
    %2223 = vadd.xlane.f32.xlu0 %v2222
    %v2224 = vpop.xlane.xlu0 %2223
    %v2225 = vadd.f32 %v1937, %v1938
    %v2226 = vadd.f32 %v2225, %v1939
    %v2227 = vadd.f32 %v2226, %v1940
    %2228 = vadd.xlane.f32.xlu0 %v2227
    %v2229 = vpop.xlane.xlu0 %2228
    %v2230 = vadd.f32 %v1941, %v1942
    %v2231 = vadd.f32 %v2230, %v1943
    %v2232 = vadd.f32 %v2231, %v1944
    %2233 = vadd.xlane.f32.xlu0 %v2232
    %v2234 = vpop.xlane.xlu0 %2233
    %v2235 = vadd.f32 %v1945, %v1946
    %v2236 = vadd.f32 %v2235, %v1947
    %v2237 = vadd.f32 %v2236, %v1948
    %2238 = vadd.xlane.f32.xlu0 %v2237
    %v2239 = vpop.xlane.xlu0 %2238
    %v2240 = vadd.f32 %v1949, %v1950
    %v2241 = vadd.f32 %v2240, %v1951
    %v2242 = vadd.f32 %v2241, %v1952
    %2243 = vadd.xlane.f32.xlu0 %v2242
    %v2244 = vpop.xlane.xlu0 %2243
    %v2245 = vadd.f32 %v1953, %v1954
    %v2246 = vadd.f32 %v2245, %v1955
    %v2247 = vadd.f32 %v2246, %v1956
    %2248 = vadd.xlane.f32.xlu0 %v2247
    %v2249 = vpop.xlane.xlu0 %2248
    %v2250 = vadd.f32 %v1957, %v1958
    %v2251 = vadd.f32 %v2250, %v1959
    %v2252 = vadd.f32 %v2251, %v1960
    %2253 = vadd.xlane.f32.xlu0 %v2252
    %v2254 = vpop.xlane.xlu0 %2253
    %v2255 = vadd.f32 %v1961, %v1962
    %v2256 = vadd.f32 %v2255, %v1963
    %v2257 = vadd.f32 %v2256, %v1964
    %2258 = vadd.xlane.f32.xlu0 %v2257
    %v2259 = vpop.xlane.xlu0 %2258
    %v2260 = vadd.f32 %v1965, %v1966
    %v2261 = vadd.f32 %v2260, %v1967
    %v2262 = vadd.f32 %v2261, %v1968
    %2263 = vadd.xlane.f32.xlu0 %v2262
    %v2264 = vpop.xlane.xlu0 %2263
    %v2265 = vadd.f32 %v1969, %v1970
    %v2266 = vadd.f32 %v2265, %v1971
    %v2267 = vadd.f32 %v2266, %v1972
    %2268 = vadd.xlane.f32.xlu0 %v2267
    %v2269 = vpop.xlane.xlu0 %2268
    %v2270 = vadd.f32 %v1973, %v1974
    %v2271 = vadd.f32 %v2270, %v1975
    %v2272 = vadd.f32 %v2271, %v1976
    %2273 = vadd.xlane.f32.xlu0 %v2272
    %v2274 = vpop.xlane.xlu0 %2273
    %v2275 = vadd.f32 %v1977, %v1978
    %v2276 = vadd.f32 %v2275, %v1979
    %v2277 = vadd.f32 %v2276, %v1980
    %2278 = vadd.xlane.f32.xlu0 %v2277
    %v2279 = vpop.xlane.xlu0 %2278
    %v2280 = vadd.f32 %v1981, %v1982
    %v2281 = vadd.f32 %v2280, %v1983
    %v2282 = vadd.f32 %v2281, %v1984
    %2283 = vadd.xlane.f32.xlu0 %v2282
    %v2284 = vpop.xlane.xlu0 %2283
    %v2285 = vadd.f32 %v1985, %v1986
    %v2286 = vadd.f32 %v2285, %v1987
    %v2287 = vadd.f32 %v2286, %v1988
    %2288 = vadd.xlane.f32.xlu0 %v2287
    %v2289 = vpop.xlane.xlu0 %2288
    %v2290 = vadd.f32 %v1989, %v1990
    %v2291 = vadd.f32 %v2290, %v1991
    %v2292 = vadd.f32 %v2291, %v1992
    %2293 = vadd.xlane.f32.xlu0 %v2292
    %v2294 = vpop.xlane.xlu0 %2293
    %v2295 = vadd.f32 %v1993, %v1994
    %v2296 = vadd.f32 %v2295, %v1995
    %v2297 = vadd.f32 %v2296, %v1996
    %2298 = vadd.xlane.f32.xlu0 %v2297
    %v2299 = vpop.xlane.xlu0 %2298
    %v2300 = vadd.f32 %v1997, %v1998
    %v2301 = vadd.f32 %v2300, %v1999
    %v2302 = vadd.f32 %v2301, %v2000
    %2303 = vadd.xlane.f32.xlu0 %v2302
    %v2304 = vpop.xlane.xlu0 %2303
    %v2305 = vadd.f32 %v2001, %v2002
    %v2306 = vadd.f32 %v2305, %v2003
    %v2307 = vadd.f32 %v2306, %v2004
    %2308 = vadd.xlane.f32.xlu0 %v2307
    %v2309 = vpop.xlane.xlu0 %2308
    %v2310 = vadd.f32 %v2005, %v2006
    %v2311 = vadd.f32 %v2310, %v2007
    %v2312 = vadd.f32 %v2311, %v2008
    %2313 = vadd.xlane.f32.xlu0 %v2312
    %v2314 = vpop.xlane.xlu0 %2313
    %v2315 = vadd.f32 %v2009, %v2010
    %v2316 = vadd.f32 %v2315, %v2011
    %v2317 = vadd.f32 %v2316, %v2012
    %2318 = vadd.xlane.f32.xlu0 %v2317
    %v2319 = vpop.xlane.xlu0 %2318
    %v2320 = vadd.f32 %v2013, %v2014
    %v2321 = vadd.f32 %v2320, %v2015
    %v2322 = vadd.f32 %v2321, %v2016
    %2323 = vadd.xlane.f32.xlu0 %v2322
    %v2324 = vpop.xlane.xlu0 %2323
    %v2325 = vadd.f32 %v2017, %v2018
    %v2326 = vadd.f32 %v2325, %v2019
    %v2327 = vadd.f32 %v2326, %v2020
    %2328 = vadd.xlane.f32.xlu0 %v2327
    %v2329 = vpop.xlane.xlu0 %2328
    %v2330 = vadd.f32 %v2021, %v2022
    %v2331 = vadd.f32 %v2330, %v2023
    %v2332 = vadd.f32 %v2331, %v2024
    %2333 = vadd.xlane.f32.xlu0 %v2332
    %v2334 = vpop.xlane.xlu0 %2333
    %v2335 = vadd.f32 %v2025, %v2026
    %v2336 = vadd.f32 %v2335, %v2027
    %v2337 = vadd.f32 %v2336, %v2028
    %2338 = vadd.xlane.f32.xlu0 %v2337
    %v2339 = vpop.xlane.xlu0 %2338
    %v2340 = vadd.f32 %v2029, %v2030
    %v2341 = vadd.f32 %v2340, %v2031
    %v2342 = vadd.f32 %v2341, %v2032
    %2343 = vadd.xlane.f32.xlu0 %v2342
    %v2344 = vpop.xlane.xlu0 %2343
    %v2345 = vadd.f32 %v2033, %v2034
    %v2346 = vadd.f32 %v2345, %v2035
    %v2347 = vadd.f32 %v2346, %v2036
    %2348 = vadd.xlane.f32.xlu0 %v2347
    %v2349 = vpop.xlane.xlu0 %2348
    %v2350 = vadd.f32 %v2037, %v2038
    %v2351 = vadd.f32 %v2350, %v2039
    %v2352 = vadd.f32 %v2351, %v2040
    %2353 = vadd.xlane.f32.xlu0 %v2352
    %v2354 = vpop.xlane.xlu0 %2353
    %v2355 = vadd.f32 %v2041, %v2042
    %v2356 = vadd.f32 %v2355, %v2043
    %v2357 = vadd.f32 %v2356, %v2044
    %2358 = vadd.xlane.f32.xlu0 %v2357
    %v2359 = vpop.xlane.xlu0 %2358
    %v2360 = vadd.f32 %v2045, %v2046
    %v2361 = vadd.f32 %v2360, %v2047
    %v2362 = vadd.f32 %v2361, %v2048
    %2363 = vadd.xlane.f32.xlu0 %v2362
    %v2364 = vpop.xlane.xlu0 %2363
    %v2365 = vadd.f32 %v2049, %v2050
    %v2366 = vadd.f32 %v2365, %v2051
    %v2367 = vadd.f32 %v2366, %v2052
    %2368 = vadd.xlane.f32.xlu0 %v2367
    %v2369 = vpop.xlane.xlu0 %2368
    %v2370 = vadd.f32 %v2053, %v2054
    %v2371 = vadd.f32 %v2370, %v2055
    %v2372 = vadd.f32 %v2371, %v2056
    %2373 = vadd.xlane.f32.xlu0 %v2372
    %v2374 = vpop.xlane.xlu0 %2373
    %v2375 = vadd.f32 %v2057, %v2058
    %v2376 = vadd.f32 %v2375, %v2059
    %v2377 = vadd.f32 %v2376, %v2060
    %2378 = vadd.xlane.f32.xlu0 %v2377
    %v2379 = vpop.xlane.xlu0 %2378
    %v2380 = vadd.f32 %v2061, %v2062
    %v2381 = vadd.f32 %v2380, %v2063
    %v2382 = vadd.f32 %v2381, %v2064
    %2383 = vadd.xlane.f32.xlu0 %v2382
    %v2384 = vpop.xlane.xlu0 %2383
    %v2385 = vadd.f32 %v2069, %v2074
    %v2386 = vadd.f32 %v2385, %v2079
    %v2387 = vadd.f32 %v2386, %v2084
    %v2388 = vadd.f32 %v2387, %v2089
    %v2389 = vadd.f32 %v2388, %v2094
    %v2390 = vadd.f32 %v2389, %v2099
    %v2391 = vadd.f32 %v2390, %v2104
    %v2392 = vadd.f32 %v2391, %v2109
    %v2393 = vadd.f32 %v2392, %v2114
    %v2394 = vadd.f32 %v2393, %v2119
    %v2395 = vadd.f32 %v2394, %v2124
    %v2396 = vadd.f32 %v2395, %v2129
    %v2397 = vadd.f32 %v2396, %v2134
    %v2398 = vadd.f32 %v2397, %v2139
    %v2399 = vadd.f32 %v2398, %v2144
    %v2400 = vadd.f32 %v2399, %v2149
    %v2401 = vadd.f32 %v2400, %v2154
    %v2402 = vadd.f32 %v2401, %v2159
    %v2403 = vadd.f32 %v2402, %v2164
    %v2404 = vadd.f32 %v2403, %v2169
    %v2405 = vadd.f32 %v2404, %v2174
    %v2406 = vadd.f32 %v2405, %v2179
    %v2407 = vadd.f32 %v2406, %v2184
    %v2408 = vadd.f32 %v2407, %v2189
    %v2409 = vadd.f32 %v2408, %v2194
    %v2410 = vadd.f32 %v2409, %v2199
    %v2411 = vadd.f32 %v2410, %v2204
    %v2412 = vadd.f32 %v2411, %v2209
    %v2413 = vadd.f32 %v2412, %v2214
    %v2414 = vadd.f32 %v2413, %v2219
    %v2415 = vadd.f32 %v2414, %v2224
    %v2416 = vadd.f32 %v2415, %v2229
    %v2417 = vadd.f32 %v2416, %v2234
    %v2418 = vadd.f32 %v2417, %v2239
    %v2419 = vadd.f32 %v2418, %v2244
    %v2420 = vadd.f32 %v2419, %v2249
    %v2421 = vadd.f32 %v2420, %v2254
    %v2422 = vadd.f32 %v2421, %v2259
    %v2423 = vadd.f32 %v2422, %v2264
    %v2424 = vadd.f32 %v2423, %v2269
    %v2425 = vadd.f32 %v2424, %v2274
    %v2426 = vadd.f32 %v2425, %v2279
    %v2427 = vadd.f32 %v2426, %v2284
    %v2428 = vadd.f32 %v2427, %v2289
    %v2429 = vadd.f32 %v2428, %v2294
    %v2430 = vadd.f32 %v2429, %v2299
    %v2431 = vadd.f32 %v2430, %v2304
    %v2432 = vadd.f32 %v2431, %v2309
    %v2433 = vadd.f32 %v2432, %v2314
    %v2434 = vadd.f32 %v2433, %v2319
    %v2435 = vadd.f32 %v2434, %v2324
    %v2436 = vadd.f32 %v2435, %v2329
    %v2437 = vadd.f32 %v2436, %v2334
    %v2438 = vadd.f32 %v2437, %v2339
    %v2439 = vadd.f32 %v2438, %v2344
    %v2440 = vadd.f32 %v2439, %v2349
    %v2441 = vadd.f32 %v2440, %v2354
    %v2442 = vadd.f32 %v2441, %v2359
    %v2443 = vadd.f32 %v2442, %v2364
    %v2444 = vadd.f32 %v2443, %v2369
    %v2445 = vadd.f32 %v2444, %v2374
    %v2446 = vadd.f32 %v2445, %v2379
    %v2447 = vadd.f32 %v2446, %v2384
    %v2448 = vrot.slane %v2447, 4
    %v2449 = vadd.f32 %v2447, %v2448
    %v2450 = vrot.slane %v2449, 2
    %v2451 = vadd.f32 %v2449, %v2450
    %v2452 = vrot.slane %v2451, 1
    %v2453 = vadd.f32 %v2451, %v2452
    %v2454 = vmul.f32 %v2453, 3.8146973e-06
    %vm2455 = vcmask 0
    %2456 = vst.msk [vmem:[#allocation2] sm:$0x1] %vm2455, %v2454
    // Predicated region
    $region6: #{disentangled_transformer_layer.28} parent=1 // pred_check
      _
    $region7: #{disentangled_transformer_layer.28} parent=1 // pred_check_branch
      %2458 = sbr.rel (0) target = $region9
    $region8: #{disentangled_transformer_layer.28} parent=1 // pred_region
      %s2460 = ssub.s32 16, 16
      %2461 = vsyncadd [#allocation3], %s2460
      %s2463 = sshll.u32 [#allocation2], 4
      %s2464 = int_to_ptr.vmem [resolvable:$true] %s2463
      %2466 = dma.vmem_to_hbm [thread:$0]  %s2464, 16, %s1, [#allocation3]
    $region9: #{disentangled_transformer_layer.28} parent=1 // pred_fallthru
      _
    // Predicated region
    $region10: #{disentangled_transformer_layer.28} parent=1 // pred_check
      _
    $region11: #{disentangled_transformer_layer.28} parent=1 // pred_check_branch
      %2468 = sbr.rel (0) target = $region13
    $region12: #{disentangled_transformer_layer.28} parent=1 // pred_region
      %2469 = dma.done [#allocation3], 16
    $region13: #{disentangled_transformer_layer.28} parent=1 // pred_fallthru
      _
    %2470 = vsyncpa [#allocation3], 1

</llo_original>
